<compile_context>
chip_gen: v7x
topology: tpu7x:2x2x1
jax: 0.10.0
libtpu: 0.0.40
codegen_flags: <defaults>
</compile_context>

<pallas_src>
import functools
import math

import jax
import jax.numpy as jnp
from jax.experimental import pallas as pl
from jax.experimental.pallas import tpu as pltpu

MASK_FILL = -1e9            # exact fill value used by the reference masked_fill
LN_EPS = 1e-5               # nn.LayerNorm default
MXU_DTYPE = jnp.bfloat16    # MXU operand dtype (f32 accumulate)
ACT_DTYPE = jnp.bfloat16    # inter-kernel activation dtype in HBM


def _vmem_capacity_bytes(default=64 * 1024 * 1024):
    """Best-effort physical VMEM query; falls back to the conservative (v7x) value."""
    try:
        info = pltpu.get_tpu_info()
        for attr in ("vmem_capacity_bytes", "vmem_size_bytes", "vmem_bytes"):
            v = getattr(info, attr, None)
            if v:
                return int(v)
    except Exception:
        pass
    return default


_VMEM_CAP = _vmem_capacity_bytes()
if _VMEM_CAP >= 100 * 1024 * 1024:
    # v5e / v6e: 128 MiB VMEM -> big tiles, raise the scoped limit well above 32 MiB default.
    TM, TN, TK, TFF = 512, 512, 1024, 512
    VMEM_LIMIT = 96 * 1024 * 1024
else:
    # v7x (64 MiB) or unknown: smaller FFN tile, keep headroom below physical VMEM.
    TM, TN, TK, TFF = 256, 256, 512, 256
    VMEM_LIMIT = 40 * 1024 * 1024


def _pick_tile(dim, target, align):
    """Largest `align`-multiple tile <= target that divides `dim`; whole dim otherwise."""
    if dim <= target:
        return dim
    t = (min(target, dim) // align) * align
    while t >= align:
        if dim % t == 0:
            return t
        t -= align
    return dim


# ----------------------------------------------------------------------------
# Kernel 1: tiled matmul + bias.   x:[M,K] @ w:[K,N] + b:[1,N]  -> bf16
# ----------------------------------------------------------------------------
def matmul_bias_kernel(x_ref, w_ref, b_ref, o_ref, acc_ref):
    @pl.when(pl.program_id(2) == 0)
    def _init():
        acc_ref[...] = jnp.zeros_like(acc_ref)

    acc_ref[...] += jnp.dot(
        x_ref[...].astype(MXU_DTYPE), w_ref[...].astype(MXU_DTYPE),
        preferred_element_type=jnp.float32)

    @pl.when(pl.program_id(2) == pl.num_programs(2) - 1)
    def _finalize():
        o_ref[...] = (acc_ref[...] + b_ref[...]).astype(o_ref.dtype)


def pallas_matmul_bias(x, w, b):
    M, K = x.shape
    _, N = w.shape
    tm = _pick_tile(M, TM, 16)
    tn = _pick_tile(N, TN, 128)
    tk = _pick_tile(K, TK, 128)
    return pl.pallas_call(
        matmul_bias_kernel,
        grid=(M // tm, N // tn, K // tk),
        in_specs=[
            pl.BlockSpec((tm, tk), lambda i, j, k: (i, k)),
            pl.BlockSpec((tk, tn), lambda i, j, k: (k, j)),
            pl.BlockSpec((1, tn), lambda i, j, k: (0, j)),
        ],
        out_specs=pl.BlockSpec((tm, tn), lambda i, j, k: (i, j)),
        out_shape=jax.ShapeDtypeStruct((M, N), ACT_DTYPE),
        scratch_shapes=[pltpu.VMEM((tm, tn), jnp.float32)],
        compiler_params=pltpu.CompilerParams(
            dimension_semantics=("parallel", "parallel", "arbitrary"),
            vmem_limit_bytes=VMEM_LIMIT),
    )(x, w, b.reshape(1, N))


# ----------------------------------------------------------------------------
# Kernel 2: matmul + bias, fused with residual-add + LayerNorm epilogue.
#   out = LayerNorm(resid + x @ w + b)      (output feature dim D kept whole per block)
# ----------------------------------------------------------------------------
def matmul_residual_ln_kernel(x_ref, w_ref, b_ref, r_ref, g_ref, bl_ref, o_ref, acc_ref):
    @pl.when(pl.program_id(1) == 0)
    def _init():
        acc_ref[...] = jnp.zeros_like(acc_ref)

    acc_ref[...] += jnp.dot(
        x_ref[...].astype(MXU_DTYPE), w_ref[...].astype(MXU_DTYPE),
        preferred_element_type=jnp.float32)

    @pl.when(pl.program_id(1) == pl.num_programs(1) - 1)
    def _finalize():
        y = acc_ref[...] + b_ref[...] + r_ref[...].astype(jnp.float32)
        mu = jnp.mean(y, axis=-1, keepdims=True)
        yc = y - mu
        var = jnp.mean(yc * yc, axis=-1, keepdims=True)   # biased variance, like nn.LayerNorm
        yn = yc * jax.lax.rsqrt(var + LN_EPS)              # EUP rsqrt, no VALU divide
        o_ref[...] = (yn * g_ref[...] + bl_ref[...]).astype(o_ref.dtype)


def pallas_matmul_residual_ln(x, w, b, resid, gamma, beta, out_dtype=ACT_DTYPE):
    M, K = x.shape
    _, D = w.shape
    tm = _pick_tile(M, TM, 16)
    tk = _pick_tile(K, TK, 128)
    return pl.pallas_call(
        matmul_residual_ln_kernel,
        grid=(M // tm, K // tk),
        in_specs=[
            pl.BlockSpec((tm, tk), lambda i, k: (i, k)),
            pl.BlockSpec((tk, D), lambda i, k: (k, 0)),
            pl.BlockSpec((1, D), lambda i, k: (0, 0)),
            pl.BlockSpec((tm, D), lambda i, k: (i, 0)),
            pl.BlockSpec((1, D), lambda i, k: (0, 0)),
            pl.BlockSpec((1, D), lambda i, k: (0, 0)),
        ],
        out_specs=pl.BlockSpec((tm, D), lambda i, k: (i, 0)),
        out_shape=jax.ShapeDtypeStruct((M, D), out_dtype),
        scratch_shapes=[pltpu.VMEM((tm, D), jnp.float32)],
        compiler_params=pltpu.CompilerParams(
            dimension_semantics=("parallel", "arbitrary"),
            vmem_limit_bytes=VMEM_LIMIT),
    )(x, w, b.reshape(1, D), resid, gamma.reshape(1, D), beta.reshape(1, D))


# ----------------------------------------------------------------------------
# Kernel 3: fused FFN:  LayerNorm(x + relu(x@W1+b1)@W2 + b2), tiled over d_ff
# (the [M, d_ff] intermediate never leaves VMEM; x doubles as the residual).
# ----------------------------------------------------------------------------
def ffn_residual_ln_kernel(x_ref, w1_ref, b1_ref, w2_ref, b2_ref, g_ref, bl_ref,
                           o_ref, acc_ref):
    @pl.when(pl.program_id(1) == 0)
    def _init():
        acc_ref[...] = jnp.zeros_like(acc_ref)

    h = jnp.dot(x_ref[...].astype(MXU_DTYPE), w1_ref[...].astype(MXU_DTYPE),
                preferred_element_type=jnp.float32)
    h = jnp.maximum(h + b1_ref[...], 0.0)
    acc_ref[...] += jnp.dot(h.astype(MXU_DTYPE), w2_ref[...].astype(MXU_DTYPE),
                            preferred_element_type=jnp.float32)

    @pl.when(pl.program_id(1) == pl.num_programs(1) - 1)
    def _finalize():
        y = acc_ref[...] + b2_ref[...] + x_ref[...].astype(jnp.float32)
        mu = jnp.mean(y, axis=-1, keepdims=True)
        yc = y - mu
        var = jnp.mean(yc * yc, axis=-1, keepdims=True)
        yn = yc * jax.lax.rsqrt(var + LN_EPS)
        o_ref[...] = (yn * g_ref[...] + bl_ref[...]).astype(o_ref.dtype)


def pallas_ffn_residual_ln(x, w1, b1, w2, b2, gamma, beta, out_dtype=jnp.float32):
    M, D = x.shape
    _, F = w1.shape
    tm = _pick_tile(M, TM, 16)
    tf = _pick_tile(F, TFF, 128)
    return pl.pallas_call(
        ffn_residual_ln_kernel,
        grid=(M // tm, F // tf),
        in_specs=[
            pl.BlockSpec((tm, D), lambda i, j: (i, 0)),
            pl.BlockSpec((D, tf), lambda i, j: (0, j)),
            pl.BlockSpec((1, tf), lambda i, j: (0, j)),
            pl.BlockSpec((tf, D), lambda i, j: (j, 0)),
            pl.BlockSpec((1, D), lambda i, j: (0, 0)),
            pl.BlockSpec((1, D), lambda i, j: (0, 0)),
            pl.BlockSpec((1, D), lambda i, j: (0, 0)),
        ],
        out_specs=pl.BlockSpec((tm, D), lambda i, j: (i, 0)),
        out_shape=jax.ShapeDtypeStruct((M, D), out_dtype),
        scratch_shapes=[pltpu.VMEM((tm, D), jnp.float32)],
        compiler_params=pltpu.CompilerParams(
            dimension_semantics=("parallel", "arbitrary"),
            vmem_limit_bytes=VMEM_LIMIT),
    )(x, w1, b1.reshape(1, F), w2, b2.reshape(1, D),
      gamma.reshape(1, D), beta.reshape(1, D))


# ----------------------------------------------------------------------------
# Kernel 4: multi-head scaled dot-product attention.
# Grid = (batch, Lq-blocks); all heads packed along the 128-wide lane dim.
# Q/K/V are column blocks of the fused projection output (picked by BlockSpec).
# ----------------------------------------------------------------------------
def attention_kernel(*refs, nhead, scale, has_attn_mask):
    if has_attn_mask:
        q_ref, k_ref, v_ref, kpm_ref, am_ref, o_ref = refs
    else:
        q_ref, k_ref, v_ref, kpm_ref, o_ref = refs

    D = q_ref.shape[-1]
    dh = D // nhead
    q = (q_ref[0] * scale).astype(MXU_DTYPE)   # fold softmax scale into q
    k = k_ref[0].astype(MXU_DTYPE)
    v = v_ref[0].astype(MXU_DTYPE)

    # Reference semantics: mask = key_padding | attn_mask; scores.masked_fill(mask == 0, -1e9)
    kpm = kpm_ref[0] > 0.0                                  # [1, Lk]
    if has_attn_mask:
        allowed = jnp.logical_or(kpm, am_ref[...] > 0.0)    # [tq, Lk]
    else:
        allowed = kpm                                       # broadcasts over rows

    outs = []
    for h in range(nhead):                                  # static unroll over heads
        lo = h * dh
        qh = q[:, lo:lo + dh]
        kh = k[:, lo:lo + dh]
        vh = v[:, lo:lo + dh]
        # contract last dims directly: no in-kernel transpose of K
        s = jax.lax.dot_general(qh, kh, (((1,), (1,)), ((), ())),
                                preferred_element_type=jnp.float32)
        s = jnp.where(allowed, s, MASK_FILL)
        m = jnp.max(s, axis=-1, keepdims=True)
        p = jnp.exp(s - m)
        p = p * pl.reciprocal(jnp.sum(p, axis=-1, keepdims=True), approx=True)
        outs.append(jnp.dot(p.astype(MXU_DTYPE), vh, preferred_element_type=jnp.float32))
    # single lane-dense [tq, D] store (no per-head 16-lane masked partial stores)
    o_ref[0] = jnp.concatenate(outs, axis=-1).astype(o_ref.dtype)


def pallas_attention(q_arr, q_col, k_arr, k_col, v_arr, v_col, kpm_f, attn_mask_f,
                     nhead, d_model):
    # q_arr: [B, Lq, cq*D]  (column block q_col holds Q);  k_arr/v_arr likewise.
    # kpm_f: [B, 1, Lk] float (1.0 == True);  attn_mask_f: [Lq, Lk] float or None.
    B, Lq, _ = q_arr.shape
    Lk = k_arr.shape[1]
    D = d_model
    scale = 1.0 / math.sqrt(D // nhead)
    tq = _pick_tile(Lq, 256, 16)
    has_attn_mask = attn_mask_f is not None

    in_specs = [
        pl.BlockSpec((1, tq, D), lambda b, qi, c=q_col: (b, qi, c)),
        pl.BlockSpec((1, Lk, D), lambda b, qi, c=k_col: (b, 0, c)),
        pl.BlockSpec((1, Lk, D), lambda b, qi, c=v_col: (b, 0, c)),
        pl.BlockSpec((1, 1, Lk), lambda b, qi: (b, 0, 0)),
    ]
    args = [q_arr, k_arr, v_arr, kpm_f]
    if has_attn_mask:
        in_specs.append(pl.BlockSpec((tq, Lk), lambda b, qi: (qi, 0)))
        args.append(attn_mask_f)

    return pl.pallas_call(
        functools.partial(attention_kernel, nhead=nhead, scale=scale,
                          has_attn_mask=has_attn_mask),
        grid=(B, Lq // tq),
        in_specs=in_specs,
        out_specs=pl.BlockSpec((1, tq, D), lambda b, qi: (b, qi, 0)),
        out_shape=jax.ShapeDtypeStruct((B, Lq, D), ACT_DTYPE),
        compiler_params=pltpu.CompilerParams(
            dimension_semantics=("parallel", "parallel"),
            vmem_limit_bytes=VMEM_LIMIT),
    )(*args)


# ----------------------------------------------------------------------------
# Decoder-layer sublayers (glue in JAX, math in Pallas)
# ----------------------------------------------------------------------------
def self_attention_sublayer(x, p, nhead, kpm_f, attn_mask_f, ln_g, ln_b):
    B, L, D = x.shape
    x2d = x.reshape(B * L, D)
    qkv = pallas_matmul_bias(x2d, p["wqkv"], p["bqkv"]).reshape(B, L, 3 * D)
    # Q/K/V are column blocks 0/1/2 of qkv -- no XLA slices / extra HBM copies.
    o = pallas_attention(qkv, 0, qkv, 1, qkv, 2, kpm_f, attn_mask_f, nhead, D)
    # out-projection + residual add + LayerNorm fused in one kernel
    y = pallas_matmul_residual_ln(o.reshape(B * L, D), p["wo"], p["bo"], x2d, ln_g, ln_b)
    return y.reshape(B, L, D)


def cross_attention_sublayer(x, mem, p, nhead, kpm_f, ln_g, ln_b):
    B, T, D = x.shape
    S = mem.shape[1]
    x2d = x.reshape(B * T, D)
    q = pallas_matmul_bias(x2d, p["wq"], p["bq"]).reshape(B, T, D)
    kv = pallas_matmul_bias(mem.reshape(B * S, D), p["wkv"], p["bkv"]).reshape(B, S, 2 * D)
    # cross-attention: no attn_mask input at all (kernel flag) -- combined mask == key padding
    o = pallas_attention(q, 0, kv, 0, kv, 1, kpm_f, None, nhead, D)
    y = pallas_matmul_residual_ln(o.reshape(B * T, D), p["wo"], p["bo"], x2d, ln_g, ln_b)
    return y.reshape(B, T, D)


def transformer_decoder_layer(params, src, tgt, tgt_mask_attn, src_key_padding_mask,
                              tgt_key_padding_mask, nhead):
    B, T, D = tgt.shape
    S = src.shape[1]
    tgt_kpm_f = tgt_key_padding_mask.astype(jnp.float32).reshape(B, 1, T)
    src_kpm_f = src_key_padding_mask.astype(jnp.float32).reshape(B, 1, S)
    attn_mask_f = tgt_mask_attn.astype(jnp.float32)

    x = self_attention_sublayer(tgt, params["self_attn"], nhead, tgt_kpm_f, attn_mask_f,
                                params["norm1_g"], params["norm1_b"])
    x = cross_attention_sublayer(x, src, params["cross_attn"], nhead, src_kpm_f,
                                 params["norm2_g"], params["norm2_b"])
    x2d = x.reshape(B * T, D)
    y2d = pallas_ffn_residual_ln(x2d, params["ffn_w1"], params["ffn_b1"],
                                 params["ffn_w2"], params["ffn_b2"],
                                 params["norm3_g"], params["norm3_b"],
                                 out_dtype=jnp.float32)
    return y2d.reshape(B, T, D)


# ----------------------------------------------------------------------------
# Deterministic parameter init.  Weights are stored bf16 as [in_features, out_features]
# (= nn.Linear.weight.T) so kernels never transpose; wqkv/wkv are concatenations.
# Biases and LayerNorm params stay f32 (added/applied in the f32 epilogues).
# ----------------------------------------------------------------------------
def init_params(key, d_model, d_ff):
    ks = jax.random.split(key, 12)
    s = 0.05

    def w(k, shape):
        return (jax.random.normal(k, shape, jnp.float32) * s).astype(jnp.bfloat16)

    def bvec(k, n):
        return jax.random.normal(k, (n,), jnp.float32) * s

    return {
        "self_attn": {
            "wqkv": w(ks[0], (d_model, 3 * d_model)),
            "bqkv": bvec(ks[1], 3 * d_model),
            "wo": w(ks[2], (d_model, d_model)),
            "bo": bvec(ks[3], d_model),
        },
        "cross_attn": {
            "wq": w(ks[4], (d_model, d_model)),
            "bq": bvec(ks[5], d_model),
            "wkv": w(ks[6], (d_model, 2 * d_model)),
            "bkv": bvec(ks[7], 2 * d_model),
            "wo": w(ks[8], (d_model, d_model)),
            "bo": bvec(ks[9], d_model),
        },
        "ffn_w1": w(ks[10], (d_model, d_ff)),
        "ffn_b1": jnp.zeros((d_ff,), jnp.float32),
        "ffn_w2": w(ks[11], (d_ff, d_model)),
        "ffn_b2": jnp.zeros((d_model,), jnp.float32),
        "norm1_g": jnp.ones((d_model,), jnp.float32),
        "norm1_b": jnp.zeros((d_model,), jnp.float32),
        "norm2_g": jnp.ones((d_model,), jnp.float32),
        "norm2_b": jnp.zeros((d_model,), jnp.float32),
        "norm3_g": jnp.ones((d_model,), jnp.float32),
        "norm3_b": jnp.zeros((d_model,), jnp.float32),
    }


# ----------------------------------------------------------------------------
if __name__ == "__main__":
    d_model, nhead, d_ff = 128, 8, 256
    batch, src_len, tgt_len = 2, 16, 16

    root = jax.random.PRNGKey(0)
    kp, ksrc, ktgt = jax.random.split(root, 3)
    params = init_params(kp, d_model, d_ff)
    src = jax.random.normal(ksrc, (batch, src_len, d_model), jnp.float32)
    tgt = jax.random.normal(ktgt, (batch, tgt_len, d_model), jnp.float32)

    # Mask convention follows the reference code: attention is allowed where the boolean
    # mask is True (scores.masked_fill(mask == 0, -1e9)).
    tgt_mask_attn = jnp.tril(jnp.ones((tgt_len, tgt_len), bool))            # causal (past=True)
    src_key_padding_mask = jnp.ones((batch, src_len), bool).at[1, -2:].set(False)
    tgt_key_padding_mask = jnp.ones((batch, tgt_len), bool).at[1, -1:].set(False)

    fwd = jax.jit(functools.partial(transformer_decoder_layer, nhead=nhead))
    y = fwd(params, src, tgt, tgt_mask_attn, src_key_padding_mask, tgt_key_padding_mask)
    y = jax.block_until_ready(y)
    assert y.shape == (batch, tgt_len, d_model)
    assert bool(jnp.all(jnp.isfinite(y)))
    print("KERNEL_OK")
</pallas_src>

<mosaic_0001>
module attributes {stable_mosaic.version = 11 : i64} {
  func.func @matmul_bias_kernel(%arg0: i32, %arg1: i32, %arg2: i32, %arg3: memref<32x128xf32, #tpu.memory_space<vmem>>, %arg4: memref<128x128xbf16, #tpu.memory_space<vmem>>, %arg5: memref<1x128xf32, #tpu.memory_space<vmem>>, %arg6: memref<32x128xbf16, #tpu.memory_space<vmem>>, %arg7: memref<32x128xf32, #tpu.memory_space<vmem>>) attributes {dimension_semantics = [#tpu.dimension_semantics<parallel>, #tpu.dimension_semantics<parallel>, #tpu.dimension_semantics<arbitrary>], iteration_bounds = array<i64: 1, 3, 1>, scalar_prefetch = 0 : i64, scratch_operands = 1 : i64, tpu.core_type = #tpu.core_type<tc>, window_params = [{transform_indices = @transform_0, window_bounds = array<i64: 32, 128>}, {transform_indices = @transform_1, window_bounds = array<i64: 128, 128>}, {transform_indices = @transform_2, window_bounds = array<i64: 1, 128>}, {transform_indices = @transform_3, window_bounds = array<i64: 32, 128>}]} {
    %c0_i32 = arith.constant 0 : i32
    %0 = arith.cmpi eq, %arg2, %c0_i32 : i32
    %1 = arith.extui %0 : i1 to i32
    %c0_i32_0 = arith.constant 0 : i32
    %2 = arith.cmpi ne, %1, %c0_i32_0 : i32
    scf.if %2 {
      %cst_10 = arith.constant 0.000000e+00 : f32
      %13 = vector.broadcast %cst_10 : f32 to vector<32x128xf32>
      %c0_11 = arith.constant 0 : index
      %c0_12 = arith.constant 0 : index
      %14 = vector.load %arg7[%c0_11, %c0_12] : memref<32x128xf32, #tpu.memory_space<vmem>>, vector<32x128xf32>
      tpu.vector_store %arg7[%c0_11, %c0_12], %13 {strides = array<i32>} : memref<32x128xf32, #tpu.memory_space<vmem>>, vector<32x128xf32>,
    } else {
    }
    %c0 = arith.constant 0 : index
    %c0_1 = arith.constant 0 : index
    %3 = vector.load %arg7[%c0, %c0_1] : memref<32x128xf32, #tpu.memory_space<vmem>>, vector<32x128xf32>
    %c0_2 = arith.constant 0 : index
    %c0_3 = arith.constant 0 : index
    %4 = vector.load %arg3[%c0_2, %c0_3] : memref<32x128xf32, #tpu.memory_space<vmem>>, vector<32x128xf32>
    %5 = arith.truncf %4 : vector<32x128xf32> to vector<32x128xbf16>
    %c0_4 = arith.constant 0 : index
    %c0_5 = arith.constant 0 : index
    %6 = vector.load %arg4[%c0_4, %c0_5] : memref<128x128xbf16, #tpu.memory_space<vmem>>, vector<128x128xbf16>
    %cst = arith.constant dense<0.000000e+00> : vector<32x128xf32>
    %7 = tpu.matmul %5, %6, %cst {dimension_numbers = #tpu.dot_dimension_numbers<[1], [0], [0], [1], [0, 0, 1, 1], [], []>} : vector<32x128xbf16>, vector<128x128xbf16>, vector<32x128xf32> -> vector<32x128xf32>
    %8 = arith.addf %3, %7 : vector<32x128xf32>
    %c0_6 = arith.constant 0 : index
    %c0_7 = arith.constant 0 : index
    %9 = vector.load %arg7[%c0_6, %c0_7] : memref<32x128xf32, #tpu.memory_space<vmem>>, vector<32x128xf32>
    tpu.vector_store %arg7[%c0_6, %c0_7], %8 {strides = array<i32>} : memref<32x128xf32, #tpu.memory_space<vmem>>, vector<32x128xf32>,
    %c0_i32_8 = arith.constant 0 : i32
    %10 = arith.cmpi eq, %arg2, %c0_i32_8 : i32
    %11 = arith.extui %10 : i1 to i32
    %c0_i32_9 = arith.constant 0 : i32
    %12 = arith.cmpi ne, %11, %c0_i32_9 : i32
    scf.if %12 {
      %c0_10 = arith.constant 0 : index
      %c0_11 = arith.constant 0 : index
      %13 = vector.load %arg7[%c0_10, %c0_11] : memref<32x128xf32, #tpu.memory_space<vmem>>, vector<32x128xf32>
      %c0_12 = arith.constant 0 : index
      %c0_13 = arith.constant 0 : index
      %14 = vector.load %arg5[%c0_12, %c0_13] : memref<1x128xf32, #tpu.memory_space<vmem>>, vector<1x128xf32>
      %15 = vector.broadcast %14 : vector<1x128xf32> to vector<32x128xf32>
      %16 = arith.addf %13, %15 : vector<32x128xf32>
      %17 = arith.truncf %16 : vector<32x128xf32> to vector<32x128xbf16>
      %c0_14 = arith.constant 0 : index
      %c0_15 = arith.constant 0 : index
      %18 = vector.load %arg6[%c0_14, %c0_15] : memref<32x128xbf16, #tpu.memory_space<vmem>>, vector<32x128xbf16>
      tpu.vector_store %arg6[%c0_14, %c0_15], %17 {strides = array<i32>} : memref<32x128xbf16, #tpu.memory_space<vmem>>, vector<32x128xbf16>,
    } else {
    }
    return
  }
  func.func @transform_0(%arg0: i32, %arg1: i32, %arg2: i32) -> (i32, i32) {
    %c0_i32 = arith.constant 0 : i32
    return %arg0, %arg2 : i32, i32
  }
  func.func @transform_1(%arg0: i32, %arg1: i32, %arg2: i32) -> (i32, i32) {
    %c0_i32 = arith.constant 0 : i32
    return %arg2, %arg1 : i32, i32
  }
  func.func @transform_2(%arg0: i32, %arg1: i32, %arg2: i32) -> (i32, i32) {
    %c0_i32 = arith.constant 0 : i32
    %c0_i32_0 = arith.constant 0 : i32
    return %c0_i32, %arg1 : i32, i32
  }
  func.func @transform_3(%arg0: i32, %arg1: i32, %arg2: i32) -> (i32, i32) {
    %c0_i32 = arith.constant 0 : i32
    return %arg0, %arg1 : i32, i32
  }
}

module attributes {stable_mosaic.version = 11 : i64} {
  func.func @matmul_residual_ln_kernel(%arg0: i32, %arg1: i32, %arg2: memref<32x128xbf16, #tpu.memory_space<vmem>>, %arg3: memref<128x128xbf16, #tpu.memory_space<vmem>>, %arg4: memref<1x128xf32, #tpu.memory_space<vmem>>, %arg5: memref<32x128xf32, #tpu.memory_space<vmem>>, %arg6: memref<1x128xf32, #tpu.memory_space<vmem>>, %arg7: memref<1x128xf32, #tpu.memory_space<vmem>>, %arg8: memref<32x128xbf16, #tpu.memory_space<vmem>>, %arg9: memref<32x128xf32, #tpu.memory_space<vmem>>) attributes {dimension_semantics = [#tpu.dimension_semantics<parallel>, #tpu.dimension_semantics<arbitrary>], iteration_bounds = array<i64: 1, 1>, scalar_prefetch = 0 : i64, scratch_operands = 1 : i64, tpu.core_type = #tpu.core_type<tc>, window_params = [{transform_indices = @transform_0, window_bounds = array<i64: 32, 128>}, {transform_indices = @transform_1, window_bounds = array<i64: 128, 128>}, {pipeline_mode = #tpu.pipeline_mode<synchronous>, transform_indices = @transform_2, window_bounds = array<i64: 1, 128>}, {transform_indices = @transform_3, window_bounds = array<i64: 32, 128>}, {pipeline_mode = #tpu.pipeline_mode<synchronous>, transform_indices = @transform_4, window_bounds = array<i64: 1, 128>}, {pipeline_mode = #tpu.pipeline_mode<synchronous>, transform_indices = @transform_5, window_bounds = array<i64: 1, 128>}, {transform_indices = @transform_6, window_bounds = array<i64: 32, 128>}]} {
    %c0_i32 = arith.constant 0 : i32
    %0 = arith.cmpi eq, %arg1, %c0_i32 : i32
    %1 = arith.extui %0 : i1 to i32
    %c0_i32_0 = arith.constant 0 : i32
    %2 = arith.cmpi ne, %1, %c0_i32_0 : i32
    scf.if %2 {
      %cst_10 = arith.constant 0.000000e+00 : f32
      %12 = vector.broadcast %cst_10 : f32 to vector<32x128xf32>
      %c0_11 = arith.constant 0 : index
      %c0_12 = arith.constant 0 : index
      %13 = vector.load %arg9[%c0_11, %c0_12] : memref<32x128xf32, #tpu.memory_space<vmem>>, vector<32x128xf32>
      tpu.vector_store %arg9[%c0_11, %c0_12], %12 {strides = array<i32>} : memref<32x128xf32, #tpu.memory_space<vmem>>, vector<32x128xf32>,
    } else {
    }
    %c0 = arith.constant 0 : index
    %c0_1 = arith.constant 0 : index
    %3 = vector.load %arg9[%c0, %c0_1] : memref<32x128xf32, #tpu.memory_space<vmem>>, vector<32x128xf32>
    %c0_2 = arith.constant 0 : index
    %c0_3 = arith.constant 0 : index
    %4 = vector.load %arg2[%c0_2, %c0_3] : memref<32x128xbf16, #tpu.memory_space<vmem>>, vector<32x128xbf16>
    %c0_4 = arith.constant 0 : index
    %c0_5 = arith.constant 0 : index
    %5 = vector.load %arg3[%c0_4, %c0_5] : memref<128x128xbf16, #tpu.memory_space<vmem>>, vector<128x128xbf16>
    %cst = arith.constant dense<0.000000e+00> : vector<32x128xf32>
    %6 = tpu.matmul %4, %5, %cst {dimension_numbers = #tpu.dot_dimension_numbers<[1], [0], [0], [1], [0, 0, 1, 1], [], []>} : vector<32x128xbf16>, vector<128x128xbf16>, vector<32x128xf32> -> vector<32x128xf32>
    %7 = arith.addf %3, %6 : vector<32x128xf32>
    %c0_6 = arith.constant 0 : index
    %c0_7 = arith.constant 0 : index
    %8 = vector.load %arg9[%c0_6, %c0_7] : memref<32x128xf32, #tpu.memory_space<vmem>>, vector<32x128xf32>
    tpu.vector_store %arg9[%c0_6, %c0_7], %7 {strides = array<i32>} : memref<32x128xf32, #tpu.memory_space<vmem>>, vector<32x128xf32>,
    %c0_i32_8 = arith.constant 0 : i32
    %9 = arith.cmpi eq, %arg1, %c0_i32_8 : i32
    %10 = arith.extui %9 : i1 to i32
    %c0_i32_9 = arith.constant 0 : i32
    %11 = arith.cmpi ne, %10, %c0_i32_9 : i32
    scf.if %11 {
      %c0_10 = arith.constant 0 : index
      %c0_11 = arith.constant 0 : index
      %12 = vector.load %arg9[%c0_10, %c0_11] : memref<32x128xf32, #tpu.memory_space<vmem>>, vector<32x128xf32>
      %c0_12 = arith.constant 0 : index
      %c0_13 = arith.constant 0 : index
      %13 = vector.load %arg4[%c0_12, %c0_13] : memref<1x128xf32, #tpu.memory_space<vmem>>, vector<1x128xf32>
      %14 = vector.broadcast %13 : vector<1x128xf32> to vector<32x128xf32>
      %15 = arith.addf %12, %14 : vector<32x128xf32>
      %c0_14 = arith.constant 0 : index
      %c0_15 = arith.constant 0 : index
      %16 = vector.load %arg5[%c0_14, %c0_15] : memref<32x128xf32, #tpu.memory_space<vmem>>, vector<32x128xf32>
      %17 = arith.addf %15, %16 : vector<32x128xf32>
      %cst_16 = arith.constant dense<0.000000e+00> : vector<32xf32>
      %18 = vector.multi_reduction <add>, %17, %cst_16 [1] : vector<32x128xf32> to vector<32xf32>
      %19 = vector.shape_cast %18 : vector<32xf32> to vector<32x1xf32>
      %cst_17 = arith.constant 1.280000e+02 : f32
      %20 = vector.broadcast %cst_17 : f32 to vector<32x1xf32>
      %21 = arith.divf %19, %20 : vector<32x1xf32>
      %22 = vector.broadcast %21 : vector<32x1xf32> to vector<32x128xf32>
      %23 = arith.subf %17, %22 : vector<32x128xf32>
      %24 = arith.mulf %23, %23 : vector<32x128xf32>
      %cst_18 = arith.constant dense<0.000000e+00> : vector<32xf32>
      %25 = vector.multi_reduction <add>, %24, %cst_18 [1] : vector<32x128xf32> to vector<32xf32>
      %26 = vector.shape_cast %25 : vector<32xf32> to vector<32x1xf32>
      %cst_19 = arith.constant 1.280000e+02 : f32
      %27 = vector.broadcast %cst_19 : f32 to vector<32x1xf32>
      %28 = arith.divf %26, %27 : vector<32x1xf32>
      %cst_20 = arith.constant 9.99999974E-6 : f32
      %29 = vector.broadcast %cst_20 : f32 to vector<32x1xf32>
      %30 = arith.addf %28, %29 : vector<32x1xf32>
      %31 = math.rsqrt %30 : vector<32x1xf32>
      %32 = vector.broadcast %31 : vector<32x1xf32> to vector<32x128xf32>
      %33 = arith.mulf %23, %32 : vector<32x128xf32>
      %c0_21 = arith.constant 0 : index
      %c0_22 = arith.constant 0 : index
      %34 = vector.load %arg6[%c0_21, %c0_22] : memref<1x128xf32, #tpu.memory_space<vmem>>, vector<1x128xf32>
      %35 = vector.broadcast %34 : vector<1x128xf32> to vector<32x128xf32>
      %36 = arith.mulf %33, %35 : vector<32x128xf32>
      %c0_23 = arith.constant 0 : index
      %c0_24 = arith.constant 0 : index
      %37 = vector.load %arg7[%c0_23, %c0_24] : memref<1x128xf32, #tpu.memory_space<vmem>>, vector<1x128xf32>
      %38 = vector.broadcast %37 : vector<1x128xf32> to vector<32x128xf32>
      %39 = arith.addf %36, %38 : vector<32x128xf32>
      %40 = arith.truncf %39 : vector<32x128xf32> to vector<32x128xbf16>
      %c0_25 = arith.constant 0 : index
      %c0_26 = arith.constant 0 : index
      %41 = vector.load %arg8[%c0_25, %c0_26] : memref<32x128xbf16, #tpu.memory_space<vmem>>, vector<32x128xbf16>
      tpu.vector_store %arg8[%c0_25, %c0_26], %40 {strides = array<i32>} : memref<32x128xbf16, #tpu.memory_space<vmem>>, vector<32x128xbf16>,
    } else {
    }
    return
  }
  func.func @transform_0(%arg0: i32, %arg1: i32) -> (i32, i32) {
    %c0_i32 = arith.constant 0 : i32
    return %arg0, %arg1 : i32, i32
  }
  func.func @transform_1(%arg0: i32, %arg1: i32) -> (i32, i32) {
    %c0_i32 = arith.constant 0 : i32
    %c0_i32_0 = arith.constant 0 : i32
    return %arg1, %c0_i32 : i32, i32
  }
  func.func @transform_2(%arg0: i32, %arg1: i32) -> (i32, i32) {
    %c0_i32 = arith.constant 0 : i32
    %c0_i32_0 = arith.constant 0 : i32
    %c0_i32_1 = arith.constant 0 : i32
    return %c0_i32, %c0_i32_0 : i32, i32
  }
  func.func @transform_3(%arg0: i32, %arg1: i32) -> (i32, i32) {
    %c0_i32 = arith.constant 0 : i32
    %c0_i32_0 = arith.constant 0 : i32
    return %arg0, %c0_i32 : i32, i32
  }
  func.func @transform_4(%arg0: i32, %arg1: i32) -> (i32, i32) {
    %c0_i32 = arith.constant 0 : i32
    %c0_i32_0 = arith.constant 0 : i32
    %c0_i32_1 = arith.constant 0 : i32
    return %c0_i32, %c0_i32_0 : i32, i32
  }
  func.func @transform_5(%arg0: i32, %arg1: i32) -> (i32, i32) {
    %c0_i32 = arith.constant 0 : i32
    %c0_i32_0 = arith.constant 0 : i32
    %c0_i32_1 = arith.constant 0 : i32
    return %c0_i32, %c0_i32_0 : i32, i32
  }
  func.func @transform_6(%arg0: i32, %arg1: i32) -> (i32, i32) {
    %c0_i32 = arith.constant 0 : i32
    %c0_i32_0 = arith.constant 0 : i32
    return %arg0, %c0_i32 : i32, i32
  }
}

module attributes {stable_mosaic.version = 11 : i64} {
  func.func @attention_kernel(%arg0: i32, %arg1: i32, %arg2: memref<1x16x128xbf16, #tpu.memory_space<vmem>>, %arg3: memref<1x16x128xbf16, #tpu.memory_space<vmem>>, %arg4: memref<1x16x128xbf16, #tpu.memory_space<vmem>>, %arg5: memref<1x1x16xf32, #tpu.memory_space<vmem>>, %arg6: memref<16x16xf32, #tpu.memory_space<vmem>>, %arg7: memref<1x16x128xbf16, #tpu.memory_space<vmem>>) attributes {dimension_semantics = [#tpu.dimension_semantics<parallel>, #tpu.dimension_semantics<parallel>], iteration_bounds = array<i64: 2, 1>, scalar_prefetch = 0 : i64, scratch_operands = 0 : i64, tpu.core_type = #tpu.core_type<tc>, window_params = [{transform_indices = @transform_0, window_bounds = array<i64: 1, 16, 128>}, {transform_indices = @transform_1, window_bounds = array<i64: 1, 16, 128>}, {transform_indices = @transform_2, window_bounds = array<i64: 1, 16, 128>}, {transform_indices = @transform_3, window_bounds = array<i64: 1, 1, 16>}, {transform_indices = @transform_4, window_bounds = array<i64: 16, 16>}, {transform_indices = @transform_5, window_bounds = array<i64: 1, 16, 128>}]} {
    %c0 = arith.constant 0 : index
    %c0_0 = arith.constant 0 : index
    %c0_1 = arith.constant 0 : index
    %0 = vector.load %arg2[%c0, %c0_0, %c0_1] : memref<1x16x128xbf16, #tpu.memory_space<vmem>>, vector<1x16x128xbf16>
    %1 = vector.shape_cast %0 : vector<1x16x128xbf16> to vector<16x128xbf16>
    %cst = arith.constant 2.500000e-01 : bf16
    %2 = vector.broadcast %cst : bf16 to vector<16x128xbf16>
    %3 = arith.mulf %1, %2 : vector<16x128xbf16>
    %c0_2 = arith.constant 0 : index
    %c0_3 = arith.constant 0 : index
    %c0_4 = arith.constant 0 : index
    %4 = vector.load %arg3[%c0_2, %c0_3, %c0_4] : memref<1x16x128xbf16, #tpu.memory_space<vmem>>, vector<1x16x128xbf16>
    %5 = vector.shape_cast %4 : vector<1x16x128xbf16> to vector<16x128xbf16>
    %c0_5 = arith.constant 0 : index
    %c0_6 = arith.constant 0 : index
    %c0_7 = arith.constant 0 : index
    %6 = vector.load %arg4[%c0_5, %c0_6, %c0_7] : memref<1x16x128xbf16, #tpu.memory_space<vmem>>, vector<1x16x128xbf16>
    %7 = vector.shape_cast %6 : vector<1x16x128xbf16> to vector<16x128xbf16>
    %c0_8 = arith.constant 0 : index
    %c0_9 = arith.constant 0 : index
    %c0_10 = arith.constant 0 : index
    %8 = vector.load %arg5[%c0_8, %c0_9, %c0_10] : memref<1x1x16xf32, #tpu.memory_space<vmem>>, vector<1x1x16xf32>
    %9 = vector.shape_cast %8 : vector<1x1x16xf32> to vector<1x16xf32>
    %cst_11 = arith.constant 0.000000e+00 : f32
    %10 = vector.broadcast %cst_11 : f32 to vector<1x16xf32>
    %11 = arith.cmpf ogt, %9, %10 : vector<1x16xf32>
    %c0_12 = arith.constant 0 : index
    %c0_13 = arith.constant 0 : index
    %12 = vector.load %arg6[%c0_12, %c0_13] : memref<16x16xf32, #tpu.memory_space<vmem>>, vector<16x16xf32>
    %cst_14 = arith.constant 0.000000e+00 : f32
    %13 = vector.broadcast %cst_14 : f32 to vector<16x16xf32>
    %14 = arith.cmpf ogt, %12, %13 : vector<16x16xf32>
    %15 = vector.broadcast %11 : vector<1x16xi1> to vector<16x16xi1>
    %16 = arith.ori %15, %14 : vector<16x16xi1>
    %17 = vector.extract_strided_slice %3 {offsets = [0, 0], sizes = [16, 16], strides = [1, 1]} : vector<16x128xbf16> to vector<16x16xbf16>
    %18 = vector.extract_strided_slice %5 {offsets = [0, 0], sizes = [16, 16], strides = [1, 1]} : vector<16x128xbf16> to vector<16x16xbf16>
    %19 = vector.extract_strided_slice %7 {offsets = [0, 0], sizes = [16, 16], strides = [1, 1]} : vector<16x128xbf16> to vector<16x16xbf16>
    %cst_15 = arith.constant dense<0.000000e+00> : vector<16x16xf32>
    %20 = tpu.matmul %17, %18, %cst_15 {dimension_numbers = #tpu.dot_dimension_numbers<[1], [1], [0], [0], [0, 0, 1, 0], [], []>} : vector<16x16xbf16>, vector<16x16xbf16>, vector<16x16xf32> -> vector<16x16xf32>
    %cst_16 = arith.constant -1.000000e+09 : f32
    %21 = vector.broadcast %cst_16 : f32 to vector<16x16xf32>
    %22 = arith.select %16, %20, %21 : vector<16x16xi1>, vector<16x16xf32>
    %cst_17 = arith.constant dense<0xFF800000> : vector<16xf32>
    %23 = vector.multi_reduction <maximumf>, %22, %cst_17 [1] : vector<16x16xf32> to vector<16xf32>
    %24 = vector.shape_cast %23 : vector<16xf32> to vector<16x1xf32>
    %25 = vector.broadcast %24 : vector<16x1xf32> to vector<16x16xf32>
    %26 = arith.subf %22, %25 : vector<16x16xf32>
    %27 = math.exp %26 : vector<16x16xf32>
    %cst_18 = arith.constant dense<0.000000e+00> : vector<16xf32>
    %28 = vector.multi_reduction <add>, %27, %cst_18 [1] : vector<16x16xf32> to vector<16xf32>
    %29 = vector.shape_cast %28 : vector<16xf32> to vector<16x1xf32>
    %30 = tpu.reciprocal %29 {approx = true} : vector<16x1xf32> -> vector<16x1xf32>
    %31 = vector.broadcast %30 : vector<16x1xf32> to vector<16x16xf32>
    %32 = arith.mulf %27, %31 : vector<16x16xf32>
    %33 = arith.truncf %32 : vector<16x16xf32> to vector<16x16xbf16>
    %cst_19 = arith.constant dense<0.000000e+00> : vector<16x16xf32>
    %34 = tpu.matmul %33, %19, %cst_19 {dimension_numbers = #tpu.dot_dimension_numbers<[1], [0], [0], [1], [0, 0, 1, 1], [], []>} : vector<16x16xbf16>, vector<16x16xbf16>, vector<16x16xf32> -> vector<16x16xf32>
    %35 = vector.extract_strided_slice %3 {offsets = [0, 16], sizes = [16, 16], strides = [1, 1]} : vector<16x128xbf16> to vector<16x16xbf16>
    %36 = vector.extract_strided_slice %5 {offsets = [0, 16], sizes = [16, 16], strides = [1, 1]} : vector<16x128xbf16> to vector<16x16xbf16>
    %37 = vector.extract_strided_slice %7 {offsets = [0, 16], sizes = [16, 16], strides = [1, 1]} : vector<16x128xbf16> to vector<16x16xbf16>
    %cst_20 = arith.constant dense<0.000000e+00> : vector<16x16xf32>
    %38 = tpu.matmul %35, %36, %cst_20 {dimension_numbers = #tpu.dot_dimension_numbers<[1], [1], [0], [0], [0, 0, 1, 0], [], []>} : vector<16x16xbf16>, vector<16x16xbf16>, vector<16x16xf32> -> vector<16x16xf32>
    %cst_21 = arith.constant -1.000000e+09 : f32
    %39 = vector.broadcast %cst_21 : f32 to vector<16x16xf32>
    %40 = arith.select %16, %38, %39 : vector<16x16xi1>, vector<16x16xf32>
    %cst_22 = arith.constant dense<0xFF800000> : vector<16xf32>
    %41 = vector.multi_reduction <maximumf>, %40, %cst_22 [1] : vector<16x16xf32> to vector<16xf32>
    %42 = vector.shape_cast %41 : vector<16xf32> to vector<16x1xf32>
    %43 = vector.broadcast %42 : vector<16x1xf32> to vector<16x16xf32>
    %44 = arith.subf %40, %43 : vector<16x16xf32>
    %45 = math.exp %44 : vector<16x16xf32>
    %cst_23 = arith.constant dense<0.000000e+00> : vector<16xf32>
    %46 = vector.multi_reduction <add>, %45, %cst_23 [1] : vector<16x16xf32> to vector<16xf32>
    %47 = vector.shape_cast %46 : vector<16xf32> to vector<16x1xf32>
    %48 = tpu.reciprocal %47 {approx = true} : vector<16x1xf32> -> vector<16x1xf32>
    %49 = vector.broadcast %48 : vector<16x1xf32> to vector<16x16xf32>
    %50 = arith.mulf %45, %49 : vector<16x16xf32>
    %51 = arith.truncf %50 : vector<16x16xf32> to vector<16x16xbf16>
    %cst_24 = arith.constant dense<0.000000e+00> : vector<16x16xf32>
    %52 = tpu.matmul %51, %37, %cst_24 {dimension_numbers = #tpu.dot_dimension_numbers<[1], [0], [0], [1], [0, 0, 1, 1], [], []>} : vector<16x16xbf16>, vector<16x16xbf16>, vector<16x16xf32> -> vector<16x16xf32>
    %53 = vector.extract_strided_slice %3 {offsets = [0, 32], sizes = [16, 16], strides = [1, 1]} : vector<16x128xbf16> to vector<16x16xbf16>
    %54 = vector.extract_strided_slice %5 {offsets = [0, 32], sizes = [16, 16], strides = [1, 1]} : vector<16x128xbf16> to vector<16x16xbf16>
    %55 = vector.extract_strided_slice %7 {offsets = [0, 32], sizes = [16, 16], strides = [1, 1]} : vector<16x128xbf16> to vector<16x16xbf16>
    %cst_25 = arith.constant dense<0.000000e+00> : vector<16x16xf32>
    %56 = tpu.matmul %53, %54, %cst_25 {dimension_numbers = #tpu.dot_dimension_numbers<[1], [1], [0], [0], [0, 0, 1, 0], [], []>} : vector<16x16xbf16>, vector<16x16xbf16>, vector<16x16xf32> -> vector<16x16xf32>
    %cst_26 = arith.constant -1.000000e+09 : f32
    %57 = vector.broadcast %cst_26 : f32 to vector<16x16xf32>
    %58 = arith.select %16, %56, %57 : vector<16x16xi1>, vector<16x16xf32>
    %cst_27 = arith.constant dense<0xFF800000> : vector<16xf32>
    %59 = vector.multi_reduction <maximumf>, %58, %cst_27 [1] : vector<16x16xf32> to vector<16xf32>
    %60 = vector.shape_cast %59 : vector<16xf32> to vector<16x1xf32>
    %61 = vector.broadcast %60 : vector<16x1xf32> to vector<16x16xf32>
    %62 = arith.subf %58, %61 : vector<16x16xf32>
    %63 = math.exp %62 : vector<16x16xf32>
    %cst_28 = arith.constant dense<0.000000e+00> : vector<16xf32>
    %64 = vector.multi_reduction <add>, %63, %cst_28 [1] : vector<16x16xf32> to vector<16xf32>
    %65 = vector.shape_cast %64 : vector<16xf32> to vector<16x1xf32>
    %66 = tpu.reciprocal %65 {approx = true} : vector<16x1xf32> -> vector<16x1xf32>
    %67 = vector.broadcast %66 : vector<16x1xf32> to vector<16x16xf32>
    %68 = arith.mulf %63, %67 : vector<16x16xf32>
    %69 = arith.truncf %68 : vector<16x16xf32> to vector<16x16xbf16>
    %cst_29 = arith.constant dense<0.000000e+00> : vector<16x16xf32>
    %70 = tpu.matmul %69, %55, %cst_29 {dimension_numbers = #tpu.dot_dimension_numbers<[1], [0], [0], [1], [0, 0, 1, 1], [], []>} : vector<16x16xbf16>, vector<16x16xbf16>, vector<16x16xf32> -> vector<16x16xf32>
    %71 = vector.extract_strided_slice %3 {offsets = [0, 48], sizes = [16, 16], strides = [1, 1]} : vector<16x128xbf16> to vector<16x16xbf16>
    %72 = vector.extract_strided_slice %5 {offsets = [0, 48], sizes = [16, 16], strides = [1, 1]} : vector<16x128xbf16> to vector<16x16xbf16>
    %73 = vector.extract_strided_slice %7 {offsets = [0, 48], sizes = [16, 16], strides = [1, 1]} : vector<16x128xbf16> to vector<16x16xbf16>
    %cst_30 = arith.constant dense<0.000000e+00> : vector<16x16xf32>
    %74 = tpu.matmul %71, %72, %cst_30 {dimension_numbers = #tpu.dot_dimension_numbers<[1], [1], [0], [0], [0, 0, 1, 0], [], []>} : vector<16x16xbf16>, vector<16x16xbf16>, vector<16x16xf32> -> vector<16x16xf32>
    %cst_31 = arith.constant -1.000000e+09 : f32
    %75 = vector.broadcast %cst_31 : f32 to vector<16x16xf32>
    %76 = arith.select %16, %74, %75 : vector<16x16xi1>, vector<16x16xf32>
    %cst_32 = arith.constant dense<0xFF800000> : vector<16xf32>
    %77 = vector.multi_reduction <maximumf>, %76, %cst_32 [1] : vector<16x16xf32> to vector<16xf32>
    %78 = vector.shape_cast %77 : vector<16xf32> to vector<16x1xf32>
    %79 = vector.broadcast %78 : vector<16x1xf32> to vector<16x16xf32>
    %80 = arith.subf %76, %79 : vector<16x16xf32>
    %81 = math.exp %80 : vector<16x16xf32>
    %cst_33 = arith.constant dense<0.000000e+00> : vector<16xf32>
    %82 = vector.multi_reduction <add>, %81, %cst_33 [1] : vector<16x16xf32> to vector<16xf32>
    %83 = vector.shape_cast %82 : vector<16xf32> to vector<16x1xf32>
    %84 = tpu.reciprocal %83 {approx = true} : vector<16x1xf32> -> vector<16x1xf32>
    %85 = vector.broadcast %84 : vector<16x1xf32> to vector<16x16xf32>
    %86 = arith.mulf %81, %85 : vector<16x16xf32>
    %87 = arith.truncf %86 : vector<16x16xf32> to vector<16x16xbf16>
    %cst_34 = arith.constant dense<0.000000e+00> : vector<16x16xf32>
    %88 = tpu.matmul %87, %73, %cst_34 {dimension_numbers = #tpu.dot_dimension_numbers<[1], [0], [0], [1], [0, 0, 1, 1], [], []>} : vector<16x16xbf16>, vector<16x16xbf16>, vector<16x16xf32> -> vector<16x16xf32>
    %89 = vector.extract_strided_slice %3 {offsets = [0, 64], sizes = [16, 16], strides = [1, 1]} : vector<16x128xbf16> to vector<16x16xbf16>
    %90 = vector.extract_strided_slice %5 {offsets = [0, 64], sizes = [16, 16], strides = [1, 1]} : vector<16x128xbf16> to vector<16x16xbf16>
    %91 = vector.extract_strided_slice %7 {offsets = [0, 64], sizes = [16, 16], strides = [1, 1]} : vector<16x128xbf16> to vector<16x16xbf16>
    %cst_35 = arith.constant dense<0.000000e+00> : vector<16x16xf32>
    %92 = tpu.matmul %89, %90, %cst_35 {dimension_numbers = #tpu.dot_dimension_numbers<[1], [1], [0], [0], [0, 0, 1, 0], [], []>} : vector<16x16xbf16>, vector<16x16xbf16>, vector<16x16xf32> -> vector<16x16xf32>
    %cst_36 = arith.constant -1.000000e+09 : f32
    %93 = vector.broadcast %cst_36 : f32 to vector<16x16xf32>
    %94 = arith.select %16, %92, %93 : vector<16x16xi1>, vector<16x16xf32>
    %cst_37 = arith.constant dense<0xFF800000> : vector<16xf32>
    %95 = vector.multi_reduction <maximumf>, %94, %cst_37 [1] : vector<16x16xf32> to vector<16xf32>
    %96 = vector.shape_cast %95 : vector<16xf32> to vector<16x1xf32>
    %97 = vector.broadcast %96 : vector<16x1xf32> to vector<16x16xf32>
    %98 = arith.subf %94, %97 : vector<16x16xf32>
    %99 = math.exp %98 : vector<16x16xf32>
    %cst_38 = arith.constant dense<0.000000e+00> : vector<16xf32>
    %100 = vector.multi_reduction <add>, %99, %cst_38 [1] : vector<16x16xf32> to vector<16xf32>
    %101 = vector.shape_cast %100 : vector<16xf32> to vector<16x1xf32>
    %102 = tpu.reciprocal %101 {approx = true} : vector<16x1xf32> -> vector<16x1xf32>
    %103 = vector.broadcast %102 : vector<16x1xf32> to vector<16x16xf32>
    %104 = arith.mulf %99, %103 : vector<16x16xf32>
    %105 = arith.truncf %104 : vector<16x16xf32> to vector<16x16xbf16>
    %cst_39 = arith.constant dense<0.000000e+00> : vector<16x16xf32>
    %106 = tpu.matmul %105, %91, %cst_39 {dimension_numbers = #tpu.dot_dimension_numbers<[1], [0], [0], [1], [0, 0, 1, 1], [], []>} : vector<16x16xbf16>, vector<16x16xbf16>, vector<16x16xf32> -> vector<16x16xf32>
    %107 = vector.extract_strided_slice %3 {offsets = [0, 80], sizes = [16, 16], strides = [1, 1]} : vector<16x128xbf16> to vector<16x16xbf16>
    %108 = vector.extract_strided_slice %5 {offsets = [0, 80], sizes = [16, 16], strides = [1, 1]} : vector<16x128xbf16> to vector<16x16xbf16>
    %109 = vector.extract_strided_slice %7 {offsets = [0, 80], sizes = [16, 16], strides = [1, 1]} : vector<16x128xbf16> to vector<16x16xbf16>
    %cst_40 = arith.constant dense<0.000000e+00> : vector<16x16xf32>
    %110 = tpu.matmul %107, %108, %cst_40 {dimension_numbers = #tpu.dot_dimension_numbers<[1], [1], [0], [0], [0, 0, 1, 0], [], []>} : vector<16x16xbf16>, vector<16x16xbf16>, vector<16x16xf32> -> vector<16x16xf32>
    %cst_41 = arith.constant -1.000000e+09 : f32
    %111 = vector.broadcast %cst_41 : f32 to vector<16x16xf32>
    %112 = arith.select %16, %110, %111 : vector<16x16xi1>, vector<16x16xf32>
    %cst_42 = arith.constant dense<0xFF800000> : vector<16xf32>
    %113 = vector.multi_reduction <maximumf>, %112, %cst_42 [1] : vector<16x16xf32> to vector<16xf32>
    %114 = vector.shape_cast %113 : vector<16xf32> to vector<16x1xf32>
    %115 = vector.broadcast %114 : vector<16x1xf32> to vector<16x16xf32>
    %116 = arith.subf %112, %115 : vector<16x16xf32>
    %117 = math.exp %116 : vector<16x16xf32>
    %cst_43 = arith.constant dense<0.000000e+00> : vector<16xf32>
    %118 = vector.multi_reduction <add>, %117, %cst_43 [1] : vector<16x16xf32> to vector<16xf32>
    %119 = vector.shape_cast %118 : vector<16xf32> to vector<16x1xf32>
    %120 = tpu.reciprocal %119 {approx = true} : vector<16x1xf32> -> vector<16x1xf32>
    %121 = vector.broadcast %120 : vector<16x1xf32> to vector<16x16xf32>
    %122 = arith.mulf %117, %121 : vector<16x16xf32>
    %123 = arith.truncf %122 : vector<16x16xf32> to vector<16x16xbf16>
    %cst_44 = arith.constant dense<0.000000e+00> : vector<16x16xf32>
    %124 = tpu.matmul %123, %109, %cst_44 {dimension_numbers = #tpu.dot_dimension_numbers<[1], [0], [0], [1], [0, 0, 1, 1], [], []>} : vector<16x16xbf16>, vector<16x16xbf16>, vector<16x16xf32> -> vector<16x16xf32>
    %125 = vector.extract_strided_slice %3 {offsets = [0, 96], sizes = [16, 16], strides = [1, 1]} : vector<16x128xbf16> to vector<16x16xbf16>
    %126 = vector.extract_strided_slice %5 {offsets = [0, 96], sizes = [16, 16], strides = [1, 1]} : vector<16x128xbf16> to vector<16x16xbf16>
    %127 = vector.extract_strided_slice %7 {offsets = [0, 96], sizes = [16, 16], strides = [1, 1]} : vector<16x128xbf16> to vector<16x16xbf16>
    %cst_45 = arith.constant dense<0.000000e+00> : vector<16x16xf32>
    %128 = tpu.matmul %125, %126, %cst_45 {dimension_numbers = #tpu.dot_dimension_numbers<[1], [1], [0], [0], [0, 0, 1, 0], [], []>} : vector<16x16xbf16>, vector<16x16xbf16>, vector<16x16xf32> -> vector<16x16xf32>
    %cst_46 = arith.constant -1.000000e+09 : f32
    %129 = vector.broadcast %cst_46 : f32 to vector<16x16xf32>
    %130 = arith.select %16, %128, %129 : vector<16x16xi1>, vector<16x16xf32>
    %cst_47 = arith.constant dense<0xFF800000> : vector<16xf32>
    %131 = vector.multi_reduction <maximumf>, %130, %cst_47 [1] : vector<16x16xf32> to vector<16xf32>
    %132 = vector.shape_cast %131 : vector<16xf32> to vector<16x1xf32>
    %133 = vector.broadcast %132 : vector<16x1xf32> to vector<16x16xf32>
    %134 = arith.subf %130, %133 : vector<16x16xf32>
    %135 = math.exp %134 : vector<16x16xf32>
    %cst_48 = arith.constant dense<0.000000e+00> : vector<16xf32>
    %136 = vector.multi_reduction <add>, %135, %cst_48 [1] : vector<16x16xf32> to vector<16xf32>
    %137 = vector.shape_cast %136 : vector<16xf32> to vector<16x1xf32>
    %138 = tpu.reciprocal %137 {approx = true} : vector<16x1xf32> -> vector<16x1xf32>
    %139 = vector.broadcast %138 : vector<16x1xf32> to vector<16x16xf32>
    %140 = arith.mulf %135, %139 : vector<16x16xf32>
    %141 = arith.truncf %140 : vector<16x16xf32> to vector<16x16xbf16>
    %cst_49 = arith.constant dense<0.000000e+00> : vector<16x16xf32>
    %142 = tpu.matmul %141, %127, %cst_49 {dimension_numbers = #tpu.dot_dimension_numbers<[1], [0], [0], [1], [0, 0, 1, 1], [], []>} : vector<16x16xbf16>, vector<16x16xbf16>, vector<16x16xf32> -> vector<16x16xf32>
    %143 = vector.extract_strided_slice %3 {offsets = [0, 112], sizes = [16, 16], strides = [1, 1]} : vector<16x128xbf16> to vector<16x16xbf16>
    %144 = vector.extract_strided_slice %5 {offsets = [0, 112], sizes = [16, 16], strides = [1, 1]} : vector<16x128xbf16> to vector<16x16xbf16>
    %145 = vector.extract_strided_slice %7 {offsets = [0, 112], sizes = [16, 16], strides = [1, 1]} : vector<16x128xbf16> to vector<16x16xbf16>
    %cst_50 = arith.constant dense<0.000000e+00> : vector<16x16xf32>
    %146 = tpu.matmul %143, %144, %cst_50 {dimension_numbers = #tpu.dot_dimension_numbers<[1], [1], [0], [0], [0, 0, 1, 0], [], []>} : vector<16x16xbf16>, vector<16x16xbf16>, vector<16x16xf32> -> vector<16x16xf32>
    %cst_51 = arith.constant -1.000000e+09 : f32
    %147 = vector.broadcast %cst_51 : f32 to vector<16x16xf32>
    %148 = arith.select %16, %146, %147 : vector<16x16xi1>, vector<16x16xf32>
    %cst_52 = arith.constant dense<0xFF800000> : vector<16xf32>
    %149 = vector.multi_reduction <maximumf>, %148, %cst_52 [1] : vector<16x16xf32> to vector<16xf32>
    %150 = vector.shape_cast %149 : vector<16xf32> to vector<16x1xf32>
    %151 = vector.broadcast %150 : vector<16x1xf32> to vector<16x16xf32>
    %152 = arith.subf %148, %151 : vector<16x16xf32>
    %153 = math.exp %152 : vector<16x16xf32>
    %cst_53 = arith.constant dense<0.000000e+00> : vector<16xf32>
    %154 = vector.multi_reduction <add>, %153, %cst_53 [1] : vector<16x16xf32> to vector<16xf32>
    %155 = vector.shape_cast %154 : vector<16xf32> to vector<16x1xf32>
    %156 = tpu.reciprocal %155 {approx = true} : vector<16x1xf32> -> vector<16x1xf32>
    %157 = vector.broadcast %156 : vector<16x1xf32> to vector<16x16xf32>
    %158 = arith.mulf %153, %157 : vector<16x16xf32>
    %159 = arith.truncf %158 : vector<16x16xf32> to vector<16x16xbf16>
    %cst_54 = arith.constant dense<0.000000e+00> : vector<16x16xf32>
    %160 = tpu.matmul %159, %145, %cst_54 {dimension_numbers = #tpu.dot_dimension_numbers<[1], [0], [0], [1], [0, 0, 1, 1], [], []>} : vector<16x16xbf16>, vector<16x16xbf16>, vector<16x16xf32> -> vector<16x16xf32>
    %161 = tpu.concatenate %34, %52, %70, %88, %106, %124, %142, %160 in 1 : vector<16x16xf32>, vector<16x16xf32>, vector<16x16xf32>, vector<16x16xf32>, vector<16x16xf32>, vector<16x16xf32>, vector<16x16xf32>, vector<16x16xf32> -> vector<16x128xf32>
    %162 = arith.truncf %161 : vector<16x128xf32> to vector<16x128xbf16>
    %c0_55 = arith.constant 0 : index
    %c0_56 = arith.constant 0 : index
    %c0_57 = arith.constant 0 : index
    %163 = vector.load %arg7[%c0_55, %c0_56, %c0_57] : memref<1x16x128xbf16, #tpu.memory_space<vmem>>, vector<1x16x128xbf16>
    %164 = vector.shape_cast %163 : vector<1x16x128xbf16> to vector<16x128xbf16>
    %165 = vector.shape_cast %162 : vector<16x128xbf16> to vector<1x16x128xbf16>
    tpu.vector_store %arg7[%c0_55, %c0_56, %c0_57], %165 {strides = array<i32>} : memref<1x16x128xbf16, #tpu.memory_space<vmem>>, vector<1x16x128xbf16>,
    return
  }
  func.func @transform_0(%arg0: i32, %arg1: i32) -> (i32, i32, i32) {
    %c0_i32 = arith.constant 0 : i32
    %c0_i32_0 = arith.constant 0 : i32
    return %arg0, %arg1, %c0_i32 : i32, i32, i32
  }
  func.func @transform_1(%arg0: i32, %arg1: i32) -> (i32, i32, i32) {
    %c0_i32 = arith.constant 0 : i32
    %c1_i32 = arith.constant 1 : i32
    %c0_i32_0 = arith.constant 0 : i32
    return %arg0, %c0_i32, %c1_i32 : i32, i32, i32
  }
  func.func @transform_2(%arg0: i32, %arg1: i32) -> (i32, i32, i32) {
    %c0_i32 = arith.constant 0 : i32
    %c2_i32 = arith.constant 2 : i32
    %c0_i32_0 = arith.constant 0 : i32
    return %arg0, %c0_i32, %c2_i32 : i32, i32, i32
  }
  func.func @transform_3(%arg0: i32, %arg1: i32) -> (i32, i32, i32) {
    %c0_i32 = arith.constant 0 : i32
    %c0_i32_0 = arith.constant 0 : i32
    %c0_i32_1 = arith.constant 0 : i32
    return %arg0, %c0_i32, %c0_i32_0 : i32, i32, i32
  }
  func.func @transform_4(%arg0: i32, %arg1: i32) -> (i32, i32) {
    %c0_i32 = arith.constant 0 : i32
    %c0_i32_0 = arith.constant 0 : i32
    return %arg1, %c0_i32 : i32, i32
  }
  func.func @transform_5(%arg0: i32, %arg1: i32) -> (i32, i32, i32) {
    %c0_i32 = arith.constant 0 : i32
    %c0_i32_0 = arith.constant 0 : i32
    return %arg0, %arg1, %c0_i32 : i32, i32, i32
  }
}

module attributes {stable_mosaic.version = 11 : i64} {
  func.func @matmul_bias_kernel(%arg0: i32, %arg1: i32, %arg2: i32, %arg3: memref<32x128xbf16, #tpu.memory_space<vmem>>, %arg4: memref<128x128xbf16, #tpu.memory_space<vmem>>, %arg5: memref<1x128xf32, #tpu.memory_space<vmem>>, %arg6: memref<32x128xbf16, #tpu.memory_space<vmem>>, %arg7: memref<32x128xf32, #tpu.memory_space<vmem>>) attributes {dimension_semantics = [#tpu.dimension_semantics<parallel>, #tpu.dimension_semantics<parallel>, #tpu.dimension_semantics<arbitrary>], iteration_bounds = array<i64: 1, 1, 1>, scalar_prefetch = 0 : i64, scratch_operands = 1 : i64, tpu.core_type = #tpu.core_type<tc>, window_params = [{transform_indices = @transform_0, window_bounds = array<i64: 32, 128>}, {transform_indices = @transform_1, window_bounds = array<i64: 128, 128>}, {transform_indices = @transform_2, window_bounds = array<i64: 1, 128>}, {transform_indices = @transform_3, window_bounds = array<i64: 32, 128>}]} {
    %c0_i32 = arith.constant 0 : i32
    %0 = arith.cmpi eq, %arg2, %c0_i32 : i32
    %1 = arith.extui %0 : i1 to i32
    %c0_i32_0 = arith.constant 0 : i32
    %2 = arith.cmpi ne, %1, %c0_i32_0 : i32
    scf.if %2 {
      %cst_10 = arith.constant 0.000000e+00 : f32
      %12 = vector.broadcast %cst_10 : f32 to vector<32x128xf32>
      %c0_11 = arith.constant 0 : index
      %c0_12 = arith.constant 0 : index
      %13 = vector.load %arg7[%c0_11, %c0_12] : memref<32x128xf32, #tpu.memory_space<vmem>>, vector<32x128xf32>
      tpu.vector_store %arg7[%c0_11, %c0_12], %12 {strides = array<i32>} : memref<32x128xf32, #tpu.memory_space<vmem>>, vector<32x128xf32>,
    } else {
    }
    %c0 = arith.constant 0 : index
    %c0_1 = arith.constant 0 : index
    %3 = vector.load %arg7[%c0, %c0_1] : memref<32x128xf32, #tpu.memory_space<vmem>>, vector<32x128xf32>
    %c0_2 = arith.constant 0 : index
    %c0_3 = arith.constant 0 : index
    %4 = vector.load %arg3[%c0_2, %c0_3] : memref<32x128xbf16, #tpu.memory_space<vmem>>, vector<32x128xbf16>
    %c0_4 = arith.constant 0 : index
    %c0_5 = arith.constant 0 : index
    %5 = vector.load %arg4[%c0_4, %c0_5] : memref<128x128xbf16, #tpu.memory_space<vmem>>, vector<128x128xbf16>
    %cst = arith.constant dense<0.000000e+00> : vector<32x128xf32>
    %6 = tpu.matmul %4, %5, %cst {dimension_numbers = #tpu.dot_dimension_numbers<[1], [0], [0], [1], [0, 0, 1, 1], [], []>} : vector<32x128xbf16>, vector<128x128xbf16>, vector<32x128xf32> -> vector<32x128xf32>
    %7 = arith.addf %3, %6 : vector<32x128xf32>
    %c0_6 = arith.constant 0 : index
    %c0_7 = arith.constant 0 : index
    %8 = vector.load %arg7[%c0_6, %c0_7] : memref<32x128xf32, #tpu.memory_space<vmem>>, vector<32x128xf32>
    tpu.vector_store %arg7[%c0_6, %c0_7], %7 {strides = array<i32>} : memref<32x128xf32, #tpu.memory_space<vmem>>, vector<32x128xf32>,
    %c0_i32_8 = arith.constant 0 : i32
    %9 = arith.cmpi eq, %arg2, %c0_i32_8 : i32
    %10 = arith.extui %9 : i1 to i32
    %c0_i32_9 = arith.constant 0 : i32
    %11 = arith.cmpi ne, %10, %c0_i32_9 : i32
    scf.if %11 {
      %c0_10 = arith.constant 0 : index
      %c0_11 = arith.constant 0 : index
      %12 = vector.load %arg7[%c0_10, %c0_11] : memref<32x128xf32, #tpu.memory_space<vmem>>, vector<32x128xf32>
      %c0_12 = arith.constant 0 : index
      %c0_13 = arith.constant 0 : index
      %13 = vector.load %arg5[%c0_12, %c0_13] : memref<1x128xf32, #tpu.memory_space<vmem>>, vector<1x128xf32>
      %14 = vector.broadcast %13 : vector<1x128xf32> to vector<32x128xf32>
      %15 = arith.addf %12, %14 : vector<32x128xf32>
      %16 = arith.truncf %15 : vector<32x128xf32> to vector<32x128xbf16>
      %c0_14 = arith.constant 0 : index
      %c0_15 = arith.constant 0 : index
      %17 = vector.load %arg6[%c0_14, %c0_15] : memref<32x128xbf16, #tpu.memory_space<vmem>>, vector<32x128xbf16>
      tpu.vector_store %arg6[%c0_14, %c0_15], %16 {strides = array<i32>} : memref<32x128xbf16, #tpu.memory_space<vmem>>, vector<32x128xbf16>,
    } else {
    }
    return
  }
  func.func @transform_0(%arg0: i32, %arg1: i32, %arg2: i32) -> (i32, i32) {
    %c0_i32 = arith.constant 0 : i32
    return %arg0, %arg2 : i32, i32
  }
  func.func @transform_1(%arg0: i32, %arg1: i32, %arg2: i32) -> (i32, i32) {
    %c0_i32 = arith.constant 0 : i32
    return %arg2, %arg1 : i32, i32
  }
  func.func @transform_2(%arg0: i32, %arg1: i32, %arg2: i32) -> (i32, i32) {
    %c0_i32 = arith.constant 0 : i32
    %c0_i32_0 = arith.constant 0 : i32
    return %c0_i32, %arg1 : i32, i32
  }
  func.func @transform_3(%arg0: i32, %arg1: i32, %arg2: i32) -> (i32, i32) {
    %c0_i32 = arith.constant 0 : i32
    return %arg0, %arg1 : i32, i32
  }
}

module attributes {stable_mosaic.version = 11 : i64} {
  func.func @matmul_bias_kernel(%arg0: i32, %arg1: i32, %arg2: i32, %arg3: memref<32x128xf32, #tpu.memory_space<vmem>>, %arg4: memref<128x256xbf16, #tpu.memory_space<vmem>>, %arg5: memref<1x256xf32, #tpu.memory_space<vmem>>, %arg6: memref<32x256xbf16, #tpu.memory_space<vmem>>, %arg7: memref<32x256xf32, #tpu.memory_space<vmem>>) attributes {dimension_semantics = [#tpu.dimension_semantics<parallel>, #tpu.dimension_semantics<parallel>, #tpu.dimension_semantics<arbitrary>], iteration_bounds = array<i64: 1, 1, 1>, scalar_prefetch = 0 : i64, scratch_operands = 1 : i64, tpu.core_type = #tpu.core_type<tc>, window_params = [{transform_indices = @transform_0, window_bounds = array<i64: 32, 128>}, {transform_indices = @transform_1, window_bounds = array<i64: 128, 256>}, {transform_indices = @transform_2, window_bounds = array<i64: 1, 256>}, {transform_indices = @transform_3, window_bounds = array<i64: 32, 256>}]} {
    %c0_i32 = arith.constant 0 : i32
    %0 = arith.cmpi eq, %arg2, %c0_i32 : i32
    %1 = arith.extui %0 : i1 to i32
    %c0_i32_0 = arith.constant 0 : i32
    %2 = arith.cmpi ne, %1, %c0_i32_0 : i32
    scf.if %2 {
      %cst_10 = arith.constant 0.000000e+00 : f32
      %13 = vector.broadcast %cst_10 : f32 to vector<32x256xf32>
      %c0_11 = arith.constant 0 : index
      %c0_12 = arith.constant 0 : index
      %14 = vector.load %arg7[%c0_11, %c0_12] : memref<32x256xf32, #tpu.memory_space<vmem>>, vector<32x256xf32>
      tpu.vector_store %arg7[%c0_11, %c0_12], %13 {strides = array<i32>} : memref<32x256xf32, #tpu.memory_space<vmem>>, vector<32x256xf32>,
    } else {
    }
    %c0 = arith.constant 0 : index
    %c0_1 = arith.constant 0 : index
    %3 = vector.load %arg7[%c0, %c0_1] : memref<32x256xf32, #tpu.memory_space<vmem>>, vector<32x256xf32>
    %c0_2 = arith.constant 0 : index
    %c0_3 = arith.constant 0 : index
    %4 = vector.load %arg3[%c0_2, %c0_3] : memref<32x128xf32, #tpu.memory_space<vmem>>, vector<32x128xf32>
    %5 = arith.truncf %4 : vector<32x128xf32> to vector<32x128xbf16>
    %c0_4 = arith.constant 0 : index
    %c0_5 = arith.constant 0 : index
    %6 = vector.load %arg4[%c0_4, %c0_5] : memref<128x256xbf16, #tpu.memory_space<vmem>>, vector<128x256xbf16>
    %cst = arith.constant dense<0.000000e+00> : vector<32x256xf32>
    %7 = tpu.matmul %5, %6, %cst {dimension_numbers = #tpu.dot_dimension_numbers<[1], [0], [0], [1], [0, 0, 1, 1], [], []>} : vector<32x128xbf16>, vector<128x256xbf16>, vector<32x256xf32> -> vector<32x256xf32>
    %8 = arith.addf %3, %7 : vector<32x256xf32>
    %c0_6 = arith.constant 0 : index
    %c0_7 = arith.constant 0 : index
    %9 = vector.load %arg7[%c0_6, %c0_7] : memref<32x256xf32, #tpu.memory_space<vmem>>, vector<32x256xf32>
    tpu.vector_store %arg7[%c0_6, %c0_7], %8 {strides = array<i32>} : memref<32x256xf32, #tpu.memory_space<vmem>>, vector<32x256xf32>,
    %c0_i32_8 = arith.constant 0 : i32
    %10 = arith.cmpi eq, %arg2, %c0_i32_8 : i32
    %11 = arith.extui %10 : i1 to i32
    %c0_i32_9 = arith.constant 0 : i32
    %12 = arith.cmpi ne, %11, %c0_i32_9 : i32
    scf.if %12 {
      %c0_10 = arith.constant 0 : index
      %c0_11 = arith.constant 0 : index
      %13 = vector.load %arg7[%c0_10, %c0_11] : memref<32x256xf32, #tpu.memory_space<vmem>>, vector<32x256xf32>
      %c0_12 = arith.constant 0 : index
      %c0_13 = arith.constant 0 : index
      %14 = vector.load %arg5[%c0_12, %c0_13] : memref<1x256xf32, #tpu.memory_space<vmem>>, vector<1x256xf32>
      %15 = vector.broadcast %14 : vector<1x256xf32> to vector<32x256xf32>
      %16 = arith.addf %13, %15 : vector<32x256xf32>
      %17 = arith.truncf %16 : vector<32x256xf32> to vector<32x256xbf16>
      %c0_14 = arith.constant 0 : index
      %c0_15 = arith.constant 0 : index
      %18 = vector.load %arg6[%c0_14, %c0_15] : memref<32x256xbf16, #tpu.memory_space<vmem>>, vector<32x256xbf16>
      tpu.vector_store %arg6[%c0_14, %c0_15], %17 {strides = array<i32>} : memref<32x256xbf16, #tpu.memory_space<vmem>>, vector<32x256xbf16>,
    } else {
    }
    return
  }
  func.func @transform_0(%arg0: i32, %arg1: i32, %arg2: i32) -> (i32, i32) {
    %c0_i32 = arith.constant 0 : i32
    return %arg0, %arg2 : i32, i32
  }
  func.func @transform_1(%arg0: i32, %arg1: i32, %arg2: i32) -> (i32, i32) {
    %c0_i32 = arith.constant 0 : i32
    return %arg2, %arg1 : i32, i32
  }
  func.func @transform_2(%arg0: i32, %arg1: i32, %arg2: i32) -> (i32, i32) {
    %c0_i32 = arith.constant 0 : i32
    %c0_i32_0 = arith.constant 0 : i32
    return %c0_i32, %arg1 : i32, i32
  }
  func.func @transform_3(%arg0: i32, %arg1: i32, %arg2: i32) -> (i32, i32) {
    %c0_i32 = arith.constant 0 : i32
    return %arg0, %arg1 : i32, i32
  }
}

module attributes {stable_mosaic.version = 11 : i64} {
  func.func @matmul_residual_ln_kernel(%arg0: i32, %arg1: i32, %arg2: memref<32x128xbf16, #tpu.memory_space<vmem>>, %arg3: memref<128x128xbf16, #tpu.memory_space<vmem>>, %arg4: memref<1x128xf32, #tpu.memory_space<vmem>>, %arg5: memref<32x128xbf16, #tpu.memory_space<vmem>>, %arg6: memref<1x128xf32, #tpu.memory_space<vmem>>, %arg7: memref<1x128xf32, #tpu.memory_space<vmem>>, %arg8: memref<32x128xbf16, #tpu.memory_space<vmem>>, %arg9: memref<32x128xf32, #tpu.memory_space<vmem>>) attributes {dimension_semantics = [#tpu.dimension_semantics<parallel>, #tpu.dimension_semantics<arbitrary>], iteration_bounds = array<i64: 1, 1>, scalar_prefetch = 0 : i64, scratch_operands = 1 : i64, tpu.core_type = #tpu.core_type<tc>, window_params = [{transform_indices = @transform_0, window_bounds = array<i64: 32, 128>}, {transform_indices = @transform_1, window_bounds = array<i64: 128, 128>}, {pipeline_mode = #tpu.pipeline_mode<synchronous>, transform_indices = @transform_2, window_bounds = array<i64: 1, 128>}, {transform_indices = @transform_3, window_bounds = array<i64: 32, 128>}, {pipeline_mode = #tpu.pipeline_mode<synchronous>, transform_indices = @transform_4, window_bounds = array<i64: 1, 128>}, {pipeline_mode = #tpu.pipeline_mode<synchronous>, transform_indices = @transform_5, window_bounds = array<i64: 1, 128>}, {transform_indices = @transform_6, window_bounds = array<i64: 32, 128>}]} {
    %c0_i32 = arith.constant 0 : i32
    %0 = arith.cmpi eq, %arg1, %c0_i32 : i32
    %1 = arith.extui %0 : i1 to i32
    %c0_i32_0 = arith.constant 0 : i32
    %2 = arith.cmpi ne, %1, %c0_i32_0 : i32
    scf.if %2 {
      %cst_10 = arith.constant 0.000000e+00 : f32
      %12 = vector.broadcast %cst_10 : f32 to vector<32x128xf32>
      %c0_11 = arith.constant 0 : index
      %c0_12 = arith.constant 0 : index
      %13 = vector.load %arg9[%c0_11, %c0_12] : memref<32x128xf32, #tpu.memory_space<vmem>>, vector<32x128xf32>
      tpu.vector_store %arg9[%c0_11, %c0_12], %12 {strides = array<i32>} : memref<32x128xf32, #tpu.memory_space<vmem>>, vector<32x128xf32>,
    } else {
    }
    %c0 = arith.constant 0 : index
    %c0_1 = arith.constant 0 : index
    %3 = vector.load %arg9[%c0, %c0_1] : memref<32x128xf32, #tpu.memory_space<vmem>>, vector<32x128xf32>
    %c0_2 = arith.constant 0 : index
    %c0_3 = arith.constant 0 : index
    %4 = vector.load %arg2[%c0_2, %c0_3] : memref<32x128xbf16, #tpu.memory_space<vmem>>, vector<32x128xbf16>
    %c0_4 = arith.constant 0 : index
    %c0_5 = arith.constant 0 : index
    %5 = vector.load %arg3[%c0_4, %c0_5] : memref<128x128xbf16, #tpu.memory_space<vmem>>, vector<128x128xbf16>
    %cst = arith.constant dense<0.000000e+00> : vector<32x128xf32>
    %6 = tpu.matmul %4, %5, %cst {dimension_numbers = #tpu.dot_dimension_numbers<[1], [0], [0], [1], [0, 0, 1, 1], [], []>} : vector<32x128xbf16>, vector<128x128xbf16>, vector<32x128xf32> -> vector<32x128xf32>
    %7 = arith.addf %3, %6 : vector<32x128xf32>
    %c0_6 = arith.constant 0 : index
    %c0_7 = arith.constant 0 : index
    %8 = vector.load %arg9[%c0_6, %c0_7] : memref<32x128xf32, #tpu.memory_space<vmem>>, vector<32x128xf32>
    tpu.vector_store %arg9[%c0_6, %c0_7], %7 {strides = array<i32>} : memref<32x128xf32, #tpu.memory_space<vmem>>, vector<32x128xf32>,
    %c0_i32_8 = arith.constant 0 : i32
    %9 = arith.cmpi eq, %arg1, %c0_i32_8 : i32
    %10 = arith.extui %9 : i1 to i32
    %c0_i32_9 = arith.constant 0 : i32
    %11 = arith.cmpi ne, %10, %c0_i32_9 : i32
    scf.if %11 {
      %c0_10 = arith.constant 0 : index
      %c0_11 = arith.constant 0 : index
      %12 = vector.load %arg9[%c0_10, %c0_11] : memref<32x128xf32, #tpu.memory_space<vmem>>, vector<32x128xf32>
      %c0_12 = arith.constant 0 : index
      %c0_13 = arith.constant 0 : index
      %13 = vector.load %arg4[%c0_12, %c0_13] : memref<1x128xf32, #tpu.memory_space<vmem>>, vector<1x128xf32>
      %14 = vector.broadcast %13 : vector<1x128xf32> to vector<32x128xf32>
      %15 = arith.addf %12, %14 : vector<32x128xf32>
      %c0_14 = arith.constant 0 : index
      %c0_15 = arith.constant 0 : index
      %16 = vector.load %arg5[%c0_14, %c0_15] : memref<32x128xbf16, #tpu.memory_space<vmem>>, vector<32x128xbf16>
      %17 = arith.extf %16 : vector<32x128xbf16> to vector<32x128xf32>
      %18 = arith.addf %15, %17 : vector<32x128xf32>
      %cst_16 = arith.constant dense<0.000000e+00> : vector<32xf32>
      %19 = vector.multi_reduction <add>, %18, %cst_16 [1] : vector<32x128xf32> to vector<32xf32>
      %20 = vector.shape_cast %19 : vector<32xf32> to vector<32x1xf32>
      %cst_17 = arith.constant 1.280000e+02 : f32
      %21 = vector.broadcast %cst_17 : f32 to vector<32x1xf32>
      %22 = arith.divf %20, %21 : vector<32x1xf32>
      %23 = vector.broadcast %22 : vector<32x1xf32> to vector<32x128xf32>
      %24 = arith.subf %18, %23 : vector<32x128xf32>
      %25 = arith.mulf %24, %24 : vector<32x128xf32>
      %cst_18 = arith.constant dense<0.000000e+00> : vector<32xf32>
      %26 = vector.multi_reduction <add>, %25, %cst_18 [1] : vector<32x128xf32> to vector<32xf32>
      %27 = vector.shape_cast %26 : vector<32xf32> to vector<32x1xf32>
      %cst_19 = arith.constant 1.280000e+02 : f32
      %28 = vector.broadcast %cst_19 : f32 to vector<32x1xf32>
      %29 = arith.divf %27, %28 : vector<32x1xf32>
      %cst_20 = arith.constant 9.99999974E-6 : f32
      %30 = vector.broadcast %cst_20 : f32 to vector<32x1xf32>
      %31 = arith.addf %29, %30 : vector<32x1xf32>
      %32 = math.rsqrt %31 : vector<32x1xf32>
      %33 = vector.broadcast %32 : vector<32x1xf32> to vector<32x128xf32>
      %34 = arith.mulf %24, %33 : vector<32x128xf32>
      %c0_21 = arith.constant 0 : index
      %c0_22 = arith.constant 0 : index
      %35 = vector.load %arg6[%c0_21, %c0_22] : memref<1x128xf32, #tpu.memory_space<vmem>>, vector<1x128xf32>
      %36 = vector.broadcast %35 : vector<1x128xf32> to vector<32x128xf32>
      %37 = arith.mulf %34, %36 : vector<32x128xf32>
      %c0_23 = arith.constant 0 : index
      %c0_24 = arith.constant 0 : index
      %38 = vector.load %arg7[%c0_23, %c0_24] : memref<1x128xf32, #tpu.memory_space<vmem>>, vector<1x128xf32>
      %39 = vector.broadcast %38 : vector<1x128xf32> to vector<32x128xf32>
      %40 = arith.addf %37, %39 : vector<32x128xf32>
      %41 = arith.truncf %40 : vector<32x128xf32> to vector<32x128xbf16>
      %c0_25 = arith.constant 0 : index
      %c0_26 = arith.constant 0 : index
      %42 = vector.load %arg8[%c0_25, %c0_26] : memref<32x128xbf16, #tpu.memory_space<vmem>>, vector<32x128xbf16>
      tpu.vector_store %arg8[%c0_25, %c0_26], %41 {strides = array<i32>} : memref<32x128xbf16, #tpu.memory_space<vmem>>, vector<32x128xbf16>,
    } else {
    }
    return
  }
  func.func @transform_0(%arg0: i32, %arg1: i32) -> (i32, i32) {
    %c0_i32 = arith.constant 0 : i32
    return %arg0, %arg1 : i32, i32
  }
  func.func @transform_1(%arg0: i32, %arg1: i32) -> (i32, i32) {
    %c0_i32 = arith.constant 0 : i32
    %c0_i32_0 = arith.constant 0 : i32
    return %arg1, %c0_i32 : i32, i32
  }
  func.func @transform_2(%arg0: i32, %arg1: i32) -> (i32, i32) {
    %c0_i32 = arith.constant 0 : i32
    %c0_i32_0 = arith.constant 0 : i32
    %c0_i32_1 = arith.constant 0 : i32
    return %c0_i32, %c0_i32_0 : i32, i32
  }
  func.func @transform_3(%arg0: i32, %arg1: i32) -> (i32, i32) {
    %c0_i32 = arith.constant 0 : i32
    %c0_i32_0 = arith.constant 0 : i32
    return %arg0, %c0_i32 : i32, i32
  }
  func.func @transform_4(%arg0: i32, %arg1: i32) -> (i32, i32) {
    %c0_i32 = arith.constant 0 : i32
    %c0_i32_0 = arith.constant 0 : i32
    %c0_i32_1 = arith.constant 0 : i32
    return %c0_i32, %c0_i32_0 : i32, i32
  }
  func.func @transform_5(%arg0: i32, %arg1: i32) -> (i32, i32) {
    %c0_i32 = arith.constant 0 : i32
    %c0_i32_0 = arith.constant 0 : i32
    %c0_i32_1 = arith.constant 0 : i32
    return %c0_i32, %c0_i32_0 : i32, i32
  }
  func.func @transform_6(%arg0: i32, %arg1: i32) -> (i32, i32) {
    %c0_i32 = arith.constant 0 : i32
    %c0_i32_0 = arith.constant 0 : i32
    return %arg0, %c0_i32 : i32, i32
  }
}

module attributes {stable_mosaic.version = 11 : i64} {
  func.func @attention_kernel(%arg0: i32, %arg1: i32, %arg2: memref<1x16x128xbf16, #tpu.memory_space<vmem>>, %arg3: memref<1x16x128xbf16, #tpu.memory_space<vmem>>, %arg4: memref<1x16x128xbf16, #tpu.memory_space<vmem>>, %arg5: memref<1x1x16xf32, #tpu.memory_space<vmem>>, %arg6: memref<1x16x128xbf16, #tpu.memory_space<vmem>>) attributes {dimension_semantics = [#tpu.dimension_semantics<parallel>, #tpu.dimension_semantics<parallel>], iteration_bounds = array<i64: 2, 1>, scalar_prefetch = 0 : i64, scratch_operands = 0 : i64, tpu.core_type = #tpu.core_type<tc>, window_params = [{transform_indices = @transform_0, window_bounds = array<i64: 1, 16, 128>}, {transform_indices = @transform_1, window_bounds = array<i64: 1, 16, 128>}, {transform_indices = @transform_2, window_bounds = array<i64: 1, 16, 128>}, {transform_indices = @transform_3, window_bounds = array<i64: 1, 1, 16>}, {transform_indices = @transform_4, window_bounds = array<i64: 1, 16, 128>}]} {
    %c0 = arith.constant 0 : index
    %c0_0 = arith.constant 0 : index
    %c0_1 = arith.constant 0 : index
    %0 = vector.load %arg2[%c0, %c0_0, %c0_1] : memref<1x16x128xbf16, #tpu.memory_space<vmem>>, vector<1x16x128xbf16>
    %1 = vector.shape_cast %0 : vector<1x16x128xbf16> to vector<16x128xbf16>
    %cst = arith.constant 2.500000e-01 : bf16
    %2 = vector.broadcast %cst : bf16 to vector<16x128xbf16>
    %3 = arith.mulf %1, %2 : vector<16x128xbf16>
    %c0_2 = arith.constant 0 : index
    %c0_3 = arith.constant 0 : index
    %c0_4 = arith.constant 0 : index
    %4 = vector.load %arg3[%c0_2, %c0_3, %c0_4] : memref<1x16x128xbf16, #tpu.memory_space<vmem>>, vector<1x16x128xbf16>
    %5 = vector.shape_cast %4 : vector<1x16x128xbf16> to vector<16x128xbf16>
    %c0_5 = arith.constant 0 : index
    %c0_6 = arith.constant 0 : index
    %c0_7 = arith.constant 0 : index
    %6 = vector.load %arg4[%c0_5, %c0_6, %c0_7] : memref<1x16x128xbf16, #tpu.memory_space<vmem>>, vector<1x16x128xbf16>
    %7 = vector.shape_cast %6 : vector<1x16x128xbf16> to vector<16x128xbf16>
    %c0_8 = arith.constant 0 : index
    %c0_9 = arith.constant 0 : index
    %c0_10 = arith.constant 0 : index
    %8 = vector.load %arg5[%c0_8, %c0_9, %c0_10] : memref<1x1x16xf32, #tpu.memory_space<vmem>>, vector<1x1x16xf32>
    %9 = vector.shape_cast %8 : vector<1x1x16xf32> to vector<1x16xf32>
    %cst_11 = arith.constant 0.000000e+00 : f32
    %10 = vector.broadcast %cst_11 : f32 to vector<1x16xf32>
    %11 = arith.cmpf ogt, %9, %10 : vector<1x16xf32>
    %12 = vector.extract_strided_slice %3 {offsets = [0, 0], sizes = [16, 16], strides = [1, 1]} : vector<16x128xbf16> to vector<16x16xbf16>
    %13 = vector.extract_strided_slice %5 {offsets = [0, 0], sizes = [16, 16], strides = [1, 1]} : vector<16x128xbf16> to vector<16x16xbf16>
    %14 = vector.extract_strided_slice %7 {offsets = [0, 0], sizes = [16, 16], strides = [1, 1]} : vector<16x128xbf16> to vector<16x16xbf16>
    %cst_12 = arith.constant dense<0.000000e+00> : vector<16x16xf32>
    %15 = tpu.matmul %12, %13, %cst_12 {dimension_numbers = #tpu.dot_dimension_numbers<[1], [1], [0], [0], [0, 0, 1, 0], [], []>} : vector<16x16xbf16>, vector<16x16xbf16>, vector<16x16xf32> -> vector<16x16xf32>
    %cst_13 = arith.constant -1.000000e+09 : f32
    %16 = vector.shape_cast %11 : vector<1x16xi1> to vector<1x16xi1>
    %17 = vector.broadcast %16 : vector<1x16xi1> to vector<16x16xi1>
    %18 = vector.broadcast %cst_13 : f32 to vector<16x16xf32>
    %19 = arith.select %17, %15, %18 : vector<16x16xi1>, vector<16x16xf32>
    %cst_14 = arith.constant dense<0xFF800000> : vector<16xf32>
    %20 = vector.multi_reduction <maximumf>, %19, %cst_14 [1] : vector<16x16xf32> to vector<16xf32>
    %21 = vector.shape_cast %20 : vector<16xf32> to vector<16x1xf32>
    %22 = vector.broadcast %21 : vector<16x1xf32> to vector<16x16xf32>
    %23 = arith.subf %19, %22 : vector<16x16xf32>
    %24 = math.exp %23 : vector<16x16xf32>
    %cst_15 = arith.constant dense<0.000000e+00> : vector<16xf32>
    %25 = vector.multi_reduction <add>, %24, %cst_15 [1] : vector<16x16xf32> to vector<16xf32>
    %26 = vector.shape_cast %25 : vector<16xf32> to vector<16x1xf32>
    %27 = tpu.reciprocal %26 {approx = true} : vector<16x1xf32> -> vector<16x1xf32>
    %28 = vector.broadcast %27 : vector<16x1xf32> to vector<16x16xf32>
    %29 = arith.mulf %24, %28 : vector<16x16xf32>
    %30 = arith.truncf %29 : vector<16x16xf32> to vector<16x16xbf16>
    %cst_16 = arith.constant dense<0.000000e+00> : vector<16x16xf32>
    %31 = tpu.matmul %30, %14, %cst_16 {dimension_numbers = #tpu.dot_dimension_numbers<[1], [0], [0], [1], [0, 0, 1, 1], [], []>} : vector<16x16xbf16>, vector<16x16xbf16>, vector<16x16xf32> -> vector<16x16xf32>
    %32 = vector.extract_strided_slice %3 {offsets = [0, 16], sizes = [16, 16], strides = [1, 1]} : vector<16x128xbf16> to vector<16x16xbf16>
    %33 = vector.extract_strided_slice %5 {offsets = [0, 16], sizes = [16, 16], strides = [1, 1]} : vector<16x128xbf16> to vector<16x16xbf16>
    %34 = vector.extract_strided_slice %7 {offsets = [0, 16], sizes = [16, 16], strides = [1, 1]} : vector<16x128xbf16> to vector<16x16xbf16>
    %cst_17 = arith.constant dense<0.000000e+00> : vector<16x16xf32>
    %35 = tpu.matmul %32, %33, %cst_17 {dimension_numbers = #tpu.dot_dimension_numbers<[1], [1], [0], [0], [0, 0, 1, 0], [], []>} : vector<16x16xbf16>, vector<16x16xbf16>, vector<16x16xf32> -> vector<16x16xf32>
    %cst_18 = arith.constant -1.000000e+09 : f32
    %36 = vector.shape_cast %11 : vector<1x16xi1> to vector<1x16xi1>
    %37 = vector.broadcast %36 : vector<1x16xi1> to vector<16x16xi1>
    %38 = vector.broadcast %cst_18 : f32 to vector<16x16xf32>
    %39 = arith.select %37, %35, %38 : vector<16x16xi1>, vector<16x16xf32>
    %cst_19 = arith.constant dense<0xFF800000> : vector<16xf32>
    %40 = vector.multi_reduction <maximumf>, %39, %cst_19 [1] : vector<16x16xf32> to vector<16xf32>
    %41 = vector.shape_cast %40 : vector<16xf32> to vector<16x1xf32>
    %42 = vector.broadcast %41 : vector<16x1xf32> to vector<16x16xf32>
    %43 = arith.subf %39, %42 : vector<16x16xf32>
    %44 = math.exp %43 : vector<16x16xf32>
    %cst_20 = arith.constant dense<0.000000e+00> : vector<16xf32>
    %45 = vector.multi_reduction <add>, %44, %cst_20 [1] : vector<16x16xf32> to vector<16xf32>
    %46 = vector.shape_cast %45 : vector<16xf32> to vector<16x1xf32>
    %47 = tpu.reciprocal %46 {approx = true} : vector<16x1xf32> -> vector<16x1xf32>
    %48 = vector.broadcast %47 : vector<16x1xf32> to vector<16x16xf32>
    %49 = arith.mulf %44, %48 : vector<16x16xf32>
    %50 = arith.truncf %49 : vector<16x16xf32> to vector<16x16xbf16>
    %cst_21 = arith.constant dense<0.000000e+00> : vector<16x16xf32>
    %51 = tpu.matmul %50, %34, %cst_21 {dimension_numbers = #tpu.dot_dimension_numbers<[1], [0], [0], [1], [0, 0, 1, 1], [], []>} : vector<16x16xbf16>, vector<16x16xbf16>, vector<16x16xf32> -> vector<16x16xf32>
    %52 = vector.extract_strided_slice %3 {offsets = [0, 32], sizes = [16, 16], strides = [1, 1]} : vector<16x128xbf16> to vector<16x16xbf16>
    %53 = vector.extract_strided_slice %5 {offsets = [0, 32], sizes = [16, 16], strides = [1, 1]} : vector<16x128xbf16> to vector<16x16xbf16>
    %54 = vector.extract_strided_slice %7 {offsets = [0, 32], sizes = [16, 16], strides = [1, 1]} : vector<16x128xbf16> to vector<16x16xbf16>
    %cst_22 = arith.constant dense<0.000000e+00> : vector<16x16xf32>
    %55 = tpu.matmul %52, %53, %cst_22 {dimension_numbers = #tpu.dot_dimension_numbers<[1], [1], [0], [0], [0, 0, 1, 0], [], []>} : vector<16x16xbf16>, vector<16x16xbf16>, vector<16x16xf32> -> vector<16x16xf32>
    %cst_23 = arith.constant -1.000000e+09 : f32
    %56 = vector.shape_cast %11 : vector<1x16xi1> to vector<1x16xi1>
    %57 = vector.broadcast %56 : vector<1x16xi1> to vector<16x16xi1>
    %58 = vector.broadcast %cst_23 : f32 to vector<16x16xf32>
    %59 = arith.select %57, %55, %58 : vector<16x16xi1>, vector<16x16xf32>
    %cst_24 = arith.constant dense<0xFF800000> : vector<16xf32>
    %60 = vector.multi_reduction <maximumf>, %59, %cst_24 [1] : vector<16x16xf32> to vector<16xf32>
    %61 = vector.shape_cast %60 : vector<16xf32> to vector<16x1xf32>
    %62 = vector.broadcast %61 : vector<16x1xf32> to vector<16x16xf32>
    %63 = arith.subf %59, %62 : vector<16x16xf32>
    %64 = math.exp %63 : vector<16x16xf32>
    %cst_25 = arith.constant dense<0.000000e+00> : vector<16xf32>
    %65 = vector.multi_reduction <add>, %64, %cst_25 [1] : vector<16x16xf32> to vector<16xf32>
    %66 = vector.shape_cast %65 : vector<16xf32> to vector<16x1xf32>
    %67 = tpu.reciprocal %66 {approx = true} : vector<16x1xf32> -> vector<16x1xf32>
    %68 = vector.broadcast %67 : vector<16x1xf32> to vector<16x16xf32>
    %69 = arith.mulf %64, %68 : vector<16x16xf32>
    %70 = arith.truncf %69 : vector<16x16xf32> to vector<16x16xbf16>
    %cst_26 = arith.constant dense<0.000000e+00> : vector<16x16xf32>
    %71 = tpu.matmul %70, %54, %cst_26 {dimension_numbers = #tpu.dot_dimension_numbers<[1], [0], [0], [1], [0, 0, 1, 1], [], []>} : vector<16x16xbf16>, vector<16x16xbf16>, vector<16x16xf32> -> vector<16x16xf32>
    %72 = vector.extract_strided_slice %3 {offsets = [0, 48], sizes = [16, 16], strides = [1, 1]} : vector<16x128xbf16> to vector<16x16xbf16>
    %73 = vector.extract_strided_slice %5 {offsets = [0, 48], sizes = [16, 16], strides = [1, 1]} : vector<16x128xbf16> to vector<16x16xbf16>
    %74 = vector.extract_strided_slice %7 {offsets = [0, 48], sizes = [16, 16], strides = [1, 1]} : vector<16x128xbf16> to vector<16x16xbf16>
    %cst_27 = arith.constant dense<0.000000e+00> : vector<16x16xf32>
    %75 = tpu.matmul %72, %73, %cst_27 {dimension_numbers = #tpu.dot_dimension_numbers<[1], [1], [0], [0], [0, 0, 1, 0], [], []>} : vector<16x16xbf16>, vector<16x16xbf16>, vector<16x16xf32> -> vector<16x16xf32>
    %cst_28 = arith.constant -1.000000e+09 : f32
    %76 = vector.shape_cast %11 : vector<1x16xi1> to vector<1x16xi1>
    %77 = vector.broadcast %76 : vector<1x16xi1> to vector<16x16xi1>
    %78 = vector.broadcast %cst_28 : f32 to vector<16x16xf32>
    %79 = arith.select %77, %75, %78 : vector<16x16xi1>, vector<16x16xf32>
    %cst_29 = arith.constant dense<0xFF800000> : vector<16xf32>
    %80 = vector.multi_reduction <maximumf>, %79, %cst_29 [1] : vector<16x16xf32> to vector<16xf32>
    %81 = vector.shape_cast %80 : vector<16xf32> to vector<16x1xf32>
    %82 = vector.broadcast %81 : vector<16x1xf32> to vector<16x16xf32>
    %83 = arith.subf %79, %82 : vector<16x16xf32>
    %84 = math.exp %83 : vector<16x16xf32>
    %cst_30 = arith.constant dense<0.000000e+00> : vector<16xf32>
    %85 = vector.multi_reduction <add>, %84, %cst_30 [1] : vector<16x16xf32> to vector<16xf32>
    %86 = vector.shape_cast %85 : vector<16xf32> to vector<16x1xf32>
    %87 = tpu.reciprocal %86 {approx = true} : vector<16x1xf32> -> vector<16x1xf32>
    %88 = vector.broadcast %87 : vector<16x1xf32> to vector<16x16xf32>
    %89 = arith.mulf %84, %88 : vector<16x16xf32>
    %90 = arith.truncf %89 : vector<16x16xf32> to vector<16x16xbf16>
    %cst_31 = arith.constant dense<0.000000e+00> : vector<16x16xf32>
    %91 = tpu.matmul %90, %74, %cst_31 {dimension_numbers = #tpu.dot_dimension_numbers<[1], [0], [0], [1], [0, 0, 1, 1], [], []>} : vector<16x16xbf16>, vector<16x16xbf16>, vector<16x16xf32> -> vector<16x16xf32>
    %92 = vector.extract_strided_slice %3 {offsets = [0, 64], sizes = [16, 16], strides = [1, 1]} : vector<16x128xbf16> to vector<16x16xbf16>
    %93 = vector.extract_strided_slice %5 {offsets = [0, 64], sizes = [16, 16], strides = [1, 1]} : vector<16x128xbf16> to vector<16x16xbf16>
    %94 = vector.extract_strided_slice %7 {offsets = [0, 64], sizes = [16, 16], strides = [1, 1]} : vector<16x128xbf16> to vector<16x16xbf16>
    %cst_32 = arith.constant dense<0.000000e+00> : vector<16x16xf32>
    %95 = tpu.matmul %92, %93, %cst_32 {dimension_numbers = #tpu.dot_dimension_numbers<[1], [1], [0], [0], [0, 0, 1, 0], [], []>} : vector<16x16xbf16>, vector<16x16xbf16>, vector<16x16xf32> -> vector<16x16xf32>
    %cst_33 = arith.constant -1.000000e+09 : f32
    %96 = vector.shape_cast %11 : vector<1x16xi1> to vector<1x16xi1>
    %97 = vector.broadcast %96 : vector<1x16xi1> to vector<16x16xi1>
    %98 = vector.broadcast %cst_33 : f32 to vector<16x16xf32>
    %99 = arith.select %97, %95, %98 : vector<16x16xi1>, vector<16x16xf32>
    %cst_34 = arith.constant dense<0xFF800000> : vector<16xf32>
    %100 = vector.multi_reduction <maximumf>, %99, %cst_34 [1] : vector<16x16xf32> to vector<16xf32>
    %101 = vector.shape_cast %100 : vector<16xf32> to vector<16x1xf32>
    %102 = vector.broadcast %101 : vector<16x1xf32> to vector<16x16xf32>
    %103 = arith.subf %99, %102 : vector<16x16xf32>
    %104 = math.exp %103 : vector<16x16xf32>
    %cst_35 = arith.constant dense<0.000000e+00> : vector<16xf32>
    %105 = vector.multi_reduction <add>, %104, %cst_35 [1] : vector<16x16xf32> to vector<16xf32>
    %106 = vector.shape_cast %105 : vector<16xf32> to vector<16x1xf32>
    %107 = tpu.reciprocal %106 {approx = true} : vector<16x1xf32> -> vector<16x1xf32>
    %108 = vector.broadcast %107 : vector<16x1xf32> to vector<16x16xf32>
    %109 = arith.mulf %104, %108 : vector<16x16xf32>
    %110 = arith.truncf %109 : vector<16x16xf32> to vector<16x16xbf16>
    %cst_36 = arith.constant dense<0.000000e+00> : vector<16x16xf32>
    %111 = tpu.matmul %110, %94, %cst_36 {dimension_numbers = #tpu.dot_dimension_numbers<[1], [0], [0], [1], [0, 0, 1, 1], [], []>} : vector<16x16xbf16>, vector<16x16xbf16>, vector<16x16xf32> -> vector<16x16xf32>
    %112 = vector.extract_strided_slice %3 {offsets = [0, 80], sizes = [16, 16], strides = [1, 1]} : vector<16x128xbf16> to vector<16x16xbf16>
    %113 = vector.extract_strided_slice %5 {offsets = [0, 80], sizes = [16, 16], strides = [1, 1]} : vector<16x128xbf16> to vector<16x16xbf16>
    %114 = vector.extract_strided_slice %7 {offsets = [0, 80], sizes = [16, 16], strides = [1, 1]} : vector<16x128xbf16> to vector<16x16xbf16>
    %cst_37 = arith.constant dense<0.000000e+00> : vector<16x16xf32>
    %115 = tpu.matmul %112, %113, %cst_37 {dimension_numbers = #tpu.dot_dimension_numbers<[1], [1], [0], [0], [0, 0, 1, 0], [], []>} : vector<16x16xbf16>, vector<16x16xbf16>, vector<16x16xf32> -> vector<16x16xf32>
    %cst_38 = arith.constant -1.000000e+09 : f32
    %116 = vector.shape_cast %11 : vector<1x16xi1> to vector<1x16xi1>
    %117 = vector.broadcast %116 : vector<1x16xi1> to vector<16x16xi1>
    %118 = vector.broadcast %cst_38 : f32 to vector<16x16xf32>
    %119 = arith.select %117, %115, %118 : vector<16x16xi1>, vector<16x16xf32>
    %cst_39 = arith.constant dense<0xFF800000> : vector<16xf32>
    %120 = vector.multi_reduction <maximumf>, %119, %cst_39 [1] : vector<16x16xf32> to vector<16xf32>
    %121 = vector.shape_cast %120 : vector<16xf32> to vector<16x1xf32>
    %122 = vector.broadcast %121 : vector<16x1xf32> to vector<16x16xf32>
    %123 = arith.subf %119, %122 : vector<16x16xf32>
    %124 = math.exp %123 : vector<16x16xf32>
    %cst_40 = arith.constant dense<0.000000e+00> : vector<16xf32>
    %125 = vector.multi_reduction <add>, %124, %cst_40 [1] : vector<16x16xf32> to vector<16xf32>
    %126 = vector.shape_cast %125 : vector<16xf32> to vector<16x1xf32>
    %127 = tpu.reciprocal %126 {approx = true} : vector<16x1xf32> -> vector<16x1xf32>
    %128 = vector.broadcast %127 : vector<16x1xf32> to vector<16x16xf32>
    %129 = arith.mulf %124, %128 : vector<16x16xf32>
    %130 = arith.truncf %129 : vector<16x16xf32> to vector<16x16xbf16>
    %cst_41 = arith.constant dense<0.000000e+00> : vector<16x16xf32>
    %131 = tpu.matmul %130, %114, %cst_41 {dimension_numbers = #tpu.dot_dimension_numbers<[1], [0], [0], [1], [0, 0, 1, 1], [], []>} : vector<16x16xbf16>, vector<16x16xbf16>, vector<16x16xf32> -> vector<16x16xf32>
    %132 = vector.extract_strided_slice %3 {offsets = [0, 96], sizes = [16, 16], strides = [1, 1]} : vector<16x128xbf16> to vector<16x16xbf16>
    %133 = vector.extract_strided_slice %5 {offsets = [0, 96], sizes = [16, 16], strides = [1, 1]} : vector<16x128xbf16> to vector<16x16xbf16>
    %134 = vector.extract_strided_slice %7 {offsets = [0, 96], sizes = [16, 16], strides = [1, 1]} : vector<16x128xbf16> to vector<16x16xbf16>
    %cst_42 = arith.constant dense<0.000000e+00> : vector<16x16xf32>
    %135 = tpu.matmul %132, %133, %cst_42 {dimension_numbers = #tpu.dot_dimension_numbers<[1], [1], [0], [0], [0, 0, 1, 0], [], []>} : vector<16x16xbf16>, vector<16x16xbf16>, vector<16x16xf32> -> vector<16x16xf32>
    %cst_43 = arith.constant -1.000000e+09 : f32
    %136 = vector.shape_cast %11 : vector<1x16xi1> to vector<1x16xi1>
    %137 = vector.broadcast %136 : vector<1x16xi1> to vector<16x16xi1>
    %138 = vector.broadcast %cst_43 : f32 to vector<16x16xf32>
    %139 = arith.select %137, %135, %138 : vector<16x16xi1>, vector<16x16xf32>
    %cst_44 = arith.constant dense<0xFF800000> : vector<16xf32>
    %140 = vector.multi_reduction <maximumf>, %139, %cst_44 [1] : vector<16x16xf32> to vector<16xf32>
    %141 = vector.shape_cast %140 : vector<16xf32> to vector<16x1xf32>
    %142 = vector.broadcast %141 : vector<16x1xf32> to vector<16x16xf32>
    %143 = arith.subf %139, %142 : vector<16x16xf32>
    %144 = math.exp %143 : vector<16x16xf32>
    %cst_45 = arith.constant dense<0.000000e+00> : vector<16xf32>
    %145 = vector.multi_reduction <add>, %144, %cst_45 [1] : vector<16x16xf32> to vector<16xf32>
    %146 = vector.shape_cast %145 : vector<16xf32> to vector<16x1xf32>
    %147 = tpu.reciprocal %146 {approx = true} : vector<16x1xf32> -> vector<16x1xf32>
    %148 = vector.broadcast %147 : vector<16x1xf32> to vector<16x16xf32>
    %149 = arith.mulf %144, %148 : vector<16x16xf32>
    %150 = arith.truncf %149 : vector<16x16xf32> to vector<16x16xbf16>
    %cst_46 = arith.constant dense<0.000000e+00> : vector<16x16xf32>
    %151 = tpu.matmul %150, %134, %cst_46 {dimension_numbers = #tpu.dot_dimension_numbers<[1], [0], [0], [1], [0, 0, 1, 1], [], []>} : vector<16x16xbf16>, vector<16x16xbf16>, vector<16x16xf32> -> vector<16x16xf32>
    %152 = vector.extract_strided_slice %3 {offsets = [0, 112], sizes = [16, 16], strides = [1, 1]} : vector<16x128xbf16> to vector<16x16xbf16>
    %153 = vector.extract_strided_slice %5 {offsets = [0, 112], sizes = [16, 16], strides = [1, 1]} : vector<16x128xbf16> to vector<16x16xbf16>
    %154 = vector.extract_strided_slice %7 {offsets = [0, 112], sizes = [16, 16], strides = [1, 1]} : vector<16x128xbf16> to vector<16x16xbf16>
    %cst_47 = arith.constant dense<0.000000e+00> : vector<16x16xf32>
    %155 = tpu.matmul %152, %153, %cst_47 {dimension_numbers = #tpu.dot_dimension_numbers<[1], [1], [0], [0], [0, 0, 1, 0], [], []>} : vector<16x16xbf16>, vector<16x16xbf16>, vector<16x16xf32> -> vector<16x16xf32>
    %cst_48 = arith.constant -1.000000e+09 : f32
    %156 = vector.shape_cast %11 : vector<1x16xi1> to vector<1x16xi1>
    %157 = vector.broadcast %156 : vector<1x16xi1> to vector<16x16xi1>
    %158 = vector.broadcast %cst_48 : f32 to vector<16x16xf32>
    %159 = arith.select %157, %155, %158 : vector<16x16xi1>, vector<16x16xf32>
    %cst_49 = arith.constant dense<0xFF800000> : vector<16xf32>
    %160 = vector.multi_reduction <maximumf>, %159, %cst_49 [1] : vector<16x16xf32> to vector<16xf32>
    %161 = vector.shape_cast %160 : vector<16xf32> to vector<16x1xf32>
    %162 = vector.broadcast %161 : vector<16x1xf32> to vector<16x16xf32>
    %163 = arith.subf %159, %162 : vector<16x16xf32>
    %164 = math.exp %163 : vector<16x16xf32>
    %cst_50 = arith.constant dense<0.000000e+00> : vector<16xf32>
    %165 = vector.multi_reduction <add>, %164, %cst_50 [1] : vector<16x16xf32> to vector<16xf32>
    %166 = vector.shape_cast %165 : vector<16xf32> to vector<16x1xf32>
    %167 = tpu.reciprocal %166 {approx = true} : vector<16x1xf32> -> vector<16x1xf32>
    %168 = vector.broadcast %167 : vector<16x1xf32> to vector<16x16xf32>
    %169 = arith.mulf %164, %168 : vector<16x16xf32>
    %170 = arith.truncf %169 : vector<16x16xf32> to vector<16x16xbf16>
    %cst_51 = arith.constant dense<0.000000e+00> : vector<16x16xf32>
    %171 = tpu.matmul %170, %154, %cst_51 {dimension_numbers = #tpu.dot_dimension_numbers<[1], [0], [0], [1], [0, 0, 1, 1], [], []>} : vector<16x16xbf16>, vector<16x16xbf16>, vector<16x16xf32> -> vector<16x16xf32>
    %172 = tpu.concatenate %31, %51, %71, %91, %111, %131, %151, %171 in 1 : vector<16x16xf32>, vector<16x16xf32>, vector<16x16xf32>, vector<16x16xf32>, vector<16x16xf32>, vector<16x16xf32>, vector<16x16xf32>, vector<16x16xf32> -> vector<16x128xf32>
    %173 = arith.truncf %172 : vector<16x128xf32> to vector<16x128xbf16>
    %c0_52 = arith.constant 0 : index
    %c0_53 = arith.constant 0 : index
    %c0_54 = arith.constant 0 : index
    %174 = vector.load %arg6[%c0_52, %c0_53, %c0_54] : memref<1x16x128xbf16, #tpu.memory_space<vmem>>, vector<1x16x128xbf16>
    %175 = vector.shape_cast %174 : vector<1x16x128xbf16> to vector<16x128xbf16>
    %176 = vector.shape_cast %173 : vector<16x128xbf16> to vector<1x16x128xbf16>
    tpu.vector_store %arg6[%c0_52, %c0_53, %c0_54], %176 {strides = array<i32>} : memref<1x16x128xbf16, #tpu.memory_space<vmem>>, vector<1x16x128xbf16>,
    return
  }
  func.func @transform_0(%arg0: i32, %arg1: i32) -> (i32, i32, i32) {
    %c0_i32 = arith.constant 0 : i32
    %c0_i32_0 = arith.constant 0 : i32
    return %arg0, %arg1, %c0_i32 : i32, i32, i32
  }
  func.func @transform_1(%arg0: i32, %arg1: i32) -> (i32, i32, i32) {
    %c0_i32 = arith.constant 0 : i32
    %c0_i32_0 = arith.constant 0 : i32
    %c0_i32_1 = arith.constant 0 : i32
    return %arg0, %c0_i32, %c0_i32_0 : i32, i32, i32
  }
  func.func @transform_2(%arg0: i32, %arg1: i32) -> (i32, i32, i32) {
    %c0_i32 = arith.constant 0 : i32
    %c1_i32 = arith.constant 1 : i32
    %c0_i32_0 = arith.constant 0 : i32
    return %arg0, %c0_i32, %c1_i32 : i32, i32, i32
  }
  func.func @transform_3(%arg0: i32, %arg1: i32) -> (i32, i32, i32) {
    %c0_i32 = arith.constant 0 : i32
    %c0_i32_0 = arith.constant 0 : i32
    %c0_i32_1 = arith.constant 0 : i32
    return %arg0, %c0_i32, %c0_i32_0 : i32, i32, i32
  }
  func.func @transform_4(%arg0: i32, %arg1: i32) -> (i32, i32, i32) {
    %c0_i32 = arith.constant 0 : i32
    %c0_i32_0 = arith.constant 0 : i32
    return %arg0, %arg1, %c0_i32 : i32, i32, i32
  }
}

module attributes {stable_mosaic.version = 11 : i64} {
  func.func @ffn_residual_ln_kernel(%arg0: i32, %arg1: i32, %arg2: memref<32x128xbf16, #tpu.memory_space<vmem>>, %arg3: memref<128x256xbf16, #tpu.memory_space<vmem>>, %arg4: memref<1x256xf32, #tpu.memory_space<vmem>>, %arg5: memref<256x128xbf16, #tpu.memory_space<vmem>>, %arg6: memref<1x128xf32, #tpu.memory_space<vmem>>, %arg7: memref<1x128xf32, #tpu.memory_space<vmem>>, %arg8: memref<1x128xf32, #tpu.memory_space<vmem>>, %arg9: memref<32x128xf32, #tpu.memory_space<vmem>>, %arg10: memref<32x128xf32, #tpu.memory_space<vmem>>) attributes {dimension_semantics = [#tpu.dimension_semantics<parallel>, #tpu.dimension_semantics<arbitrary>], iteration_bounds = array<i64: 1, 1>, scalar_prefetch = 0 : i64, scratch_operands = 1 : i64, tpu.core_type = #tpu.core_type<tc>, window_params = [{transform_indices = @transform_0, window_bounds = array<i64: 32, 128>}, {transform_indices = @transform_1, window_bounds = array<i64: 128, 256>}, {transform_indices = @transform_2, window_bounds = array<i64: 1, 256>}, {transform_indices = @transform_3, window_bounds = array<i64: 256, 128>}, {pipeline_mode = #tpu.pipeline_mode<synchronous>, transform_indices = @transform_4, window_bounds = array<i64: 1, 128>}, {pipeline_mode = #tpu.pipeline_mode<synchronous>, transform_indices = @transform_5, window_bounds = array<i64: 1, 128>}, {pipeline_mode = #tpu.pipeline_mode<synchronous>, transform_indices = @transform_6, window_bounds = array<i64: 1, 128>}, {transform_indices = @transform_7, window_bounds = array<i64: 32, 128>}]} {
    %c0_i32 = arith.constant 0 : i32
    %0 = arith.cmpi eq, %arg1, %c0_i32 : i32
    %1 = arith.extui %0 : i1 to i32
    %c0_i32_0 = arith.constant 0 : i32
    %2 = arith.cmpi ne, %1, %c0_i32_0 : i32
    scf.if %2 {
      %cst_16 = arith.constant 0.000000e+00 : f32
      %20 = vector.broadcast %cst_16 : f32 to vector<32x128xf32>
      %c0_17 = arith.constant 0 : index
      %c0_18 = arith.constant 0 : index
      %21 = vector.load %arg10[%c0_17, %c0_18] : memref<32x128xf32, #tpu.memory_space<vmem>>, vector<32x128xf32>
      tpu.vector_store %arg10[%c0_17, %c0_18], %20 {strides = array<i32>} : memref<32x128xf32, #tpu.memory_space<vmem>>, vector<32x128xf32>,
    } else {
    }
    %c0 = arith.constant 0 : index
    %c0_1 = arith.constant 0 : index
    %3 = vector.load %arg2[%c0, %c0_1] : memref<32x128xbf16, #tpu.memory_space<vmem>>, vector<32x128xbf16>
    %c0_2 = arith.constant 0 : index
    %c0_3 = arith.constant 0 : index
    %4 = vector.load %arg3[%c0_2, %c0_3] : memref<128x256xbf16, #tpu.memory_space<vmem>>, vector<128x256xbf16>
    %cst = arith.constant dense<0.000000e+00> : vector<32x256xf32>
    %5 = tpu.matmul %3, %4, %cst {dimension_numbers = #tpu.dot_dimension_numbers<[1], [0], [0], [1], [0, 0, 1, 1], [], []>} : vector<32x128xbf16>, vector<128x256xbf16>, vector<32x256xf32> -> vector<32x256xf32>
    %c0_4 = arith.constant 0 : index
    %c0_5 = arith.constant 0 : index
    %6 = vector.load %arg4[%c0_4, %c0_5] : memref<1x256xf32, #tpu.memory_space<vmem>>, vector<1x256xf32>
    %7 = vector.broadcast %6 : vector<1x256xf32> to vector<32x256xf32>
    %8 = arith.addf %5, %7 : vector<32x256xf32>
    %cst_6 = arith.constant 0.000000e+00 : f32
    %9 = vector.broadcast %cst_6 : f32 to vector<32x256xf32>
    %10 = arith.maximumf %8, %9 : vector<32x256xf32>
    %c0_7 = arith.constant 0 : index
    %c0_8 = arith.constant 0 : index
    %11 = vector.load %arg10[%c0_7, %c0_8] : memref<32x128xf32, #tpu.memory_space<vmem>>, vector<32x128xf32>
    %12 = arith.truncf %10 : vector<32x256xf32> to vector<32x256xbf16>
    %c0_9 = arith.constant 0 : index
    %c0_10 = arith.constant 0 : index
    %13 = vector.load %arg5[%c0_9, %c0_10] : memref<256x128xbf16, #tpu.memory_space<vmem>>, vector<256x128xbf16>
    %cst_11 = arith.constant dense<0.000000e+00> : vector<32x128xf32>
    %14 = tpu.matmul %12, %13, %cst_11 {dimension_numbers = #tpu.dot_dimension_numbers<[1], [0], [0], [1], [0, 0, 1, 1], [], []>} : vector<32x256xbf16>, vector<256x128xbf16>, vector<32x128xf32> -> vector<32x128xf32>
    %15 = arith.addf %11, %14 : vector<32x128xf32>
    %c0_12 = arith.constant 0 : index
    %c0_13 = arith.constant 0 : index
    %16 = vector.load %arg10[%c0_12, %c0_13] : memref<32x128xf32, #tpu.memory_space<vmem>>, vector<32x128xf32>
    tpu.vector_store %arg10[%c0_12, %c0_13], %15 {strides = array<i32>} : memref<32x128xf32, #tpu.memory_space<vmem>>, vector<32x128xf32>,
    %c0_i32_14 = arith.constant 0 : i32
    %17 = arith.cmpi eq, %arg1, %c0_i32_14 : i32
    %18 = arith.extui %17 : i1 to i32
    %c0_i32_15 = arith.constant 0 : i32
    %19 = arith.cmpi ne, %18, %c0_i32_15 : i32
    scf.if %19 {
      %c0_16 = arith.constant 0 : index
      %c0_17 = arith.constant 0 : index
      %20 = vector.load %arg10[%c0_16, %c0_17] : memref<32x128xf32, #tpu.memory_space<vmem>>, vector<32x128xf32>
      %c0_18 = arith.constant 0 : index
      %c0_19 = arith.constant 0 : index
      %21 = vector.load %arg6[%c0_18, %c0_19] : memref<1x128xf32, #tpu.memory_space<vmem>>, vector<1x128xf32>
      %22 = vector.broadcast %21 : vector<1x128xf32> to vector<32x128xf32>
      %23 = arith.addf %20, %22 : vector<32x128xf32>
      %c0_20 = arith.constant 0 : index
      %c0_21 = arith.constant 0 : index
      %24 = vector.load %arg2[%c0_20, %c0_21] : memref<32x128xbf16, #tpu.memory_space<vmem>>, vector<32x128xbf16>
      %25 = arith.extf %24 : vector<32x128xbf16> to vector<32x128xf32>
      %26 = arith.addf %23, %25 : vector<32x128xf32>
      %cst_22 = arith.constant dense<0.000000e+00> : vector<32xf32>
      %27 = vector.multi_reduction <add>, %26, %cst_22 [1] : vector<32x128xf32> to vector<32xf32>
      %28 = vector.shape_cast %27 : vector<32xf32> to vector<32x1xf32>
      %cst_23 = arith.constant 1.280000e+02 : f32
      %29 = vector.broadcast %cst_23 : f32 to vector<32x1xf32>
      %30 = arith.divf %28, %29 : vector<32x1xf32>
      %31 = vector.broadcast %30 : vector<32x1xf32> to vector<32x128xf32>
      %32 = arith.subf %26, %31 : vector<32x128xf32>
      %33 = arith.mulf %32, %32 : vector<32x128xf32>
      %cst_24 = arith.constant dense<0.000000e+00> : vector<32xf32>
      %34 = vector.multi_reduction <add>, %33, %cst_24 [1] : vector<32x128xf32> to vector<32xf32>
      %35 = vector.shape_cast %34 : vector<32xf32> to vector<32x1xf32>
      %cst_25 = arith.constant 1.280000e+02 : f32
      %36 = vector.broadcast %cst_25 : f32 to vector<32x1xf32>
      %37 = arith.divf %35, %36 : vector<32x1xf32>
      %cst_26 = arith.constant 9.99999974E-6 : f32
      %38 = vector.broadcast %cst_26 : f32 to vector<32x1xf32>
      %39 = arith.addf %37, %38 : vector<32x1xf32>
      %40 = math.rsqrt %39 : vector<32x1xf32>
      %41 = vector.broadcast %40 : vector<32x1xf32> to vector<32x128xf32>
      %42 = arith.mulf %32, %41 : vector<32x128xf32>
      %c0_27 = arith.constant 0 : index
      %c0_28 = arith.constant 0 : index
      %43 = vector.load %arg7[%c0_27, %c0_28] : memref<1x128xf32, #tpu.memory_space<vmem>>, vector<1x128xf32>
      %44 = vector.broadcast %43 : vector<1x128xf32> to vector<32x128xf32>
      %45 = arith.mulf %42, %44 : vector<32x128xf32>
      %c0_29 = arith.constant 0 : index
      %c0_30 = arith.constant 0 : index
      %46 = vector.load %arg8[%c0_29, %c0_30] : memref<1x128xf32, #tpu.memory_space<vmem>>, vector<1x128xf32>
      %47 = vector.broadcast %46 : vector<1x128xf32> to vector<32x128xf32>
      %48 = arith.addf %45, %47 : vector<32x128xf32>
      %c0_31 = arith.constant 0 : index
      %c0_32 = arith.constant 0 : index
      %49 = vector.load %arg9[%c0_31, %c0_32] : memref<32x128xf32, #tpu.memory_space<vmem>>, vector<32x128xf32>
      tpu.vector_store %arg9[%c0_31, %c0_32], %48 {strides = array<i32>} : memref<32x128xf32, #tpu.memory_space<vmem>>, vector<32x128xf32>,
    } else {
    }
    return
  }
  func.func @transform_0(%arg0: i32, %arg1: i32) -> (i32, i32) {
    %c0_i32 = arith.constant 0 : i32
    %c0_i32_0 = arith.constant 0 : i32
    return %arg0, %c0_i32 : i32, i32
  }
  func.func @transform_1(%arg0: i32, %arg1: i32) -> (i32, i32) {
    %c0_i32 = arith.constant 0 : i32
    %c0_i32_0 = arith.constant 0 : i32
    return %c0_i32, %arg1 : i32, i32
  }
  func.func @transform_2(%arg0: i32, %arg1: i32) -> (i32, i32) {
    %c0_i32 = arith.constant 0 : i32
    %c0_i32_0 = arith.constant 0 : i32
    return %c0_i32, %arg1 : i32, i32
  }
  func.func @transform_3(%arg0: i32, %arg1: i32) -> (i32, i32) {
    %c0_i32 = arith.constant 0 : i32
    %c0_i32_0 = arith.constant 0 : i32
    return %arg1, %c0_i32 : i32, i32
  }
  func.func @transform_4(%arg0: i32, %arg1: i32) -> (i32, i32) {
    %c0_i32 = arith.constant 0 : i32
    %c0_i32_0 = arith.constant 0 : i32
    %c0_i32_1 = arith.constant 0 : i32
    return %c0_i32, %c0_i32_0 : i32, i32
  }
  func.func @transform_5(%arg0: i32, %arg1: i32) -> (i32, i32) {
    %c0_i32 = arith.constant 0 : i32
    %c0_i32_0 = arith.constant 0 : i32
    %c0_i32_1 = arith.constant 0 : i32
    return %c0_i32, %c0_i32_0 : i32, i32
  }
  func.func @transform_6(%arg0: i32, %arg1: i32) -> (i32, i32) {
    %c0_i32 = arith.constant 0 : i32
    %c0_i32_0 = arith.constant 0 : i32
    %c0_i32_1 = arith.constant 0 : i32
    return %c0_i32, %c0_i32_0 : i32, i32
  }
  func.func @transform_7(%arg0: i32, %arg1: i32) -> (i32, i32) {
    %c0_i32 = arith.constant 0 : i32
    %c0_i32_0 = arith.constant 0 : i32
    return %arg0, %c0_i32 : i32, i32
  }
}

</mosaic_0001>

<llo_original>
// kernel: transformer_decoder_layer.8
$region0: #{transformer_decoder_layer.8}
  #allocation0 [shape = 'u32[]', space=smem, size = 0x4, offset = 0x4, fixed_abs, tag = 'smem constant byte address 0x4 - core index']
  #allocation1 [shape = 'u32[144,128]{1,0:T(1,128)}', space=vmem, size = 0x12000, scoped, tag = 'internal scratch']
  #allocation2 [shape = 'f32[32,128]{1,0:T(8,128)}', space=vmem, size = 0x4000, scoped, tag = 'scratch operand']
  %s0 = inlined_call_operand.vmem [shape: f32[32,128], index: 0, kind: input, shape index: {}]
  %s1 = inlined_call_operand.hbm [shape: bf16[128,384], index: 1, kind: input, shape index: {}]
  %s2 = inlined_call_operand.vmem [shape: f32[1,384], index: 2, kind: input, shape index: {}]
  %s3 = inlined_call_operand.vmem [shape: bf16[32,384], index: 3, kind: output, shape index: {}]
  %s4 = sld [smem:[#allocation0]]
  $region94: #{transformer_decoder_layer.8} parent=0
    _
  %s6 = ssub.s32 1, %s4
  %s7 = scalar_select 0, %s6, %s4
  $region1: #{transformer_decoder_layer.8} parent=0
    #allocation3 [shape = 'u8[65536]{0}', space=vmem, size = 0x10000, scoped, tag = 'input window, operand 1']
    #allocation4 [shape = 's32[2]{0}', space=sflag, size = 0x8, scoped, tag = 'scoped memory for transformer_decoder_layer.8']
    #allocation5 [shape = 'u8[16384]{0}', space=vmem, size = 0x4000, scoped, tag = 'output window, operand 0']
    %8 = vsyncpa [#allocation4], 0
    %s9 = scalar_lea.sflag [#allocation4], 1
    %10 = vsyncpa %s9, 0
    loop: start=0, step=1, limit=5
    $region2: #{transformer_decoder_layer.8} parent=1 // loop_pre_header
      _
    $region3: #{transformer_decoder_layer.8} parent=1 // loop_header
      %s12 = sphi 0, %s16
      %p13 = scmp.ge.s32.totalorder %s12, 5
      %s19 = sphi 0, %s38
      %s20 = sphi 0, %s34
      %s21 = sphi 0, %s30
      %s22 = sphi 0, %s19
      %s23 = sphi 0, %s20
      %s24 = sphi 0, %s21
      %s25 = sphi 0, %s22
      %s26 = sphi 0, %s23
      %s27 = sphi 0, %s24
      %s43 = sphi 0, %s45
      %s46 = sphi 0, %s43
      %s47 = sphi 0, %s46
      %s63 = sphi 0, %s47
      %s71 = sphi 0, %s73
      %s74 = sphi 0, %s71
      %s75 = sphi 0, %s74
      %s91 = sphi 0, %s75
      %s97 = sphi 0, %s99
      %s100 = sphi 0, %s97
      %s101 = sphi 0, %s100
      %s117 = sphi 0, %s101
      %s125 = sphi 0, %s127
      %s128 = sphi 0, %s125
      %s129 = sphi 0, %s128
      %s145 = sphi 0, %s129
    $region4: #{transformer_decoder_layer.8} parent=1 // loop_header_branch
      %15 = sbr.rel (%p13) target = $region8
    $region5: #{transformer_decoder_layer.8} parent=1 // loop_body
      %s17 = ssub.s32 %s12, 1
      %s18 = ssub.s32 %s12, 2
      %s28 = sadd.s32 1, %s21
      %p29 = scmp.ge.s32.totalorder %s28, 1
      %s30 = scalar_select %p29, 0, %s28
      %s31 = sadd.s32 1, %s20
      %s32 = scalar_select %p29, %s31, %s20
      %p33 = scmp.ge.s32.totalorder %s32, 3
      %s34 = scalar_select %p33, 0, %s32
      %s35 = sadd.s32 1, %s19
      %s36 = scalar_select %p33, %s35, %s19
      %p37 = scmp.ge.s32.totalorder %s36, 1
      %s38 = scalar_select %p37, 0, %s36
      %s39 = ssub.s32 %s19, %s38
      %s40 = ssub.s32 %s21, %s30
      %s41 = sor.u32 %s39, %s40
      %p42 = scmp.eq.s32.totalorder %s41, 0
      %s44 = sadd.s32 %s43, 1
      %s45 = scalar_select %p42, %s43, %s44
      %p48 = pneg %p42
      %p49 = scmp.eq.s32.totalorder %s12, 2
      %p50 = por %p48, %p49
      %p51 = scmp.ne.s32.totalorder %s43, %s46
      %p52 = scmp.eq.s32.totalorder %s12, 0
      %p53 = por %p51, %p52
      %p54 = scmp.ne.s32.totalorder %s43, %s46
      %p55 = scmp.eq.s32.totalorder %s17, 2
      %p56 = por %p54, %p55
      %p57 = scmp.ne.s32.totalorder %s46, %s47
      %p58 = scmp.eq.s32.totalorder %s17, 0
      %p59 = por %p57, %p58
      %p60 = scmp.ne.s32.totalorder %s46, %s47
      %p61 = scmp.eq.s32.totalorder %s18, 2
      %p62 = por %p60, %p61
      %p64 = scmp.ne.s32.totalorder %s47, %s63
      %p65 = scmp.eq.s32.totalorder %s18, 0
      %p66 = por %p64, %p65
      %s67 = ssub.s32 %s21, %s30
      %s68 = ssub.s32 %s20, %s34
      %s69 = sor.u32 %s67, %s68
      %p70 = scmp.eq.s32.totalorder %s69, 0
      %s72 = sadd.s32 %s71, 1
      %s73 = scalar_select %p70, %s71, %s72
      %p76 = pneg %p70
      %p77 = scmp.eq.s32.totalorder %s12, 2
      %p78 = por %p76, %p77
      %p79 = scmp.ne.s32.totalorder %s71, %s74
      %p80 = scmp.eq.s32.totalorder %s12, 0
      %p81 = por %p79, %p80
      %p82 = scmp.ne.s32.totalorder %s71, %s74
      %p83 = scmp.eq.s32.totalorder %s17, 2
      %p84 = por %p82, %p83
      %p85 = scmp.ne.s32.totalorder %s74, %s75
      %p86 = scmp.eq.s32.totalorder %s17, 0
      %p87 = por %p85, %p86
      %p88 = scmp.ne.s32.totalorder %s74, %s75
      %p89 = scmp.eq.s32.totalorder %s18, 2
      %p90 = por %p88, %p89
      %p92 = scmp.ne.s32.totalorder %s75, %s91
      %p93 = scmp.eq.s32.totalorder %s18, 0
      %p94 = por %p92, %p93
      %s95 = ssub.s32 %s20, %s34
      %p96 = scmp.eq.s32.totalorder %s95, 0
      %s98 = sadd.s32 %s97, 1
      %s99 = scalar_select %p96, %s97, %s98
      %p102 = pneg %p96
      %p103 = scmp.eq.s32.totalorder %s12, 2
      %p104 = por %p102, %p103
      %p105 = scmp.ne.s32.totalorder %s97, %s100
      %p106 = scmp.eq.s32.totalorder %s12, 0
      %p107 = por %p105, %p106
      %p108 = scmp.ne.s32.totalorder %s97, %s100
      %p109 = scmp.eq.s32.totalorder %s17, 2
      %p110 = por %p108, %p109
      %p111 = scmp.ne.s32.totalorder %s100, %s101
      %p112 = scmp.eq.s32.totalorder %s17, 0
      %p113 = por %p111, %p112
      %p114 = scmp.ne.s32.totalorder %s100, %s101
      %p115 = scmp.eq.s32.totalorder %s18, 2
      %p116 = por %p114, %p115
      %p118 = scmp.ne.s32.totalorder %s101, %s117
      %p119 = scmp.eq.s32.totalorder %s18, 0
      %p120 = por %p118, %p119
      %s121 = ssub.s32 %s19, %s38
      %s122 = ssub.s32 %s20, %s34
      %s123 = sor.u32 %s121, %s122
      %p124 = scmp.eq.s32.totalorder %s123, 0
      %s126 = sadd.s32 %s125, 1
      %s127 = scalar_select %p124, %s125, %s126
      %p130 = pneg %p124
      %p131 = scmp.eq.s32.totalorder %s12, 2
      %p132 = por %p130, %p131
      %p133 = scmp.ne.s32.totalorder %s125, %s128
      %p134 = scmp.eq.s32.totalorder %s12, 0
      %p135 = por %p133, %p134
      %p136 = scmp.ne.s32.totalorder %s125, %s128
      %p137 = scmp.eq.s32.totalorder %s17, 2
      %p138 = por %p136, %p137
      %p139 = scmp.ne.s32.totalorder %s128, %s129
      %p140 = scmp.eq.s32.totalorder %s17, 0
      %p141 = por %p139, %p140
      %p142 = scmp.ne.s32.totalorder %s128, %s129
      %p143 = scmp.eq.s32.totalorder %s18, 2
      %p144 = por %p142, %p143
      %p146 = scmp.ne.s32.totalorder %s129, %s145
      %p147 = scmp.eq.s32.totalorder %s18, 0
      %p148 = por %p146, %p147
      %p149 = scmp.le.s32.totalorder 1, %s12
      %p150 = scmp.lt.s32.totalorder %s12, 4
      %p151 = pnand %p149, %p150
      %p152 = pneg %p151
      // Predicated region
      $region9: #{transformer_decoder_layer.8} parent=5 // pred_check
        _
      $region10: #{transformer_decoder_layer.8} parent=5 // pred_check_branch
        %154 = sbr.rel (%p151) target = $region12
      $region11: #{transformer_decoder_layer.8} parent=5 // pred_region
        %s155 = ssub.s32 %s12, 1
        // Predicated region
        $region13: #{transformer_decoder_layer.8} parent=11 // pred_check
          %p156 = pneg %p59
        $region14: #{transformer_decoder_layer.8} parent=11 // pred_check_branch
          %158 = sbr.rel (%p156) target = $region16
        $region15: #{transformer_decoder_layer.8} parent=11 // pred_region
          %s159 = smul.u32 4, %s22
          %p160 = scmp.lt.s32.totalorder %s159, 3
          %s161 = scalar_select %p160, %s159, 3
          %p162 = scmp.lt.s32.totalorder %s24, 0
          %s163 = scalar_select %p162, %s24, 0
          %s164 = sadd.s32 %s163, %s161
          %s165 = smul.addr %s164, 8
          %s166 = scalar_lea.vmem %s0, %s165
          %s167 = smul.u32 4, %s22
        $region16: #{transformer_decoder_layer.8} parent=11 // pred_fallthru
          _
      $region12: #{transformer_decoder_layer.8} parent=5 // pred_fallthru
        _
      %p168 = scmp.lt.s32.totalorder %s12, 3
      // Predicated region
      $region17: #{transformer_decoder_layer.8} parent=5 // pred_check
        %p169 = pneg %p168
      $region18: #{transformer_decoder_layer.8} parent=5 // pred_check_branch
        %171 = sbr.rel (%p169) target = $region20
      $region19: #{transformer_decoder_layer.8} parent=5 // pred_region
        // Predicated region
        $region21: #{transformer_decoder_layer.8} parent=19 // pred_check
          %p172 = pneg %p81
        $region22: #{transformer_decoder_layer.8} parent=19 // pred_check_branch
          %174 = sbr.rel (%p172) target = $region24
        $region23: #{transformer_decoder_layer.8} parent=19 // pred_region
          %s175 = sand.u32 %s71, 1
          %s176 = scalar_lea.sflag [#allocation4], %s175
          %s177 = sand.u32 %s71, 1
          %s178 = smul.addr %s177, 64
          %s179 = scalar_lea.vmem [#allocation3], %s178
          %s180 = smul.u32 16, %s21
          %s182 = ssub.s32 1024, 1024
          %183 = vsyncadd %s176, %s182
          %s184 = smul.addr %s180, 3
          %s185 = sadd.s32 %s20, %s184
          %s186 = smul.addr %s185, 64
          %s187 = scalar_lea.hbm %s1, %s186
          %s188 = sshll.u32 %s179, 4
          %s189 = int_to_ptr.vmem [resolvable:$true] %s188
          %194 = dma.hbm_to_vmem [thread:$0]  %s187, 1024, %s189, %s176, 192, 64, 4
        $region24: #{transformer_decoder_layer.8} parent=19 // pred_fallthru
          _
        // Predicated region
        $region25: #{transformer_decoder_layer.8} parent=19 // pred_check
          %p195 = pneg %p107
        $region26: #{transformer_decoder_layer.8} parent=19 // pred_check_branch
          %197 = sbr.rel (%p195) target = $region28
        $region27: #{transformer_decoder_layer.8} parent=19 // pred_region
          %p198 = scmp.lt.s32.totalorder %s20, 2
          %s199 = scalar_select %p198, %s20, 2
          %s200 = scalar_lea.vmem %s2, %s199
        $region28: #{transformer_decoder_layer.8} parent=19 // pred_fallthru
          _
      $region20: #{transformer_decoder_layer.8} parent=5 // pred_fallthru
        _
      %p201 = scmp.le.s32.totalorder 1, %s12
      %p202 = scmp.lt.s32.totalorder %s12, 4
      %p203 = pnand %p201, %p202
      %p204 = pneg %p203
      // Predicated region
      $region29: #{transformer_decoder_layer.8} parent=5 // pred_check
        _
      $region30: #{transformer_decoder_layer.8} parent=5 // pred_check_branch
        %206 = sbr.rel (%p203) target = $region32
      $region31: #{transformer_decoder_layer.8} parent=5 // pred_region
        %s207 = ssub.s32 %s12, 1
        %s208 = sand.u32 %s74, 1
        %s209 = scalar_lea.sflag [#allocation4], %s208
        %s210 = sand.u32 %s74, 1
        %s211 = smul.addr %s210, 64
        %s212 = scalar_lea.vmem [#allocation3], %s211
        // Predicated region
        $region33: #{transformer_decoder_layer.8} parent=31 // pred_check
          %p213 = pneg %p87
        $region34: #{transformer_decoder_layer.8} parent=31 // pred_check_branch
          %215 = sbr.rel (%p213) target = $region36
        $region35: #{transformer_decoder_layer.8} parent=31 // pred_region
          %216 = dma.done %s209, 1024
        $region36: #{transformer_decoder_layer.8} parent=31 // pred_fallthru
          _
        %s217 = smul.u32 4, %s22
        %p218 = scmp.lt.s32.totalorder %s217, 3
        %s219 = scalar_select %p218, %s217, 3
        %p220 = scmp.lt.s32.totalorder %s24, 0
        %s221 = scalar_select %p220, %s24, 0
        %s222 = sadd.s32 %s221, %s219
        %s223 = smul.addr %s222, 8
        %s224 = scalar_lea.vmem %s0, %s223
        %p225 = pneg %p59
        %p226 = pneg %p56
        %s227 = sand.u32 %s74, 1
        %s228 = scalar_lea.sflag [#allocation4], %s227
        %s229 = sand.u32 %s74, 1
        %s230 = smul.addr %s229, 64
        %s231 = scalar_lea.vmem [#allocation3], %s230
        %p232 = pneg %p87
        %p233 = pneg %p84
        %p234 = scmp.lt.s32.totalorder %s23, 2
        %s235 = scalar_select %p234, %s23, 2
        %s236 = scalar_lea.vmem %s2, %s235
        %p237 = pneg %p113
        %p238 = pneg %p110
        %p239 = pneg %p141
        %p240 = pneg %p138
        %s241 = sand.u32 %s128, 1
        %s242 = sand.u32 %s128, 1
        %s243 = smul.addr %s242, 16
        %s244 = scalar_lea.vmem [#allocation5], %s243
        %s245 = smul.u32 4, %s22
        %p246 = scmp.lt.s32.totalorder %s245, 3
        %s247 = scalar_select %p246, %s245, 3
        %p248 = scmp.lt.s32.totalorder %s24, 0
        %s249 = scalar_select %p248, %s24, 0
        %s250 = sadd.s32 %s249, %s247
        %s251 = smul.addr %s250, 8
        %s252 = scalar_lea.vmem %s0, %s251
        %s253 = smul.u32 4, %s22
        %s254 = smul.u32 16, %s24
        %p255 = scmp.lt.s32.totalorder %s23, 2
        %s256 = scalar_select %p255, %s23, 2
        %s257 = scalar_lea.vmem %s2, %s256
        %s258 = smul.u32 4, %s22
        %p260 = scmp.eq.s32.totalorder %s24, 0
        // Predicated region
        $region37: #{transformer_decoder_layer.8} parent=31 // pred_check
          %p261 = pneg %p260
        $region38: #{transformer_decoder_layer.8} parent=31 // pred_check_branch
          %263 = sbr.rel (%p261) target = $region40
        $region39: #{transformer_decoder_layer.8} parent=31 // pred_region
          %264 = vst [vmem:[#allocation2] sm:$0xff] 0.0
          %265 = vst [vmem:[#allocation2 + $0x8] sm:$0xff] 0.0
          %266 = vst [vmem:[#allocation2 + $0x10] sm:$0xff] 0.0
          %267 = vst [vmem:[#allocation2 + $0x18] sm:$0xff] 0.0
        $region40: #{transformer_decoder_layer.8} parent=31 // pred_fallthru
          _
        %v268 = vld [vmem:[#allocation2] sm:$0xff]
        %v269 = vld [vmem:[#allocation2 + $0x8] sm:$0xff]
        %v270 = vld [vmem:[#allocation2 + $0x10] sm:$0xff]
        %v271 = vld [vmem:[#allocation2 + $0x18] sm:$0xff]
        %v272 = vld [vmem:[%s252] sm:$0xff]
        %v273 = vld [vmem:[%s252 + $0x8] sm:$0xff]
        %v274 = vld [vmem:[%s252 + $0x10] sm:$0xff]
        %v275 = vld [vmem:[%s252 + $0x18] sm:$0xff]
        %v276 = vpack.c.bf16 %v273, %v272
        %v277 = vpack.c.bf16 %v275, %v274
        %v278 = vld [vmem:[%s212] sm:$0xf]
        %v279 = vld [vmem:[%s212 + $0x4] sm:$0xf]
        %v280 = vld [vmem:[%s212 + $0x8] sm:$0xf]
        %v281 = vld [vmem:[%s212 + $0xc] sm:$0xf]
        %v282 = vld [vmem:[%s212 + $0x10] sm:$0xf]
        %v283 = vld [vmem:[%s212 + $0x14] sm:$0xf]
        %v284 = vld [vmem:[%s212 + $0x18] sm:$0xf]
        %v285 = vld [vmem:[%s212 + $0x1c] sm:$0xf]
        %v286 = vld [vmem:[%s212 + $0x20] sm:$0xf]
        %v287 = vld [vmem:[%s212 + $0x24] sm:$0xf]
        %v288 = vld [vmem:[%s212 + $0x28] sm:$0xf]
        %v289 = vld [vmem:[%s212 + $0x2c] sm:$0xf]
        %v290 = vld [vmem:[%s212 + $0x30] sm:$0xf]
        %v291 = vld [vmem:[%s212 + $0x34] sm:$0xf]
        %v292 = vld [vmem:[%s212 + $0x38] sm:$0xf]
        %v293 = vld [vmem:[%s212 + $0x3c] sm:$0xf]
        %v310 = vunpack.c.l.b16 %v278
        %v311 = vunpack.c.l.b16 %v279
        %v312 = vunpack.c.l.b16 %v280
        %v313 = vunpack.c.l.b16 %v281
        %v314 = vunpack.c.l.b16 %v282
        %v315 = vunpack.c.l.b16 %v283
        %v316 = vunpack.c.l.b16 %v284
        %v317 = vunpack.c.l.b16 %v285
        %v318 = vunpack.c.l.b16 %v286
        %v319 = vunpack.c.l.b16 %v287
        %v320 = vunpack.c.l.b16 %v288
        %v321 = vunpack.c.l.b16 %v289
        %v322 = vunpack.c.l.b16 %v290
        %v323 = vunpack.c.l.b16 %v291
        %v324 = vunpack.c.l.b16 %v292
        %v325 = vunpack.c.l.b16 %v293
        %v326 = vpack.c.b16 %v311, %v310
        %v327 = vpack.c.b16 %v313, %v312
        %v328 = vpack.c.b16 %v315, %v314
        %v329 = vpack.c.b16 %v317, %v316
        %v330 = vpack.c.b16 %v319, %v318
        %v331 = vpack.c.b16 %v321, %v320
        %v332 = vpack.c.b16 %v323, %v322
        %v333 = vpack.c.b16 %v325, %v324
        %342 = vmatprep.subr.bf16.mxu0 0
        %343 = vmatpush1.bf16.msra.mxu0 %v326
        %344 = vmatprep.subr.bf16.mxu0 0
        %345 = vmatpush1.bf16.msra.mxu0 %v327
        %346 = vmatprep.subr.bf16.mxu0 0
        %347 = vmatpush1.bf16.msra.mxu0 %v328
        %348 = vmatprep.subr.bf16.mxu0 0
        %349 = vmatpush1.bf16.msra.mxu0 %v329
        %350 = vmatprep.subr.bf16.mxu0 0
        %351 = vmatpush1.bf16.msra.mxu0 %v330
        %352 = vmatprep.subr.bf16.mxu0 0
        %353 = vmatpush1.bf16.msra.mxu0 %v331
        %354 = vmatprep.subr.bf16.mxu0 0
        %355 = vmatpush1.bf16.msra.mxu0 %v332
        %356 = vmatprep.subr.bf16.mxu0 0
        %357 = vmatpush1.bf16.msra.mxu0 %v333
        %358 = vmatprep.subr.bf16.mxu0 0
        %359 = vmatpush1.bf16.msra.mxu0 0
        %360 = vmatprep.subr.bf16.mxu0 0
        %361 = vmatpush1.bf16.msra.mxu0 0
        %362 = vmatprep.subr.bf16.mxu0 0
        %363 = vmatpush1.bf16.msra.mxu0 0
        %364 = vmatprep.subr.bf16.mxu0 0
        %365 = vmatpush1.bf16.msra.mxu0 0
        %366 = vmatprep.subr.bf16.mxu0 0
        %367 = vmatpush1.bf16.msra.mxu0 0
        %368 = vmatprep.subr.bf16.mxu0 0
        %369 = vmatpush1.bf16.msra.mxu0 0
        %370 = vmatprep.subr.bf16.mxu0 0
        %371 = vmatpush1.bf16.msra.mxu0 0
        %372 = vmatprep.subr.bf16.mxu0 0
        %373 = vmatpush1.bf16.msra.mxu0 0
        %374 = vmatprep.mubr.bf16.mxu0 0
        %375 = vmatmul.mubr.bf16.gmra.mrb[0].mxu0 %v276
        %v376 = vpop.f32.mrb[0].mxu0
        %v377 = vadd.f32 0.0, %v376
        %v378 = vpop.f32.mrb[0].mxu0
        %v379 = vpop.f32.mrb[0].mxu0
        %v380 = vadd.f32 0.0, %v379
        %v381 = vpop.f32.mrb[0].mxu0
        %382 = vmatprep.mubr.bf16.mxu0 0
        %383 = vmatmul.mubr.bf16.gmra.mrb[0].mxu0 %v277
        %v384 = vpop.f32.mrb[0].mxu0
        %v385 = vadd.f32 0.0, %v384
        %v386 = vpop.f32.mrb[0].mxu0
        %v387 = vpop.f32.mrb[0].mxu0
        %v388 = vadd.f32 0.0, %v387
        %v389 = vpop.f32.mrb[0].mxu0
        %390 = vdwg.mxu0
        %v391 = vadd.f32 %v268, %v377
        %v392 = vadd.f32 %v269, %v380
        %v393 = vadd.f32 %v270, %v385
        %v394 = vadd.f32 %v271, %v388
        %395 = vst [vmem:[#allocation2] sm:$0xff] %v391
        %396 = vst [vmem:[#allocation2 + $0x8] sm:$0xff] %v392
        %397 = vst [vmem:[#allocation2 + $0x10] sm:$0xff] %v393
        %398 = vst [vmem:[#allocation2 + $0x18] sm:$0xff] %v394
        // Predicated region
        $region41: #{transformer_decoder_layer.8} parent=31 // pred_check
          %p399 = pneg %p260
        $region42: #{transformer_decoder_layer.8} parent=31 // pred_check_branch
          %401 = sbr.rel (%p399) target = $region44
        $region43: #{transformer_decoder_layer.8} parent=31 // pred_region
          %v402 = vld [vmem:[#allocation2] sm:$0xff]
          %v403 = vld [vmem:[#allocation2 + $0x8] sm:$0xff]
          %v404 = vld [vmem:[#allocation2 + $0x10] sm:$0xff]
          %v405 = vld [vmem:[#allocation2 + $0x18] sm:$0xff]
          %v406 = vld [vmem:[%s257] sm:$0x1]
          %v408 = vlaneseq
          %v409 = vshrl.u32 %v408, 7
          %v410 = vsub.s32 0, %v409
          %v411 = vrot.slane %v406, %v410
          %v413 = vadd.f32 %v402, %v411
          %v414 = vadd.f32 %v403, %v411
          %v415 = vadd.f32 %v404, %v411
          %v416 = vadd.f32 %v405, %v411
          %v417 = vpack.c.bf16 %v414, %v413
          %v418 = vpack.c.bf16 %v416, %v415
          %v421 = vunpack.c.l.b16 %v417
          %v422 = vunpack.c.h.b16 %v417
          %v423 = vunpack.c.l.b16 %v418
          %v424 = vunpack.c.h.b16 %v418
          %v425 = vpack.c.b16 %v421, %v421
          %v426 = vpack.c.b16 %v422, %v422
          %v427 = vpack.c.b16 %v423, %v423
          %v428 = vpack.c.b16 %v424, %v424
          %433 = vst [vmem:[%s244] sm:$0xf] %v425
          %434 = vst [vmem:[%s244 + $0x4] sm:$0xf] %v426
          %435 = vst [vmem:[%s244 + $0x8] sm:$0xf] %v427
          %436 = vst [vmem:[%s244 + $0xc] sm:$0xf] %v428
        $region44: #{transformer_decoder_layer.8} parent=31 // pred_fallthru
          _
        %s437 = sand.u32 %s128, 1
        %s438 = sand.u32 %s128, 1
        %s439 = smul.addr %s438, 16
        %s440 = scalar_lea.vmem [#allocation5], %s439
        // Predicated region
        $region45: #{transformer_decoder_layer.8} parent=31 // pred_check
          %p441 = pneg %p138
        $region46: #{transformer_decoder_layer.8} parent=31 // pred_check_branch
          %443 = sbr.rel (%p441) target = $region48
        $region47: #{transformer_decoder_layer.8} parent=31 // pred_region
          %s444 = smul.u32 4, %s22
          %s445 = smul.addr %s444, 3
          %s446 = sadd.s32 %s23, %s445
          %s447 = smul.addr %s446, 4
          %s448 = scalar_lea.vmem %s3, %s447
          // Predicated region
          $region49: #{transformer_decoder_layer.8} parent=47 // pred_check
            _
          $region50: #{transformer_decoder_layer.8} parent=47 // pred_check_branch
            %450 = sbr.rel (0) target = $region52
          $region51: #{transformer_decoder_layer.8} parent=47 // pred_region
            // Predicated region
            $region53: #{transformer_decoder_layer.8} parent=51 // pred_check
              _
            $region54: #{transformer_decoder_layer.8} parent=51 // pred_check_branch
              %452 = sbr.rel target = $region56
            $region55: #{transformer_decoder_layer.8} parent=51 // pred_region
              // Predicated region
              $region68: #{transformer_decoder_layer.8} parent=55 // pred_check
                _
              $region69: #{transformer_decoder_layer.8} parent=55 // pred_check_branch
                %473 = sbr.rel (0) target = $region71
              $region70: #{transformer_decoder_layer.8} parent=55 // pred_region
                loop: start=0, step=1, limit=1
                $region72: #{transformer_decoder_layer.8} parent=70 // loop_pre_header
                  _
                $region73: #{transformer_decoder_layer.8} parent=70 // loop_header
                  %s475 = sphi 0, %s479
                  %p476 = scmp.ge.s32.totalorder %s475, 1
                  %s480 = sphi %s440, %s440
                  %s481 = sphi %s448, %s448
                $region74: #{transformer_decoder_layer.8} parent=70 // loop_header_branch
                  %478 = sbr.rel (%p476) target = $region78
                $region75: #{transformer_decoder_layer.8} parent=70 // loop_body
                  _
                $region76: #{transformer_decoder_layer.8} parent=70 // loop_footer
                  %s479 = sadd.s32 1, %s475
                $region77: #{transformer_decoder_layer.8} parent=70 // loop_footer_branch
                  %474 = sbr.rel target = $region73
                $region78: #{transformer_decoder_layer.8} parent=70 // loop_exit
                  _
                loop: start=0, step=1, limit=1
                $region79: #{transformer_decoder_layer.8} parent=70 // loop_pre_header
                  _
                $region80: #{transformer_decoder_layer.8} parent=70 // loop_header
                  %s484 = sphi 0, %s488
                  %p485 = scmp.ge.s32.totalorder %s484, 1
                  %s489 = sphi %s440, %s440
                  %s490 = sphi %s448, %s448
                $region81: #{transformer_decoder_layer.8} parent=70 // loop_header_branch
                  %487 = sbr.rel (%p485) target = $region85
                $region82: #{transformer_decoder_layer.8} parent=70 // loop_body
                  %v491 = vld [vmem:[%s489] sm:$0xf]
                  %492 = vst [vmem:[%s490] sm:$0xf] %v491
                  %v493 = vld [vmem:[%s489 + $0x4] sm:$0xf]
                  %494 = vst [vmem:[%s490 + $0xc] sm:$0xf] %v493
                  %v495 = vld [vmem:[%s489 + $0x8] sm:$0xf]
                  %496 = vst [vmem:[%s490 + $0x18] sm:$0xf] %v495
                  %v497 = vld [vmem:[%s489 + $0xc] sm:$0xf]
                  %498 = vst [vmem:[%s490 + $0x24] sm:$0xf] %v497
                $region83: #{transformer_decoder_layer.8} parent=70 // loop_footer
                  %s488 = sadd.s32 1, %s484
                $region84: #{transformer_decoder_layer.8} parent=70 // loop_footer_branch
                  %483 = sbr.rel target = $region80
                $region85: #{transformer_decoder_layer.8} parent=70 // loop_exit
                  _
              $region71: #{transformer_decoder_layer.8} parent=55 // pred_fallthru
                _
            $region56: #{transformer_decoder_layer.8} parent=51 // pred_fallthru
              _
            // Predicated region
            $region57: #{transformer_decoder_layer.8} parent=51 // pred_check
              _
            $region58: #{transformer_decoder_layer.8} parent=51 // pred_check_branch
              %454 = sbr.rel (0) target = $region60
            $region59: #{transformer_decoder_layer.8} parent=51 // pred_region
              loop: start=0, step=1, limit=1
              $region61: #{transformer_decoder_layer.8} parent=59 // loop_pre_header
                _
              $region62: #{transformer_decoder_layer.8} parent=59 // loop_header
                %s457 = sphi 0, %s461
                %p458 = scmp.ge.s32.totalorder %s457, 1
                %s462 = sphi %s440, %s440
                %s463 = sphi %s448, %s448
              $region63: #{transformer_decoder_layer.8} parent=59 // loop_header_branch
                %460 = sbr.rel (%p458) target = $region67
              $region64: #{transformer_decoder_layer.8} parent=59 // loop_body
                %v464 = vld [vmem:[%s462] sm:$0xf]
                %465 = vst [vmem:[%s463] sm:$0xf] %v464
                %v466 = vld [vmem:[%s462 + $0x4] sm:$0xf]
                %467 = vst [vmem:[%s463 + $0xc] sm:$0xf] %v466
                %v468 = vld [vmem:[%s462 + $0x8] sm:$0xf]
                %469 = vst [vmem:[%s463 + $0x18] sm:$0xf] %v468
                %v470 = vld [vmem:[%s462 + $0xc] sm:$0xf]
                %471 = vst [vmem:[%s463 + $0x24] sm:$0xf] %v470
              $region65: #{transformer_decoder_layer.8} parent=59 // loop_footer
                %s461 = sadd.s32 1, %s457
              $region66: #{transformer_decoder_layer.8} parent=59 // loop_footer_branch
                %456 = sbr.rel target = $region62
              $region67: #{transformer_decoder_layer.8} parent=59 // loop_exit
                _
            $region60: #{transformer_decoder_layer.8} parent=51 // pred_fallthru
              _
          $region52: #{transformer_decoder_layer.8} parent=47 // pred_fallthru
            _
          %499 = vnop
        $region48: #{transformer_decoder_layer.8} parent=31 // pred_fallthru
          _
      $region32: #{transformer_decoder_layer.8} parent=5 // pred_fallthru
        _
      %p500 = scmp.le.s32.totalorder 2, %s12
      // Predicated region
      $region86: #{transformer_decoder_layer.8} parent=5 // pred_check
        %p501 = pneg %p500
      $region87: #{transformer_decoder_layer.8} parent=5 // pred_check_branch
        %503 = sbr.rel (%p501) target = $region89
      $region88: #{transformer_decoder_layer.8} parent=5 // pred_region
        %s504 = ssub.s32 %s12, 2
        // Predicated region
        $region90: #{transformer_decoder_layer.8} parent=88 // pred_check
          %p505 = pneg %p144
        $region91: #{transformer_decoder_layer.8} parent=88 // pred_check_branch
          %507 = sbr.rel (%p505) target = $region93
        $region92: #{transformer_decoder_layer.8} parent=88 // pred_region
          %s508 = sand.u32 %s129, 1
          %s509 = sand.u32 %s129, 1
          %s510 = smul.addr %s509, 16
          %s511 = scalar_lea.vmem [#allocation5], %s510
        $region93: #{transformer_decoder_layer.8} parent=88 // pred_fallthru
          _
      $region89: #{transformer_decoder_layer.8} parent=5 // pred_fallthru
        _
    $region6: #{transformer_decoder_layer.8} parent=1 // loop_footer
      %s16 = sadd.s32 1, %s12
    $region7: #{transformer_decoder_layer.8} parent=1 // loop_footer_branch
      %11 = sbr.rel target = $region3
    $region8: #{transformer_decoder_layer.8} parent=1 // loop_exit
      _
    %512 = vsyncpa [#allocation4], 1
    %s513 = scalar_lea.sflag [#allocation4], 1
    %514 = vsyncpa %s513, 1

// kernel: transformer_decoder_layer.11
$region0: #{transformer_decoder_layer.11}
  #allocation0 [shape = 'u32[]', space=smem, size = 0x4, offset = 0x4, fixed_abs, tag = 'smem constant byte address 0x4 - core index']
  #allocation1 [shape = 'u32[144,128]{1,0:T(1,128)}', space=vmem, size = 0x12000, scoped, tag = 'internal scratch']
  #allocation2 [shape = 'f32[32,128]{1,0:T(8,128)}', space=vmem, size = 0x4000, scoped, tag = 'scratch operand']
  %s0 = inlined_call_operand.vmem [shape: bf16[32,128], index: 0, kind: input, shape index: {}]
  %s1 = inlined_call_operand.vmem [shape: bf16[128,128], index: 1, kind: input, shape index: {}]
  %s2 = inlined_call_operand.vmem [shape: f32[1,128], index: 2, kind: input, shape index: {}]
  %s3 = inlined_call_operand.vmem [shape: bf16[32,128], index: 3, kind: output, shape index: {}]
  %s4 = sld [smem:[#allocation0]]
  $region30: #{transformer_decoder_layer.11} parent=0
    _
  %s6 = ssub.s32 1, %s4
  %s7 = scalar_select 0, %s6, %s4
  // Predicated region
  $region2: #{transformer_decoder_layer.11} parent=0 // pred_check
    _
  $region3: #{transformer_decoder_layer.11} parent=0 // pred_check_branch
    %9 = sbr.rel (0) target = $region5
  $region4: #{transformer_decoder_layer.11} parent=0 // pred_region
    _
  $region5: #{transformer_decoder_layer.11} parent=0 // pred_fallthru
    _
  // Predicated region
  $region6: #{transformer_decoder_layer.11} parent=0 // pred_check
    _
  $region7: #{transformer_decoder_layer.11} parent=0 // pred_check_branch
    %11 = sbr.rel (0) target = $region9
  $region8: #{transformer_decoder_layer.11} parent=0 // pred_region
    _
  $region9: #{transformer_decoder_layer.11} parent=0 // pred_fallthru
    _
  // Predicated region
  $region10: #{transformer_decoder_layer.11} parent=0 // pred_check
    _
  $region11: #{transformer_decoder_layer.11} parent=0 // pred_check_branch
    %13 = sbr.rel (0) target = $region13
  $region12: #{transformer_decoder_layer.11} parent=0 // pred_region
    _
  $region13: #{transformer_decoder_layer.11} parent=0 // pred_fallthru
    _
  %p15 = scmp.eq.s32.totalorder 0, 0
  // Predicated region
  $region14: #{transformer_decoder_layer.11} parent=0 // pred_check
    %p16 = pneg %p15
  $region15: #{transformer_decoder_layer.11} parent=0 // pred_check_branch
    %18 = sbr.rel (%p16) target = $region17
  $region16: #{transformer_decoder_layer.11} parent=0 // pred_region
    %19 = vst [vmem:[#allocation2] sm:$0xff] 0.0
    %20 = vst [vmem:[#allocation2 + $0x8] sm:$0xff] 0.0
    %21 = vst [vmem:[#allocation2 + $0x10] sm:$0xff] 0.0
    %22 = vst [vmem:[#allocation2 + $0x18] sm:$0xff] 0.0
  $region17: #{transformer_decoder_layer.11} parent=0 // pred_fallthru
    _
  %v23 = vld [vmem:[#allocation2] sm:$0xff]
  %v24 = vld [vmem:[#allocation2 + $0x8] sm:$0xff]
  %v25 = vld [vmem:[#allocation2 + $0x10] sm:$0xff]
  %v26 = vld [vmem:[#allocation2 + $0x18] sm:$0xff]
  %v27 = vld [vmem:[%s0] sm:$0xf]
  %v28 = vld [vmem:[%s0 + $0x4] sm:$0xf]
  %v29 = vld [vmem:[%s0 + $0x8] sm:$0xf]
  %v30 = vld [vmem:[%s0 + $0xc] sm:$0xf]
  %v31 = vld [vmem:[%s1] sm:$0xf]
  %v32 = vld [vmem:[%s1 + $0x4] sm:$0xf]
  %v33 = vld [vmem:[%s1 + $0x8] sm:$0xf]
  %v34 = vld [vmem:[%s1 + $0xc] sm:$0xf]
  %v35 = vld [vmem:[%s1 + $0x10] sm:$0xf]
  %v36 = vld [vmem:[%s1 + $0x14] sm:$0xf]
  %v37 = vld [vmem:[%s1 + $0x18] sm:$0xf]
  %v38 = vld [vmem:[%s1 + $0x1c] sm:$0xf]
  %v39 = vld [vmem:[%s1 + $0x20] sm:$0xf]
  %v40 = vld [vmem:[%s1 + $0x24] sm:$0xf]
  %v41 = vld [vmem:[%s1 + $0x28] sm:$0xf]
  %v42 = vld [vmem:[%s1 + $0x2c] sm:$0xf]
  %v43 = vld [vmem:[%s1 + $0x30] sm:$0xf]
  %v44 = vld [vmem:[%s1 + $0x34] sm:$0xf]
  %v45 = vld [vmem:[%s1 + $0x38] sm:$0xf]
  %v46 = vld [vmem:[%s1 + $0x3c] sm:$0xf]
  %v51 = vunpack.c.l.b16 %v27
  %v52 = vunpack.c.l.b16 %v28
  %v53 = vunpack.c.l.b16 %v29
  %v54 = vunpack.c.l.b16 %v30
  %v55 = vpack.c.b16 %v52, %v51
  %v56 = vpack.c.b16 %v54, %v53
  %v75 = vunpack.c.l.b16 %v31
  %v76 = vunpack.c.l.b16 %v32
  %v77 = vunpack.c.l.b16 %v33
  %v78 = vunpack.c.l.b16 %v34
  %v79 = vunpack.c.l.b16 %v35
  %v80 = vunpack.c.l.b16 %v36
  %v81 = vunpack.c.l.b16 %v37
  %v82 = vunpack.c.l.b16 %v38
  %v83 = vunpack.c.l.b16 %v39
  %v84 = vunpack.c.l.b16 %v40
  %v85 = vunpack.c.l.b16 %v41
  %v86 = vunpack.c.l.b16 %v42
  %v87 = vunpack.c.l.b16 %v43
  %v88 = vunpack.c.l.b16 %v44
  %v89 = vunpack.c.l.b16 %v45
  %v90 = vunpack.c.l.b16 %v46
  %v91 = vpack.c.b16 %v76, %v75
  %v92 = vpack.c.b16 %v78, %v77
  %v93 = vpack.c.b16 %v80, %v79
  %v94 = vpack.c.b16 %v82, %v81
  %v95 = vpack.c.b16 %v84, %v83
  %v96 = vpack.c.b16 %v86, %v85
  %v97 = vpack.c.b16 %v88, %v87
  %v98 = vpack.c.b16 %v90, %v89
  %107 = vmatprep.subr.bf16.mxu0 0
  %108 = vmatpush1.bf16.msra.mxu0 %v91
  %109 = vmatprep.subr.bf16.mxu0 0
  %110 = vmatpush1.bf16.msra.mxu0 %v92
  %111 = vmatprep.subr.bf16.mxu0 0
  %112 = vmatpush1.bf16.msra.mxu0 %v93
  %113 = vmatprep.subr.bf16.mxu0 0
  %114 = vmatpush1.bf16.msra.mxu0 %v94
  %115 = vmatprep.subr.bf16.mxu0 0
  %116 = vmatpush1.bf16.msra.mxu0 %v95
  %117 = vmatprep.subr.bf16.mxu0 0
  %118 = vmatpush1.bf16.msra.mxu0 %v96
  %119 = vmatprep.subr.bf16.mxu0 0
  %120 = vmatpush1.bf16.msra.mxu0 %v97
  %121 = vmatprep.subr.bf16.mxu0 0
  %122 = vmatpush1.bf16.msra.mxu0 %v98
  %123 = vmatprep.subr.bf16.mxu0 0
  %124 = vmatpush1.bf16.msra.mxu0 0
  %125 = vmatprep.subr.bf16.mxu0 0
  %126 = vmatpush1.bf16.msra.mxu0 0
  %127 = vmatprep.subr.bf16.mxu0 0
  %128 = vmatpush1.bf16.msra.mxu0 0
  %129 = vmatprep.subr.bf16.mxu0 0
  %130 = vmatpush1.bf16.msra.mxu0 0
  %131 = vmatprep.subr.bf16.mxu0 0
  %132 = vmatpush1.bf16.msra.mxu0 0
  %133 = vmatprep.subr.bf16.mxu0 0
  %134 = vmatpush1.bf16.msra.mxu0 0
  %135 = vmatprep.subr.bf16.mxu0 0
  %136 = vmatpush1.bf16.msra.mxu0 0
  %137 = vmatprep.subr.bf16.mxu0 0
  %138 = vmatpush1.bf16.msra.mxu0 0
  %139 = vmatprep.mubr.bf16.mxu0 0
  %140 = vmatmul.mubr.bf16.gmra.mrb[0].mxu0 %v55
  %v141 = vpop.f32.mrb[0].mxu0
  %v142 = vadd.f32 0.0, %v141
  %v143 = vpop.f32.mrb[0].mxu0
  %v144 = vpop.f32.mrb[0].mxu0
  %v145 = vadd.f32 0.0, %v144
  %v146 = vpop.f32.mrb[0].mxu0
  %147 = vmatprep.mubr.bf16.mxu0 0
  %148 = vmatmul.mubr.bf16.gmra.mrb[0].mxu0 %v56
  %v149 = vpop.f32.mrb[0].mxu0
  %v150 = vadd.f32 0.0, %v149
  %v151 = vpop.f32.mrb[0].mxu0
  %v152 = vpop.f32.mrb[0].mxu0
  %v153 = vadd.f32 0.0, %v152
  %v154 = vpop.f32.mrb[0].mxu0
  %155 = vdwg.mxu0
  %v156 = vadd.f32 %v23, %v142
  %v157 = vadd.f32 %v24, %v145
  %v158 = vadd.f32 %v25, %v150
  %v159 = vadd.f32 %v26, %v153
  %160 = vst [vmem:[#allocation2] sm:$0xff] %v156
  %161 = vst [vmem:[#allocation2 + $0x8] sm:$0xff] %v157
  %162 = vst [vmem:[#allocation2 + $0x10] sm:$0xff] %v158
  %163 = vst [vmem:[#allocation2 + $0x18] sm:$0xff] %v159
  // Predicated region
  $region18: #{transformer_decoder_layer.11} parent=0 // pred_check
    %p164 = pneg %p15
  $region19: #{transformer_decoder_layer.11} parent=0 // pred_check_branch
    %166 = sbr.rel (%p164) target = $region21
  $region20: #{transformer_decoder_layer.11} parent=0 // pred_region
    %v167 = vld [vmem:[#allocation2] sm:$0xff]
    %v168 = vld [vmem:[#allocation2 + $0x8] sm:$0xff]
    %v169 = vld [vmem:[#allocation2 + $0x10] sm:$0xff]
    %v170 = vld [vmem:[#allocation2 + $0x18] sm:$0xff]
    %v171 = vld [vmem:[%s2] sm:$0x1]
    %v173 = vlaneseq
    %v174 = vshrl.u32 %v173, 7
    %v175 = vsub.s32 0, %v174
    %v176 = vrot.slane %v171, %v175
    %v178 = vadd.f32 %v167, %v176
    %v179 = vadd.f32 %v168, %v176
    %v180 = vadd.f32 %v169, %v176
    %v181 = vadd.f32 %v170, %v176
    %v182 = vpack.c.bf16 %v179, %v178
    %v183 = vpack.c.bf16 %v181, %v180
    %v186 = vunpack.c.l.b16 %v182
    %v187 = vunpack.c.h.b16 %v182
    %v188 = vunpack.c.l.b16 %v183
    %v189 = vunpack.c.h.b16 %v183
    %v190 = vpack.c.b16 %v186, %v186
    %v191 = vpack.c.b16 %v187, %v187
    %v192 = vpack.c.b16 %v188, %v188
    %v193 = vpack.c.b16 %v189, %v189
    %198 = vst [vmem:[%s3] sm:$0xf] %v190
    %199 = vst [vmem:[%s3 + $0x4] sm:$0xf] %v191
    %200 = vst [vmem:[%s3 + $0x8] sm:$0xf] %v192
    %201 = vst [vmem:[%s3 + $0xc] sm:$0xf] %v193
  $region21: #{transformer_decoder_layer.11} parent=0 // pred_fallthru
    _
  // Predicated region
  $region22: #{transformer_decoder_layer.11} parent=0 // pred_check
    _
  $region23: #{transformer_decoder_layer.11} parent=0 // pred_check_branch
    %203 = sbr.rel (0) target = $region25
  $region24: #{transformer_decoder_layer.11} parent=0 // pred_region
    _
  $region25: #{transformer_decoder_layer.11} parent=0 // pred_fallthru
    _
  // Predicated region
  $region26: #{transformer_decoder_layer.11} parent=0 // pred_check
    _
  $region27: #{transformer_decoder_layer.11} parent=0 // pred_check_branch
    %205 = sbr.rel (0) target = $region29
  $region28: #{transformer_decoder_layer.11} parent=0 // pred_region
    _
  $region29: #{transformer_decoder_layer.11} parent=0 // pred_fallthru
    _

// kernel: transformer_decoder_layer.10
$region0: #{transformer_decoder_layer.10}
  #allocation0 [shape = 'u32[]', space=smem, size = 0x4, offset = 0x4, fixed_abs, tag = 'smem constant byte address 0x4 - core index']
  #allocation1 [shape = 'u32[144,128]{1,0:T(1,128)}', space=vmem, size = 0x12000, scoped, tag = 'internal scratch']
  #allocation2 [shape = 'f32[32,128]{1,0:T(8,128)}', space=vmem, size = 0x4000, scoped, tag = 'scratch operand']
  %s0 = inlined_call_operand.vmem [shape: bf16[32,128], index: 0, kind: input, shape index: {}]
  %s1 = inlined_call_operand.vmem [shape: bf16[128,128], index: 1, kind: input, shape index: {}]
  %s2 = inlined_call_operand.vmem [shape: f32[1,128], index: 2, kind: input, shape index: {}]
  %s3 = inlined_call_operand.vmem [shape: f32[32,128], index: 3, kind: input, shape index: {}]
  %s4 = inlined_call_operand.vmem [shape: f32[1,128], index: 4, kind: input, shape index: {}]
  %s5 = inlined_call_operand.vmem [shape: f32[1,128], index: 5, kind: input, shape index: {}]
  %s6 = inlined_call_operand.vmem [shape: bf16[32,128], index: 6, kind: output, shape index: {}]
  %s7 = sld [smem:[#allocation0]]
  $region42: #{transformer_decoder_layer.10} parent=0
    _
  %s9 = ssub.s32 1, %s7
  %s10 = scalar_select 0, %s9, %s7
  // Predicated region
  $region2: #{transformer_decoder_layer.10} parent=0 // pred_check
    _
  $region3: #{transformer_decoder_layer.10} parent=0 // pred_check_branch
    %12 = sbr.rel (0) target = $region5
  $region4: #{transformer_decoder_layer.10} parent=0 // pred_region
    _
  $region5: #{transformer_decoder_layer.10} parent=0 // pred_fallthru
    _
  // Predicated region
  $region6: #{transformer_decoder_layer.10} parent=0 // pred_check
    _
  $region7: #{transformer_decoder_layer.10} parent=0 // pred_check_branch
    %14 = sbr.rel (0) target = $region9
  $region8: #{transformer_decoder_layer.10} parent=0 // pred_region
    _
  $region9: #{transformer_decoder_layer.10} parent=0 // pred_fallthru
    _
  // Predicated region
  $region10: #{transformer_decoder_layer.10} parent=0 // pred_check
    _
  $region11: #{transformer_decoder_layer.10} parent=0 // pred_check_branch
    %16 = sbr.rel (0) target = $region13
  $region12: #{transformer_decoder_layer.10} parent=0 // pred_region
    _
  $region13: #{transformer_decoder_layer.10} parent=0 // pred_fallthru
    _
  // Predicated region
  $region14: #{transformer_decoder_layer.10} parent=0 // pred_check
    _
  $region15: #{transformer_decoder_layer.10} parent=0 // pred_check_branch
    %18 = sbr.rel (0) target = $region17
  $region16: #{transformer_decoder_layer.10} parent=0 // pred_region
    _
  $region17: #{transformer_decoder_layer.10} parent=0 // pred_fallthru
    _
  // Predicated region
  $region18: #{transformer_decoder_layer.10} parent=0 // pred_check
    _
  $region19: #{transformer_decoder_layer.10} parent=0 // pred_check_branch
    %20 = sbr.rel (0) target = $region21
  $region20: #{transformer_decoder_layer.10} parent=0 // pred_region
    _
  $region21: #{transformer_decoder_layer.10} parent=0 // pred_fallthru
    _
  // Predicated region
  $region22: #{transformer_decoder_layer.10} parent=0 // pred_check
    _
  $region23: #{transformer_decoder_layer.10} parent=0 // pred_check_branch
    %22 = sbr.rel (0) target = $region25
  $region24: #{transformer_decoder_layer.10} parent=0 // pred_region
    _
  $region25: #{transformer_decoder_layer.10} parent=0 // pred_fallthru
    _
  %p24 = scmp.eq.s32.totalorder 0, 0
  // Predicated region
  $region26: #{transformer_decoder_layer.10} parent=0 // pred_check
    %p25 = pneg %p24
  $region27: #{transformer_decoder_layer.10} parent=0 // pred_check_branch
    %27 = sbr.rel (%p25) target = $region29
  $region28: #{transformer_decoder_layer.10} parent=0 // pred_region
    %28 = vst [vmem:[#allocation2] sm:$0xff] 0.0
    %29 = vst [vmem:[#allocation2 + $0x8] sm:$0xff] 0.0
    %30 = vst [vmem:[#allocation2 + $0x10] sm:$0xff] 0.0
    %31 = vst [vmem:[#allocation2 + $0x18] sm:$0xff] 0.0
  $region29: #{transformer_decoder_layer.10} parent=0 // pred_fallthru
    _
  %v32 = vld [vmem:[#allocation2] sm:$0xff]
  %v33 = vld [vmem:[#allocation2 + $0x8] sm:$0xff]
  %v34 = vld [vmem:[#allocation2 + $0x10] sm:$0xff]
  %v35 = vld [vmem:[#allocation2 + $0x18] sm:$0xff]
  %v36 = vld [vmem:[%s0] sm:$0xf]
  %v37 = vld [vmem:[%s0 + $0x4] sm:$0xf]
  %v38 = vld [vmem:[%s0 + $0x8] sm:$0xf]
  %v39 = vld [vmem:[%s0 + $0xc] sm:$0xf]
  %v40 = vld [vmem:[%s1] sm:$0xf]
  %v41 = vld [vmem:[%s1 + $0x4] sm:$0xf]
  %v42 = vld [vmem:[%s1 + $0x8] sm:$0xf]
  %v43 = vld [vmem:[%s1 + $0xc] sm:$0xf]
  %v44 = vld [vmem:[%s1 + $0x10] sm:$0xf]
  %v45 = vld [vmem:[%s1 + $0x14] sm:$0xf]
  %v46 = vld [vmem:[%s1 + $0x18] sm:$0xf]
  %v47 = vld [vmem:[%s1 + $0x1c] sm:$0xf]
  %v48 = vld [vmem:[%s1 + $0x20] sm:$0xf]
  %v49 = vld [vmem:[%s1 + $0x24] sm:$0xf]
  %v50 = vld [vmem:[%s1 + $0x28] sm:$0xf]
  %v51 = vld [vmem:[%s1 + $0x2c] sm:$0xf]
  %v52 = vld [vmem:[%s1 + $0x30] sm:$0xf]
  %v53 = vld [vmem:[%s1 + $0x34] sm:$0xf]
  %v54 = vld [vmem:[%s1 + $0x38] sm:$0xf]
  %v55 = vld [vmem:[%s1 + $0x3c] sm:$0xf]
  %v60 = vunpack.c.l.b16 %v36
  %v61 = vunpack.c.l.b16 %v37
  %v62 = vunpack.c.l.b16 %v38
  %v63 = vunpack.c.l.b16 %v39
  %v64 = vpack.c.b16 %v61, %v60
  %v65 = vpack.c.b16 %v63, %v62
  %v84 = vunpack.c.l.b16 %v40
  %v85 = vunpack.c.l.b16 %v41
  %v86 = vunpack.c.l.b16 %v42
  %v87 = vunpack.c.l.b16 %v43
  %v88 = vunpack.c.l.b16 %v44
  %v89 = vunpack.c.l.b16 %v45
  %v90 = vunpack.c.l.b16 %v46
  %v91 = vunpack.c.l.b16 %v47
  %v92 = vunpack.c.l.b16 %v48
  %v93 = vunpack.c.l.b16 %v49
  %v94 = vunpack.c.l.b16 %v50
  %v95 = vunpack.c.l.b16 %v51
  %v96 = vunpack.c.l.b16 %v52
  %v97 = vunpack.c.l.b16 %v53
  %v98 = vunpack.c.l.b16 %v54
  %v99 = vunpack.c.l.b16 %v55
  %v100 = vpack.c.b16 %v85, %v84
  %v101 = vpack.c.b16 %v87, %v86
  %v102 = vpack.c.b16 %v89, %v88
  %v103 = vpack.c.b16 %v91, %v90
  %v104 = vpack.c.b16 %v93, %v92
  %v105 = vpack.c.b16 %v95, %v94
  %v106 = vpack.c.b16 %v97, %v96
  %v107 = vpack.c.b16 %v99, %v98
  %116 = vmatprep.subr.bf16.mxu0 0
  %117 = vmatpush1.bf16.msra.mxu0 %v100
  %118 = vmatprep.subr.bf16.mxu0 0
  %119 = vmatpush1.bf16.msra.mxu0 %v101
  %120 = vmatprep.subr.bf16.mxu0 0
  %121 = vmatpush1.bf16.msra.mxu0 %v102
  %122 = vmatprep.subr.bf16.mxu0 0
  %123 = vmatpush1.bf16.msra.mxu0 %v103
  %124 = vmatprep.subr.bf16.mxu0 0
  %125 = vmatpush1.bf16.msra.mxu0 %v104
  %126 = vmatprep.subr.bf16.mxu0 0
  %127 = vmatpush1.bf16.msra.mxu0 %v105
  %128 = vmatprep.subr.bf16.mxu0 0
  %129 = vmatpush1.bf16.msra.mxu0 %v106
  %130 = vmatprep.subr.bf16.mxu0 0
  %131 = vmatpush1.bf16.msra.mxu0 %v107
  %132 = vmatprep.subr.bf16.mxu0 0
  %133 = vmatpush1.bf16.msra.mxu0 0
  %134 = vmatprep.subr.bf16.mxu0 0
  %135 = vmatpush1.bf16.msra.mxu0 0
  %136 = vmatprep.subr.bf16.mxu0 0
  %137 = vmatpush1.bf16.msra.mxu0 0
  %138 = vmatprep.subr.bf16.mxu0 0
  %139 = vmatpush1.bf16.msra.mxu0 0
  %140 = vmatprep.subr.bf16.mxu0 0
  %141 = vmatpush1.bf16.msra.mxu0 0
  %142 = vmatprep.subr.bf16.mxu0 0
  %143 = vmatpush1.bf16.msra.mxu0 0
  %144 = vmatprep.subr.bf16.mxu0 0
  %145 = vmatpush1.bf16.msra.mxu0 0
  %146 = vmatprep.subr.bf16.mxu0 0
  %147 = vmatpush1.bf16.msra.mxu0 0
  %148 = vmatprep.mubr.bf16.mxu0 0
  %149 = vmatmul.mubr.bf16.gmra.mrb[0].mxu0 %v64
  %v150 = vpop.f32.mrb[0].mxu0
  %v151 = vadd.f32 0.0, %v150
  %v152 = vpop.f32.mrb[0].mxu0
  %v153 = vpop.f32.mrb[0].mxu0
  %v154 = vadd.f32 0.0, %v153
  %v155 = vpop.f32.mrb[0].mxu0
  %156 = vmatprep.mubr.bf16.mxu0 0
  %157 = vmatmul.mubr.bf16.gmra.mrb[0].mxu0 %v65
  %v158 = vpop.f32.mrb[0].mxu0
  %v159 = vadd.f32 0.0, %v158
  %v160 = vpop.f32.mrb[0].mxu0
  %v161 = vpop.f32.mrb[0].mxu0
  %v162 = vadd.f32 0.0, %v161
  %v163 = vpop.f32.mrb[0].mxu0
  %164 = vdwg.mxu0
  %v165 = vadd.f32 %v32, %v151
  %v166 = vadd.f32 %v33, %v154
  %v167 = vadd.f32 %v34, %v159
  %v168 = vadd.f32 %v35, %v162
  %169 = vst [vmem:[#allocation2] sm:$0xff] %v165
  %170 = vst [vmem:[#allocation2 + $0x8] sm:$0xff] %v166
  %171 = vst [vmem:[#allocation2 + $0x10] sm:$0xff] %v167
  %172 = vst [vmem:[#allocation2 + $0x18] sm:$0xff] %v168
  // Predicated region
  $region30: #{transformer_decoder_layer.10} parent=0 // pred_check
    %p173 = pneg %p24
  $region31: #{transformer_decoder_layer.10} parent=0 // pred_check_branch
    %175 = sbr.rel (%p173) target = $region33
  $region32: #{transformer_decoder_layer.10} parent=0 // pred_region
    %v176 = vld [vmem:[#allocation2] sm:$0xff]
    %v177 = vld [vmem:[#allocation2 + $0x8] sm:$0xff]
    %v178 = vld [vmem:[#allocation2 + $0x10] sm:$0xff]
    %v179 = vld [vmem:[#allocation2 + $0x18] sm:$0xff]
    %v180 = vld [vmem:[%s2] sm:$0x1]
    %v182 = vlaneseq
    %v183 = vshrl.u32 %v182, 7
    %v184 = vsub.s32 0, %v183
    %v185 = vrot.slane %v180, %v184
    %v187 = vadd.f32 %v176, %v185
    %v188 = vadd.f32 %v177, %v185
    %v189 = vadd.f32 %v178, %v185
    %v190 = vadd.f32 %v179, %v185
    %v191 = vld [vmem:[%s3] sm:$0xff]
    %v192 = vld [vmem:[%s3 + $0x8] sm:$0xff]
    %v193 = vld [vmem:[%s3 + $0x10] sm:$0xff]
    %v194 = vld [vmem:[%s3 + $0x18] sm:$0xff]
    %v195 = vadd.f32 %v187, %v191
    %v196 = vadd.f32 %v188, %v192
    %v197 = vadd.f32 %v189, %v193
    %v198 = vadd.f32 %v190, %v194
    %199 = vadd.xlane.f32.xlu0 %v195
    %v200 = vpop.xlane.xlu0 %199
    %201 = vadd.xlane.f32.xlu0 %v196
    %v202 = vpop.xlane.xlu0 %201
    %203 = vadd.xlane.f32.xlu0 %v197
    %v204 = vpop.xlane.xlu0 %203
    %205 = vadd.xlane.f32.xlu0 %v198
    %v206 = vpop.xlane.xlu0 %205
    %v207 = vrcp.pop 128.0
    %v208 = vmul.f32 %v200, %v207
    %v209 = vmul.f32 %v202, %v207
    %v210 = vmul.f32 %v204, %v207
    %v211 = vmul.f32 %v206, %v207
    %v212 = vsub.f32 %v195, %v208
    %v213 = vsub.f32 %v196, %v209
    %v214 = vsub.f32 %v197, %v210
    %v215 = vsub.f32 %v198, %v211
    %v216 = vmul.f32 %v212, %v212
    %v217 = vmul.f32 %v213, %v213
    %v218 = vmul.f32 %v214, %v214
    %v219 = vmul.f32 %v215, %v215
    %220 = vadd.xlane.f32.xlu0 %v216
    %v221 = vpop.xlane.xlu0 %220
    %222 = vadd.xlane.f32.xlu0 %v217
    %v223 = vpop.xlane.xlu0 %222
    %224 = vadd.xlane.f32.xlu0 %v218
    %v225 = vpop.xlane.xlu0 %224
    %226 = vadd.xlane.f32.xlu0 %v219
    %v227 = vpop.xlane.xlu0 %226
    %v228 = vmul.f32 %v221, %v207
    %v229 = vmul.f32 %v223, %v207
    %v230 = vmul.f32 %v225, %v207
    %v231 = vmul.f32 %v227, %v207
    %v232 = vadd.f32 %v228, 1e-05
    %v233 = vadd.f32 %v229, 1e-05
    %v234 = vadd.f32 %v230, 1e-05
    %v235 = vadd.f32 %v231, 1e-05
    %v236 = vrsqrt.pop %v232
    %v237 = vrsqrt.pop %v233
    %v238 = vrsqrt.pop %v234
    %v239 = vrsqrt.pop %v235
    %v240 = vmul.f32 %v212, %v236
    %v241 = vmul.f32 %v213, %v237
    %v242 = vmul.f32 %v214, %v238
    %v243 = vmul.f32 %v215, %v239
    %v244 = vld [vmem:[%s4] sm:$0x1]
    %v246 = vlaneseq
    %v247 = vshrl.u32 %v246, 7
    %v248 = vsub.s32 0, %v247
    %v249 = vrot.slane %v244, %v248
    %v251 = vmul.f32 %v240, %v249
    %v252 = vmul.f32 %v241, %v249
    %v253 = vmul.f32 %v242, %v249
    %v254 = vmul.f32 %v243, %v249
    %v255 = vld [vmem:[%s5] sm:$0x1]
    %v257 = vlaneseq
    %v258 = vshrl.u32 %v257, 7
    %v259 = vsub.s32 0, %v258
    %v260 = vrot.slane %v255, %v259
    %v262 = vadd.f32 %v251, %v260
    %v263 = vadd.f32 %v252, %v260
    %v264 = vadd.f32 %v253, %v260
    %v265 = vadd.f32 %v254, %v260
    %v266 = vpack.c.bf16 %v263, %v262
    %v267 = vpack.c.bf16 %v265, %v264
    %v270 = vunpack.c.l.b16 %v266
    %v271 = vunpack.c.h.b16 %v266
    %v272 = vunpack.c.l.b16 %v267
    %v273 = vunpack.c.h.b16 %v267
    %v274 = vpack.c.b16 %v270, %v270
    %v275 = vpack.c.b16 %v271, %v271
    %v276 = vpack.c.b16 %v272, %v272
    %v277 = vpack.c.b16 %v273, %v273
    %282 = vst [vmem:[%s6] sm:$0xf] %v274
    %283 = vst [vmem:[%s6 + $0x4] sm:$0xf] %v275
    %284 = vst [vmem:[%s6 + $0x8] sm:$0xf] %v276
    %285 = vst [vmem:[%s6 + $0xc] sm:$0xf] %v277
  $region33: #{transformer_decoder_layer.10} parent=0 // pred_fallthru
    _
  // Predicated region
  $region34: #{transformer_decoder_layer.10} parent=0 // pred_check
    _
  $region35: #{transformer_decoder_layer.10} parent=0 // pred_check_branch
    %287 = sbr.rel (0) target = $region37
  $region36: #{transformer_decoder_layer.10} parent=0 // pred_region
    _
  $region37: #{transformer_decoder_layer.10} parent=0 // pred_fallthru
    _
  // Predicated region
  $region38: #{transformer_decoder_layer.10} parent=0 // pred_check
    _
  $region39: #{transformer_decoder_layer.10} parent=0 // pred_check_branch
    %289 = sbr.rel (0) target = $region41
  $region40: #{transformer_decoder_layer.10} parent=0 // pred_region
    _
  $region41: #{transformer_decoder_layer.10} parent=0 // pred_fallthru
    _

// kernel: transformer_decoder_layer.9
$region0: #{transformer_decoder_layer.9}
  #allocation0 [shape = 'u32[]', space=smem, size = 0x4, offset = 0x4, fixed_abs, tag = 'smem constant byte address 0x4 - core index']
  #allocation1 [shape = 'u32[144,128]{1,0:T(1,128)}', space=vmem, size = 0x12000, scoped, tag = 'internal scratch']
  %s0 = inlined_call_operand.vmem [shape: bf16[2,16,384], index: 0, kind: input, shape index: {}, may-alias: {0,1,2}]
  %s1 = inlined_call_operand.vmem [shape: bf16[2,16,384], index: 1, kind: input, shape index: {}, may-alias: {0,1,2}]
  %s2 = inlined_call_operand.vmem [shape: bf16[2,16,384], index: 2, kind: input, shape index: {}, may-alias: {0,1,2}]
  %s3 = inlined_call_operand.vmem [shape: f32[2,1,16], index: 3, kind: input, shape index: {}]
  %s4 = inlined_call_operand.vmem [shape: f32[16,16], index: 4, kind: input, shape index: {}]
  %s5 = inlined_call_operand.vmem [shape: bf16[2,16,128], index: 5, kind: output, shape index: {}]
  %s6 = sld [smem:[#allocation0]]
  $region176: #{transformer_decoder_layer.9} parent=0
    _
  %s8 = ssub.s32 1, %s6
  %s9 = scalar_select 0, %s8, %s6
  $region1: #{transformer_decoder_layer.9} parent=0
    #allocation2 [shape = 'u8[8192]{0}', space=vmem, size = 0x2000, scoped, tag = 'input window, operand 0']
    #allocation3 [shape = 'u8[8192]{0}', space=vmem, size = 0x2000, scoped, tag = 'input window, operand 1']
    #allocation4 [shape = 'u8[8192]{0}', space=vmem, size = 0x2000, scoped, tag = 'input window, operand 2']
    loop: start=0, step=1, limit=4
    $region2: #{transformer_decoder_layer.9} parent=1 // loop_pre_header
      _
    $region3: #{transformer_decoder_layer.9} parent=1 // loop_header
      %s11 = sphi 0, %s15
      %p12 = scmp.ge.s32.totalorder %s11, 4
      %s18 = sphi 0, %s30
      %s19 = sphi 0, %s26
      %s20 = sphi 0, %s18
      %s21 = sphi 0, %s19
      %s22 = sphi 0, %s20
      %s23 = sphi 0, %s21
      %s35 = sphi 0, %s37
      %s38 = sphi 0, %s35
      %s39 = sphi 0, %s38
      %s55 = sphi 0, %s39
      %s61 = sphi 0, %s63
      %s64 = sphi 0, %s61
      %s65 = sphi 0, %s64
      %s81 = sphi 0, %s65
      %s87 = sphi 0, %s89
      %s90 = sphi 0, %s87
      %s91 = sphi 0, %s90
      %s107 = sphi 0, %s91
      %s113 = sphi 0, %s115
      %s116 = sphi 0, %s113
      %s117 = sphi 0, %s116
      %s133 = sphi 0, %s117
      %s139 = sphi 0, %s141
      %s142 = sphi 0, %s139
      %s143 = sphi 0, %s142
      %s159 = sphi 0, %s143
      %s167 = sphi 0, %s169
      %s170 = sphi 0, %s167
      %s171 = sphi 0, %s170
      %s187 = sphi 0, %s171
    $region4: #{transformer_decoder_layer.9} parent=1 // loop_header_branch
      %14 = sbr.rel (%p12) target = $region8
    $region5: #{transformer_decoder_layer.9} parent=1 // loop_body
      %s16 = ssub.s32 %s11, 1
      %s17 = ssub.s32 %s11, 2
      %s24 = sadd.s32 1, %s19
      %p25 = scmp.ge.s32.totalorder %s24, 1
      %s26 = scalar_select %p25, 0, %s24
      %s27 = sadd.s32 1, %s18
      %s28 = scalar_select %p25, %s27, %s18
      %p29 = scmp.ge.s32.totalorder %s28, 2
      %s30 = scalar_select %p29, 0, %s28
      %s31 = ssub.s32 %s18, %s30
      %s32 = ssub.s32 %s19, %s26
      %s33 = sor.u32 %s31, %s32
      %p34 = scmp.eq.s32.totalorder %s33, 0
      %s36 = sadd.s32 %s35, 1
      %s37 = scalar_select %p34, %s35, %s36
      %p40 = pneg %p34
      %p41 = scmp.eq.s32.totalorder %s11, 1
      %p42 = por %p40, %p41
      %p43 = scmp.ne.s32.totalorder %s35, %s38
      %p44 = scmp.eq.s32.totalorder %s11, 0
      %p45 = por %p43, %p44
      %p46 = scmp.ne.s32.totalorder %s35, %s38
      %p47 = scmp.eq.s32.totalorder %s16, 1
      %p48 = por %p46, %p47
      %p49 = scmp.ne.s32.totalorder %s38, %s39
      %p50 = scmp.eq.s32.totalorder %s16, 0
      %p51 = por %p49, %p50
      %p52 = scmp.ne.s32.totalorder %s38, %s39
      %p53 = scmp.eq.s32.totalorder %s17, 1
      %p54 = por %p52, %p53
      %p56 = scmp.ne.s32.totalorder %s39, %s55
      %p57 = scmp.eq.s32.totalorder %s17, 0
      %p58 = por %p56, %p57
      %s59 = ssub.s32 %s18, %s30
      %p60 = scmp.eq.s32.totalorder %s59, 0
      %s62 = sadd.s32 %s61, 1
      %s63 = scalar_select %p60, %s61, %s62
      %p66 = pneg %p60
      %p67 = scmp.eq.s32.totalorder %s11, 1
      %p68 = por %p66, %p67
      %p69 = scmp.ne.s32.totalorder %s61, %s64
      %p70 = scmp.eq.s32.totalorder %s11, 0
      %p71 = por %p69, %p70
      %p72 = scmp.ne.s32.totalorder %s61, %s64
      %p73 = scmp.eq.s32.totalorder %s16, 1
      %p74 = por %p72, %p73
      %p75 = scmp.ne.s32.totalorder %s64, %s65
      %p76 = scmp.eq.s32.totalorder %s16, 0
      %p77 = por %p75, %p76
      %p78 = scmp.ne.s32.totalorder %s64, %s65
      %p79 = scmp.eq.s32.totalorder %s17, 1
      %p80 = por %p78, %p79
      %p82 = scmp.ne.s32.totalorder %s65, %s81
      %p83 = scmp.eq.s32.totalorder %s17, 0
      %p84 = por %p82, %p83
      %s85 = ssub.s32 %s18, %s30
      %p86 = scmp.eq.s32.totalorder %s85, 0
      %s88 = sadd.s32 %s87, 1
      %s89 = scalar_select %p86, %s87, %s88
      %p92 = pneg %p86
      %p93 = scmp.eq.s32.totalorder %s11, 1
      %p94 = por %p92, %p93
      %p95 = scmp.ne.s32.totalorder %s87, %s90
      %p96 = scmp.eq.s32.totalorder %s11, 0
      %p97 = por %p95, %p96
      %p98 = scmp.ne.s32.totalorder %s87, %s90
      %p99 = scmp.eq.s32.totalorder %s16, 1
      %p100 = por %p98, %p99
      %p101 = scmp.ne.s32.totalorder %s90, %s91
      %p102 = scmp.eq.s32.totalorder %s16, 0
      %p103 = por %p101, %p102
      %p104 = scmp.ne.s32.totalorder %s90, %s91
      %p105 = scmp.eq.s32.totalorder %s17, 1
      %p106 = por %p104, %p105
      %p108 = scmp.ne.s32.totalorder %s91, %s107
      %p109 = scmp.eq.s32.totalorder %s17, 0
      %p110 = por %p108, %p109
      %s111 = ssub.s32 %s18, %s30
      %p112 = scmp.eq.s32.totalorder %s111, 0
      %s114 = sadd.s32 %s113, 1
      %s115 = scalar_select %p112, %s113, %s114
      %p118 = pneg %p112
      %p119 = scmp.eq.s32.totalorder %s11, 1
      %p120 = por %p118, %p119
      %p121 = scmp.ne.s32.totalorder %s113, %s116
      %p122 = scmp.eq.s32.totalorder %s11, 0
      %p123 = por %p121, %p122
      %p124 = scmp.ne.s32.totalorder %s113, %s116
      %p125 = scmp.eq.s32.totalorder %s16, 1
      %p126 = por %p124, %p125
      %p127 = scmp.ne.s32.totalorder %s116, %s117
      %p128 = scmp.eq.s32.totalorder %s16, 0
      %p129 = por %p127, %p128
      %p130 = scmp.ne.s32.totalorder %s116, %s117
      %p131 = scmp.eq.s32.totalorder %s17, 1
      %p132 = por %p130, %p131
      %p134 = scmp.ne.s32.totalorder %s117, %s133
      %p135 = scmp.eq.s32.totalorder %s17, 0
      %p136 = por %p134, %p135
      %s137 = ssub.s32 %s19, %s26
      %p138 = scmp.eq.s32.totalorder %s137, 0
      %s140 = sadd.s32 %s139, 1
      %s141 = scalar_select %p138, %s139, %s140
      %p144 = pneg %p138
      %p145 = scmp.eq.s32.totalorder %s11, 1
      %p146 = por %p144, %p145
      %p147 = scmp.ne.s32.totalorder %s139, %s142
      %p148 = scmp.eq.s32.totalorder %s11, 0
      %p149 = por %p147, %p148
      %p150 = scmp.ne.s32.totalorder %s139, %s142
      %p151 = scmp.eq.s32.totalorder %s16, 1
      %p152 = por %p150, %p151
      %p153 = scmp.ne.s32.totalorder %s142, %s143
      %p154 = scmp.eq.s32.totalorder %s16, 0
      %p155 = por %p153, %p154
      %p156 = scmp.ne.s32.totalorder %s142, %s143
      %p157 = scmp.eq.s32.totalorder %s17, 1
      %p158 = por %p156, %p157
      %p160 = scmp.ne.s32.totalorder %s143, %s159
      %p161 = scmp.eq.s32.totalorder %s17, 0
      %p162 = por %p160, %p161
      %s163 = ssub.s32 %s18, %s30
      %s164 = ssub.s32 %s19, %s26
      %s165 = sor.u32 %s163, %s164
      %p166 = scmp.eq.s32.totalorder %s165, 0
      %s168 = sadd.s32 %s167, 1
      %s169 = scalar_select %p166, %s167, %s168
      %p172 = pneg %p166
      %p173 = scmp.eq.s32.totalorder %s11, 1
      %p174 = por %p172, %p173
      %p175 = scmp.ne.s32.totalorder %s167, %s170
      %p176 = scmp.eq.s32.totalorder %s11, 0
      %p177 = por %p175, %p176
      %p178 = scmp.ne.s32.totalorder %s167, %s170
      %p179 = scmp.eq.s32.totalorder %s16, 1
      %p180 = por %p178, %p179
      %p181 = scmp.ne.s32.totalorder %s170, %s171
      %p182 = scmp.eq.s32.totalorder %s16, 0
      %p183 = por %p181, %p182
      %p184 = scmp.ne.s32.totalorder %s170, %s171
      %p185 = scmp.eq.s32.totalorder %s17, 1
      %p186 = por %p184, %p185
      %p188 = scmp.ne.s32.totalorder %s171, %s187
      %p189 = scmp.eq.s32.totalorder %s17, 0
      %p190 = por %p188, %p189
      %p191 = scmp.le.s32.totalorder 1, %s11
      %p192 = scmp.lt.s32.totalorder %s11, 3
      %p193 = pnand %p191, %p192
      %p194 = pneg %p193
      // Predicated region
      $region9: #{transformer_decoder_layer.9} parent=5 // pred_check
        _
      $region10: #{transformer_decoder_layer.9} parent=5 // pred_check_branch
        %196 = sbr.rel (%p193) target = $region12
      $region11: #{transformer_decoder_layer.9} parent=5 // pred_region
        %s197 = ssub.s32 %s11, 1
        // Predicated region
        $region13: #{transformer_decoder_layer.9} parent=11 // pred_check
          %p198 = pneg %p155
        $region14: #{transformer_decoder_layer.9} parent=11 // pred_check_branch
          %200 = sbr.rel (%p198) target = $region16
        $region15: #{transformer_decoder_layer.9} parent=11 // pred_region
          %s201 = smul.u32 2, %s21
          %p202 = scmp.lt.s32.totalorder %s201, 1
          %s203 = scalar_select %p202, %s201, 1
          %s204 = smul.addr %s203, 8
          %s205 = scalar_lea.vmem %s4, %s204
          %s206 = smul.u32 2, %s21
        $region16: #{transformer_decoder_layer.9} parent=11 // pred_fallthru
          _
      $region12: #{transformer_decoder_layer.9} parent=5 // pred_fallthru
        _
      %p207 = scmp.lt.s32.totalorder %s11, 2
      // Predicated region
      $region17: #{transformer_decoder_layer.9} parent=5 // pred_check
        %p208 = pneg %p207
      $region18: #{transformer_decoder_layer.9} parent=5 // pred_check_branch
        %210 = sbr.rel (%p208) target = $region20
      $region19: #{transformer_decoder_layer.9} parent=5 // pred_region
        // Predicated region
        $region21: #{transformer_decoder_layer.9} parent=19 // pred_check
          %p211 = pneg %p45
        $region22: #{transformer_decoder_layer.9} parent=19 // pred_check_branch
          %213 = sbr.rel (%p211) target = $region24
        $region23: #{transformer_decoder_layer.9} parent=19 // pred_region
          %s214 = sand.u32 %s35, 1
          %s215 = sand.u32 %s35, 1
          %s216 = smul.addr %s215, 8
          %s217 = scalar_lea.vmem [#allocation2], %s216
          %s218 = smul.u32 2, %s19
          %s219 = smul.addr %s218, 3
          %s220 = smul.addr %s18, 6
          %s221 = sadd.s32 %s219, %s220
          %s222 = smul.addr %s221, 4
          %s223 = scalar_lea.vmem %s0, %s222
          // Predicated region
          $region25: #{transformer_decoder_layer.9} parent=23 // pred_check
            _
          $region26: #{transformer_decoder_layer.9} parent=23 // pred_check_branch
            %225 = sbr.rel (0) target = $region28
          $region27: #{transformer_decoder_layer.9} parent=23 // pred_region
            // Predicated region
            $region29: #{transformer_decoder_layer.9} parent=27 // pred_check
              _
            $region30: #{transformer_decoder_layer.9} parent=27 // pred_check_branch
              %227 = sbr.rel target = $region32
            $region31: #{transformer_decoder_layer.9} parent=27 // pred_region
              // Predicated region
              $region44: #{transformer_decoder_layer.9} parent=31 // pred_check
                _
              $region45: #{transformer_decoder_layer.9} parent=31 // pred_check_branch
                %244 = sbr.rel (0) target = $region47
              $region46: #{transformer_decoder_layer.9} parent=31 // pred_region
                loop: start=0, step=1, limit=1
                $region48: #{transformer_decoder_layer.9} parent=46 // loop_pre_header
                  _
                $region49: #{transformer_decoder_layer.9} parent=46 // loop_header
                  %s246 = sphi 0, %s250
                  %p247 = scmp.ge.s32.totalorder %s246, 1
                  %s251 = sphi %s223, %s223
                  %s252 = sphi %s217, %s217
                $region50: #{transformer_decoder_layer.9} parent=46 // loop_header_branch
                  %249 = sbr.rel (%p247) target = $region54
                $region51: #{transformer_decoder_layer.9} parent=46 // loop_body
                  _
                $region52: #{transformer_decoder_layer.9} parent=46 // loop_footer
                  %s250 = sadd.s32 1, %s246
                $region53: #{transformer_decoder_layer.9} parent=46 // loop_footer_branch
                  %245 = sbr.rel target = $region49
                $region54: #{transformer_decoder_layer.9} parent=46 // loop_exit
                  _
                loop: start=0, step=1, limit=1
                $region55: #{transformer_decoder_layer.9} parent=46 // loop_pre_header
                  _
                $region56: #{transformer_decoder_layer.9} parent=46 // loop_header
                  %s255 = sphi 0, %s259
                  %p256 = scmp.ge.s32.totalorder %s255, 1
                  %s260 = sphi %s223, %s223
                  %s261 = sphi %s217, %s217
                $region57: #{transformer_decoder_layer.9} parent=46 // loop_header_branch
                  %258 = sbr.rel (%p256) target = $region61
                $region58: #{transformer_decoder_layer.9} parent=46 // loop_body
                  %v262 = vld [vmem:[%s260] sm:$0xf]
                  %263 = vst [vmem:[%s261] sm:$0xf] %v262
                  %v264 = vld [vmem:[%s260 + $0xc] sm:$0xf]
                  %265 = vst [vmem:[%s261 + $0x4] sm:$0xf] %v264
                $region59: #{transformer_decoder_layer.9} parent=46 // loop_footer
                  %s259 = sadd.s32 1, %s255
                $region60: #{transformer_decoder_layer.9} parent=46 // loop_footer_branch
                  %254 = sbr.rel target = $region56
                $region61: #{transformer_decoder_layer.9} parent=46 // loop_exit
                  _
              $region47: #{transformer_decoder_layer.9} parent=31 // pred_fallthru
                _
            $region32: #{transformer_decoder_layer.9} parent=27 // pred_fallthru
              _
            // Predicated region
            $region33: #{transformer_decoder_layer.9} parent=27 // pred_check
              _
            $region34: #{transformer_decoder_layer.9} parent=27 // pred_check_branch
              %229 = sbr.rel (0) target = $region36
            $region35: #{transformer_decoder_layer.9} parent=27 // pred_region
              loop: start=0, step=1, limit=1
              $region37: #{transformer_decoder_layer.9} parent=35 // loop_pre_header
                _
              $region38: #{transformer_decoder_layer.9} parent=35 // loop_header
                %s232 = sphi 0, %s236
                %p233 = scmp.ge.s32.totalorder %s232, 1
                %s237 = sphi %s223, %s223
                %s238 = sphi %s217, %s217
              $region39: #{transformer_decoder_layer.9} parent=35 // loop_header_branch
                %235 = sbr.rel (%p233) target = $region43
              $region40: #{transformer_decoder_layer.9} parent=35 // loop_body
                %v239 = vld [vmem:[%s237] sm:$0xf]
                %240 = vst [vmem:[%s238] sm:$0xf] %v239
                %v241 = vld [vmem:[%s237 + $0xc] sm:$0xf]
                %242 = vst [vmem:[%s238 + $0x4] sm:$0xf] %v241
              $region41: #{transformer_decoder_layer.9} parent=35 // loop_footer
                %s236 = sadd.s32 1, %s232
              $region42: #{transformer_decoder_layer.9} parent=35 // loop_footer_branch
                %231 = sbr.rel target = $region38
              $region43: #{transformer_decoder_layer.9} parent=35 // loop_exit
                _
            $region36: #{transformer_decoder_layer.9} parent=27 // pred_fallthru
              _
          $region28: #{transformer_decoder_layer.9} parent=23 // pred_fallthru
            _
          %266 = vnop
        $region24: #{transformer_decoder_layer.9} parent=19 // pred_fallthru
          _
        // Predicated region
        $region62: #{transformer_decoder_layer.9} parent=19 // pred_check
          %p267 = pneg %p71
        $region63: #{transformer_decoder_layer.9} parent=19 // pred_check_branch
          %269 = sbr.rel (%p267) target = $region65
        $region64: #{transformer_decoder_layer.9} parent=19 // pred_region
          %s270 = sand.u32 %s61, 1
          %s271 = sand.u32 %s61, 1
          %s272 = smul.addr %s271, 8
          %s273 = scalar_lea.vmem [#allocation3], %s272
          %s274 = smul.addr %s18, 6
          %s275 = sadd.s32 1, %s274
          %s276 = smul.addr %s275, 4
          %s277 = scalar_lea.vmem %s1, %s276
          // Predicated region
          $region66: #{transformer_decoder_layer.9} parent=64 // pred_check
            _
          $region67: #{transformer_decoder_layer.9} parent=64 // pred_check_branch
            %279 = sbr.rel (0) target = $region69
          $region68: #{transformer_decoder_layer.9} parent=64 // pred_region
            // Predicated region
            $region70: #{transformer_decoder_layer.9} parent=68 // pred_check
              _
            $region71: #{transformer_decoder_layer.9} parent=68 // pred_check_branch
              %281 = sbr.rel target = $region73
            $region72: #{transformer_decoder_layer.9} parent=68 // pred_region
              // Predicated region
              $region85: #{transformer_decoder_layer.9} parent=72 // pred_check
                _
              $region86: #{transformer_decoder_layer.9} parent=72 // pred_check_branch
                %298 = sbr.rel (0) target = $region88
              $region87: #{transformer_decoder_layer.9} parent=72 // pred_region
                loop: start=0, step=1, limit=1
                $region89: #{transformer_decoder_layer.9} parent=87 // loop_pre_header
                  _
                $region90: #{transformer_decoder_layer.9} parent=87 // loop_header
                  %s300 = sphi 0, %s304
                  %p301 = scmp.ge.s32.totalorder %s300, 1
                  %s305 = sphi %s277, %s277
                  %s306 = sphi %s273, %s273
                $region91: #{transformer_decoder_layer.9} parent=87 // loop_header_branch
                  %303 = sbr.rel (%p301) target = $region95
                $region92: #{transformer_decoder_layer.9} parent=87 // loop_body
                  _
                $region93: #{transformer_decoder_layer.9} parent=87 // loop_footer
                  %s304 = sadd.s32 1, %s300
                $region94: #{transformer_decoder_layer.9} parent=87 // loop_footer_branch
                  %299 = sbr.rel target = $region90
                $region95: #{transformer_decoder_layer.9} parent=87 // loop_exit
                  _
                loop: start=0, step=1, limit=1
                $region96: #{transformer_decoder_layer.9} parent=87 // loop_pre_header
                  _
                $region97: #{transformer_decoder_layer.9} parent=87 // loop_header
                  %s309 = sphi 0, %s313
                  %p310 = scmp.ge.s32.totalorder %s309, 1
                  %s314 = sphi %s277, %s277
                  %s315 = sphi %s273, %s273
                $region98: #{transformer_decoder_layer.9} parent=87 // loop_header_branch
                  %312 = sbr.rel (%p310) target = $region102
                $region99: #{transformer_decoder_layer.9} parent=87 // loop_body
                  %v316 = vld [vmem:[%s314] sm:$0xf]
                  %317 = vst [vmem:[%s315] sm:$0xf] %v316
                  %v318 = vld [vmem:[%s314 + $0xc] sm:$0xf]
                  %319 = vst [vmem:[%s315 + $0x4] sm:$0xf] %v318
                $region100: #{transformer_decoder_layer.9} parent=87 // loop_footer
                  %s313 = sadd.s32 1, %s309
                $region101: #{transformer_decoder_layer.9} parent=87 // loop_footer_branch
                  %308 = sbr.rel target = $region97
                $region102: #{transformer_decoder_layer.9} parent=87 // loop_exit
                  _
              $region88: #{transformer_decoder_layer.9} parent=72 // pred_fallthru
                _
            $region73: #{transformer_decoder_layer.9} parent=68 // pred_fallthru
              _
            // Predicated region
            $region74: #{transformer_decoder_layer.9} parent=68 // pred_check
              _
            $region75: #{transformer_decoder_layer.9} parent=68 // pred_check_branch
              %283 = sbr.rel (0) target = $region77
            $region76: #{transformer_decoder_layer.9} parent=68 // pred_region
              loop: start=0, step=1, limit=1
              $region78: #{transformer_decoder_layer.9} parent=76 // loop_pre_header
                _
              $region79: #{transformer_decoder_layer.9} parent=76 // loop_header
                %s286 = sphi 0, %s290
                %p287 = scmp.ge.s32.totalorder %s286, 1
                %s291 = sphi %s277, %s277
                %s292 = sphi %s273, %s273
              $region80: #{transformer_decoder_layer.9} parent=76 // loop_header_branch
                %289 = sbr.rel (%p287) target = $region84
              $region81: #{transformer_decoder_layer.9} parent=76 // loop_body
                %v293 = vld [vmem:[%s291] sm:$0xf]
                %294 = vst [vmem:[%s292] sm:$0xf] %v293
                %v295 = vld [vmem:[%s291 + $0xc] sm:$0xf]
                %296 = vst [vmem:[%s292 + $0x4] sm:$0xf] %v295
              $region82: #{transformer_decoder_layer.9} parent=76 // loop_footer
                %s290 = sadd.s32 1, %s286
              $region83: #{transformer_decoder_layer.9} parent=76 // loop_footer_branch
                %285 = sbr.rel target = $region79
              $region84: #{transformer_decoder_layer.9} parent=76 // loop_exit
                _
            $region77: #{transformer_decoder_layer.9} parent=68 // pred_fallthru
              _
          $region69: #{transformer_decoder_layer.9} parent=64 // pred_fallthru
            _
          %320 = vnop
        $region65: #{transformer_decoder_layer.9} parent=19 // pred_fallthru
          _
        // Predicated region
        $region103: #{transformer_decoder_layer.9} parent=19 // pred_check
          %p321 = pneg %p97
        $region104: #{transformer_decoder_layer.9} parent=19 // pred_check_branch
          %323 = sbr.rel (%p321) target = $region106
        $region105: #{transformer_decoder_layer.9} parent=19 // pred_region
          %s324 = sand.u32 %s87, 1
          %s325 = sand.u32 %s87, 1
          %s326 = smul.addr %s325, 8
          %s327 = scalar_lea.vmem [#allocation4], %s326
          %s328 = smul.addr %s18, 6
          %s329 = sadd.s32 2, %s328
          %s330 = smul.addr %s329, 4
          %s331 = scalar_lea.vmem %s2, %s330
          // Predicated region
          $region107: #{transformer_decoder_layer.9} parent=105 // pred_check
            _
          $region108: #{transformer_decoder_layer.9} parent=105 // pred_check_branch
            %333 = sbr.rel (0) target = $region110
          $region109: #{transformer_decoder_layer.9} parent=105 // pred_region
            // Predicated region
            $region111: #{transformer_decoder_layer.9} parent=109 // pred_check
              _
            $region112: #{transformer_decoder_layer.9} parent=109 // pred_check_branch
              %335 = sbr.rel target = $region114
            $region113: #{transformer_decoder_layer.9} parent=109 // pred_region
              // Predicated region
              $region126: #{transformer_decoder_layer.9} parent=113 // pred_check
                _
              $region127: #{transformer_decoder_layer.9} parent=113 // pred_check_branch
                %352 = sbr.rel (0) target = $region129
              $region128: #{transformer_decoder_layer.9} parent=113 // pred_region
                loop: start=0, step=1, limit=1
                $region130: #{transformer_decoder_layer.9} parent=128 // loop_pre_header
                  _
                $region131: #{transformer_decoder_layer.9} parent=128 // loop_header
                  %s354 = sphi 0, %s358
                  %p355 = scmp.ge.s32.totalorder %s354, 1
                  %s359 = sphi %s331, %s331
                  %s360 = sphi %s327, %s327
                $region132: #{transformer_decoder_layer.9} parent=128 // loop_header_branch
                  %357 = sbr.rel (%p355) target = $region136
                $region133: #{transformer_decoder_layer.9} parent=128 // loop_body
                  _
                $region134: #{transformer_decoder_layer.9} parent=128 // loop_footer
                  %s358 = sadd.s32 1, %s354
                $region135: #{transformer_decoder_layer.9} parent=128 // loop_footer_branch
                  %353 = sbr.rel target = $region131
                $region136: #{transformer_decoder_layer.9} parent=128 // loop_exit
                  _
                loop: start=0, step=1, limit=1
                $region137: #{transformer_decoder_layer.9} parent=128 // loop_pre_header
                  _
                $region138: #{transformer_decoder_layer.9} parent=128 // loop_header
                  %s363 = sphi 0, %s367
                  %p364 = scmp.ge.s32.totalorder %s363, 1
                  %s368 = sphi %s331, %s331
                  %s369 = sphi %s327, %s327
                $region139: #{transformer_decoder_layer.9} parent=128 // loop_header_branch
                  %366 = sbr.rel (%p364) target = $region143
                $region140: #{transformer_decoder_layer.9} parent=128 // loop_body
                  %v370 = vld [vmem:[%s368] sm:$0xf]
                  %371 = vst [vmem:[%s369] sm:$0xf] %v370
                  %v372 = vld [vmem:[%s368 + $0xc] sm:$0xf]
                  %373 = vst [vmem:[%s369 + $0x4] sm:$0xf] %v372
                $region141: #{transformer_decoder_layer.9} parent=128 // loop_footer
                  %s367 = sadd.s32 1, %s363
                $region142: #{transformer_decoder_layer.9} parent=128 // loop_footer_branch
                  %362 = sbr.rel target = $region138
                $region143: #{transformer_decoder_layer.9} parent=128 // loop_exit
                  _
              $region129: #{transformer_decoder_layer.9} parent=113 // pred_fallthru
                _
            $region114: #{transformer_decoder_layer.9} parent=109 // pred_fallthru
              _
            // Predicated region
            $region115: #{transformer_decoder_layer.9} parent=109 // pred_check
              _
            $region116: #{transformer_decoder_layer.9} parent=109 // pred_check_branch
              %337 = sbr.rel (0) target = $region118
            $region117: #{transformer_decoder_layer.9} parent=109 // pred_region
              loop: start=0, step=1, limit=1
              $region119: #{transformer_decoder_layer.9} parent=117 // loop_pre_header
                _
              $region120: #{transformer_decoder_layer.9} parent=117 // loop_header
                %s340 = sphi 0, %s344
                %p341 = scmp.ge.s32.totalorder %s340, 1
                %s345 = sphi %s331, %s331
                %s346 = sphi %s327, %s327
              $region121: #{transformer_decoder_layer.9} parent=117 // loop_header_branch
                %343 = sbr.rel (%p341) target = $region125
              $region122: #{transformer_decoder_layer.9} parent=117 // loop_body
                %v347 = vld [vmem:[%s345] sm:$0xf]
                %348 = vst [vmem:[%s346] sm:$0xf] %v347
                %v349 = vld [vmem:[%s345 + $0xc] sm:$0xf]
                %350 = vst [vmem:[%s346 + $0x4] sm:$0xf] %v349
              $region123: #{transformer_decoder_layer.9} parent=117 // loop_footer
                %s344 = sadd.s32 1, %s340
              $region124: #{transformer_decoder_layer.9} parent=117 // loop_footer_branch
                %339 = sbr.rel target = $region120
              $region125: #{transformer_decoder_layer.9} parent=117 // loop_exit
                _
            $region118: #{transformer_decoder_layer.9} parent=109 // pred_fallthru
              _
          $region110: #{transformer_decoder_layer.9} parent=105 // pred_fallthru
            _
          %374 = vnop
        $region106: #{transformer_decoder_layer.9} parent=19 // pred_fallthru
          _
        // Predicated region
        $region144: #{transformer_decoder_layer.9} parent=19 // pred_check
          %p375 = pneg %p123
        $region145: #{transformer_decoder_layer.9} parent=19 // pred_check_branch
          %377 = sbr.rel (%p375) target = $region147
        $region146: #{transformer_decoder_layer.9} parent=19 // pred_region
          %p378 = scmp.lt.s32.totalorder %s18, 1
          %s379 = scalar_select %p378, %s18, 1
          %s380 = scalar_lea.vmem %s3, %s379
        $region147: #{transformer_decoder_layer.9} parent=19 // pred_fallthru
          _
      $region20: #{transformer_decoder_layer.9} parent=5 // pred_fallthru
        _
      %p381 = scmp.le.s32.totalorder 1, %s11
      %p382 = scmp.lt.s32.totalorder %s11, 3
      %p383 = pnand %p381, %p382
      %p384 = pneg %p383
      // Predicated region
      $region148: #{transformer_decoder_layer.9} parent=5 // pred_check
        _
      $region149: #{transformer_decoder_layer.9} parent=5 // pred_check_branch
        %386 = sbr.rel (%p383) target = $region151
      $region150: #{transformer_decoder_layer.9} parent=5 // pred_region
        %s387 = ssub.s32 %s11, 1
        %s388 = sand.u32 %s38, 1
        %s389 = sand.u32 %s38, 1
        %s390 = smul.addr %s389, 8
        %s391 = scalar_lea.vmem [#allocation2], %s390
        // Predicated region
        $region152: #{transformer_decoder_layer.9} parent=150 // pred_check
          %p392 = pneg %p51
        $region153: #{transformer_decoder_layer.9} parent=150 // pred_check_branch
          %394 = sbr.rel (%p392) target = $region155
        $region154: #{transformer_decoder_layer.9} parent=150 // pred_region
          _
        $region155: #{transformer_decoder_layer.9} parent=150 // pred_fallthru
          _
        %s395 = sand.u32 %s64, 1
        %s396 = sand.u32 %s64, 1
        %s397 = smul.addr %s396, 8
        %s398 = scalar_lea.vmem [#allocation3], %s397
        // Predicated region
        $region156: #{transformer_decoder_layer.9} parent=150 // pred_check
          %p399 = pneg %p77
        $region157: #{transformer_decoder_layer.9} parent=150 // pred_check_branch
          %401 = sbr.rel (%p399) target = $region159
        $region158: #{transformer_decoder_layer.9} parent=150 // pred_region
          _
        $region159: #{transformer_decoder_layer.9} parent=150 // pred_fallthru
          _
        %s402 = sand.u32 %s90, 1
        %s403 = sand.u32 %s90, 1
        %s404 = smul.addr %s403, 8
        %s405 = scalar_lea.vmem [#allocation4], %s404
        // Predicated region
        $region160: #{transformer_decoder_layer.9} parent=150 // pred_check
          %p406 = pneg %p103
        $region161: #{transformer_decoder_layer.9} parent=150 // pred_check_branch
          %408 = sbr.rel (%p406) target = $region163
        $region162: #{transformer_decoder_layer.9} parent=150 // pred_region
          _
        $region163: #{transformer_decoder_layer.9} parent=150 // pred_fallthru
          _
        %s409 = sand.u32 %s38, 1
        %s410 = sand.u32 %s38, 1
        %s411 = smul.addr %s410, 8
        %s412 = scalar_lea.vmem [#allocation2], %s411
        %p413 = pneg %p51
        %p414 = pneg %p48
        %s415 = sand.u32 %s64, 1
        %s416 = sand.u32 %s64, 1
        %s417 = smul.addr %s416, 8
        %s418 = scalar_lea.vmem [#allocation3], %s417
        %p419 = pneg %p77
        %p420 = pneg %p74
        %s421 = sand.u32 %s90, 1
        %s422 = sand.u32 %s90, 1
        %s423 = smul.addr %s422, 8
        %s424 = scalar_lea.vmem [#allocation4], %s423
        %p425 = pneg %p103
        %p426 = pneg %p100
        %p427 = scmp.lt.s32.totalorder %s20, 1
        %s428 = scalar_select %p427, %s20, 1
        %s429 = scalar_lea.vmem %s3, %s428
        %p430 = pneg %p129
        %p431 = pneg %p126
        %s432 = smul.u32 2, %s21
        %p433 = scmp.lt.s32.totalorder %s432, 1
        %s434 = scalar_select %p433, %s432, 1
        %s435 = smul.addr %s434, 8
        %s436 = scalar_lea.vmem %s4, %s435
        %p437 = pneg %p155
        %p438 = pneg %p152
        %p439 = pneg %p183
        %p440 = pneg %p180
        %s441 = smul.u32 2, %s21
        %p442 = scmp.lt.s32.totalorder %s20, 1
        %s443 = scalar_select %p442, %s20, 1
        %p444 = scmp.lt.s32.totalorder %s441, 1
        %s445 = scalar_select %p444, %s441, 1
        %s446 = smul.addr %s443, 2
        %s447 = sadd.s32 %s445, %s446
        %s448 = smul.addr %s447, 4
        %s449 = scalar_lea.vmem %s5, %s448
        %s450 = smul.u32 2, %s21
        %p451 = scmp.lt.s32.totalorder %s20, 1
        %s452 = scalar_select %p451, %s20, 1
        %s453 = scalar_lea.vmem %s3, %s452
        %s454 = smul.u32 2, %s21
        %p455 = scmp.lt.s32.totalorder %s454, 1
        %s456 = scalar_select %p455, %s454, 1
        %s457 = smul.addr %s456, 8
        %s458 = scalar_lea.vmem %s4, %s457
        %s459 = smul.u32 2, %s21
        %s460 = smul.u32 2, %s21
        %p461 = scmp.lt.s32.totalorder %s20, 1
        %s462 = scalar_select %p461, %s20, 1
        %p463 = scmp.lt.s32.totalorder %s460, 1
        %s464 = scalar_select %p463, %s460, 1
        %s465 = smul.addr %s462, 2
        %s466 = sadd.s32 %s464, %s465
        %s467 = smul.addr %s466, 4
        %s468 = scalar_lea.vmem %s5, %s467
        %s469 = smul.u32 2, %s21
        %v472 = vld [vmem:[%s391] sm:$0xf]
        %v473 = vld [vmem:[%s391 + $0x4] sm:$0xf]
        %v474 = vmul.bf16 %v472, 1048592000
        %v475 = vmul.bf16 %v473, 1048592000
        %v476 = vld [vmem:[%s398] sm:$0xf]
        %v477 = vld [vmem:[%s398 + $0x4] sm:$0xf]
        %v478 = vld [vmem:[%s405] sm:$0xf]
        %v479 = vld [vmem:[%s405 + $0x4] sm:$0xf]
        %v480 = vld [vmem:[%s453] sm:$0x1]
        %vm481 = vcmp.gt.f32.partialorder %v480, 0.0
        %v482 = vld [vmem:[%s458] sm:$0xff]
        %v483 = vld [vmem:[%s458 + $0x8] sm:$0xff]
        %vm484 = vcmp.gt.f32.partialorder %v482, 0.0
        %vm485 = vcmp.gt.f32.partialorder %v483, 0.0
        %v486 = vsel %vm481, 1, 0
        %v487 = vlaneseq
        %v488 = vshrl.u32 %v487, 7
        %v489 = vsub.s32 0, %v488
        %v490 = vrot.slane %v486, %v489
        %vm491 = vcmp.eq.s32.totalorder %v490, 1
        %vm492 = vmor %vm491, %vm484
        %vm493 = vmor %vm491, %vm485
        %v496 = vunpack.c.l.b16 %v474
        %v497 = vunpack.c.l.b16 %v475
        %v498 = vpack.c.b16 %v497, %v496
        %v501 = vunpack.c.l.b16 %v476
        %v502 = vunpack.c.l.b16 %v477
        %v503 = vpack.c.b16 %v502, %v501
        %vm504 = vcmask 130048
        %v506 = vsel %vm504, %v498, 0
        %v509 = vsel %vm504, %v503, 0
        %511 = vmatprep.subr.bf16.mxu0 0
        %512 = vmatpush1.bf16.xpose.msra.mxu0 %v509
        %513 = vmatprep.subr.bf16.mxu0 0
        %514 = vmatpush1.bf16.xpose.msra.mxu0 0
        %515 = vmatprep.subr.bf16.mxu0 0
        %516 = vmatpush1.bf16.xpose.msra.mxu0 0
        %517 = vmatprep.subr.bf16.mxu0 0
        %518 = vmatpush1.bf16.xpose.msra.mxu0 0
        %519 = vmatprep.subr.bf16.mxu0 0
        %520 = vmatpush1.bf16.xpose.msra.mxu0 0
        %521 = vmatprep.subr.bf16.mxu0 0
        %522 = vmatpush1.bf16.xpose.msra.mxu0 0
        %523 = vmatprep.subr.bf16.mxu0 0
        %524 = vmatpush1.bf16.xpose.msra.mxu0 0
        %525 = vmatprep.subr.bf16.mxu0 0
        %526 = vmatpush1.bf16.xpose.msra.mxu0 0
        %527 = vmatprep.subr.bf16.mxu0 0
        %528 = vmatpush1.bf16.xpose.msra.mxu0 0
        %529 = vmatprep.subr.bf16.mxu0 0
        %530 = vmatpush1.bf16.xpose.msra.mxu0 0
        %531 = vmatprep.subr.bf16.mxu0 0
        %532 = vmatpush1.bf16.xpose.msra.mxu0 0
        %533 = vmatprep.subr.bf16.mxu0 0
        %534 = vmatpush1.bf16.xpose.msra.mxu0 0
        %535 = vmatprep.subr.bf16.mxu0 0
        %536 = vmatpush1.bf16.xpose.msra.mxu0 0
        %537 = vmatprep.subr.bf16.mxu0 0
        %538 = vmatpush1.bf16.xpose.msra.mxu0 0
        %539 = vmatprep.subr.bf16.mxu0 0
        %540 = vmatpush1.bf16.xpose.msra.mxu0 0
        %541 = vmatprep.subr.bf16.mxu0 0
        %542 = vmatpush1.bf16.xpose.msra.mxu0 0
        %543 = vmatprep.mubr.bf16.mxu0 0
        %544 = vmatmul.mubr.bf16.gmra.mrb[0].mxu0 %v506
        %v545 = vpop.f32.mrb[0].mxu0
        %v546 = vadd.f32 0.0, %v545
        %v547 = vpop.f32.mrb[0].mxu0
        %v548 = vpop.f32.mrb[0].mxu0
        %v549 = vadd.f32 0.0, %v548
        %v550 = vpop.f32.mrb[0].mxu0
        %551 = vdwg.mxu0
        %v552 = vsel %vm492, %v546, -1e+09
        %v553 = vsel %vm493, %v549, -1e+09
        %v554 = vsel %vm504, %v552, -inf
        %555 = vmax.xlane.f32.xlu0 %v554
        %v556 = vpop.xlane.xlu0 %555
        %v557 = vsel %vm504, %v553, -inf
        %558 = vmax.xlane.f32.xlu0 %v557
        %v559 = vpop.xlane.xlu0 %558
        %v560 = vsub.f32 %v552, %v556
        %v561 = vsub.f32 %v553, %v559
        %v562 = vmul.f32 %v560, 1.442695
        %v563 = vpow.pop %v562
        %v564 = vmul.f32 %v561, 1.442695
        %v565 = vpow.pop %v564
        %v566 = vsel %vm504, %v563, 0.0
        %567 = vadd.xlane.f32.xlu0 %v566
        %v568 = vpop.xlane.xlu0 %567
        %v569 = vsel %vm504, %v565, 0.0
        %570 = vadd.xlane.f32.xlu0 %v569
        %v571 = vpop.xlane.xlu0 %570
        %v572 = vrcp.pop %v568
        %v573 = vrcp.pop %v571
        %v574 = vmul.f32 %v563, %v572
        %v575 = vmul.f32 %v565, %v573
        %v576 = vpack.c.bf16 %v575, %v574
        %v579 = vunpack.c.l.b16 %v478
        %v580 = vunpack.c.l.b16 %v479
        %v581 = vpack.c.b16 %v580, %v579
        %v584 = vsel %vm504, %v576, 0
        %586 = vmatprep.subr.bf16.mxu0 0
        %587 = vmatpush1.bf16.msra.mxu0 %v581
        %588 = vmatprep.subr.bf16.mxu0 0
        %589 = vmatpush1.bf16.msra.mxu0 0
        %590 = vmatprep.subr.bf16.mxu0 0
        %591 = vmatpush1.bf16.msra.mxu0 0
        %592 = vmatprep.subr.bf16.mxu0 0
        %593 = vmatpush1.bf16.msra.mxu0 0
        %594 = vmatprep.subr.bf16.mxu0 0
        %595 = vmatpush1.bf16.msra.mxu0 0
        %596 = vmatprep.subr.bf16.mxu0 0
        %597 = vmatpush1.bf16.msra.mxu0 0
        %598 = vmatprep.subr.bf16.mxu0 0
        %599 = vmatpush1.bf16.msra.mxu0 0
        %600 = vmatprep.subr.bf16.mxu0 0
        %601 = vmatpush1.bf16.msra.mxu0 0
        %602 = vmatprep.subr.bf16.mxu0 0
        %603 = vmatpush1.bf16.msra.mxu0 0
        %604 = vmatprep.subr.bf16.mxu0 0
        %605 = vmatpush1.bf16.msra.mxu0 0
        %606 = vmatprep.subr.bf16.mxu0 0
        %607 = vmatpush1.bf16.msra.mxu0 0
        %608 = vmatprep.subr.bf16.mxu0 0
        %609 = vmatpush1.bf16.msra.mxu0 0
        %610 = vmatprep.subr.bf16.mxu0 0
        %611 = vmatpush1.bf16.msra.mxu0 0
        %612 = vmatprep.subr.bf16.mxu0 0
        %613 = vmatpush1.bf16.msra.mxu0 0
        %614 = vmatprep.subr.bf16.mxu0 0
        %615 = vmatpush1.bf16.msra.mxu0 0
        %616 = vmatprep.subr.bf16.mxu0 0
        %617 = vmatpush1.bf16.msra.mxu0 0
        %618 = vmatprep.mubr.bf16.mxu0 0
        %619 = vmatmul.mubr.bf16.gmra.mrb[0].mxu0 %v584
        %v620 = vpop.f32.mrb[0].mxu0
        %v621 = vadd.f32 0.0, %v620
        %v622 = vpop.f32.mrb[0].mxu0
        %v623 = vpop.f32.mrb[0].mxu0
        %v624 = vadd.f32 0.0, %v623
        %v625 = vpop.f32.mrb[0].mxu0
        %626 = vdwg.mxu0
        %627 = vrot.lane.b32.xlu0 %v498, 112
        %v628 = vpop.permute.xlu0 %627
        %629 = vrot.lane.b32.xlu0 %v503, 112
        %v630 = vpop.permute.xlu0 %629
        %v632 = vsel %vm504, %v628, 0
        %v635 = vsel %vm504, %v630, 0
        %637 = vmatprep.subr.bf16.mxu0 0
        %638 = vmatpush1.bf16.xpose.msra.mxu0 %v635
        %639 = vmatprep.subr.bf16.mxu0 0
        %640 = vmatpush1.bf16.xpose.msra.mxu0 0
        %641 = vmatprep.subr.bf16.mxu0 0
        %642 = vmatpush1.bf16.xpose.msra.mxu0 0
        %643 = vmatprep.subr.bf16.mxu0 0
        %644 = vmatpush1.bf16.xpose.msra.mxu0 0
        %645 = vmatprep.subr.bf16.mxu0 0
        %646 = vmatpush1.bf16.xpose.msra.mxu0 0
        %647 = vmatprep.subr.bf16.mxu0 0
        %648 = vmatpush1.bf16.xpose.msra.mxu0 0
        %649 = vmatprep.subr.bf16.mxu0 0
        %650 = vmatpush1.bf16.xpose.msra.mxu0 0
        %651 = vmatprep.subr.bf16.mxu0 0
        %652 = vmatpush1.bf16.xpose.msra.mxu0 0
        %653 = vmatprep.subr.bf16.mxu0 0
        %654 = vmatpush1.bf16.xpose.msra.mxu0 0
        %655 = vmatprep.subr.bf16.mxu0 0
        %656 = vmatpush1.bf16.xpose.msra.mxu0 0
        %657 = vmatprep.subr.bf16.mxu0 0
        %658 = vmatpush1.bf16.xpose.msra.mxu0 0
        %659 = vmatprep.subr.bf16.mxu0 0
        %660 = vmatpush1.bf16.xpose.msra.mxu0 0
        %661 = vmatprep.subr.bf16.mxu0 0
        %662 = vmatpush1.bf16.xpose.msra.mxu0 0
        %663 = vmatprep.subr.bf16.mxu0 0
        %664 = vmatpush1.bf16.xpose.msra.mxu0 0
        %665 = vmatprep.subr.bf16.mxu0 0
        %666 = vmatpush1.bf16.xpose.msra.mxu0 0
        %667 = vmatprep.subr.bf16.mxu0 0
        %668 = vmatpush1.bf16.xpose.msra.mxu0 0
        %669 = vmatprep.mubr.bf16.mxu0 0
        %670 = vmatmul.mubr.bf16.gmra.mrb[0].mxu0 %v632
        %v671 = vpop.f32.mrb[0].mxu0
        %v672 = vadd.f32 0.0, %v671
        %v673 = vpop.f32.mrb[0].mxu0
        %v674 = vpop.f32.mrb[0].mxu0
        %v675 = vadd.f32 0.0, %v674
        %v676 = vpop.f32.mrb[0].mxu0
        %677 = vdwg.mxu0
        %v678 = vsel %vm492, %v672, -1e+09
        %v679 = vsel %vm493, %v675, -1e+09
        %v680 = vsel %vm504, %v678, -inf
        %681 = vmax.xlane.f32.xlu0 %v680
        %v682 = vpop.xlane.xlu0 %681
        %v683 = vsel %vm504, %v679, -inf
        %684 = vmax.xlane.f32.xlu0 %v683
        %v685 = vpop.xlane.xlu0 %684
        %v686 = vsub.f32 %v678, %v682
        %v687 = vsub.f32 %v679, %v685
        %v688 = vmul.f32 %v686, 1.442695
        %v689 = vpow.pop %v688
        %v690 = vmul.f32 %v687, 1.442695
        %v691 = vpow.pop %v690
        %v692 = vsel %vm504, %v689, 0.0
        %693 = vadd.xlane.f32.xlu0 %v692
        %v694 = vpop.xlane.xlu0 %693
        %v695 = vsel %vm504, %v691, 0.0
        %696 = vadd.xlane.f32.xlu0 %v695
        %v697 = vpop.xlane.xlu0 %696
        %v698 = vrcp.pop %v694
        %v699 = vrcp.pop %v697
        %v700 = vmul.f32 %v689, %v698
        %v701 = vmul.f32 %v691, %v699
        %v702 = vpack.c.bf16 %v701, %v700
        %703 = vrot.lane.b32.xlu0 %v581, 112
        %v704 = vpop.permute.xlu0 %703
        %v707 = vsel %vm504, %v702, 0
        %709 = vmatprep.subr.bf16.mxu0 0
        %710 = vmatpush1.bf16.msra.mxu0 %v704
        %711 = vmatprep.subr.bf16.mxu0 0
        %712 = vmatpush1.bf16.msra.mxu0 0
        %713 = vmatprep.subr.bf16.mxu0 0
        %714 = vmatpush1.bf16.msra.mxu0 0
        %715 = vmatprep.subr.bf16.mxu0 0
        %716 = vmatpush1.bf16.msra.mxu0 0
        %717 = vmatprep.subr.bf16.mxu0 0
        %718 = vmatpush1.bf16.msra.mxu0 0
        %719 = vmatprep.subr.bf16.mxu0 0
        %720 = vmatpush1.bf16.msra.mxu0 0
        %721 = vmatprep.subr.bf16.mxu0 0
        %722 = vmatpush1.bf16.msra.mxu0 0
        %723 = vmatprep.subr.bf16.mxu0 0
        %724 = vmatpush1.bf16.msra.mxu0 0
        %725 = vmatprep.subr.bf16.mxu0 0
        %726 = vmatpush1.bf16.msra.mxu0 0
        %727 = vmatprep.subr.bf16.mxu0 0
        %728 = vmatpush1.bf16.msra.mxu0 0
        %729 = vmatprep.subr.bf16.mxu0 0
        %730 = vmatpush1.bf16.msra.mxu0 0
        %731 = vmatprep.subr.bf16.mxu0 0
        %732 = vmatpush1.bf16.msra.mxu0 0
        %733 = vmatprep.subr.bf16.mxu0 0
        %734 = vmatpush1.bf16.msra.mxu0 0
        %735 = vmatprep.subr.bf16.mxu0 0
        %736 = vmatpush1.bf16.msra.mxu0 0
        %737 = vmatprep.subr.bf16.mxu0 0
        %738 = vmatpush1.bf16.msra.mxu0 0
        %739 = vmatprep.subr.bf16.mxu0 0
        %740 = vmatpush1.bf16.msra.mxu0 0
        %741 = vmatprep.mubr.bf16.mxu0 0
        %742 = vmatmul.mubr.bf16.gmra.mrb[0].mxu0 %v707
        %v743 = vpop.f32.mrb[0].mxu0
        %v744 = vadd.f32 0.0, %v743
        %v745 = vpop.f32.mrb[0].mxu0
        %v746 = vpop.f32.mrb[0].mxu0
        %v747 = vadd.f32 0.0, %v746
        %v748 = vpop.f32.mrb[0].mxu0
        %749 = vdwg.mxu0
        %750 = vrot.lane.b32.xlu0 %v498, 96
        %v751 = vpop.permute.xlu0 %750
        %752 = vrot.lane.b32.xlu0 %v503, 96
        %v753 = vpop.permute.xlu0 %752
        %v755 = vsel %vm504, %v751, 0
        %v758 = vsel %vm504, %v753, 0
        %760 = vmatprep.subr.bf16.mxu0 0
        %761 = vmatpush1.bf16.xpose.msra.mxu0 %v758
        %762 = vmatprep.subr.bf16.mxu0 0
        %763 = vmatpush1.bf16.xpose.msra.mxu0 0
        %764 = vmatprep.subr.bf16.mxu0 0
        %765 = vmatpush1.bf16.xpose.msra.mxu0 0
        %766 = vmatprep.subr.bf16.mxu0 0
        %767 = vmatpush1.bf16.xpose.msra.mxu0 0
        %768 = vmatprep.subr.bf16.mxu0 0
        %769 = vmatpush1.bf16.xpose.msra.mxu0 0
        %770 = vmatprep.subr.bf16.mxu0 0
        %771 = vmatpush1.bf16.xpose.msra.mxu0 0
        %772 = vmatprep.subr.bf16.mxu0 0
        %773 = vmatpush1.bf16.xpose.msra.mxu0 0
        %774 = vmatprep.subr.bf16.mxu0 0
        %775 = vmatpush1.bf16.xpose.msra.mxu0 0
        %776 = vmatprep.subr.bf16.mxu0 0
        %777 = vmatpush1.bf16.xpose.msra.mxu0 0
        %778 = vmatprep.subr.bf16.mxu0 0
        %779 = vmatpush1.bf16.xpose.msra.mxu0 0
        %780 = vmatprep.subr.bf16.mxu0 0
        %781 = vmatpush1.bf16.xpose.msra.mxu0 0
        %782 = vmatprep.subr.bf16.mxu0 0
        %783 = vmatpush1.bf16.xpose.msra.mxu0 0
        %784 = vmatprep.subr.bf16.mxu0 0
        %785 = vmatpush1.bf16.xpose.msra.mxu0 0
        %786 = vmatprep.subr.bf16.mxu0 0
        %787 = vmatpush1.bf16.xpose.msra.mxu0 0
        %788 = vmatprep.subr.bf16.mxu0 0
        %789 = vmatpush1.bf16.xpose.msra.mxu0 0
        %790 = vmatprep.subr.bf16.mxu0 0
        %791 = vmatpush1.bf16.xpose.msra.mxu0 0
        %792 = vmatprep.mubr.bf16.mxu0 0
        %793 = vmatmul.mubr.bf16.gmra.mrb[0].mxu0 %v755
        %v794 = vpop.f32.mrb[0].mxu0
        %v795 = vadd.f32 0.0, %v794
        %v796 = vpop.f32.mrb[0].mxu0
        %v797 = vpop.f32.mrb[0].mxu0
        %v798 = vadd.f32 0.0, %v797
        %v799 = vpop.f32.mrb[0].mxu0
        %800 = vdwg.mxu0
        %v801 = vsel %vm492, %v795, -1e+09
        %v802 = vsel %vm493, %v798, -1e+09
        %v803 = vsel %vm504, %v801, -inf
        %804 = vmax.xlane.f32.xlu0 %v803
        %v805 = vpop.xlane.xlu0 %804
        %v806 = vsel %vm504, %v802, -inf
        %807 = vmax.xlane.f32.xlu0 %v806
        %v808 = vpop.xlane.xlu0 %807
        %v809 = vsub.f32 %v801, %v805
        %v810 = vsub.f32 %v802, %v808
        %v811 = vmul.f32 %v809, 1.442695
        %v812 = vpow.pop %v811
        %v813 = vmul.f32 %v810, 1.442695
        %v814 = vpow.pop %v813
        %v815 = vsel %vm504, %v812, 0.0
        %816 = vadd.xlane.f32.xlu0 %v815
        %v817 = vpop.xlane.xlu0 %816
        %v818 = vsel %vm504, %v814, 0.0
        %819 = vadd.xlane.f32.xlu0 %v818
        %v820 = vpop.xlane.xlu0 %819
        %v821 = vrcp.pop %v817
        %v822 = vrcp.pop %v820
        %v823 = vmul.f32 %v812, %v821
        %v824 = vmul.f32 %v814, %v822
        %v825 = vpack.c.bf16 %v824, %v823
        %826 = vrot.lane.b32.xlu0 %v581, 96
        %v827 = vpop.permute.xlu0 %826
        %v830 = vsel %vm504, %v825, 0
        %832 = vmatprep.subr.bf16.mxu0 0
        %833 = vmatpush1.bf16.msra.mxu0 %v827
        %834 = vmatprep.subr.bf16.mxu0 0
        %835 = vmatpush1.bf16.msra.mxu0 0
        %836 = vmatprep.subr.bf16.mxu0 0
        %837 = vmatpush1.bf16.msra.mxu0 0
        %838 = vmatprep.subr.bf16.mxu0 0
        %839 = vmatpush1.bf16.msra.mxu0 0
        %840 = vmatprep.subr.bf16.mxu0 0
        %841 = vmatpush1.bf16.msra.mxu0 0
        %842 = vmatprep.subr.bf16.mxu0 0
        %843 = vmatpush1.bf16.msra.mxu0 0
        %844 = vmatprep.subr.bf16.mxu0 0
        %845 = vmatpush1.bf16.msra.mxu0 0
        %846 = vmatprep.subr.bf16.mxu0 0
        %847 = vmatpush1.bf16.msra.mxu0 0
        %848 = vmatprep.subr.bf16.mxu0 0
        %849 = vmatpush1.bf16.msra.mxu0 0
        %850 = vmatprep.subr.bf16.mxu0 0
        %851 = vmatpush1.bf16.msra.mxu0 0
        %852 = vmatprep.subr.bf16.mxu0 0
        %853 = vmatpush1.bf16.msra.mxu0 0
        %854 = vmatprep.subr.bf16.mxu0 0
        %855 = vmatpush1.bf16.msra.mxu0 0
        %856 = vmatprep.subr.bf16.mxu0 0
        %857 = vmatpush1.bf16.msra.mxu0 0
        %858 = vmatprep.subr.bf16.mxu0 0
        %859 = vmatpush1.bf16.msra.mxu0 0
        %860 = vmatprep.subr.bf16.mxu0 0
        %861 = vmatpush1.bf16.msra.mxu0 0
        %862 = vmatprep.subr.bf16.mxu0 0
        %863 = vmatpush1.bf16.msra.mxu0 0
        %864 = vmatprep.mubr.bf16.mxu0 0
        %865 = vmatmul.mubr.bf16.gmra.mrb[0].mxu0 %v830
        %v866 = vpop.f32.mrb[0].mxu0
        %v867 = vadd.f32 0.0, %v866
        %v868 = vpop.f32.mrb[0].mxu0
        %v869 = vpop.f32.mrb[0].mxu0
        %v870 = vadd.f32 0.0, %v869
        %v871 = vpop.f32.mrb[0].mxu0
        %872 = vdwg.mxu0
        %873 = vrot.lane.b32.xlu0 %v498, 80
        %v874 = vpop.permute.xlu0 %873
        %875 = vrot.lane.b32.xlu0 %v503, 80
        %v876 = vpop.permute.xlu0 %875
        %v878 = vsel %vm504, %v874, 0
        %v881 = vsel %vm504, %v876, 0
        %883 = vmatprep.subr.bf16.mxu0 0
        %884 = vmatpush1.bf16.xpose.msra.mxu0 %v881
        %885 = vmatprep.subr.bf16.mxu0 0
        %886 = vmatpush1.bf16.xpose.msra.mxu0 0
        %887 = vmatprep.subr.bf16.mxu0 0
        %888 = vmatpush1.bf16.xpose.msra.mxu0 0
        %889 = vmatprep.subr.bf16.mxu0 0
        %890 = vmatpush1.bf16.xpose.msra.mxu0 0
        %891 = vmatprep.subr.bf16.mxu0 0
        %892 = vmatpush1.bf16.xpose.msra.mxu0 0
        %893 = vmatprep.subr.bf16.mxu0 0
        %894 = vmatpush1.bf16.xpose.msra.mxu0 0
        %895 = vmatprep.subr.bf16.mxu0 0
        %896 = vmatpush1.bf16.xpose.msra.mxu0 0
        %897 = vmatprep.subr.bf16.mxu0 0
        %898 = vmatpush1.bf16.xpose.msra.mxu0 0
        %899 = vmatprep.subr.bf16.mxu0 0
        %900 = vmatpush1.bf16.xpose.msra.mxu0 0
        %901 = vmatprep.subr.bf16.mxu0 0
        %902 = vmatpush1.bf16.xpose.msra.mxu0 0
        %903 = vmatprep.subr.bf16.mxu0 0
        %904 = vmatpush1.bf16.xpose.msra.mxu0 0
        %905 = vmatprep.subr.bf16.mxu0 0
        %906 = vmatpush1.bf16.xpose.msra.mxu0 0
        %907 = vmatprep.subr.bf16.mxu0 0
        %908 = vmatpush1.bf16.xpose.msra.mxu0 0
        %909 = vmatprep.subr.bf16.mxu0 0
        %910 = vmatpush1.bf16.xpose.msra.mxu0 0
        %911 = vmatprep.subr.bf16.mxu0 0
        %912 = vmatpush1.bf16.xpose.msra.mxu0 0
        %913 = vmatprep.subr.bf16.mxu0 0
        %914 = vmatpush1.bf16.xpose.msra.mxu0 0
        %915 = vmatprep.mubr.bf16.mxu0 0
        %916 = vmatmul.mubr.bf16.gmra.mrb[0].mxu0 %v878
        %v917 = vpop.f32.mrb[0].mxu0
        %v918 = vadd.f32 0.0, %v917
        %v919 = vpop.f32.mrb[0].mxu0
        %v920 = vpop.f32.mrb[0].mxu0
        %v921 = vadd.f32 0.0, %v920
        %v922 = vpop.f32.mrb[0].mxu0
        %923 = vdwg.mxu0
        %v924 = vsel %vm492, %v918, -1e+09
        %v925 = vsel %vm493, %v921, -1e+09
        %v926 = vsel %vm504, %v924, -inf
        %927 = vmax.xlane.f32.xlu0 %v926
        %v928 = vpop.xlane.xlu0 %927
        %v929 = vsel %vm504, %v925, -inf
        %930 = vmax.xlane.f32.xlu0 %v929
        %v931 = vpop.xlane.xlu0 %930
        %v932 = vsub.f32 %v924, %v928
        %v933 = vsub.f32 %v925, %v931
        %v934 = vmul.f32 %v932, 1.442695
        %v935 = vpow.pop %v934
        %v936 = vmul.f32 %v933, 1.442695
        %v937 = vpow.pop %v936
        %v938 = vsel %vm504, %v935, 0.0
        %939 = vadd.xlane.f32.xlu0 %v938
        %v940 = vpop.xlane.xlu0 %939
        %v941 = vsel %vm504, %v937, 0.0
        %942 = vadd.xlane.f32.xlu0 %v941
        %v943 = vpop.xlane.xlu0 %942
        %v944 = vrcp.pop %v940
        %v945 = vrcp.pop %v943
        %v946 = vmul.f32 %v935, %v944
        %v947 = vmul.f32 %v937, %v945
        %v948 = vpack.c.bf16 %v947, %v946
        %949 = vrot.lane.b32.xlu0 %v581, 80
        %v950 = vpop.permute.xlu0 %949
        %v953 = vsel %vm504, %v948, 0
        %955 = vmatprep.subr.bf16.mxu0 0
        %956 = vmatpush1.bf16.msra.mxu0 %v950
        %957 = vmatprep.subr.bf16.mxu0 0
        %958 = vmatpush1.bf16.msra.mxu0 0
        %959 = vmatprep.subr.bf16.mxu0 0
        %960 = vmatpush1.bf16.msra.mxu0 0
        %961 = vmatprep.subr.bf16.mxu0 0
        %962 = vmatpush1.bf16.msra.mxu0 0
        %963 = vmatprep.subr.bf16.mxu0 0
        %964 = vmatpush1.bf16.msra.mxu0 0
        %965 = vmatprep.subr.bf16.mxu0 0
        %966 = vmatpush1.bf16.msra.mxu0 0
        %967 = vmatprep.subr.bf16.mxu0 0
        %968 = vmatpush1.bf16.msra.mxu0 0
        %969 = vmatprep.subr.bf16.mxu0 0
        %970 = vmatpush1.bf16.msra.mxu0 0
        %971 = vmatprep.subr.bf16.mxu0 0
        %972 = vmatpush1.bf16.msra.mxu0 0
        %973 = vmatprep.subr.bf16.mxu0 0
        %974 = vmatpush1.bf16.msra.mxu0 0
        %975 = vmatprep.subr.bf16.mxu0 0
        %976 = vmatpush1.bf16.msra.mxu0 0
        %977 = vmatprep.subr.bf16.mxu0 0
        %978 = vmatpush1.bf16.msra.mxu0 0
        %979 = vmatprep.subr.bf16.mxu0 0
        %980 = vmatpush1.bf16.msra.mxu0 0
        %981 = vmatprep.subr.bf16.mxu0 0
        %982 = vmatpush1.bf16.msra.mxu0 0
        %983 = vmatprep.subr.bf16.mxu0 0
        %984 = vmatpush1.bf16.msra.mxu0 0
        %985 = vmatprep.subr.bf16.mxu0 0
        %986 = vmatpush1.bf16.msra.mxu0 0
        %987 = vmatprep.mubr.bf16.mxu0 0
        %988 = vmatmul.mubr.bf16.gmra.mrb[0].mxu0 %v953
        %v989 = vpop.f32.mrb[0].mxu0
        %v990 = vadd.f32 0.0, %v989
        %v991 = vpop.f32.mrb[0].mxu0
        %v992 = vpop.f32.mrb[0].mxu0
        %v993 = vadd.f32 0.0, %v992
        %v994 = vpop.f32.mrb[0].mxu0
        %995 = vdwg.mxu0
        %996 = vrot.lane.b32.xlu0 %v498, 64
        %v997 = vpop.permute.xlu0 %996
        %998 = vrot.lane.b32.xlu0 %v503, 64
        %v999 = vpop.permute.xlu0 %998
        %v1001 = vsel %vm504, %v997, 0
        %v1004 = vsel %vm504, %v999, 0
        %1006 = vmatprep.subr.bf16.mxu0 0
        %1007 = vmatpush1.bf16.xpose.msra.mxu0 %v1004
        %1008 = vmatprep.subr.bf16.mxu0 0
        %1009 = vmatpush1.bf16.xpose.msra.mxu0 0
        %1010 = vmatprep.subr.bf16.mxu0 0
        %1011 = vmatpush1.bf16.xpose.msra.mxu0 0
        %1012 = vmatprep.subr.bf16.mxu0 0
        %1013 = vmatpush1.bf16.xpose.msra.mxu0 0
        %1014 = vmatprep.subr.bf16.mxu0 0
        %1015 = vmatpush1.bf16.xpose.msra.mxu0 0
        %1016 = vmatprep.subr.bf16.mxu0 0
        %1017 = vmatpush1.bf16.xpose.msra.mxu0 0
        %1018 = vmatprep.subr.bf16.mxu0 0
        %1019 = vmatpush1.bf16.xpose.msra.mxu0 0
        %1020 = vmatprep.subr.bf16.mxu0 0
        %1021 = vmatpush1.bf16.xpose.msra.mxu0 0
        %1022 = vmatprep.subr.bf16.mxu0 0
        %1023 = vmatpush1.bf16.xpose.msra.mxu0 0
        %1024 = vmatprep.subr.bf16.mxu0 0
        %1025 = vmatpush1.bf16.xpose.msra.mxu0 0
        %1026 = vmatprep.subr.bf16.mxu0 0
        %1027 = vmatpush1.bf16.xpose.msra.mxu0 0
        %1028 = vmatprep.subr.bf16.mxu0 0
        %1029 = vmatpush1.bf16.xpose.msra.mxu0 0
        %1030 = vmatprep.subr.bf16.mxu0 0
        %1031 = vmatpush1.bf16.xpose.msra.mxu0 0
        %1032 = vmatprep.subr.bf16.mxu0 0
        %1033 = vmatpush1.bf16.xpose.msra.mxu0 0
        %1034 = vmatprep.subr.bf16.mxu0 0
        %1035 = vmatpush1.bf16.xpose.msra.mxu0 0
        %1036 = vmatprep.subr.bf16.mxu0 0
        %1037 = vmatpush1.bf16.xpose.msra.mxu0 0
        %1038 = vmatprep.mubr.bf16.mxu0 0
        %1039 = vmatmul.mubr.bf16.gmra.mrb[0].mxu0 %v1001
        %v1040 = vpop.f32.mrb[0].mxu0
        %v1041 = vadd.f32 0.0, %v1040
        %v1042 = vpop.f32.mrb[0].mxu0
        %v1043 = vpop.f32.mrb[0].mxu0
        %v1044 = vadd.f32 0.0, %v1043
        %v1045 = vpop.f32.mrb[0].mxu0
        %1046 = vdwg.mxu0
        %v1047 = vsel %vm492, %v1041, -1e+09
        %v1048 = vsel %vm493, %v1044, -1e+09
        %v1049 = vsel %vm504, %v1047, -inf
        %1050 = vmax.xlane.f32.xlu0 %v1049
        %v1051 = vpop.xlane.xlu0 %1050
        %v1052 = vsel %vm504, %v1048, -inf
        %1053 = vmax.xlane.f32.xlu0 %v1052
        %v1054 = vpop.xlane.xlu0 %1053
        %v1055 = vsub.f32 %v1047, %v1051
        %v1056 = vsub.f32 %v1048, %v1054
        %v1057 = vmul.f32 %v1055, 1.442695
        %v1058 = vpow.pop %v1057
        %v1059 = vmul.f32 %v1056, 1.442695
        %v1060 = vpow.pop %v1059
        %v1061 = vsel %vm504, %v1058, 0.0
        %1062 = vadd.xlane.f32.xlu0 %v1061
        %v1063 = vpop.xlane.xlu0 %1062
        %v1064 = vsel %vm504, %v1060, 0.0
        %1065 = vadd.xlane.f32.xlu0 %v1064
        %v1066 = vpop.xlane.xlu0 %1065
        %v1067 = vrcp.pop %v1063
        %v1068 = vrcp.pop %v1066
        %v1069 = vmul.f32 %v1058, %v1067
        %v1070 = vmul.f32 %v1060, %v1068
        %v1071 = vpack.c.bf16 %v1070, %v1069
        %1072 = vrot.lane.b32.xlu0 %v581, 64
        %v1073 = vpop.permute.xlu0 %1072
        %v1076 = vsel %vm504, %v1071, 0
        %1078 = vmatprep.subr.bf16.mxu0 0
        %1079 = vmatpush1.bf16.msra.mxu0 %v1073
        %1080 = vmatprep.subr.bf16.mxu0 0
        %1081 = vmatpush1.bf16.msra.mxu0 0
        %1082 = vmatprep.subr.bf16.mxu0 0
        %1083 = vmatpush1.bf16.msra.mxu0 0
        %1084 = vmatprep.subr.bf16.mxu0 0
        %1085 = vmatpush1.bf16.msra.mxu0 0
        %1086 = vmatprep.subr.bf16.mxu0 0
        %1087 = vmatpush1.bf16.msra.mxu0 0
        %1088 = vmatprep.subr.bf16.mxu0 0
        %1089 = vmatpush1.bf16.msra.mxu0 0
        %1090 = vmatprep.subr.bf16.mxu0 0
        %1091 = vmatpush1.bf16.msra.mxu0 0
        %1092 = vmatprep.subr.bf16.mxu0 0
        %1093 = vmatpush1.bf16.msra.mxu0 0
        %1094 = vmatprep.subr.bf16.mxu0 0
        %1095 = vmatpush1.bf16.msra.mxu0 0
        %1096 = vmatprep.subr.bf16.mxu0 0
        %1097 = vmatpush1.bf16.msra.mxu0 0
        %1098 = vmatprep.subr.bf16.mxu0 0
        %1099 = vmatpush1.bf16.msra.mxu0 0
        %1100 = vmatprep.subr.bf16.mxu0 0
        %1101 = vmatpush1.bf16.msra.mxu0 0
        %1102 = vmatprep.subr.bf16.mxu0 0
        %1103 = vmatpush1.bf16.msra.mxu0 0
        %1104 = vmatprep.subr.bf16.mxu0 0
        %1105 = vmatpush1.bf16.msra.mxu0 0
        %1106 = vmatprep.subr.bf16.mxu0 0
        %1107 = vmatpush1.bf16.msra.mxu0 0
        %1108 = vmatprep.subr.bf16.mxu0 0
        %1109 = vmatpush1.bf16.msra.mxu0 0
        %1110 = vmatprep.mubr.bf16.mxu0 0
        %1111 = vmatmul.mubr.bf16.gmra.mrb[0].mxu0 %v1076
        %v1112 = vpop.f32.mrb[0].mxu0
        %v1113 = vadd.f32 0.0, %v1112
        %v1114 = vpop.f32.mrb[0].mxu0
        %v1115 = vpop.f32.mrb[0].mxu0
        %v1116 = vadd.f32 0.0, %v1115
        %v1117 = vpop.f32.mrb[0].mxu0
        %1118 = vdwg.mxu0
        %1119 = vrot.lane.b32.xlu0 %v498, 48
        %v1120 = vpop.permute.xlu0 %1119
        %1121 = vrot.lane.b32.xlu0 %v503, 48
        %v1122 = vpop.permute.xlu0 %1121
        %v1124 = vsel %vm504, %v1120, 0
        %v1127 = vsel %vm504, %v1122, 0
        %1129 = vmatprep.subr.bf16.mxu0 0
        %1130 = vmatpush1.bf16.xpose.msra.mxu0 %v1127
        %1131 = vmatprep.subr.bf16.mxu0 0
        %1132 = vmatpush1.bf16.xpose.msra.mxu0 0
        %1133 = vmatprep.subr.bf16.mxu0 0
        %1134 = vmatpush1.bf16.xpose.msra.mxu0 0
        %1135 = vmatprep.subr.bf16.mxu0 0
        %1136 = vmatpush1.bf16.xpose.msra.mxu0 0
        %1137 = vmatprep.subr.bf16.mxu0 0
        %1138 = vmatpush1.bf16.xpose.msra.mxu0 0
        %1139 = vmatprep.subr.bf16.mxu0 0
        %1140 = vmatpush1.bf16.xpose.msra.mxu0 0
        %1141 = vmatprep.subr.bf16.mxu0 0
        %1142 = vmatpush1.bf16.xpose.msra.mxu0 0
        %1143 = vmatprep.subr.bf16.mxu0 0
        %1144 = vmatpush1.bf16.xpose.msra.mxu0 0
        %1145 = vmatprep.subr.bf16.mxu0 0
        %1146 = vmatpush1.bf16.xpose.msra.mxu0 0
        %1147 = vmatprep.subr.bf16.mxu0 0
        %1148 = vmatpush1.bf16.xpose.msra.mxu0 0
        %1149 = vmatprep.subr.bf16.mxu0 0
        %1150 = vmatpush1.bf16.xpose.msra.mxu0 0
        %1151 = vmatprep.subr.bf16.mxu0 0
        %1152 = vmatpush1.bf16.xpose.msra.mxu0 0
        %1153 = vmatprep.subr.bf16.mxu0 0
        %1154 = vmatpush1.bf16.xpose.msra.mxu0 0
        %1155 = vmatprep.subr.bf16.mxu0 0
        %1156 = vmatpush1.bf16.xpose.msra.mxu0 0
        %1157 = vmatprep.subr.bf16.mxu0 0
        %1158 = vmatpush1.bf16.xpose.msra.mxu0 0
        %1159 = vmatprep.subr.bf16.mxu0 0
        %1160 = vmatpush1.bf16.xpose.msra.mxu0 0
        %1161 = vmatprep.mubr.bf16.mxu0 0
        %1162 = vmatmul.mubr.bf16.gmra.mrb[0].mxu0 %v1124
        %v1163 = vpop.f32.mrb[0].mxu0
        %v1164 = vadd.f32 0.0, %v1163
        %v1165 = vpop.f32.mrb[0].mxu0
        %v1166 = vpop.f32.mrb[0].mxu0
        %v1167 = vadd.f32 0.0, %v1166
        %v1168 = vpop.f32.mrb[0].mxu0
        %1169 = vdwg.mxu0
        %v1170 = vsel %vm492, %v1164, -1e+09
        %v1171 = vsel %vm493, %v1167, -1e+09
        %v1172 = vsel %vm504, %v1170, -inf
        %1173 = vmax.xlane.f32.xlu0 %v1172
        %v1174 = vpop.xlane.xlu0 %1173
        %v1175 = vsel %vm504, %v1171, -inf
        %1176 = vmax.xlane.f32.xlu0 %v1175
        %v1177 = vpop.xlane.xlu0 %1176
        %v1178 = vsub.f32 %v1170, %v1174
        %v1179 = vsub.f32 %v1171, %v1177
        %v1180 = vmul.f32 %v1178, 1.442695
        %v1181 = vpow.pop %v1180
        %v1182 = vmul.f32 %v1179, 1.442695
        %v1183 = vpow.pop %v1182
        %v1184 = vsel %vm504, %v1181, 0.0
        %1185 = vadd.xlane.f32.xlu0 %v1184
        %v1186 = vpop.xlane.xlu0 %1185
        %v1187 = vsel %vm504, %v1183, 0.0
        %1188 = vadd.xlane.f32.xlu0 %v1187
        %v1189 = vpop.xlane.xlu0 %1188
        %v1190 = vrcp.pop %v1186
        %v1191 = vrcp.pop %v1189
        %v1192 = vmul.f32 %v1181, %v1190
        %v1193 = vmul.f32 %v1183, %v1191
        %v1194 = vpack.c.bf16 %v1193, %v1192
        %1195 = vrot.lane.b32.xlu0 %v581, 48
        %v1196 = vpop.permute.xlu0 %1195
        %v1199 = vsel %vm504, %v1194, 0
        %1201 = vmatprep.subr.bf16.mxu0 0
        %1202 = vmatpush1.bf16.msra.mxu0 %v1196
        %1203 = vmatprep.subr.bf16.mxu0 0
        %1204 = vmatpush1.bf16.msra.mxu0 0
        %1205 = vmatprep.subr.bf16.mxu0 0
        %1206 = vmatpush1.bf16.msra.mxu0 0
        %1207 = vmatprep.subr.bf16.mxu0 0
        %1208 = vmatpush1.bf16.msra.mxu0 0
        %1209 = vmatprep.subr.bf16.mxu0 0
        %1210 = vmatpush1.bf16.msra.mxu0 0
        %1211 = vmatprep.subr.bf16.mxu0 0
        %1212 = vmatpush1.bf16.msra.mxu0 0
        %1213 = vmatprep.subr.bf16.mxu0 0
        %1214 = vmatpush1.bf16.msra.mxu0 0
        %1215 = vmatprep.subr.bf16.mxu0 0
        %1216 = vmatpush1.bf16.msra.mxu0 0
        %1217 = vmatprep.subr.bf16.mxu0 0
        %1218 = vmatpush1.bf16.msra.mxu0 0
        %1219 = vmatprep.subr.bf16.mxu0 0
        %1220 = vmatpush1.bf16.msra.mxu0 0
        %1221 = vmatprep.subr.bf16.mxu0 0
        %1222 = vmatpush1.bf16.msra.mxu0 0
        %1223 = vmatprep.subr.bf16.mxu0 0
        %1224 = vmatpush1.bf16.msra.mxu0 0
        %1225 = vmatprep.subr.bf16.mxu0 0
        %1226 = vmatpush1.bf16.msra.mxu0 0
        %1227 = vmatprep.subr.bf16.mxu0 0
        %1228 = vmatpush1.bf16.msra.mxu0 0
        %1229 = vmatprep.subr.bf16.mxu0 0
        %1230 = vmatpush1.bf16.msra.mxu0 0
        %1231 = vmatprep.subr.bf16.mxu0 0
        %1232 = vmatpush1.bf16.msra.mxu0 0
        %1233 = vmatprep.mubr.bf16.mxu0 0
        %1234 = vmatmul.mubr.bf16.gmra.mrb[0].mxu0 %v1199
        %v1235 = vpop.f32.mrb[0].mxu0
        %v1236 = vadd.f32 0.0, %v1235
        %v1237 = vpop.f32.mrb[0].mxu0
        %v1238 = vpop.f32.mrb[0].mxu0
        %v1239 = vadd.f32 0.0, %v1238
        %v1240 = vpop.f32.mrb[0].mxu0
        %1241 = vdwg.mxu0
        %1242 = vrot.lane.b32.xlu0 %v498, 32
        %v1243 = vpop.permute.xlu0 %1242
        %1244 = vrot.lane.b32.xlu0 %v503, 32
        %v1245 = vpop.permute.xlu0 %1244
        %v1247 = vsel %vm504, %v1243, 0
        %v1250 = vsel %vm504, %v1245, 0
        %1252 = vmatprep.subr.bf16.mxu0 0
        %1253 = vmatpush1.bf16.xpose.msra.mxu0 %v1250
        %1254 = vmatprep.subr.bf16.mxu0 0
        %1255 = vmatpush1.bf16.xpose.msra.mxu0 0
        %1256 = vmatprep.subr.bf16.mxu0 0
        %1257 = vmatpush1.bf16.xpose.msra.mxu0 0
        %1258 = vmatprep.subr.bf16.mxu0 0
        %1259 = vmatpush1.bf16.xpose.msra.mxu0 0
        %1260 = vmatprep.subr.bf16.mxu0 0
        %1261 = vmatpush1.bf16.xpose.msra.mxu0 0
        %1262 = vmatprep.subr.bf16.mxu0 0
        %1263 = vmatpush1.bf16.xpose.msra.mxu0 0
        %1264 = vmatprep.subr.bf16.mxu0 0
        %1265 = vmatpush1.bf16.xpose.msra.mxu0 0
        %1266 = vmatprep.subr.bf16.mxu0 0
        %1267 = vmatpush1.bf16.xpose.msra.mxu0 0
        %1268 = vmatprep.subr.bf16.mxu0 0
        %1269 = vmatpush1.bf16.xpose.msra.mxu0 0
        %1270 = vmatprep.subr.bf16.mxu0 0
        %1271 = vmatpush1.bf16.xpose.msra.mxu0 0
        %1272 = vmatprep.subr.bf16.mxu0 0
        %1273 = vmatpush1.bf16.xpose.msra.mxu0 0
        %1274 = vmatprep.subr.bf16.mxu0 0
        %1275 = vmatpush1.bf16.xpose.msra.mxu0 0
        %1276 = vmatprep.subr.bf16.mxu0 0
        %1277 = vmatpush1.bf16.xpose.msra.mxu0 0
        %1278 = vmatprep.subr.bf16.mxu0 0
        %1279 = vmatpush1.bf16.xpose.msra.mxu0 0
        %1280 = vmatprep.subr.bf16.mxu0 0
        %1281 = vmatpush1.bf16.xpose.msra.mxu0 0
        %1282 = vmatprep.subr.bf16.mxu0 0
        %1283 = vmatpush1.bf16.xpose.msra.mxu0 0
        %1284 = vmatprep.mubr.bf16.mxu0 0
        %1285 = vmatmul.mubr.bf16.gmra.mrb[0].mxu0 %v1247
        %v1286 = vpop.f32.mrb[0].mxu0
        %v1287 = vadd.f32 0.0, %v1286
        %v1288 = vpop.f32.mrb[0].mxu0
        %v1289 = vpop.f32.mrb[0].mxu0
        %v1290 = vadd.f32 0.0, %v1289
        %v1291 = vpop.f32.mrb[0].mxu0
        %1292 = vdwg.mxu0
        %v1293 = vsel %vm492, %v1287, -1e+09
        %v1294 = vsel %vm493, %v1290, -1e+09
        %v1295 = vsel %vm504, %v1293, -inf
        %1296 = vmax.xlane.f32.xlu0 %v1295
        %v1297 = vpop.xlane.xlu0 %1296
        %v1298 = vsel %vm504, %v1294, -inf
        %1299 = vmax.xlane.f32.xlu0 %v1298
        %v1300 = vpop.xlane.xlu0 %1299
        %v1301 = vsub.f32 %v1293, %v1297
        %v1302 = vsub.f32 %v1294, %v1300
        %v1303 = vmul.f32 %v1301, 1.442695
        %v1304 = vpow.pop %v1303
        %v1305 = vmul.f32 %v1302, 1.442695
        %v1306 = vpow.pop %v1305
        %v1307 = vsel %vm504, %v1304, 0.0
        %1308 = vadd.xlane.f32.xlu0 %v1307
        %v1309 = vpop.xlane.xlu0 %1308
        %v1310 = vsel %vm504, %v1306, 0.0
        %1311 = vadd.xlane.f32.xlu0 %v1310
        %v1312 = vpop.xlane.xlu0 %1311
        %v1313 = vrcp.pop %v1309
        %v1314 = vrcp.pop %v1312
        %v1315 = vmul.f32 %v1304, %v1313
        %v1316 = vmul.f32 %v1306, %v1314
        %v1317 = vpack.c.bf16 %v1316, %v1315
        %1318 = vrot.lane.b32.xlu0 %v581, 32
        %v1319 = vpop.permute.xlu0 %1318
        %v1322 = vsel %vm504, %v1317, 0
        %1324 = vmatprep.subr.bf16.mxu0 0
        %1325 = vmatpush1.bf16.msra.mxu0 %v1319
        %1326 = vmatprep.subr.bf16.mxu0 0
        %1327 = vmatpush1.bf16.msra.mxu0 0
        %1328 = vmatprep.subr.bf16.mxu0 0
        %1329 = vmatpush1.bf16.msra.mxu0 0
        %1330 = vmatprep.subr.bf16.mxu0 0
        %1331 = vmatpush1.bf16.msra.mxu0 0
        %1332 = vmatprep.subr.bf16.mxu0 0
        %1333 = vmatpush1.bf16.msra.mxu0 0
        %1334 = vmatprep.subr.bf16.mxu0 0
        %1335 = vmatpush1.bf16.msra.mxu0 0
        %1336 = vmatprep.subr.bf16.mxu0 0
        %1337 = vmatpush1.bf16.msra.mxu0 0
        %1338 = vmatprep.subr.bf16.mxu0 0
        %1339 = vmatpush1.bf16.msra.mxu0 0
        %1340 = vmatprep.subr.bf16.mxu0 0
        %1341 = vmatpush1.bf16.msra.mxu0 0
        %1342 = vmatprep.subr.bf16.mxu0 0
        %1343 = vmatpush1.bf16.msra.mxu0 0
        %1344 = vmatprep.subr.bf16.mxu0 0
        %1345 = vmatpush1.bf16.msra.mxu0 0
        %1346 = vmatprep.subr.bf16.mxu0 0
        %1347 = vmatpush1.bf16.msra.mxu0 0
        %1348 = vmatprep.subr.bf16.mxu0 0
        %1349 = vmatpush1.bf16.msra.mxu0 0
        %1350 = vmatprep.subr.bf16.mxu0 0
        %1351 = vmatpush1.bf16.msra.mxu0 0
        %1352 = vmatprep.subr.bf16.mxu0 0
        %1353 = vmatpush1.bf16.msra.mxu0 0
        %1354 = vmatprep.subr.bf16.mxu0 0
        %1355 = vmatpush1.bf16.msra.mxu0 0
        %1356 = vmatprep.mubr.bf16.mxu0 0
        %1357 = vmatmul.mubr.bf16.gmra.mrb[0].mxu0 %v1322
        %v1358 = vpop.f32.mrb[0].mxu0
        %v1359 = vadd.f32 0.0, %v1358
        %v1360 = vpop.f32.mrb[0].mxu0
        %v1361 = vpop.f32.mrb[0].mxu0
        %v1362 = vadd.f32 0.0, %v1361
        %v1363 = vpop.f32.mrb[0].mxu0
        %1364 = vdwg.mxu0
        %1365 = vrot.lane.b32.xlu0 %v498, 16
        %v1366 = vpop.permute.xlu0 %1365
        %1367 = vrot.lane.b32.xlu0 %v503, 16
        %v1368 = vpop.permute.xlu0 %1367
        %v1370 = vsel %vm504, %v1366, 0
        %v1373 = vsel %vm504, %v1368, 0
        %1375 = vmatprep.subr.bf16.mxu0 0
        %1376 = vmatpush1.bf16.xpose.msra.mxu0 %v1373
        %1377 = vmatprep.subr.bf16.mxu0 0
        %1378 = vmatpush1.bf16.xpose.msra.mxu0 0
        %1379 = vmatprep.subr.bf16.mxu0 0
        %1380 = vmatpush1.bf16.xpose.msra.mxu0 0
        %1381 = vmatprep.subr.bf16.mxu0 0
        %1382 = vmatpush1.bf16.xpose.msra.mxu0 0
        %1383 = vmatprep.subr.bf16.mxu0 0
        %1384 = vmatpush1.bf16.xpose.msra.mxu0 0
        %1385 = vmatprep.subr.bf16.mxu0 0
        %1386 = vmatpush1.bf16.xpose.msra.mxu0 0
        %1387 = vmatprep.subr.bf16.mxu0 0
        %1388 = vmatpush1.bf16.xpose.msra.mxu0 0
        %1389 = vmatprep.subr.bf16.mxu0 0
        %1390 = vmatpush1.bf16.xpose.msra.mxu0 0
        %1391 = vmatprep.subr.bf16.mxu0 0
        %1392 = vmatpush1.bf16.xpose.msra.mxu0 0
        %1393 = vmatprep.subr.bf16.mxu0 0
        %1394 = vmatpush1.bf16.xpose.msra.mxu0 0
        %1395 = vmatprep.subr.bf16.mxu0 0
        %1396 = vmatpush1.bf16.xpose.msra.mxu0 0
        %1397 = vmatprep.subr.bf16.mxu0 0
        %1398 = vmatpush1.bf16.xpose.msra.mxu0 0
        %1399 = vmatprep.subr.bf16.mxu0 0
        %1400 = vmatpush1.bf16.xpose.msra.mxu0 0
        %1401 = vmatprep.subr.bf16.mxu0 0
        %1402 = vmatpush1.bf16.xpose.msra.mxu0 0
        %1403 = vmatprep.subr.bf16.mxu0 0
        %1404 = vmatpush1.bf16.xpose.msra.mxu0 0
        %1405 = vmatprep.subr.bf16.mxu0 0
        %1406 = vmatpush1.bf16.xpose.msra.mxu0 0
        %1407 = vmatprep.mubr.bf16.mxu0 0
        %1408 = vmatmul.mubr.bf16.gmra.mrb[0].mxu0 %v1370
        %v1409 = vpop.f32.mrb[0].mxu0
        %v1410 = vadd.f32 0.0, %v1409
        %v1411 = vpop.f32.mrb[0].mxu0
        %v1412 = vpop.f32.mrb[0].mxu0
        %v1413 = vadd.f32 0.0, %v1412
        %v1414 = vpop.f32.mrb[0].mxu0
        %1415 = vdwg.mxu0
        %v1416 = vsel %vm492, %v1410, -1e+09
        %v1417 = vsel %vm493, %v1413, -1e+09
        %v1418 = vsel %vm504, %v1416, -inf
        %1419 = vmax.xlane.f32.xlu0 %v1418
        %v1420 = vpop.xlane.xlu0 %1419
        %v1421 = vsel %vm504, %v1417, -inf
        %1422 = vmax.xlane.f32.xlu0 %v1421
        %v1423 = vpop.xlane.xlu0 %1422
        %v1424 = vsub.f32 %v1416, %v1420
        %v1425 = vsub.f32 %v1417, %v1423
        %v1426 = vmul.f32 %v1424, 1.442695
        %v1427 = vpow.pop %v1426
        %v1428 = vmul.f32 %v1425, 1.442695
        %v1429 = vpow.pop %v1428
        %v1430 = vsel %vm504, %v1427, 0.0
        %1431 = vadd.xlane.f32.xlu0 %v1430
        %v1432 = vpop.xlane.xlu0 %1431
        %v1433 = vsel %vm504, %v1429, 0.0
        %1434 = vadd.xlane.f32.xlu0 %v1433
        %v1435 = vpop.xlane.xlu0 %1434
        %v1436 = vrcp.pop %v1432
        %v1437 = vrcp.pop %v1435
        %v1438 = vmul.f32 %v1427, %v1436
        %v1439 = vmul.f32 %v1429, %v1437
        %v1440 = vpack.c.bf16 %v1439, %v1438
        %1441 = vrot.lane.b32.xlu0 %v581, 16
        %v1442 = vpop.permute.xlu0 %1441
        %v1445 = vsel %vm504, %v1440, 0
        %1447 = vmatprep.subr.bf16.mxu0 0
        %1448 = vmatpush1.bf16.msra.mxu0 %v1442
        %1449 = vmatprep.subr.bf16.mxu0 0
        %1450 = vmatpush1.bf16.msra.mxu0 0
        %1451 = vmatprep.subr.bf16.mxu0 0
        %1452 = vmatpush1.bf16.msra.mxu0 0
        %1453 = vmatprep.subr.bf16.mxu0 0
        %1454 = vmatpush1.bf16.msra.mxu0 0
        %1455 = vmatprep.subr.bf16.mxu0 0
        %1456 = vmatpush1.bf16.msra.mxu0 0
        %1457 = vmatprep.subr.bf16.mxu0 0
        %1458 = vmatpush1.bf16.msra.mxu0 0
        %1459 = vmatprep.subr.bf16.mxu0 0
        %1460 = vmatpush1.bf16.msra.mxu0 0
        %1461 = vmatprep.subr.bf16.mxu0 0
        %1462 = vmatpush1.bf16.msra.mxu0 0
        %1463 = vmatprep.subr.bf16.mxu0 0
        %1464 = vmatpush1.bf16.msra.mxu0 0
        %1465 = vmatprep.subr.bf16.mxu0 0
        %1466 = vmatpush1.bf16.msra.mxu0 0
        %1467 = vmatprep.subr.bf16.mxu0 0
        %1468 = vmatpush1.bf16.msra.mxu0 0
        %1469 = vmatprep.subr.bf16.mxu0 0
        %1470 = vmatpush1.bf16.msra.mxu0 0
        %1471 = vmatprep.subr.bf16.mxu0 0
        %1472 = vmatpush1.bf16.msra.mxu0 0
        %1473 = vmatprep.subr.bf16.mxu0 0
        %1474 = vmatpush1.bf16.msra.mxu0 0
        %1475 = vmatprep.subr.bf16.mxu0 0
        %1476 = vmatpush1.bf16.msra.mxu0 0
        %1477 = vmatprep.subr.bf16.mxu0 0
        %1478 = vmatpush1.bf16.msra.mxu0 0
        %1479 = vmatprep.mubr.bf16.mxu0 0
        %1480 = vmatmul.mubr.bf16.gmra.mrb[0].mxu0 %v1445
        %v1481 = vpop.f32.mrb[0].mxu0
        %v1482 = vadd.f32 0.0, %v1481
        %v1483 = vpop.f32.mrb[0].mxu0
        %v1484 = vpop.f32.mrb[0].mxu0
        %v1485 = vadd.f32 0.0, %v1484
        %v1486 = vpop.f32.mrb[0].mxu0
        %1487 = vdwg.mxu0
        %1490 = vrot.lane.b32.xlu0 %v744, 16
        %v1491 = vpop.permute.xlu0 %1490
        %1492 = vrot.lane.b32.xlu0 %v747, 16
        %v1493 = vpop.permute.xlu0 %1492
        %1498 = vrot.lane.b32.xlu0 %v867, 32
        %v1499 = vpop.permute.xlu0 %1498
        %1500 = vrot.lane.b32.xlu0 %v870, 32
        %v1501 = vpop.permute.xlu0 %1500
        %1506 = vrot.lane.b32.xlu0 %v990, 48
        %v1507 = vpop.permute.xlu0 %1506
        %1508 = vrot.lane.b32.xlu0 %v993, 48
        %v1509 = vpop.permute.xlu0 %1508
        %1514 = vrot.lane.b32.xlu0 %v1113, 64
        %v1515 = vpop.permute.xlu0 %1514
        %1516 = vrot.lane.b32.xlu0 %v1116, 64
        %v1517 = vpop.permute.xlu0 %1516
        %1522 = vrot.lane.b32.xlu0 %v1236, 80
        %v1523 = vpop.permute.xlu0 %1522
        %1524 = vrot.lane.b32.xlu0 %v1239, 80
        %v1525 = vpop.permute.xlu0 %1524
        %1530 = vrot.lane.b32.xlu0 %v1359, 96
        %v1531 = vpop.permute.xlu0 %1530
        %1532 = vrot.lane.b32.xlu0 %v1362, 96
        %v1533 = vpop.permute.xlu0 %1532
        %1538 = vrot.lane.b32.xlu0 %v1482, 112
        %v1539 = vpop.permute.xlu0 %1538
        %1540 = vrot.lane.b32.xlu0 %v1485, 112
        %v1541 = vpop.permute.xlu0 %1540
        %v1544 = vsel %vm504, %v621, %v1491
        %v1545 = vsel %vm504, %v624, %v1493
        %vm1546 = vcmask 261120
        %v1547 = vsel %vm1546, %v1544, %v1499
        %v1548 = vsel %vm1546, %v1545, %v1501
        %vm1549 = vcmask 392192
        %v1550 = vsel %vm1549, %v1547, %v1507
        %v1551 = vsel %vm1549, %v1548, %v1509
        %vm1552 = vcmask 523264
        %v1553 = vsel %vm1552, %v1550, %v1515
        %v1554 = vsel %vm1552, %v1551, %v1517
        %vm1555 = vcmask 654336
        %v1556 = vsel %vm1555, %v1553, %v1523
        %v1557 = vsel %vm1555, %v1554, %v1525
        %vm1558 = vcmask 785408
        %v1559 = vsel %vm1558, %v1556, %v1531
        %v1560 = vsel %vm1558, %v1557, %v1533
        %vm1561 = vcmask 916480
        %v1562 = vsel %vm1561, %v1559, %v1539
        %v1563 = vsel %vm1561, %v1560, %v1541
        %v1564 = vpack.c.bf16 %v1563, %v1562
        %v1566 = vunpack.c.l.b16 %v1564
        %v1567 = vunpack.c.h.b16 %v1564
        %v1568 = vpack.c.b16 %v1566, %v1566
        %v1569 = vpack.c.b16 %v1567, %v1567
        %1572 = vst [vmem:[%s468] sm:$0xf] %v1568
        %1573 = vst [vmem:[%s468 + $0x4] sm:$0xf] %v1569
        %s1574 = smul.u32 2, %s21
        %p1575 = scmp.lt.s32.totalorder %s20, 1
        %s1576 = scalar_select %p1575, %s20, 1
        %p1577 = scmp.lt.s32.totalorder %s1574, 1
        %s1578 = scalar_select %p1577, %s1574, 1
        %s1579 = smul.addr %s1576, 2
        %s1580 = sadd.s32 %s1578, %s1579
        %s1581 = smul.addr %s1580, 4
        %s1582 = scalar_lea.vmem %s5, %s1581
        // Predicated region
        $region164: #{transformer_decoder_layer.9} parent=150 // pred_check
          %p1583 = pneg %p180
        $region165: #{transformer_decoder_layer.9} parent=150 // pred_check_branch
          %1585 = sbr.rel (%p1583) target = $region167
        $region166: #{transformer_decoder_layer.9} parent=150 // pred_region
          %s1586 = smul.u32 2, %s21
        $region167: #{transformer_decoder_layer.9} parent=150 // pred_fallthru
          _
      $region151: #{transformer_decoder_layer.9} parent=5 // pred_fallthru
        _
      %p1587 = scmp.le.s32.totalorder 2, %s11
      // Predicated region
      $region168: #{transformer_decoder_layer.9} parent=5 // pred_check
        %p1588 = pneg %p1587
      $region169: #{transformer_decoder_layer.9} parent=5 // pred_check_branch
        %1590 = sbr.rel (%p1588) target = $region171
      $region170: #{transformer_decoder_layer.9} parent=5 // pred_region
        %s1591 = ssub.s32 %s11, 2
        // Predicated region
        $region172: #{transformer_decoder_layer.9} parent=170 // pred_check
          %p1592 = pneg %p186
        $region173: #{transformer_decoder_layer.9} parent=170 // pred_check_branch
          %1594 = sbr.rel (%p1592) target = $region175
        $region174: #{transformer_decoder_layer.9} parent=170 // pred_region
          %s1595 = smul.u32 2, %s23
          %p1596 = scmp.lt.s32.totalorder %s22, 1
          %s1597 = scalar_select %p1596, %s22, 1
          %p1598 = scmp.lt.s32.totalorder %s1595, 1
          %s1599 = scalar_select %p1598, %s1595, 1
          %s1600 = smul.addr %s1597, 2
          %s1601 = sadd.s32 %s1599, %s1600
          %s1602 = smul.addr %s1601, 4
          %s1603 = scalar_lea.vmem %s5, %s1602
        $region175: #{transformer_decoder_layer.9} parent=170 // pred_fallthru
          _
      $region171: #{transformer_decoder_layer.9} parent=5 // pred_fallthru
        _
    $region6: #{transformer_decoder_layer.9} parent=1 // loop_footer
      %s15 = sadd.s32 1, %s11
    $region7: #{transformer_decoder_layer.9} parent=1 // loop_footer_branch
      %10 = sbr.rel target = $region3
    $region8: #{transformer_decoder_layer.9} parent=1 // loop_exit
      _

// kernel: transformer_decoder_layer.12
$region0: #{transformer_decoder_layer.12}
  #allocation0 [shape = 'u32[]', space=smem, size = 0x4, offset = 0x4, fixed_abs, tag = 'smem constant byte address 0x4 - core index']
  #allocation1 [shape = 'u32[144,128]{1,0:T(1,128)}', space=vmem, size = 0x12000, scoped, tag = 'internal scratch']
  #allocation2 [shape = 'f32[32,256]{1,0:T(8,128)}', space=vmem, size = 0x8000, scoped, tag = 'scratch operand']
  %s0 = inlined_call_operand.vmem [shape: f32[32,128], index: 0, kind: input, shape index: {}]
  %s1 = inlined_call_operand.vmem [shape: bf16[128,256], index: 1, kind: input, shape index: {}]
  %s2 = inlined_call_operand.vmem [shape: f32[1,256], index: 2, kind: input, shape index: {}]
  %s3 = inlined_call_operand.vmem [shape: bf16[32,256], index: 3, kind: output, shape index: {}]
  %s4 = sld [smem:[#allocation0]]
  $region30: #{transformer_decoder_layer.12} parent=0
    _
  %s6 = ssub.s32 1, %s4
  %s7 = scalar_select 0, %s6, %s4
  // Predicated region
  $region2: #{transformer_decoder_layer.12} parent=0 // pred_check
    _
  $region3: #{transformer_decoder_layer.12} parent=0 // pred_check_branch
    %9 = sbr.rel (0) target = $region5
  $region4: #{transformer_decoder_layer.12} parent=0 // pred_region
    _
  $region5: #{transformer_decoder_layer.12} parent=0 // pred_fallthru
    _
  // Predicated region
  $region6: #{transformer_decoder_layer.12} parent=0 // pred_check
    _
  $region7: #{transformer_decoder_layer.12} parent=0 // pred_check_branch
    %11 = sbr.rel (0) target = $region9
  $region8: #{transformer_decoder_layer.12} parent=0 // pred_region
    _
  $region9: #{transformer_decoder_layer.12} parent=0 // pred_fallthru
    _
  // Predicated region
  $region10: #{transformer_decoder_layer.12} parent=0 // pred_check
    _
  $region11: #{transformer_decoder_layer.12} parent=0 // pred_check_branch
    %13 = sbr.rel (0) target = $region13
  $region12: #{transformer_decoder_layer.12} parent=0 // pred_region
    _
  $region13: #{transformer_decoder_layer.12} parent=0 // pred_fallthru
    _
  %p15 = scmp.eq.s32.totalorder 0, 0
  // Predicated region
  $region14: #{transformer_decoder_layer.12} parent=0 // pred_check
    %p16 = pneg %p15
  $region15: #{transformer_decoder_layer.12} parent=0 // pred_check_branch
    %18 = sbr.rel (%p16) target = $region17
  $region16: #{transformer_decoder_layer.12} parent=0 // pred_region
    %19 = vst [vmem:[#allocation2] sm:$0xff] 0.0
    %20 = vst [vmem:[#allocation2 + $0x8] sm:$0xff] 0.0
    %21 = vst [vmem:[#allocation2 + $0x10] sm:$0xff] 0.0
    %22 = vst [vmem:[#allocation2 + $0x18] sm:$0xff] 0.0
    %23 = vst [vmem:[#allocation2 + $0x20] sm:$0xff] 0.0
    %24 = vst [vmem:[#allocation2 + $0x28] sm:$0xff] 0.0
    %25 = vst [vmem:[#allocation2 + $0x30] sm:$0xff] 0.0
    %26 = vst [vmem:[#allocation2 + $0x38] sm:$0xff] 0.0
  $region17: #{transformer_decoder_layer.12} parent=0 // pred_fallthru
    _
  %v27 = vld [vmem:[#allocation2] sm:$0xff]
  %v28 = vld [vmem:[#allocation2 + $0x8] sm:$0xff]
  %v29 = vld [vmem:[#allocation2 + $0x10] sm:$0xff]
  %v30 = vld [vmem:[#allocation2 + $0x18] sm:$0xff]
  %v31 = vld [vmem:[#allocation2 + $0x20] sm:$0xff]
  %v32 = vld [vmem:[#allocation2 + $0x28] sm:$0xff]
  %v33 = vld [vmem:[#allocation2 + $0x30] sm:$0xff]
  %v34 = vld [vmem:[#allocation2 + $0x38] sm:$0xff]
  %v35 = vld [vmem:[%s0] sm:$0xff]
  %v36 = vld [vmem:[%s0 + $0x8] sm:$0xff]
  %v37 = vld [vmem:[%s0 + $0x10] sm:$0xff]
  %v38 = vld [vmem:[%s0 + $0x18] sm:$0xff]
  %v39 = vpack.c.bf16 %v36, %v35
  %v40 = vpack.c.bf16 %v38, %v37
  %v41 = vld [vmem:[%s1] sm:$0xff]
  %v42 = vld [vmem:[%s1 + $0x8] sm:$0xff]
  %v43 = vld [vmem:[%s1 + $0x10] sm:$0xff]
  %v44 = vld [vmem:[%s1 + $0x18] sm:$0xff]
  %v45 = vld [vmem:[%s1 + $0x20] sm:$0xff]
  %v46 = vld [vmem:[%s1 + $0x28] sm:$0xff]
  %v47 = vld [vmem:[%s1 + $0x30] sm:$0xff]
  %v48 = vld [vmem:[%s1 + $0x38] sm:$0xff]
  %v49 = vld [vmem:[%s1 + $0x40] sm:$0xff]
  %v50 = vld [vmem:[%s1 + $0x48] sm:$0xff]
  %v51 = vld [vmem:[%s1 + $0x50] sm:$0xff]
  %v52 = vld [vmem:[%s1 + $0x58] sm:$0xff]
  %v53 = vld [vmem:[%s1 + $0x60] sm:$0xff]
  %v54 = vld [vmem:[%s1 + $0x68] sm:$0xff]
  %v55 = vld [vmem:[%s1 + $0x70] sm:$0xff]
  %v56 = vld [vmem:[%s1 + $0x78] sm:$0xff]
  %v73 = vunpack.c.l.b16 %v41
  %v74 = vunpack.c.h.b16 %v41
  %v75 = vunpack.c.l.b16 %v42
  %v76 = vunpack.c.h.b16 %v42
  %v77 = vunpack.c.l.b16 %v43
  %v78 = vunpack.c.h.b16 %v43
  %v79 = vunpack.c.l.b16 %v44
  %v80 = vunpack.c.h.b16 %v44
  %v81 = vunpack.c.l.b16 %v45
  %v82 = vunpack.c.h.b16 %v45
  %v83 = vunpack.c.l.b16 %v46
  %v84 = vunpack.c.h.b16 %v46
  %v85 = vunpack.c.l.b16 %v47
  %v86 = vunpack.c.h.b16 %v47
  %v87 = vunpack.c.l.b16 %v48
  %v88 = vunpack.c.h.b16 %v48
  %v89 = vunpack.c.l.b16 %v49
  %v90 = vunpack.c.h.b16 %v49
  %v91 = vunpack.c.l.b16 %v50
  %v92 = vunpack.c.h.b16 %v50
  %v93 = vunpack.c.l.b16 %v51
  %v94 = vunpack.c.h.b16 %v51
  %v95 = vunpack.c.l.b16 %v52
  %v96 = vunpack.c.h.b16 %v52
  %v97 = vunpack.c.l.b16 %v53
  %v98 = vunpack.c.h.b16 %v53
  %v99 = vunpack.c.l.b16 %v54
  %v100 = vunpack.c.h.b16 %v54
  %v101 = vunpack.c.l.b16 %v55
  %v102 = vunpack.c.h.b16 %v55
  %v103 = vunpack.c.l.b16 %v56
  %v104 = vunpack.c.h.b16 %v56
  %v105 = vpack.c.b16 %v75, %v73
  %v106 = vpack.c.b16 %v76, %v74
  %v107 = vpack.c.b16 %v79, %v77
  %v108 = vpack.c.b16 %v80, %v78
  %v109 = vpack.c.b16 %v83, %v81
  %v110 = vpack.c.b16 %v84, %v82
  %v111 = vpack.c.b16 %v87, %v85
  %v112 = vpack.c.b16 %v88, %v86
  %v113 = vpack.c.b16 %v91, %v89
  %v114 = vpack.c.b16 %v92, %v90
  %v115 = vpack.c.b16 %v95, %v93
  %v116 = vpack.c.b16 %v96, %v94
  %v117 = vpack.c.b16 %v99, %v97
  %v118 = vpack.c.b16 %v100, %v98
  %v119 = vpack.c.b16 %v103, %v101
  %v120 = vpack.c.b16 %v104, %v102
  %137 = vmatprep.subr.bf16.mxu0 %v106
  %138 = vmatpush1.bf16.msra.mxu0 %v105
  %139 = vmatprep.subr.bf16.mxu0 %v108
  %140 = vmatpush1.bf16.msra.mxu0 %v107
  %141 = vmatprep.subr.bf16.mxu0 %v110
  %142 = vmatpush1.bf16.msra.mxu0 %v109
  %143 = vmatprep.subr.bf16.mxu0 %v112
  %144 = vmatpush1.bf16.msra.mxu0 %v111
  %145 = vmatprep.subr.bf16.mxu0 %v114
  %146 = vmatpush1.bf16.msra.mxu0 %v113
  %147 = vmatprep.subr.bf16.mxu0 %v116
  %148 = vmatpush1.bf16.msra.mxu0 %v115
  %149 = vmatprep.subr.bf16.mxu0 %v118
  %150 = vmatpush1.bf16.msra.mxu0 %v117
  %151 = vmatprep.subr.bf16.mxu0 %v120
  %152 = vmatpush1.bf16.msra.mxu0 %v119
  %153 = vmatprep.subr.bf16.mxu0 0
  %154 = vmatpush1.bf16.msra.mxu0 0
  %155 = vmatprep.subr.bf16.mxu0 0
  %156 = vmatpush1.bf16.msra.mxu0 0
  %157 = vmatprep.subr.bf16.mxu0 0
  %158 = vmatpush1.bf16.msra.mxu0 0
  %159 = vmatprep.subr.bf16.mxu0 0
  %160 = vmatpush1.bf16.msra.mxu0 0
  %161 = vmatprep.subr.bf16.mxu0 0
  %162 = vmatpush1.bf16.msra.mxu0 0
  %163 = vmatprep.subr.bf16.mxu0 0
  %164 = vmatpush1.bf16.msra.mxu0 0
  %165 = vmatprep.subr.bf16.mxu0 0
  %166 = vmatpush1.bf16.msra.mxu0 0
  %167 = vmatprep.subr.bf16.mxu0 0
  %168 = vmatpush1.bf16.msra.mxu0 0
  %169 = vmatprep.mubr.bf16.mxu0 0
  %170 = vmatmul.mubr.bf16.gmra.mrb[0].mxu0 %v39
  %v171 = vpop.f32.mrb[0].mxu0
  %v172 = vadd.f32 0.0, %v171
  %v173 = vpop.f32.mrb[0].mxu0
  %v174 = vadd.f32 0.0, %v173
  %v175 = vpop.f32.mrb[0].mxu0
  %v176 = vadd.f32 0.0, %v175
  %v177 = vpop.f32.mrb[0].mxu0
  %v178 = vadd.f32 0.0, %v177
  %179 = vmatprep.mubr.bf16.mxu0 0
  %180 = vmatmul.mubr.bf16.gmra.mrb[0].mxu0 %v40
  %v181 = vpop.f32.mrb[0].mxu0
  %v182 = vadd.f32 0.0, %v181
  %v183 = vpop.f32.mrb[0].mxu0
  %v184 = vadd.f32 0.0, %v183
  %v185 = vpop.f32.mrb[0].mxu0
  %v186 = vadd.f32 0.0, %v185
  %v187 = vpop.f32.mrb[0].mxu0
  %v188 = vadd.f32 0.0, %v187
  %189 = vdwg.mxu0
  %v190 = vadd.f32 %v27, %v172
  %v191 = vadd.f32 %v28, %v174
  %v192 = vadd.f32 %v29, %v176
  %v193 = vadd.f32 %v30, %v178
  %v194 = vadd.f32 %v31, %v182
  %v195 = vadd.f32 %v32, %v184
  %v196 = vadd.f32 %v33, %v186
  %v197 = vadd.f32 %v34, %v188
  %198 = vst [vmem:[#allocation2] sm:$0xff] %v190
  %199 = vst [vmem:[#allocation2 + $0x8] sm:$0xff] %v191
  %200 = vst [vmem:[#allocation2 + $0x10] sm:$0xff] %v192
  %201 = vst [vmem:[#allocation2 + $0x18] sm:$0xff] %v193
  %202 = vst [vmem:[#allocation2 + $0x20] sm:$0xff] %v194
  %203 = vst [vmem:[#allocation2 + $0x28] sm:$0xff] %v195
  %204 = vst [vmem:[#allocation2 + $0x30] sm:$0xff] %v196
  %205 = vst [vmem:[#allocation2 + $0x38] sm:$0xff] %v197
  // Predicated region
  $region18: #{transformer_decoder_layer.12} parent=0 // pred_check
    %p206 = pneg %p15
  $region19: #{transformer_decoder_layer.12} parent=0 // pred_check_branch
    %208 = sbr.rel (%p206) target = $region21
  $region20: #{transformer_decoder_layer.12} parent=0 // pred_region
    %v209 = vld [vmem:[#allocation2] sm:$0xff]
    %v210 = vld [vmem:[#allocation2 + $0x8] sm:$0xff]
    %v211 = vld [vmem:[#allocation2 + $0x10] sm:$0xff]
    %v212 = vld [vmem:[#allocation2 + $0x18] sm:$0xff]
    %v213 = vld [vmem:[#allocation2 + $0x20] sm:$0xff]
    %v214 = vld [vmem:[#allocation2 + $0x28] sm:$0xff]
    %v215 = vld [vmem:[#allocation2 + $0x30] sm:$0xff]
    %v216 = vld [vmem:[#allocation2 + $0x38] sm:$0xff]
    %v217 = vld [vmem:[%s2] sm:$0x3]
    %v219 = vlaneseq
    %v220 = vshrl.u32 %v219, 7
    %v221 = vsub.s32 0, %v220
    %v222 = vrot.slane %v217, %v221
    %v223 = vlaneseq
    %v224 = vshrl.u32 %v223, 7
    %v225 = vsub.s32 1, %v224
    %v226 = vrot.slane %v217, %v225
    %v229 = vadd.f32 %v209, %v222
    %v230 = vadd.f32 %v210, %v226
    %v231 = vadd.f32 %v211, %v222
    %v232 = vadd.f32 %v212, %v226
    %v233 = vadd.f32 %v213, %v222
    %v234 = vadd.f32 %v214, %v226
    %v235 = vadd.f32 %v215, %v222
    %v236 = vadd.f32 %v216, %v226
    %v237 = vpack.c.bf16 %v231, %v229
    %v238 = vpack.c.bf16 %v232, %v230
    %v239 = vpack.c.bf16 %v235, %v233
    %v240 = vpack.c.bf16 %v236, %v234
    %v245 = vunpack.c.l.b16 %v237
    %v246 = vunpack.c.l.b16 %v238
    %v247 = vunpack.c.h.b16 %v237
    %v248 = vunpack.c.h.b16 %v238
    %v249 = vunpack.c.l.b16 %v239
    %v250 = vunpack.c.l.b16 %v240
    %v251 = vunpack.c.h.b16 %v239
    %v252 = vunpack.c.h.b16 %v240
    %v253 = vpack.c.b16 %v246, %v245
    %v254 = vpack.c.b16 %v248, %v247
    %v255 = vpack.c.b16 %v250, %v249
    %v256 = vpack.c.b16 %v252, %v251
    %261 = vst [vmem:[%s3] sm:$0xff] %v253
    %262 = vst [vmem:[%s3 + $0x8] sm:$0xff] %v254
    %263 = vst [vmem:[%s3 + $0x10] sm:$0xff] %v255
    %264 = vst [vmem:[%s3 + $0x18] sm:$0xff] %v256
  $region21: #{transformer_decoder_layer.12} parent=0 // pred_fallthru
    _
  // Predicated region
  $region22: #{transformer_decoder_layer.12} parent=0 // pred_check
    _
  $region23: #{transformer_decoder_layer.12} parent=0 // pred_check_branch
    %266 = sbr.rel (0) target = $region25
  $region24: #{transformer_decoder_layer.12} parent=0 // pred_region
    _
  $region25: #{transformer_decoder_layer.12} parent=0 // pred_fallthru
    _
  // Predicated region
  $region26: #{transformer_decoder_layer.12} parent=0 // pred_check
    _
  $region27: #{transformer_decoder_layer.12} parent=0 // pred_check_branch
    %268 = sbr.rel (0) target = $region29
  $region28: #{transformer_decoder_layer.12} parent=0 // pred_region
    _
  $region29: #{transformer_decoder_layer.12} parent=0 // pred_fallthru
    _

// kernel: transformer_decoder_layer.14
$region0: #{transformer_decoder_layer.14}
  #allocation0 [shape = 'u32[]', space=smem, size = 0x4, offset = 0x4, fixed_abs, tag = 'smem constant byte address 0x4 - core index']
  #allocation1 [shape = 'u32[144,128]{1,0:T(1,128)}', space=vmem, size = 0x12000, scoped, tag = 'internal scratch']
  #allocation2 [shape = 'f32[32,128]{1,0:T(8,128)}', space=vmem, size = 0x4000, scoped, tag = 'scratch operand']
  %s0 = inlined_call_operand.vmem [shape: bf16[32,128], index: 0, kind: input, shape index: {}]
  %s1 = inlined_call_operand.vmem [shape: bf16[128,128], index: 1, kind: input, shape index: {}]
  %s2 = inlined_call_operand.vmem [shape: f32[1,128], index: 2, kind: input, shape index: {}]
  %s3 = inlined_call_operand.vmem [shape: bf16[32,128], index: 3, kind: input, shape index: {}]
  %s4 = inlined_call_operand.vmem [shape: f32[1,128], index: 4, kind: input, shape index: {}]
  %s5 = inlined_call_operand.vmem [shape: f32[1,128], index: 5, kind: input, shape index: {}]
  %s6 = inlined_call_operand.vmem [shape: bf16[32,128], index: 6, kind: output, shape index: {}]
  %s7 = sld [smem:[#allocation0]]
  $region42: #{transformer_decoder_layer.14} parent=0
    _
  %s9 = ssub.s32 1, %s7
  %s10 = scalar_select 0, %s9, %s7
  // Predicated region
  $region2: #{transformer_decoder_layer.14} parent=0 // pred_check
    _
  $region3: #{transformer_decoder_layer.14} parent=0 // pred_check_branch
    %12 = sbr.rel (0) target = $region5
  $region4: #{transformer_decoder_layer.14} parent=0 // pred_region
    _
  $region5: #{transformer_decoder_layer.14} parent=0 // pred_fallthru
    _
  // Predicated region
  $region6: #{transformer_decoder_layer.14} parent=0 // pred_check
    _
  $region7: #{transformer_decoder_layer.14} parent=0 // pred_check_branch
    %14 = sbr.rel (0) target = $region9
  $region8: #{transformer_decoder_layer.14} parent=0 // pred_region
    _
  $region9: #{transformer_decoder_layer.14} parent=0 // pred_fallthru
    _
  // Predicated region
  $region10: #{transformer_decoder_layer.14} parent=0 // pred_check
    _
  $region11: #{transformer_decoder_layer.14} parent=0 // pred_check_branch
    %16 = sbr.rel (0) target = $region13
  $region12: #{transformer_decoder_layer.14} parent=0 // pred_region
    _
  $region13: #{transformer_decoder_layer.14} parent=0 // pred_fallthru
    _
  // Predicated region
  $region14: #{transformer_decoder_layer.14} parent=0 // pred_check
    _
  $region15: #{transformer_decoder_layer.14} parent=0 // pred_check_branch
    %18 = sbr.rel (0) target = $region17
  $region16: #{transformer_decoder_layer.14} parent=0 // pred_region
    _
  $region17: #{transformer_decoder_layer.14} parent=0 // pred_fallthru
    _
  // Predicated region
  $region18: #{transformer_decoder_layer.14} parent=0 // pred_check
    _
  $region19: #{transformer_decoder_layer.14} parent=0 // pred_check_branch
    %20 = sbr.rel (0) target = $region21
  $region20: #{transformer_decoder_layer.14} parent=0 // pred_region
    _
  $region21: #{transformer_decoder_layer.14} parent=0 // pred_fallthru
    _
  // Predicated region
  $region22: #{transformer_decoder_layer.14} parent=0 // pred_check
    _
  $region23: #{transformer_decoder_layer.14} parent=0 // pred_check_branch
    %22 = sbr.rel (0) target = $region25
  $region24: #{transformer_decoder_layer.14} parent=0 // pred_region
    _
  $region25: #{transformer_decoder_layer.14} parent=0 // pred_fallthru
    _
  %p24 = scmp.eq.s32.totalorder 0, 0
  // Predicated region
  $region26: #{transformer_decoder_layer.14} parent=0 // pred_check
    %p25 = pneg %p24
  $region27: #{transformer_decoder_layer.14} parent=0 // pred_check_branch
    %27 = sbr.rel (%p25) target = $region29
  $region28: #{transformer_decoder_layer.14} parent=0 // pred_region
    %28 = vst [vmem:[#allocation2] sm:$0xff] 0.0
    %29 = vst [vmem:[#allocation2 + $0x8] sm:$0xff] 0.0
    %30 = vst [vmem:[#allocation2 + $0x10] sm:$0xff] 0.0
    %31 = vst [vmem:[#allocation2 + $0x18] sm:$0xff] 0.0
  $region29: #{transformer_decoder_layer.14} parent=0 // pred_fallthru
    _
  %v32 = vld [vmem:[#allocation2] sm:$0xff]
  %v33 = vld [vmem:[#allocation2 + $0x8] sm:$0xff]
  %v34 = vld [vmem:[#allocation2 + $0x10] sm:$0xff]
  %v35 = vld [vmem:[#allocation2 + $0x18] sm:$0xff]
  %v36 = vld [vmem:[%s0] sm:$0xf]
  %v37 = vld [vmem:[%s0 + $0x4] sm:$0xf]
  %v38 = vld [vmem:[%s0 + $0x8] sm:$0xf]
  %v39 = vld [vmem:[%s0 + $0xc] sm:$0xf]
  %v40 = vld [vmem:[%s1] sm:$0xf]
  %v41 = vld [vmem:[%s1 + $0x4] sm:$0xf]
  %v42 = vld [vmem:[%s1 + $0x8] sm:$0xf]
  %v43 = vld [vmem:[%s1 + $0xc] sm:$0xf]
  %v44 = vld [vmem:[%s1 + $0x10] sm:$0xf]
  %v45 = vld [vmem:[%s1 + $0x14] sm:$0xf]
  %v46 = vld [vmem:[%s1 + $0x18] sm:$0xf]
  %v47 = vld [vmem:[%s1 + $0x1c] sm:$0xf]
  %v48 = vld [vmem:[%s1 + $0x20] sm:$0xf]
  %v49 = vld [vmem:[%s1 + $0x24] sm:$0xf]
  %v50 = vld [vmem:[%s1 + $0x28] sm:$0xf]
  %v51 = vld [vmem:[%s1 + $0x2c] sm:$0xf]
  %v52 = vld [vmem:[%s1 + $0x30] sm:$0xf]
  %v53 = vld [vmem:[%s1 + $0x34] sm:$0xf]
  %v54 = vld [vmem:[%s1 + $0x38] sm:$0xf]
  %v55 = vld [vmem:[%s1 + $0x3c] sm:$0xf]
  %v60 = vunpack.c.l.b16 %v36
  %v61 = vunpack.c.l.b16 %v37
  %v62 = vunpack.c.l.b16 %v38
  %v63 = vunpack.c.l.b16 %v39
  %v64 = vpack.c.b16 %v61, %v60
  %v65 = vpack.c.b16 %v63, %v62
  %v84 = vunpack.c.l.b16 %v40
  %v85 = vunpack.c.l.b16 %v41
  %v86 = vunpack.c.l.b16 %v42
  %v87 = vunpack.c.l.b16 %v43
  %v88 = vunpack.c.l.b16 %v44
  %v89 = vunpack.c.l.b16 %v45
  %v90 = vunpack.c.l.b16 %v46
  %v91 = vunpack.c.l.b16 %v47
  %v92 = vunpack.c.l.b16 %v48
  %v93 = vunpack.c.l.b16 %v49
  %v94 = vunpack.c.l.b16 %v50
  %v95 = vunpack.c.l.b16 %v51
  %v96 = vunpack.c.l.b16 %v52
  %v97 = vunpack.c.l.b16 %v53
  %v98 = vunpack.c.l.b16 %v54
  %v99 = vunpack.c.l.b16 %v55
  %v100 = vpack.c.b16 %v85, %v84
  %v101 = vpack.c.b16 %v87, %v86
  %v102 = vpack.c.b16 %v89, %v88
  %v103 = vpack.c.b16 %v91, %v90
  %v104 = vpack.c.b16 %v93, %v92
  %v105 = vpack.c.b16 %v95, %v94
  %v106 = vpack.c.b16 %v97, %v96
  %v107 = vpack.c.b16 %v99, %v98
  %116 = vmatprep.subr.bf16.mxu0 0
  %117 = vmatpush1.bf16.msra.mxu0 %v100
  %118 = vmatprep.subr.bf16.mxu0 0
  %119 = vmatpush1.bf16.msra.mxu0 %v101
  %120 = vmatprep.subr.bf16.mxu0 0
  %121 = vmatpush1.bf16.msra.mxu0 %v102
  %122 = vmatprep.subr.bf16.mxu0 0
  %123 = vmatpush1.bf16.msra.mxu0 %v103
  %124 = vmatprep.subr.bf16.mxu0 0
  %125 = vmatpush1.bf16.msra.mxu0 %v104
  %126 = vmatprep.subr.bf16.mxu0 0
  %127 = vmatpush1.bf16.msra.mxu0 %v105
  %128 = vmatprep.subr.bf16.mxu0 0
  %129 = vmatpush1.bf16.msra.mxu0 %v106
  %130 = vmatprep.subr.bf16.mxu0 0
  %131 = vmatpush1.bf16.msra.mxu0 %v107
  %132 = vmatprep.subr.bf16.mxu0 0
  %133 = vmatpush1.bf16.msra.mxu0 0
  %134 = vmatprep.subr.bf16.mxu0 0
  %135 = vmatpush1.bf16.msra.mxu0 0
  %136 = vmatprep.subr.bf16.mxu0 0
  %137 = vmatpush1.bf16.msra.mxu0 0
  %138 = vmatprep.subr.bf16.mxu0 0
  %139 = vmatpush1.bf16.msra.mxu0 0
  %140 = vmatprep.subr.bf16.mxu0 0
  %141 = vmatpush1.bf16.msra.mxu0 0
  %142 = vmatprep.subr.bf16.mxu0 0
  %143 = vmatpush1.bf16.msra.mxu0 0
  %144 = vmatprep.subr.bf16.mxu0 0
  %145 = vmatpush1.bf16.msra.mxu0 0
  %146 = vmatprep.subr.bf16.mxu0 0
  %147 = vmatpush1.bf16.msra.mxu0 0
  %148 = vmatprep.mubr.bf16.mxu0 0
  %149 = vmatmul.mubr.bf16.gmra.mrb[0].mxu0 %v64
  %v150 = vpop.f32.mrb[0].mxu0
  %v151 = vadd.f32 0.0, %v150
  %v152 = vpop.f32.mrb[0].mxu0
  %v153 = vpop.f32.mrb[0].mxu0
  %v154 = vadd.f32 0.0, %v153
  %v155 = vpop.f32.mrb[0].mxu0
  %156 = vmatprep.mubr.bf16.mxu0 0
  %157 = vmatmul.mubr.bf16.gmra.mrb[0].mxu0 %v65
  %v158 = vpop.f32.mrb[0].mxu0
  %v159 = vadd.f32 0.0, %v158
  %v160 = vpop.f32.mrb[0].mxu0
  %v161 = vpop.f32.mrb[0].mxu0
  %v162 = vadd.f32 0.0, %v161
  %v163 = vpop.f32.mrb[0].mxu0
  %164 = vdwg.mxu0
  %v165 = vadd.f32 %v32, %v151
  %v166 = vadd.f32 %v33, %v154
  %v167 = vadd.f32 %v34, %v159
  %v168 = vadd.f32 %v35, %v162
  %169 = vst [vmem:[#allocation2] sm:$0xff] %v165
  %170 = vst [vmem:[#allocation2 + $0x8] sm:$0xff] %v166
  %171 = vst [vmem:[#allocation2 + $0x10] sm:$0xff] %v167
  %172 = vst [vmem:[#allocation2 + $0x18] sm:$0xff] %v168
  // Predicated region
  $region30: #{transformer_decoder_layer.14} parent=0 // pred_check
    %p173 = pneg %p24
  $region31: #{transformer_decoder_layer.14} parent=0 // pred_check_branch
    %175 = sbr.rel (%p173) target = $region33
  $region32: #{transformer_decoder_layer.14} parent=0 // pred_region
    %v176 = vld [vmem:[#allocation2] sm:$0xff]
    %v177 = vld [vmem:[#allocation2 + $0x8] sm:$0xff]
    %v178 = vld [vmem:[#allocation2 + $0x10] sm:$0xff]
    %v179 = vld [vmem:[#allocation2 + $0x18] sm:$0xff]
    %v180 = vld [vmem:[%s2] sm:$0x1]
    %v182 = vlaneseq
    %v183 = vshrl.u32 %v182, 7
    %v184 = vsub.s32 0, %v183
    %v185 = vrot.slane %v180, %v184
    %v187 = vadd.f32 %v176, %v185
    %v188 = vadd.f32 %v177, %v185
    %v189 = vadd.f32 %v178, %v185
    %v190 = vadd.f32 %v179, %v185
    %v191 = vld [vmem:[%s3] sm:$0xf]
    %v192 = vld [vmem:[%s3 + $0x4] sm:$0xf]
    %v193 = vld [vmem:[%s3 + $0x8] sm:$0xf]
    %v194 = vld [vmem:[%s3 + $0xc] sm:$0xf]
    %v195 = vunpack.c.l.bf16 %v191
    %v196 = vunpack.c.l.bf16 %v192
    %v197 = vunpack.c.l.bf16 %v193
    %v198 = vunpack.c.l.bf16 %v194
    %v199 = vadd.f32 %v187, %v195
    %v200 = vadd.f32 %v188, %v196
    %v201 = vadd.f32 %v189, %v197
    %v202 = vadd.f32 %v190, %v198
    %203 = vadd.xlane.f32.xlu0 %v199
    %v204 = vpop.xlane.xlu0 %203
    %205 = vadd.xlane.f32.xlu0 %v200
    %v206 = vpop.xlane.xlu0 %205
    %207 = vadd.xlane.f32.xlu0 %v201
    %v208 = vpop.xlane.xlu0 %207
    %209 = vadd.xlane.f32.xlu0 %v202
    %v210 = vpop.xlane.xlu0 %209
    %v211 = vrcp.pop 128.0
    %v212 = vmul.f32 %v204, %v211
    %v213 = vmul.f32 %v206, %v211
    %v214 = vmul.f32 %v208, %v211
    %v215 = vmul.f32 %v210, %v211
    %v216 = vsub.f32 %v199, %v212
    %v217 = vsub.f32 %v200, %v213
    %v218 = vsub.f32 %v201, %v214
    %v219 = vsub.f32 %v202, %v215
    %v220 = vmul.f32 %v216, %v216
    %v221 = vmul.f32 %v217, %v217
    %v222 = vmul.f32 %v218, %v218
    %v223 = vmul.f32 %v219, %v219
    %224 = vadd.xlane.f32.xlu0 %v220
    %v225 = vpop.xlane.xlu0 %224
    %226 = vadd.xlane.f32.xlu0 %v221
    %v227 = vpop.xlane.xlu0 %226
    %228 = vadd.xlane.f32.xlu0 %v222
    %v229 = vpop.xlane.xlu0 %228
    %230 = vadd.xlane.f32.xlu0 %v223
    %v231 = vpop.xlane.xlu0 %230
    %v232 = vmul.f32 %v225, %v211
    %v233 = vmul.f32 %v227, %v211
    %v234 = vmul.f32 %v229, %v211
    %v235 = vmul.f32 %v231, %v211
    %v236 = vadd.f32 %v232, 1e-05
    %v237 = vadd.f32 %v233, 1e-05
    %v238 = vadd.f32 %v234, 1e-05
    %v239 = vadd.f32 %v235, 1e-05
    %v240 = vrsqrt.pop %v236
    %v241 = vrsqrt.pop %v237
    %v242 = vrsqrt.pop %v238
    %v243 = vrsqrt.pop %v239
    %v244 = vmul.f32 %v216, %v240
    %v245 = vmul.f32 %v217, %v241
    %v246 = vmul.f32 %v218, %v242
    %v247 = vmul.f32 %v219, %v243
    %v248 = vld [vmem:[%s4] sm:$0x1]
    %v250 = vlaneseq
    %v251 = vshrl.u32 %v250, 7
    %v252 = vsub.s32 0, %v251
    %v253 = vrot.slane %v248, %v252
    %v255 = vmul.f32 %v244, %v253
    %v256 = vmul.f32 %v245, %v253
    %v257 = vmul.f32 %v246, %v253
    %v258 = vmul.f32 %v247, %v253
    %v259 = vld [vmem:[%s5] sm:$0x1]
    %v261 = vlaneseq
    %v262 = vshrl.u32 %v261, 7
    %v263 = vsub.s32 0, %v262
    %v264 = vrot.slane %v259, %v263
    %v266 = vadd.f32 %v255, %v264
    %v267 = vadd.f32 %v256, %v264
    %v268 = vadd.f32 %v257, %v264
    %v269 = vadd.f32 %v258, %v264
    %v270 = vpack.c.bf16 %v267, %v266
    %v271 = vpack.c.bf16 %v269, %v268
    %v274 = vunpack.c.l.b16 %v270
    %v275 = vunpack.c.h.b16 %v270
    %v276 = vunpack.c.l.b16 %v271
    %v277 = vunpack.c.h.b16 %v271
    %v278 = vpack.c.b16 %v274, %v274
    %v279 = vpack.c.b16 %v275, %v275
    %v280 = vpack.c.b16 %v276, %v276
    %v281 = vpack.c.b16 %v277, %v277
    %286 = vst [vmem:[%s6] sm:$0xf] %v278
    %287 = vst [vmem:[%s6 + $0x4] sm:$0xf] %v279
    %288 = vst [vmem:[%s6 + $0x8] sm:$0xf] %v280
    %289 = vst [vmem:[%s6 + $0xc] sm:$0xf] %v281
  $region33: #{transformer_decoder_layer.14} parent=0 // pred_fallthru
    _
  // Predicated region
  $region34: #{transformer_decoder_layer.14} parent=0 // pred_check
    _
  $region35: #{transformer_decoder_layer.14} parent=0 // pred_check_branch
    %291 = sbr.rel (0) target = $region37
  $region36: #{transformer_decoder_layer.14} parent=0 // pred_region
    _
  $region37: #{transformer_decoder_layer.14} parent=0 // pred_fallthru
    _
  // Predicated region
  $region38: #{transformer_decoder_layer.14} parent=0 // pred_check
    _
  $region39: #{transformer_decoder_layer.14} parent=0 // pred_check_branch
    %293 = sbr.rel (0) target = $region41
  $region40: #{transformer_decoder_layer.14} parent=0 // pred_region
    _
  $region41: #{transformer_decoder_layer.14} parent=0 // pred_fallthru
    _

// kernel: transformer_decoder_layer.13
$region0: #{transformer_decoder_layer.13}
  #allocation0 [shape = 'u32[]', space=smem, size = 0x4, offset = 0x4, fixed_abs, tag = 'smem constant byte address 0x4 - core index']
  #allocation1 [shape = 'u32[144,128]{1,0:T(1,128)}', space=vmem, size = 0x12000, scoped, tag = 'internal scratch']
  %s0 = inlined_call_operand.vmem [shape: bf16[2,16,128], index: 0, kind: input, shape index: {}]
  %s1 = inlined_call_operand.vmem [shape: bf16[2,16,256], index: 1, kind: input, shape index: {}, may-alias: {1,2}]
  %s2 = inlined_call_operand.vmem [shape: bf16[2,16,256], index: 2, kind: input, shape index: {}, may-alias: {1,2}]
  %s3 = inlined_call_operand.vmem [shape: f32[2,1,16], index: 3, kind: input, shape index: {}]
  %s4 = inlined_call_operand.vmem [shape: bf16[2,16,128], index: 4, kind: output, shape index: {}]
  %s5 = sld [smem:[#allocation0]]
  $region131: #{transformer_decoder_layer.13} parent=0
    _
  %s7 = ssub.s32 1, %s5
  %s8 = scalar_select 0, %s7, %s5
  $region1: #{transformer_decoder_layer.13} parent=0
    #allocation2 [shape = 'u8[8192]{0}', space=vmem, size = 0x2000, scoped, tag = 'input window, operand 1']
    #allocation3 [shape = 'u8[8192]{0}', space=vmem, size = 0x2000, scoped, tag = 'input window, operand 2']
    loop: start=0, step=1, limit=4
    $region2: #{transformer_decoder_layer.13} parent=1 // loop_pre_header
      _
    $region3: #{transformer_decoder_layer.13} parent=1 // loop_header
      %s10 = sphi 0, %s14
      %p11 = scmp.ge.s32.totalorder %s10, 4
      %s17 = sphi 0, %s29
      %s18 = sphi 0, %s25
      %s19 = sphi 0, %s17
      %s20 = sphi 0, %s18
      %s21 = sphi 0, %s19
      %s22 = sphi 0, %s20
      %s34 = sphi 0, %s36
      %s37 = sphi 0, %s34
      %s38 = sphi 0, %s37
      %s54 = sphi 0, %s38
      %s60 = sphi 0, %s62
      %s63 = sphi 0, %s60
      %s64 = sphi 0, %s63
      %s80 = sphi 0, %s64
      %s86 = sphi 0, %s88
      %s89 = sphi 0, %s86
      %s90 = sphi 0, %s89
      %s106 = sphi 0, %s90
      %s112 = sphi 0, %s114
      %s115 = sphi 0, %s112
      %s116 = sphi 0, %s115
      %s132 = sphi 0, %s116
      %s140 = sphi 0, %s142
      %s143 = sphi 0, %s140
      %s144 = sphi 0, %s143
      %s160 = sphi 0, %s144
    $region4: #{transformer_decoder_layer.13} parent=1 // loop_header_branch
      %13 = sbr.rel (%p11) target = $region8
    $region5: #{transformer_decoder_layer.13} parent=1 // loop_body
      %s15 = ssub.s32 %s10, 1
      %s16 = ssub.s32 %s10, 2
      %s23 = sadd.s32 1, %s18
      %p24 = scmp.ge.s32.totalorder %s23, 1
      %s25 = scalar_select %p24, 0, %s23
      %s26 = sadd.s32 1, %s17
      %s27 = scalar_select %p24, %s26, %s17
      %p28 = scmp.ge.s32.totalorder %s27, 2
      %s29 = scalar_select %p28, 0, %s27
      %s30 = ssub.s32 %s17, %s29
      %s31 = ssub.s32 %s18, %s25
      %s32 = sor.u32 %s30, %s31
      %p33 = scmp.eq.s32.totalorder %s32, 0
      %s35 = sadd.s32 %s34, 1
      %s36 = scalar_select %p33, %s34, %s35
      %p39 = pneg %p33
      %p40 = scmp.eq.s32.totalorder %s10, 1
      %p41 = por %p39, %p40
      %p42 = scmp.ne.s32.totalorder %s34, %s37
      %p43 = scmp.eq.s32.totalorder %s10, 0
      %p44 = por %p42, %p43
      %p45 = scmp.ne.s32.totalorder %s34, %s37
      %p46 = scmp.eq.s32.totalorder %s15, 1
      %p47 = por %p45, %p46
      %p48 = scmp.ne.s32.totalorder %s37, %s38
      %p49 = scmp.eq.s32.totalorder %s15, 0
      %p50 = por %p48, %p49
      %p51 = scmp.ne.s32.totalorder %s37, %s38
      %p52 = scmp.eq.s32.totalorder %s16, 1
      %p53 = por %p51, %p52
      %p55 = scmp.ne.s32.totalorder %s38, %s54
      %p56 = scmp.eq.s32.totalorder %s16, 0
      %p57 = por %p55, %p56
      %s58 = ssub.s32 %s17, %s29
      %p59 = scmp.eq.s32.totalorder %s58, 0
      %s61 = sadd.s32 %s60, 1
      %s62 = scalar_select %p59, %s60, %s61
      %p65 = pneg %p59
      %p66 = scmp.eq.s32.totalorder %s10, 1
      %p67 = por %p65, %p66
      %p68 = scmp.ne.s32.totalorder %s60, %s63
      %p69 = scmp.eq.s32.totalorder %s10, 0
      %p70 = por %p68, %p69
      %p71 = scmp.ne.s32.totalorder %s60, %s63
      %p72 = scmp.eq.s32.totalorder %s15, 1
      %p73 = por %p71, %p72
      %p74 = scmp.ne.s32.totalorder %s63, %s64
      %p75 = scmp.eq.s32.totalorder %s15, 0
      %p76 = por %p74, %p75
      %p77 = scmp.ne.s32.totalorder %s63, %s64
      %p78 = scmp.eq.s32.totalorder %s16, 1
      %p79 = por %p77, %p78
      %p81 = scmp.ne.s32.totalorder %s64, %s80
      %p82 = scmp.eq.s32.totalorder %s16, 0
      %p83 = por %p81, %p82
      %s84 = ssub.s32 %s17, %s29
      %p85 = scmp.eq.s32.totalorder %s84, 0
      %s87 = sadd.s32 %s86, 1
      %s88 = scalar_select %p85, %s86, %s87
      %p91 = pneg %p85
      %p92 = scmp.eq.s32.totalorder %s10, 1
      %p93 = por %p91, %p92
      %p94 = scmp.ne.s32.totalorder %s86, %s89
      %p95 = scmp.eq.s32.totalorder %s10, 0
      %p96 = por %p94, %p95
      %p97 = scmp.ne.s32.totalorder %s86, %s89
      %p98 = scmp.eq.s32.totalorder %s15, 1
      %p99 = por %p97, %p98
      %p100 = scmp.ne.s32.totalorder %s89, %s90
      %p101 = scmp.eq.s32.totalorder %s15, 0
      %p102 = por %p100, %p101
      %p103 = scmp.ne.s32.totalorder %s89, %s90
      %p104 = scmp.eq.s32.totalorder %s16, 1
      %p105 = por %p103, %p104
      %p107 = scmp.ne.s32.totalorder %s90, %s106
      %p108 = scmp.eq.s32.totalorder %s16, 0
      %p109 = por %p107, %p108
      %s110 = ssub.s32 %s17, %s29
      %p111 = scmp.eq.s32.totalorder %s110, 0
      %s113 = sadd.s32 %s112, 1
      %s114 = scalar_select %p111, %s112, %s113
      %p117 = pneg %p111
      %p118 = scmp.eq.s32.totalorder %s10, 1
      %p119 = por %p117, %p118
      %p120 = scmp.ne.s32.totalorder %s112, %s115
      %p121 = scmp.eq.s32.totalorder %s10, 0
      %p122 = por %p120, %p121
      %p123 = scmp.ne.s32.totalorder %s112, %s115
      %p124 = scmp.eq.s32.totalorder %s15, 1
      %p125 = por %p123, %p124
      %p126 = scmp.ne.s32.totalorder %s115, %s116
      %p127 = scmp.eq.s32.totalorder %s15, 0
      %p128 = por %p126, %p127
      %p129 = scmp.ne.s32.totalorder %s115, %s116
      %p130 = scmp.eq.s32.totalorder %s16, 1
      %p131 = por %p129, %p130
      %p133 = scmp.ne.s32.totalorder %s116, %s132
      %p134 = scmp.eq.s32.totalorder %s16, 0
      %p135 = por %p133, %p134
      %s136 = ssub.s32 %s17, %s29
      %s137 = ssub.s32 %s18, %s25
      %s138 = sor.u32 %s136, %s137
      %p139 = scmp.eq.s32.totalorder %s138, 0
      %s141 = sadd.s32 %s140, 1
      %s142 = scalar_select %p139, %s140, %s141
      %p145 = pneg %p139
      %p146 = scmp.eq.s32.totalorder %s10, 1
      %p147 = por %p145, %p146
      %p148 = scmp.ne.s32.totalorder %s140, %s143
      %p149 = scmp.eq.s32.totalorder %s10, 0
      %p150 = por %p148, %p149
      %p151 = scmp.ne.s32.totalorder %s140, %s143
      %p152 = scmp.eq.s32.totalorder %s15, 1
      %p153 = por %p151, %p152
      %p154 = scmp.ne.s32.totalorder %s143, %s144
      %p155 = scmp.eq.s32.totalorder %s15, 0
      %p156 = por %p154, %p155
      %p157 = scmp.ne.s32.totalorder %s143, %s144
      %p158 = scmp.eq.s32.totalorder %s16, 1
      %p159 = por %p157, %p158
      %p161 = scmp.ne.s32.totalorder %s144, %s160
      %p162 = scmp.eq.s32.totalorder %s16, 0
      %p163 = por %p161, %p162
      %p164 = scmp.le.s32.totalorder 1, %s10
      %p165 = scmp.lt.s32.totalorder %s10, 3
      %p166 = pnand %p164, %p165
      %p167 = pneg %p166
      // Predicated region
      $region9: #{transformer_decoder_layer.13} parent=5 // pred_check
        _
      $region10: #{transformer_decoder_layer.13} parent=5 // pred_check_branch
        %169 = sbr.rel (%p166) target = $region12
      $region11: #{transformer_decoder_layer.13} parent=5 // pred_region
        %s170 = ssub.s32 %s10, 1
      $region12: #{transformer_decoder_layer.13} parent=5 // pred_fallthru
        _
      %p171 = scmp.lt.s32.totalorder %s10, 2
      // Predicated region
      $region13: #{transformer_decoder_layer.13} parent=5 // pred_check
        %p172 = pneg %p171
      $region14: #{transformer_decoder_layer.13} parent=5 // pred_check_branch
        %174 = sbr.rel (%p172) target = $region16
      $region15: #{transformer_decoder_layer.13} parent=5 // pred_region
        // Predicated region
        $region17: #{transformer_decoder_layer.13} parent=15 // pred_check
          %p175 = pneg %p44
        $region18: #{transformer_decoder_layer.13} parent=15 // pred_check_branch
          %177 = sbr.rel (%p175) target = $region20
        $region19: #{transformer_decoder_layer.13} parent=15 // pred_region
          %s178 = smul.u32 2, %s18
          %p179 = scmp.lt.s32.totalorder %s17, 1
          %s180 = scalar_select %p179, %s17, 1
          %p181 = scmp.lt.s32.totalorder %s178, 1
          %s182 = scalar_select %p181, %s178, 1
          %s183 = smul.addr %s180, 2
          %s184 = sadd.s32 %s182, %s183
          %s185 = smul.addr %s184, 4
          %s186 = scalar_lea.vmem %s0, %s185
          %s187 = smul.u32 2, %s18
        $region20: #{transformer_decoder_layer.13} parent=15 // pred_fallthru
          _
        // Predicated region
        $region21: #{transformer_decoder_layer.13} parent=15 // pred_check
          %p188 = pneg %p70
        $region22: #{transformer_decoder_layer.13} parent=15 // pred_check_branch
          %190 = sbr.rel (%p188) target = $region24
        $region23: #{transformer_decoder_layer.13} parent=15 // pred_region
          %s191 = sand.u32 %s60, 1
          %s192 = sand.u32 %s60, 1
          %s193 = smul.addr %s192, 8
          %s194 = scalar_lea.vmem [#allocation2], %s193
          %s195 = smul.addr %s17, 4
          %s196 = smul.addr %s195, 4
          %s197 = scalar_lea.vmem %s1, %s196
          // Predicated region
          $region25: #{transformer_decoder_layer.13} parent=23 // pred_check
            _
          $region26: #{transformer_decoder_layer.13} parent=23 // pred_check_branch
            %199 = sbr.rel (0) target = $region28
          $region27: #{transformer_decoder_layer.13} parent=23 // pred_region
            // Predicated region
            $region29: #{transformer_decoder_layer.13} parent=27 // pred_check
              _
            $region30: #{transformer_decoder_layer.13} parent=27 // pred_check_branch
              %201 = sbr.rel target = $region32
            $region31: #{transformer_decoder_layer.13} parent=27 // pred_region
              // Predicated region
              $region44: #{transformer_decoder_layer.13} parent=31 // pred_check
                _
              $region45: #{transformer_decoder_layer.13} parent=31 // pred_check_branch
                %218 = sbr.rel (0) target = $region47
              $region46: #{transformer_decoder_layer.13} parent=31 // pred_region
                loop: start=0, step=1, limit=1
                $region48: #{transformer_decoder_layer.13} parent=46 // loop_pre_header
                  _
                $region49: #{transformer_decoder_layer.13} parent=46 // loop_header
                  %s220 = sphi 0, %s224
                  %p221 = scmp.ge.s32.totalorder %s220, 1
                  %s225 = sphi %s197, %s197
                  %s226 = sphi %s194, %s194
                $region50: #{transformer_decoder_layer.13} parent=46 // loop_header_branch
                  %223 = sbr.rel (%p221) target = $region54
                $region51: #{transformer_decoder_layer.13} parent=46 // loop_body
                  _
                $region52: #{transformer_decoder_layer.13} parent=46 // loop_footer
                  %s224 = sadd.s32 1, %s220
                $region53: #{transformer_decoder_layer.13} parent=46 // loop_footer_branch
                  %219 = sbr.rel target = $region49
                $region54: #{transformer_decoder_layer.13} parent=46 // loop_exit
                  _
                loop: start=0, step=1, limit=1
                $region55: #{transformer_decoder_layer.13} parent=46 // loop_pre_header
                  _
                $region56: #{transformer_decoder_layer.13} parent=46 // loop_header
                  %s229 = sphi 0, %s233
                  %p230 = scmp.ge.s32.totalorder %s229, 1
                  %s234 = sphi %s197, %s197
                  %s235 = sphi %s194, %s194
                $region57: #{transformer_decoder_layer.13} parent=46 // loop_header_branch
                  %232 = sbr.rel (%p230) target = $region61
                $region58: #{transformer_decoder_layer.13} parent=46 // loop_body
                  %v236 = vld [vmem:[%s234] sm:$0xf]
                  %237 = vst [vmem:[%s235] sm:$0xf] %v236
                  %v238 = vld [vmem:[%s234 + $0x8] sm:$0xf]
                  %239 = vst [vmem:[%s235 + $0x4] sm:$0xf] %v238
                $region59: #{transformer_decoder_layer.13} parent=46 // loop_footer
                  %s233 = sadd.s32 1, %s229
                $region60: #{transformer_decoder_layer.13} parent=46 // loop_footer_branch
                  %228 = sbr.rel target = $region56
                $region61: #{transformer_decoder_layer.13} parent=46 // loop_exit
                  _
              $region47: #{transformer_decoder_layer.13} parent=31 // pred_fallthru
                _
            $region32: #{transformer_decoder_layer.13} parent=27 // pred_fallthru
              _
            // Predicated region
            $region33: #{transformer_decoder_layer.13} parent=27 // pred_check
              _
            $region34: #{transformer_decoder_layer.13} parent=27 // pred_check_branch
              %203 = sbr.rel (0) target = $region36
            $region35: #{transformer_decoder_layer.13} parent=27 // pred_region
              loop: start=0, step=1, limit=1
              $region37: #{transformer_decoder_layer.13} parent=35 // loop_pre_header
                _
              $region38: #{transformer_decoder_layer.13} parent=35 // loop_header
                %s206 = sphi 0, %s210
                %p207 = scmp.ge.s32.totalorder %s206, 1
                %s211 = sphi %s197, %s197
                %s212 = sphi %s194, %s194
              $region39: #{transformer_decoder_layer.13} parent=35 // loop_header_branch
                %209 = sbr.rel (%p207) target = $region43
              $region40: #{transformer_decoder_layer.13} parent=35 // loop_body
                %v213 = vld [vmem:[%s211] sm:$0xf]
                %214 = vst [vmem:[%s212] sm:$0xf] %v213
                %v215 = vld [vmem:[%s211 + $0x8] sm:$0xf]
                %216 = vst [vmem:[%s212 + $0x4] sm:$0xf] %v215
              $region41: #{transformer_decoder_layer.13} parent=35 // loop_footer
                %s210 = sadd.s32 1, %s206
              $region42: #{transformer_decoder_layer.13} parent=35 // loop_footer_branch
                %205 = sbr.rel target = $region38
              $region43: #{transformer_decoder_layer.13} parent=35 // loop_exit
                _
            $region36: #{transformer_decoder_layer.13} parent=27 // pred_fallthru
              _
          $region28: #{transformer_decoder_layer.13} parent=23 // pred_fallthru
            _
          %240 = vnop
        $region24: #{transformer_decoder_layer.13} parent=15 // pred_fallthru
          _
        // Predicated region
        $region62: #{transformer_decoder_layer.13} parent=15 // pred_check
          %p241 = pneg %p96
        $region63: #{transformer_decoder_layer.13} parent=15 // pred_check_branch
          %243 = sbr.rel (%p241) target = $region65
        $region64: #{transformer_decoder_layer.13} parent=15 // pred_region
          %s244 = sand.u32 %s86, 1
          %s245 = sand.u32 %s86, 1
          %s246 = smul.addr %s245, 8
          %s247 = scalar_lea.vmem [#allocation3], %s246
          %s248 = smul.addr %s17, 4
          %s249 = sadd.s32 1, %s248
          %s250 = smul.addr %s249, 4
          %s251 = scalar_lea.vmem %s2, %s250
          // Predicated region
          $region66: #{transformer_decoder_layer.13} parent=64 // pred_check
            _
          $region67: #{transformer_decoder_layer.13} parent=64 // pred_check_branch
            %253 = sbr.rel (0) target = $region69
          $region68: #{transformer_decoder_layer.13} parent=64 // pred_region
            // Predicated region
            $region70: #{transformer_decoder_layer.13} parent=68 // pred_check
              _
            $region71: #{transformer_decoder_layer.13} parent=68 // pred_check_branch
              %255 = sbr.rel target = $region73
            $region72: #{transformer_decoder_layer.13} parent=68 // pred_region
              // Predicated region
              $region85: #{transformer_decoder_layer.13} parent=72 // pred_check
                _
              $region86: #{transformer_decoder_layer.13} parent=72 // pred_check_branch
                %272 = sbr.rel (0) target = $region88
              $region87: #{transformer_decoder_layer.13} parent=72 // pred_region
                loop: start=0, step=1, limit=1
                $region89: #{transformer_decoder_layer.13} parent=87 // loop_pre_header
                  _
                $region90: #{transformer_decoder_layer.13} parent=87 // loop_header
                  %s274 = sphi 0, %s278
                  %p275 = scmp.ge.s32.totalorder %s274, 1
                  %s279 = sphi %s251, %s251
                  %s280 = sphi %s247, %s247
                $region91: #{transformer_decoder_layer.13} parent=87 // loop_header_branch
                  %277 = sbr.rel (%p275) target = $region95
                $region92: #{transformer_decoder_layer.13} parent=87 // loop_body
                  _
                $region93: #{transformer_decoder_layer.13} parent=87 // loop_footer
                  %s278 = sadd.s32 1, %s274
                $region94: #{transformer_decoder_layer.13} parent=87 // loop_footer_branch
                  %273 = sbr.rel target = $region90
                $region95: #{transformer_decoder_layer.13} parent=87 // loop_exit
                  _
                loop: start=0, step=1, limit=1
                $region96: #{transformer_decoder_layer.13} parent=87 // loop_pre_header
                  _
                $region97: #{transformer_decoder_layer.13} parent=87 // loop_header
                  %s283 = sphi 0, %s287
                  %p284 = scmp.ge.s32.totalorder %s283, 1
                  %s288 = sphi %s251, %s251
                  %s289 = sphi %s247, %s247
                $region98: #{transformer_decoder_layer.13} parent=87 // loop_header_branch
                  %286 = sbr.rel (%p284) target = $region102
                $region99: #{transformer_decoder_layer.13} parent=87 // loop_body
                  %v290 = vld [vmem:[%s288] sm:$0xf]
                  %291 = vst [vmem:[%s289] sm:$0xf] %v290
                  %v292 = vld [vmem:[%s288 + $0x8] sm:$0xf]
                  %293 = vst [vmem:[%s289 + $0x4] sm:$0xf] %v292
                $region100: #{transformer_decoder_layer.13} parent=87 // loop_footer
                  %s287 = sadd.s32 1, %s283
                $region101: #{transformer_decoder_layer.13} parent=87 // loop_footer_branch
                  %282 = sbr.rel target = $region97
                $region102: #{transformer_decoder_layer.13} parent=87 // loop_exit
                  _
              $region88: #{transformer_decoder_layer.13} parent=72 // pred_fallthru
                _
            $region73: #{transformer_decoder_layer.13} parent=68 // pred_fallthru
              _
            // Predicated region
            $region74: #{transformer_decoder_layer.13} parent=68 // pred_check
              _
            $region75: #{transformer_decoder_layer.13} parent=68 // pred_check_branch
              %257 = sbr.rel (0) target = $region77
            $region76: #{transformer_decoder_layer.13} parent=68 // pred_region
              loop: start=0, step=1, limit=1
              $region78: #{transformer_decoder_layer.13} parent=76 // loop_pre_header
                _
              $region79: #{transformer_decoder_layer.13} parent=76 // loop_header
                %s260 = sphi 0, %s264
                %p261 = scmp.ge.s32.totalorder %s260, 1
                %s265 = sphi %s251, %s251
                %s266 = sphi %s247, %s247
              $region80: #{transformer_decoder_layer.13} parent=76 // loop_header_branch
                %263 = sbr.rel (%p261) target = $region84
              $region81: #{transformer_decoder_layer.13} parent=76 // loop_body
                %v267 = vld [vmem:[%s265] sm:$0xf]
                %268 = vst [vmem:[%s266] sm:$0xf] %v267
                %v269 = vld [vmem:[%s265 + $0x8] sm:$0xf]
                %270 = vst [vmem:[%s266 + $0x4] sm:$0xf] %v269
              $region82: #{transformer_decoder_layer.13} parent=76 // loop_footer
                %s264 = sadd.s32 1, %s260
              $region83: #{transformer_decoder_layer.13} parent=76 // loop_footer_branch
                %259 = sbr.rel target = $region79
              $region84: #{transformer_decoder_layer.13} parent=76 // loop_exit
                _
            $region77: #{transformer_decoder_layer.13} parent=68 // pred_fallthru
              _
          $region69: #{transformer_decoder_layer.13} parent=64 // pred_fallthru
            _
          %294 = vnop
        $region65: #{transformer_decoder_layer.13} parent=15 // pred_fallthru
          _
        // Predicated region
        $region103: #{transformer_decoder_layer.13} parent=15 // pred_check
          %p295 = pneg %p122
        $region104: #{transformer_decoder_layer.13} parent=15 // pred_check_branch
          %297 = sbr.rel (%p295) target = $region106
        $region105: #{transformer_decoder_layer.13} parent=15 // pred_region
          %p298 = scmp.lt.s32.totalorder %s17, 1
          %s299 = scalar_select %p298, %s17, 1
          %s300 = scalar_lea.vmem %s3, %s299
        $region106: #{transformer_decoder_layer.13} parent=15 // pred_fallthru
          _
      $region16: #{transformer_decoder_layer.13} parent=5 // pred_fallthru
        _
      %p301 = scmp.le.s32.totalorder 1, %s10
      %p302 = scmp.lt.s32.totalorder %s10, 3
      %p303 = pnand %p301, %p302
      %p304 = pneg %p303
      // Predicated region
      $region107: #{transformer_decoder_layer.13} parent=5 // pred_check
        _
      $region108: #{transformer_decoder_layer.13} parent=5 // pred_check_branch
        %306 = sbr.rel (%p303) target = $region110
      $region109: #{transformer_decoder_layer.13} parent=5 // pred_region
        %s307 = ssub.s32 %s10, 1
        %s308 = sand.u32 %s63, 1
        %s309 = sand.u32 %s63, 1
        %s310 = smul.addr %s309, 8
        %s311 = scalar_lea.vmem [#allocation2], %s310
        // Predicated region
        $region111: #{transformer_decoder_layer.13} parent=109 // pred_check
          %p312 = pneg %p76
        $region112: #{transformer_decoder_layer.13} parent=109 // pred_check_branch
          %314 = sbr.rel (%p312) target = $region114
        $region113: #{transformer_decoder_layer.13} parent=109 // pred_region
          _
        $region114: #{transformer_decoder_layer.13} parent=109 // pred_fallthru
          _
        %s315 = sand.u32 %s89, 1
        %s316 = sand.u32 %s89, 1
        %s317 = smul.addr %s316, 8
        %s318 = scalar_lea.vmem [#allocation3], %s317
        // Predicated region
        $region115: #{transformer_decoder_layer.13} parent=109 // pred_check
          %p319 = pneg %p102
        $region116: #{transformer_decoder_layer.13} parent=109 // pred_check_branch
          %321 = sbr.rel (%p319) target = $region118
        $region117: #{transformer_decoder_layer.13} parent=109 // pred_region
          _
        $region118: #{transformer_decoder_layer.13} parent=109 // pred_fallthru
          _
        %s322 = smul.u32 2, %s20
        %p323 = scmp.lt.s32.totalorder %s19, 1
        %s324 = scalar_select %p323, %s19, 1
        %p325 = scmp.lt.s32.totalorder %s322, 1
        %s326 = scalar_select %p325, %s322, 1
        %s327 = smul.addr %s324, 2
        %s328 = sadd.s32 %s326, %s327
        %s329 = smul.addr %s328, 4
        %s330 = scalar_lea.vmem %s0, %s329
        %p331 = pneg %p50
        %p332 = pneg %p47
        %s333 = sand.u32 %s63, 1
        %s334 = sand.u32 %s63, 1
        %s335 = smul.addr %s334, 8
        %s336 = scalar_lea.vmem [#allocation2], %s335
        %p337 = pneg %p76
        %p338 = pneg %p73
        %s339 = sand.u32 %s89, 1
        %s340 = sand.u32 %s89, 1
        %s341 = smul.addr %s340, 8
        %s342 = scalar_lea.vmem [#allocation3], %s341
        %p343 = pneg %p102
        %p344 = pneg %p99
        %p345 = scmp.lt.s32.totalorder %s19, 1
        %s346 = scalar_select %p345, %s19, 1
        %s347 = scalar_lea.vmem %s3, %s346
        %p348 = pneg %p128
        %p349 = pneg %p125
        %p350 = pneg %p156
        %p351 = pneg %p153
        %s352 = smul.u32 2, %s20
        %p353 = scmp.lt.s32.totalorder %s19, 1
        %s354 = scalar_select %p353, %s19, 1
        %p355 = scmp.lt.s32.totalorder %s352, 1
        %s356 = scalar_select %p355, %s352, 1
        %s357 = smul.addr %s354, 2
        %s358 = sadd.s32 %s356, %s357
        %s359 = smul.addr %s358, 4
        %s360 = scalar_lea.vmem %s4, %s359
        %s361 = smul.u32 2, %s20
        %p362 = scmp.lt.s32.totalorder %s19, 1
        %s363 = scalar_select %p362, %s19, 1
        %p364 = scmp.lt.s32.totalorder %s361, 1
        %s365 = scalar_select %p364, %s361, 1
        %s366 = smul.addr %s363, 2
        %s367 = sadd.s32 %s365, %s366
        %s368 = smul.addr %s367, 4
        %s369 = scalar_lea.vmem %s0, %s368
        %s370 = smul.u32 2, %s20
        %p371 = scmp.lt.s32.totalorder %s19, 1
        %s372 = scalar_select %p371, %s19, 1
        %s373 = scalar_lea.vmem %s3, %s372
        %s374 = smul.u32 2, %s20
        %p375 = scmp.lt.s32.totalorder %s19, 1
        %s376 = scalar_select %p375, %s19, 1
        %p377 = scmp.lt.s32.totalorder %s374, 1
        %s378 = scalar_select %p377, %s374, 1
        %s379 = smul.addr %s376, 2
        %s380 = sadd.s32 %s378, %s379
        %s381 = smul.addr %s380, 4
        %s382 = scalar_lea.vmem %s4, %s381
        %s383 = smul.u32 2, %s20
        %v386 = vld [vmem:[%s369] sm:$0xf]
        %v387 = vld [vmem:[%s369 + $0x4] sm:$0xf]
        %v388 = vmul.bf16 %v386, 1048592000
        %v389 = vmul.bf16 %v387, 1048592000
        %v390 = vld [vmem:[%s311] sm:$0xf]
        %v391 = vld [vmem:[%s311 + $0x4] sm:$0xf]
        %v392 = vld [vmem:[%s318] sm:$0xf]
        %v393 = vld [vmem:[%s318 + $0x4] sm:$0xf]
        %v394 = vld [vmem:[%s373] sm:$0x1]
        %vm395 = vcmp.gt.f32.partialorder %v394, 0.0
        %v398 = vunpack.c.l.b16 %v388
        %v399 = vunpack.c.l.b16 %v389
        %v400 = vpack.c.b16 %v399, %v398
        %v403 = vunpack.c.l.b16 %v390
        %v404 = vunpack.c.l.b16 %v391
        %v405 = vpack.c.b16 %v404, %v403
        %vm406 = vcmask 130048
        %v408 = vsel %vm406, %v400, 0
        %v411 = vsel %vm406, %v405, 0
        %413 = vmatprep.subr.bf16.mxu0 0
        %414 = vmatpush1.bf16.xpose.msra.mxu0 %v411
        %415 = vmatprep.subr.bf16.mxu0 0
        %416 = vmatpush1.bf16.xpose.msra.mxu0 0
        %417 = vmatprep.subr.bf16.mxu0 0
        %418 = vmatpush1.bf16.xpose.msra.mxu0 0
        %419 = vmatprep.subr.bf16.mxu0 0
        %420 = vmatpush1.bf16.xpose.msra.mxu0 0
        %421 = vmatprep.subr.bf16.mxu0 0
        %422 = vmatpush1.bf16.xpose.msra.mxu0 0
        %423 = vmatprep.subr.bf16.mxu0 0
        %424 = vmatpush1.bf16.xpose.msra.mxu0 0
        %425 = vmatprep.subr.bf16.mxu0 0
        %426 = vmatpush1.bf16.xpose.msra.mxu0 0
        %427 = vmatprep.subr.bf16.mxu0 0
        %428 = vmatpush1.bf16.xpose.msra.mxu0 0
        %429 = vmatprep.subr.bf16.mxu0 0
        %430 = vmatpush1.bf16.xpose.msra.mxu0 0
        %431 = vmatprep.subr.bf16.mxu0 0
        %432 = vmatpush1.bf16.xpose.msra.mxu0 0
        %433 = vmatprep.subr.bf16.mxu0 0
        %434 = vmatpush1.bf16.xpose.msra.mxu0 0
        %435 = vmatprep.subr.bf16.mxu0 0
        %436 = vmatpush1.bf16.xpose.msra.mxu0 0
        %437 = vmatprep.subr.bf16.mxu0 0
        %438 = vmatpush1.bf16.xpose.msra.mxu0 0
        %439 = vmatprep.subr.bf16.mxu0 0
        %440 = vmatpush1.bf16.xpose.msra.mxu0 0
        %441 = vmatprep.subr.bf16.mxu0 0
        %442 = vmatpush1.bf16.xpose.msra.mxu0 0
        %443 = vmatprep.subr.bf16.mxu0 0
        %444 = vmatpush1.bf16.xpose.msra.mxu0 0
        %445 = vmatprep.mubr.bf16.mxu0 0
        %446 = vmatmul.mubr.bf16.gmra.mrb[0].mxu0 %v408
        %v447 = vpop.f32.mrb[0].mxu0
        %v448 = vadd.f32 0.0, %v447
        %v449 = vpop.f32.mrb[0].mxu0
        %v450 = vpop.f32.mrb[0].mxu0
        %v451 = vadd.f32 0.0, %v450
        %v452 = vpop.f32.mrb[0].mxu0
        %453 = vdwg.mxu0
        %v454 = vsel %vm395, 1, 0
        %v455 = vlaneseq
        %v456 = vshrl.u32 %v455, 7
        %v457 = vsub.s32 0, %v456
        %v458 = vrot.slane %v454, %v457
        %vm459 = vcmp.eq.s32.totalorder %v458, 1
        %v460 = vsel %vm459, %v448, -1e+09
        %v461 = vsel %vm459, %v451, -1e+09
        %v462 = vsel %vm406, %v460, -inf
        %463 = vmax.xlane.f32.xlu0 %v462
        %v464 = vpop.xlane.xlu0 %463
        %v465 = vsel %vm406, %v461, -inf
        %466 = vmax.xlane.f32.xlu0 %v465
        %v467 = vpop.xlane.xlu0 %466
        %v468 = vsub.f32 %v460, %v464
        %v469 = vsub.f32 %v461, %v467
        %v470 = vmul.f32 %v468, 1.442695
        %v471 = vpow.pop %v470
        %v472 = vmul.f32 %v469, 1.442695
        %v473 = vpow.pop %v472
        %v474 = vsel %vm406, %v471, 0.0
        %475 = vadd.xlane.f32.xlu0 %v474
        %v476 = vpop.xlane.xlu0 %475
        %v477 = vsel %vm406, %v473, 0.0
        %478 = vadd.xlane.f32.xlu0 %v477
        %v479 = vpop.xlane.xlu0 %478
        %v480 = vrcp.pop %v476
        %v481 = vrcp.pop %v479
        %v482 = vmul.f32 %v471, %v480
        %v483 = vmul.f32 %v473, %v481
        %v484 = vpack.c.bf16 %v483, %v482
        %v487 = vunpack.c.l.b16 %v392
        %v488 = vunpack.c.l.b16 %v393
        %v489 = vpack.c.b16 %v488, %v487
        %v492 = vsel %vm406, %v484, 0
        %494 = vmatprep.subr.bf16.mxu0 0
        %495 = vmatpush1.bf16.msra.mxu0 %v489
        %496 = vmatprep.subr.bf16.mxu0 0
        %497 = vmatpush1.bf16.msra.mxu0 0
        %498 = vmatprep.subr.bf16.mxu0 0
        %499 = vmatpush1.bf16.msra.mxu0 0
        %500 = vmatprep.subr.bf16.mxu0 0
        %501 = vmatpush1.bf16.msra.mxu0 0
        %502 = vmatprep.subr.bf16.mxu0 0
        %503 = vmatpush1.bf16.msra.mxu0 0
        %504 = vmatprep.subr.bf16.mxu0 0
        %505 = vmatpush1.bf16.msra.mxu0 0
        %506 = vmatprep.subr.bf16.mxu0 0
        %507 = vmatpush1.bf16.msra.mxu0 0
        %508 = vmatprep.subr.bf16.mxu0 0
        %509 = vmatpush1.bf16.msra.mxu0 0
        %510 = vmatprep.subr.bf16.mxu0 0
        %511 = vmatpush1.bf16.msra.mxu0 0
        %512 = vmatprep.subr.bf16.mxu0 0
        %513 = vmatpush1.bf16.msra.mxu0 0
        %514 = vmatprep.subr.bf16.mxu0 0
        %515 = vmatpush1.bf16.msra.mxu0 0
        %516 = vmatprep.subr.bf16.mxu0 0
        %517 = vmatpush1.bf16.msra.mxu0 0
        %518 = vmatprep.subr.bf16.mxu0 0
        %519 = vmatpush1.bf16.msra.mxu0 0
        %520 = vmatprep.subr.bf16.mxu0 0
        %521 = vmatpush1.bf16.msra.mxu0 0
        %522 = vmatprep.subr.bf16.mxu0 0
        %523 = vmatpush1.bf16.msra.mxu0 0
        %524 = vmatprep.subr.bf16.mxu0 0
        %525 = vmatpush1.bf16.msra.mxu0 0
        %526 = vmatprep.mubr.bf16.mxu0 0
        %527 = vmatmul.mubr.bf16.gmra.mrb[0].mxu0 %v492
        %v528 = vpop.f32.mrb[0].mxu0
        %v529 = vadd.f32 0.0, %v528
        %v530 = vpop.f32.mrb[0].mxu0
        %v531 = vpop.f32.mrb[0].mxu0
        %v532 = vadd.f32 0.0, %v531
        %v533 = vpop.f32.mrb[0].mxu0
        %534 = vdwg.mxu0
        %535 = vrot.lane.b32.xlu0 %v400, 112
        %v536 = vpop.permute.xlu0 %535
        %537 = vrot.lane.b32.xlu0 %v405, 112
        %v538 = vpop.permute.xlu0 %537
        %v540 = vsel %vm406, %v536, 0
        %v543 = vsel %vm406, %v538, 0
        %545 = vmatprep.subr.bf16.mxu0 0
        %546 = vmatpush1.bf16.xpose.msra.mxu0 %v543
        %547 = vmatprep.subr.bf16.mxu0 0
        %548 = vmatpush1.bf16.xpose.msra.mxu0 0
        %549 = vmatprep.subr.bf16.mxu0 0
        %550 = vmatpush1.bf16.xpose.msra.mxu0 0
        %551 = vmatprep.subr.bf16.mxu0 0
        %552 = vmatpush1.bf16.xpose.msra.mxu0 0
        %553 = vmatprep.subr.bf16.mxu0 0
        %554 = vmatpush1.bf16.xpose.msra.mxu0 0
        %555 = vmatprep.subr.bf16.mxu0 0
        %556 = vmatpush1.bf16.xpose.msra.mxu0 0
        %557 = vmatprep.subr.bf16.mxu0 0
        %558 = vmatpush1.bf16.xpose.msra.mxu0 0
        %559 = vmatprep.subr.bf16.mxu0 0
        %560 = vmatpush1.bf16.xpose.msra.mxu0 0
        %561 = vmatprep.subr.bf16.mxu0 0
        %562 = vmatpush1.bf16.xpose.msra.mxu0 0
        %563 = vmatprep.subr.bf16.mxu0 0
        %564 = vmatpush1.bf16.xpose.msra.mxu0 0
        %565 = vmatprep.subr.bf16.mxu0 0
        %566 = vmatpush1.bf16.xpose.msra.mxu0 0
        %567 = vmatprep.subr.bf16.mxu0 0
        %568 = vmatpush1.bf16.xpose.msra.mxu0 0
        %569 = vmatprep.subr.bf16.mxu0 0
        %570 = vmatpush1.bf16.xpose.msra.mxu0 0
        %571 = vmatprep.subr.bf16.mxu0 0
        %572 = vmatpush1.bf16.xpose.msra.mxu0 0
        %573 = vmatprep.subr.bf16.mxu0 0
        %574 = vmatpush1.bf16.xpose.msra.mxu0 0
        %575 = vmatprep.subr.bf16.mxu0 0
        %576 = vmatpush1.bf16.xpose.msra.mxu0 0
        %577 = vmatprep.mubr.bf16.mxu0 0
        %578 = vmatmul.mubr.bf16.gmra.mrb[0].mxu0 %v540
        %v579 = vpop.f32.mrb[0].mxu0
        %v580 = vadd.f32 0.0, %v579
        %v581 = vpop.f32.mrb[0].mxu0
        %v582 = vpop.f32.mrb[0].mxu0
        %v583 = vadd.f32 0.0, %v582
        %v584 = vpop.f32.mrb[0].mxu0
        %585 = vdwg.mxu0
        %v586 = vsel %vm459, %v580, -1e+09
        %v587 = vsel %vm459, %v583, -1e+09
        %v588 = vsel %vm406, %v586, -inf
        %589 = vmax.xlane.f32.xlu0 %v588
        %v590 = vpop.xlane.xlu0 %589
        %v591 = vsel %vm406, %v587, -inf
        %592 = vmax.xlane.f32.xlu0 %v591
        %v593 = vpop.xlane.xlu0 %592
        %v594 = vsub.f32 %v586, %v590
        %v595 = vsub.f32 %v587, %v593
        %v596 = vmul.f32 %v594, 1.442695
        %v597 = vpow.pop %v596
        %v598 = vmul.f32 %v595, 1.442695
        %v599 = vpow.pop %v598
        %v600 = vsel %vm406, %v597, 0.0
        %601 = vadd.xlane.f32.xlu0 %v600
        %v602 = vpop.xlane.xlu0 %601
        %v603 = vsel %vm406, %v599, 0.0
        %604 = vadd.xlane.f32.xlu0 %v603
        %v605 = vpop.xlane.xlu0 %604
        %v606 = vrcp.pop %v602
        %v607 = vrcp.pop %v605
        %v608 = vmul.f32 %v597, %v606
        %v609 = vmul.f32 %v599, %v607
        %v610 = vpack.c.bf16 %v609, %v608
        %611 = vrot.lane.b32.xlu0 %v489, 112
        %v612 = vpop.permute.xlu0 %611
        %v615 = vsel %vm406, %v610, 0
        %617 = vmatprep.subr.bf16.mxu0 0
        %618 = vmatpush1.bf16.msra.mxu0 %v612
        %619 = vmatprep.subr.bf16.mxu0 0
        %620 = vmatpush1.bf16.msra.mxu0 0
        %621 = vmatprep.subr.bf16.mxu0 0
        %622 = vmatpush1.bf16.msra.mxu0 0
        %623 = vmatprep.subr.bf16.mxu0 0
        %624 = vmatpush1.bf16.msra.mxu0 0
        %625 = vmatprep.subr.bf16.mxu0 0
        %626 = vmatpush1.bf16.msra.mxu0 0
        %627 = vmatprep.subr.bf16.mxu0 0
        %628 = vmatpush1.bf16.msra.mxu0 0
        %629 = vmatprep.subr.bf16.mxu0 0
        %630 = vmatpush1.bf16.msra.mxu0 0
        %631 = vmatprep.subr.bf16.mxu0 0
        %632 = vmatpush1.bf16.msra.mxu0 0
        %633 = vmatprep.subr.bf16.mxu0 0
        %634 = vmatpush1.bf16.msra.mxu0 0
        %635 = vmatprep.subr.bf16.mxu0 0
        %636 = vmatpush1.bf16.msra.mxu0 0
        %637 = vmatprep.subr.bf16.mxu0 0
        %638 = vmatpush1.bf16.msra.mxu0 0
        %639 = vmatprep.subr.bf16.mxu0 0
        %640 = vmatpush1.bf16.msra.mxu0 0
        %641 = vmatprep.subr.bf16.mxu0 0
        %642 = vmatpush1.bf16.msra.mxu0 0
        %643 = vmatprep.subr.bf16.mxu0 0
        %644 = vmatpush1.bf16.msra.mxu0 0
        %645 = vmatprep.subr.bf16.mxu0 0
        %646 = vmatpush1.bf16.msra.mxu0 0
        %647 = vmatprep.subr.bf16.mxu0 0
        %648 = vmatpush1.bf16.msra.mxu0 0
        %649 = vmatprep.mubr.bf16.mxu0 0
        %650 = vmatmul.mubr.bf16.gmra.mrb[0].mxu0 %v615
        %v651 = vpop.f32.mrb[0].mxu0
        %v652 = vadd.f32 0.0, %v651
        %v653 = vpop.f32.mrb[0].mxu0
        %v654 = vpop.f32.mrb[0].mxu0
        %v655 = vadd.f32 0.0, %v654
        %v656 = vpop.f32.mrb[0].mxu0
        %657 = vdwg.mxu0
        %658 = vrot.lane.b32.xlu0 %v400, 96
        %v659 = vpop.permute.xlu0 %658
        %660 = vrot.lane.b32.xlu0 %v405, 96
        %v661 = vpop.permute.xlu0 %660
        %v663 = vsel %vm406, %v659, 0
        %v666 = vsel %vm406, %v661, 0
        %668 = vmatprep.subr.bf16.mxu0 0
        %669 = vmatpush1.bf16.xpose.msra.mxu0 %v666
        %670 = vmatprep.subr.bf16.mxu0 0
        %671 = vmatpush1.bf16.xpose.msra.mxu0 0
        %672 = vmatprep.subr.bf16.mxu0 0
        %673 = vmatpush1.bf16.xpose.msra.mxu0 0
        %674 = vmatprep.subr.bf16.mxu0 0
        %675 = vmatpush1.bf16.xpose.msra.mxu0 0
        %676 = vmatprep.subr.bf16.mxu0 0
        %677 = vmatpush1.bf16.xpose.msra.mxu0 0
        %678 = vmatprep.subr.bf16.mxu0 0
        %679 = vmatpush1.bf16.xpose.msra.mxu0 0
        %680 = vmatprep.subr.bf16.mxu0 0
        %681 = vmatpush1.bf16.xpose.msra.mxu0 0
        %682 = vmatprep.subr.bf16.mxu0 0
        %683 = vmatpush1.bf16.xpose.msra.mxu0 0
        %684 = vmatprep.subr.bf16.mxu0 0
        %685 = vmatpush1.bf16.xpose.msra.mxu0 0
        %686 = vmatprep.subr.bf16.mxu0 0
        %687 = vmatpush1.bf16.xpose.msra.mxu0 0
        %688 = vmatprep.subr.bf16.mxu0 0
        %689 = vmatpush1.bf16.xpose.msra.mxu0 0
        %690 = vmatprep.subr.bf16.mxu0 0
        %691 = vmatpush1.bf16.xpose.msra.mxu0 0
        %692 = vmatprep.subr.bf16.mxu0 0
        %693 = vmatpush1.bf16.xpose.msra.mxu0 0
        %694 = vmatprep.subr.bf16.mxu0 0
        %695 = vmatpush1.bf16.xpose.msra.mxu0 0
        %696 = vmatprep.subr.bf16.mxu0 0
        %697 = vmatpush1.bf16.xpose.msra.mxu0 0
        %698 = vmatprep.subr.bf16.mxu0 0
        %699 = vmatpush1.bf16.xpose.msra.mxu0 0
        %700 = vmatprep.mubr.bf16.mxu0 0
        %701 = vmatmul.mubr.bf16.gmra.mrb[0].mxu0 %v663
        %v702 = vpop.f32.mrb[0].mxu0
        %v703 = vadd.f32 0.0, %v702
        %v704 = vpop.f32.mrb[0].mxu0
        %v705 = vpop.f32.mrb[0].mxu0
        %v706 = vadd.f32 0.0, %v705
        %v707 = vpop.f32.mrb[0].mxu0
        %708 = vdwg.mxu0
        %v709 = vsel %vm459, %v703, -1e+09
        %v710 = vsel %vm459, %v706, -1e+09
        %v711 = vsel %vm406, %v709, -inf
        %712 = vmax.xlane.f32.xlu0 %v711
        %v713 = vpop.xlane.xlu0 %712
        %v714 = vsel %vm406, %v710, -inf
        %715 = vmax.xlane.f32.xlu0 %v714
        %v716 = vpop.xlane.xlu0 %715
        %v717 = vsub.f32 %v709, %v713
        %v718 = vsub.f32 %v710, %v716
        %v719 = vmul.f32 %v717, 1.442695
        %v720 = vpow.pop %v719
        %v721 = vmul.f32 %v718, 1.442695
        %v722 = vpow.pop %v721
        %v723 = vsel %vm406, %v720, 0.0
        %724 = vadd.xlane.f32.xlu0 %v723
        %v725 = vpop.xlane.xlu0 %724
        %v726 = vsel %vm406, %v722, 0.0
        %727 = vadd.xlane.f32.xlu0 %v726
        %v728 = vpop.xlane.xlu0 %727
        %v729 = vrcp.pop %v725
        %v730 = vrcp.pop %v728
        %v731 = vmul.f32 %v720, %v729
        %v732 = vmul.f32 %v722, %v730
        %v733 = vpack.c.bf16 %v732, %v731
        %734 = vrot.lane.b32.xlu0 %v489, 96
        %v735 = vpop.permute.xlu0 %734
        %v738 = vsel %vm406, %v733, 0
        %740 = vmatprep.subr.bf16.mxu0 0
        %741 = vmatpush1.bf16.msra.mxu0 %v735
        %742 = vmatprep.subr.bf16.mxu0 0
        %743 = vmatpush1.bf16.msra.mxu0 0
        %744 = vmatprep.subr.bf16.mxu0 0
        %745 = vmatpush1.bf16.msra.mxu0 0
        %746 = vmatprep.subr.bf16.mxu0 0
        %747 = vmatpush1.bf16.msra.mxu0 0
        %748 = vmatprep.subr.bf16.mxu0 0
        %749 = vmatpush1.bf16.msra.mxu0 0
        %750 = vmatprep.subr.bf16.mxu0 0
        %751 = vmatpush1.bf16.msra.mxu0 0
        %752 = vmatprep.subr.bf16.mxu0 0
        %753 = vmatpush1.bf16.msra.mxu0 0
        %754 = vmatprep.subr.bf16.mxu0 0
        %755 = vmatpush1.bf16.msra.mxu0 0
        %756 = vmatprep.subr.bf16.mxu0 0
        %757 = vmatpush1.bf16.msra.mxu0 0
        %758 = vmatprep.subr.bf16.mxu0 0
        %759 = vmatpush1.bf16.msra.mxu0 0
        %760 = vmatprep.subr.bf16.mxu0 0
        %761 = vmatpush1.bf16.msra.mxu0 0
        %762 = vmatprep.subr.bf16.mxu0 0
        %763 = vmatpush1.bf16.msra.mxu0 0
        %764 = vmatprep.subr.bf16.mxu0 0
        %765 = vmatpush1.bf16.msra.mxu0 0
        %766 = vmatprep.subr.bf16.mxu0 0
        %767 = vmatpush1.bf16.msra.mxu0 0
        %768 = vmatprep.subr.bf16.mxu0 0
        %769 = vmatpush1.bf16.msra.mxu0 0
        %770 = vmatprep.subr.bf16.mxu0 0
        %771 = vmatpush1.bf16.msra.mxu0 0
        %772 = vmatprep.mubr.bf16.mxu0 0
        %773 = vmatmul.mubr.bf16.gmra.mrb[0].mxu0 %v738
        %v774 = vpop.f32.mrb[0].mxu0
        %v775 = vadd.f32 0.0, %v774
        %v776 = vpop.f32.mrb[0].mxu0
        %v777 = vpop.f32.mrb[0].mxu0
        %v778 = vadd.f32 0.0, %v777
        %v779 = vpop.f32.mrb[0].mxu0
        %780 = vdwg.mxu0
        %781 = vrot.lane.b32.xlu0 %v400, 80
        %v782 = vpop.permute.xlu0 %781
        %783 = vrot.lane.b32.xlu0 %v405, 80
        %v784 = vpop.permute.xlu0 %783
        %v786 = vsel %vm406, %v782, 0
        %v789 = vsel %vm406, %v784, 0
        %791 = vmatprep.subr.bf16.mxu0 0
        %792 = vmatpush1.bf16.xpose.msra.mxu0 %v789
        %793 = vmatprep.subr.bf16.mxu0 0
        %794 = vmatpush1.bf16.xpose.msra.mxu0 0
        %795 = vmatprep.subr.bf16.mxu0 0
        %796 = vmatpush1.bf16.xpose.msra.mxu0 0
        %797 = vmatprep.subr.bf16.mxu0 0
        %798 = vmatpush1.bf16.xpose.msra.mxu0 0
        %799 = vmatprep.subr.bf16.mxu0 0
        %800 = vmatpush1.bf16.xpose.msra.mxu0 0
        %801 = vmatprep.subr.bf16.mxu0 0
        %802 = vmatpush1.bf16.xpose.msra.mxu0 0
        %803 = vmatprep.subr.bf16.mxu0 0
        %804 = vmatpush1.bf16.xpose.msra.mxu0 0
        %805 = vmatprep.subr.bf16.mxu0 0
        %806 = vmatpush1.bf16.xpose.msra.mxu0 0
        %807 = vmatprep.subr.bf16.mxu0 0
        %808 = vmatpush1.bf16.xpose.msra.mxu0 0
        %809 = vmatprep.subr.bf16.mxu0 0
        %810 = vmatpush1.bf16.xpose.msra.mxu0 0
        %811 = vmatprep.subr.bf16.mxu0 0
        %812 = vmatpush1.bf16.xpose.msra.mxu0 0
        %813 = vmatprep.subr.bf16.mxu0 0
        %814 = vmatpush1.bf16.xpose.msra.mxu0 0
        %815 = vmatprep.subr.bf16.mxu0 0
        %816 = vmatpush1.bf16.xpose.msra.mxu0 0
        %817 = vmatprep.subr.bf16.mxu0 0
        %818 = vmatpush1.bf16.xpose.msra.mxu0 0
        %819 = vmatprep.subr.bf16.mxu0 0
        %820 = vmatpush1.bf16.xpose.msra.mxu0 0
        %821 = vmatprep.subr.bf16.mxu0 0
        %822 = vmatpush1.bf16.xpose.msra.mxu0 0
        %823 = vmatprep.mubr.bf16.mxu0 0
        %824 = vmatmul.mubr.bf16.gmra.mrb[0].mxu0 %v786
        %v825 = vpop.f32.mrb[0].mxu0
        %v826 = vadd.f32 0.0, %v825
        %v827 = vpop.f32.mrb[0].mxu0
        %v828 = vpop.f32.mrb[0].mxu0
        %v829 = vadd.f32 0.0, %v828
        %v830 = vpop.f32.mrb[0].mxu0
        %831 = vdwg.mxu0
        %v832 = vsel %vm459, %v826, -1e+09
        %v833 = vsel %vm459, %v829, -1e+09
        %v834 = vsel %vm406, %v832, -inf
        %835 = vmax.xlane.f32.xlu0 %v834
        %v836 = vpop.xlane.xlu0 %835
        %v837 = vsel %vm406, %v833, -inf
        %838 = vmax.xlane.f32.xlu0 %v837
        %v839 = vpop.xlane.xlu0 %838
        %v840 = vsub.f32 %v832, %v836
        %v841 = vsub.f32 %v833, %v839
        %v842 = vmul.f32 %v840, 1.442695
        %v843 = vpow.pop %v842
        %v844 = vmul.f32 %v841, 1.442695
        %v845 = vpow.pop %v844
        %v846 = vsel %vm406, %v843, 0.0
        %847 = vadd.xlane.f32.xlu0 %v846
        %v848 = vpop.xlane.xlu0 %847
        %v849 = vsel %vm406, %v845, 0.0
        %850 = vadd.xlane.f32.xlu0 %v849
        %v851 = vpop.xlane.xlu0 %850
        %v852 = vrcp.pop %v848
        %v853 = vrcp.pop %v851
        %v854 = vmul.f32 %v843, %v852
        %v855 = vmul.f32 %v845, %v853
        %v856 = vpack.c.bf16 %v855, %v854
        %857 = vrot.lane.b32.xlu0 %v489, 80
        %v858 = vpop.permute.xlu0 %857
        %v861 = vsel %vm406, %v856, 0
        %863 = vmatprep.subr.bf16.mxu0 0
        %864 = vmatpush1.bf16.msra.mxu0 %v858
        %865 = vmatprep.subr.bf16.mxu0 0
        %866 = vmatpush1.bf16.msra.mxu0 0
        %867 = vmatprep.subr.bf16.mxu0 0
        %868 = vmatpush1.bf16.msra.mxu0 0
        %869 = vmatprep.subr.bf16.mxu0 0
        %870 = vmatpush1.bf16.msra.mxu0 0
        %871 = vmatprep.subr.bf16.mxu0 0
        %872 = vmatpush1.bf16.msra.mxu0 0
        %873 = vmatprep.subr.bf16.mxu0 0
        %874 = vmatpush1.bf16.msra.mxu0 0
        %875 = vmatprep.subr.bf16.mxu0 0
        %876 = vmatpush1.bf16.msra.mxu0 0
        %877 = vmatprep.subr.bf16.mxu0 0
        %878 = vmatpush1.bf16.msra.mxu0 0
        %879 = vmatprep.subr.bf16.mxu0 0
        %880 = vmatpush1.bf16.msra.mxu0 0
        %881 = vmatprep.subr.bf16.mxu0 0
        %882 = vmatpush1.bf16.msra.mxu0 0
        %883 = vmatprep.subr.bf16.mxu0 0
        %884 = vmatpush1.bf16.msra.mxu0 0
        %885 = vmatprep.subr.bf16.mxu0 0
        %886 = vmatpush1.bf16.msra.mxu0 0
        %887 = vmatprep.subr.bf16.mxu0 0
        %888 = vmatpush1.bf16.msra.mxu0 0
        %889 = vmatprep.subr.bf16.mxu0 0
        %890 = vmatpush1.bf16.msra.mxu0 0
        %891 = vmatprep.subr.bf16.mxu0 0
        %892 = vmatpush1.bf16.msra.mxu0 0
        %893 = vmatprep.subr.bf16.mxu0 0
        %894 = vmatpush1.bf16.msra.mxu0 0
        %895 = vmatprep.mubr.bf16.mxu0 0
        %896 = vmatmul.mubr.bf16.gmra.mrb[0].mxu0 %v861
        %v897 = vpop.f32.mrb[0].mxu0
        %v898 = vadd.f32 0.0, %v897
        %v899 = vpop.f32.mrb[0].mxu0
        %v900 = vpop.f32.mrb[0].mxu0
        %v901 = vadd.f32 0.0, %v900
        %v902 = vpop.f32.mrb[0].mxu0
        %903 = vdwg.mxu0
        %904 = vrot.lane.b32.xlu0 %v400, 64
        %v905 = vpop.permute.xlu0 %904
        %906 = vrot.lane.b32.xlu0 %v405, 64
        %v907 = vpop.permute.xlu0 %906
        %v909 = vsel %vm406, %v905, 0
        %v912 = vsel %vm406, %v907, 0
        %914 = vmatprep.subr.bf16.mxu0 0
        %915 = vmatpush1.bf16.xpose.msra.mxu0 %v912
        %916 = vmatprep.subr.bf16.mxu0 0
        %917 = vmatpush1.bf16.xpose.msra.mxu0 0
        %918 = vmatprep.subr.bf16.mxu0 0
        %919 = vmatpush1.bf16.xpose.msra.mxu0 0
        %920 = vmatprep.subr.bf16.mxu0 0
        %921 = vmatpush1.bf16.xpose.msra.mxu0 0
        %922 = vmatprep.subr.bf16.mxu0 0
        %923 = vmatpush1.bf16.xpose.msra.mxu0 0
        %924 = vmatprep.subr.bf16.mxu0 0
        %925 = vmatpush1.bf16.xpose.msra.mxu0 0
        %926 = vmatprep.subr.bf16.mxu0 0
        %927 = vmatpush1.bf16.xpose.msra.mxu0 0
        %928 = vmatprep.subr.bf16.mxu0 0
        %929 = vmatpush1.bf16.xpose.msra.mxu0 0
        %930 = vmatprep.subr.bf16.mxu0 0
        %931 = vmatpush1.bf16.xpose.msra.mxu0 0
        %932 = vmatprep.subr.bf16.mxu0 0
        %933 = vmatpush1.bf16.xpose.msra.mxu0 0
        %934 = vmatprep.subr.bf16.mxu0 0
        %935 = vmatpush1.bf16.xpose.msra.mxu0 0
        %936 = vmatprep.subr.bf16.mxu0 0
        %937 = vmatpush1.bf16.xpose.msra.mxu0 0
        %938 = vmatprep.subr.bf16.mxu0 0
        %939 = vmatpush1.bf16.xpose.msra.mxu0 0
        %940 = vmatprep.subr.bf16.mxu0 0
        %941 = vmatpush1.bf16.xpose.msra.mxu0 0
        %942 = vmatprep.subr.bf16.mxu0 0
        %943 = vmatpush1.bf16.xpose.msra.mxu0 0
        %944 = vmatprep.subr.bf16.mxu0 0
        %945 = vmatpush1.bf16.xpose.msra.mxu0 0
        %946 = vmatprep.mubr.bf16.mxu0 0
        %947 = vmatmul.mubr.bf16.gmra.mrb[0].mxu0 %v909
        %v948 = vpop.f32.mrb[0].mxu0
        %v949 = vadd.f32 0.0, %v948
        %v950 = vpop.f32.mrb[0].mxu0
        %v951 = vpop.f32.mrb[0].mxu0
        %v952 = vadd.f32 0.0, %v951
        %v953 = vpop.f32.mrb[0].mxu0
        %954 = vdwg.mxu0
        %v955 = vsel %vm459, %v949, -1e+09
        %v956 = vsel %vm459, %v952, -1e+09
        %v957 = vsel %vm406, %v955, -inf
        %958 = vmax.xlane.f32.xlu0 %v957
        %v959 = vpop.xlane.xlu0 %958
        %v960 = vsel %vm406, %v956, -inf
        %961 = vmax.xlane.f32.xlu0 %v960
        %v962 = vpop.xlane.xlu0 %961
        %v963 = vsub.f32 %v955, %v959
        %v964 = vsub.f32 %v956, %v962
        %v965 = vmul.f32 %v963, 1.442695
        %v966 = vpow.pop %v965
        %v967 = vmul.f32 %v964, 1.442695
        %v968 = vpow.pop %v967
        %v969 = vsel %vm406, %v966, 0.0
        %970 = vadd.xlane.f32.xlu0 %v969
        %v971 = vpop.xlane.xlu0 %970
        %v972 = vsel %vm406, %v968, 0.0
        %973 = vadd.xlane.f32.xlu0 %v972
        %v974 = vpop.xlane.xlu0 %973
        %v975 = vrcp.pop %v971
        %v976 = vrcp.pop %v974
        %v977 = vmul.f32 %v966, %v975
        %v978 = vmul.f32 %v968, %v976
        %v979 = vpack.c.bf16 %v978, %v977
        %980 = vrot.lane.b32.xlu0 %v489, 64
        %v981 = vpop.permute.xlu0 %980
        %v984 = vsel %vm406, %v979, 0
        %986 = vmatprep.subr.bf16.mxu0 0
        %987 = vmatpush1.bf16.msra.mxu0 %v981
        %988 = vmatprep.subr.bf16.mxu0 0
        %989 = vmatpush1.bf16.msra.mxu0 0
        %990 = vmatprep.subr.bf16.mxu0 0
        %991 = vmatpush1.bf16.msra.mxu0 0
        %992 = vmatprep.subr.bf16.mxu0 0
        %993 = vmatpush1.bf16.msra.mxu0 0
        %994 = vmatprep.subr.bf16.mxu0 0
        %995 = vmatpush1.bf16.msra.mxu0 0
        %996 = vmatprep.subr.bf16.mxu0 0
        %997 = vmatpush1.bf16.msra.mxu0 0
        %998 = vmatprep.subr.bf16.mxu0 0
        %999 = vmatpush1.bf16.msra.mxu0 0
        %1000 = vmatprep.subr.bf16.mxu0 0
        %1001 = vmatpush1.bf16.msra.mxu0 0
        %1002 = vmatprep.subr.bf16.mxu0 0
        %1003 = vmatpush1.bf16.msra.mxu0 0
        %1004 = vmatprep.subr.bf16.mxu0 0
        %1005 = vmatpush1.bf16.msra.mxu0 0
        %1006 = vmatprep.subr.bf16.mxu0 0
        %1007 = vmatpush1.bf16.msra.mxu0 0
        %1008 = vmatprep.subr.bf16.mxu0 0
        %1009 = vmatpush1.bf16.msra.mxu0 0
        %1010 = vmatprep.subr.bf16.mxu0 0
        %1011 = vmatpush1.bf16.msra.mxu0 0
        %1012 = vmatprep.subr.bf16.mxu0 0
        %1013 = vmatpush1.bf16.msra.mxu0 0
        %1014 = vmatprep.subr.bf16.mxu0 0
        %1015 = vmatpush1.bf16.msra.mxu0 0
        %1016 = vmatprep.subr.bf16.mxu0 0
        %1017 = vmatpush1.bf16.msra.mxu0 0
        %1018 = vmatprep.mubr.bf16.mxu0 0
        %1019 = vmatmul.mubr.bf16.gmra.mrb[0].mxu0 %v984
        %v1020 = vpop.f32.mrb[0].mxu0
        %v1021 = vadd.f32 0.0, %v1020
        %v1022 = vpop.f32.mrb[0].mxu0
        %v1023 = vpop.f32.mrb[0].mxu0
        %v1024 = vadd.f32 0.0, %v1023
        %v1025 = vpop.f32.mrb[0].mxu0
        %1026 = vdwg.mxu0
        %1027 = vrot.lane.b32.xlu0 %v400, 48
        %v1028 = vpop.permute.xlu0 %1027
        %1029 = vrot.lane.b32.xlu0 %v405, 48
        %v1030 = vpop.permute.xlu0 %1029
        %v1032 = vsel %vm406, %v1028, 0
        %v1035 = vsel %vm406, %v1030, 0
        %1037 = vmatprep.subr.bf16.mxu0 0
        %1038 = vmatpush1.bf16.xpose.msra.mxu0 %v1035
        %1039 = vmatprep.subr.bf16.mxu0 0
        %1040 = vmatpush1.bf16.xpose.msra.mxu0 0
        %1041 = vmatprep.subr.bf16.mxu0 0
        %1042 = vmatpush1.bf16.xpose.msra.mxu0 0
        %1043 = vmatprep.subr.bf16.mxu0 0
        %1044 = vmatpush1.bf16.xpose.msra.mxu0 0
        %1045 = vmatprep.subr.bf16.mxu0 0
        %1046 = vmatpush1.bf16.xpose.msra.mxu0 0
        %1047 = vmatprep.subr.bf16.mxu0 0
        %1048 = vmatpush1.bf16.xpose.msra.mxu0 0
        %1049 = vmatprep.subr.bf16.mxu0 0
        %1050 = vmatpush1.bf16.xpose.msra.mxu0 0
        %1051 = vmatprep.subr.bf16.mxu0 0
        %1052 = vmatpush1.bf16.xpose.msra.mxu0 0
        %1053 = vmatprep.subr.bf16.mxu0 0
        %1054 = vmatpush1.bf16.xpose.msra.mxu0 0
        %1055 = vmatprep.subr.bf16.mxu0 0
        %1056 = vmatpush1.bf16.xpose.msra.mxu0 0
        %1057 = vmatprep.subr.bf16.mxu0 0
        %1058 = vmatpush1.bf16.xpose.msra.mxu0 0
        %1059 = vmatprep.subr.bf16.mxu0 0
        %1060 = vmatpush1.bf16.xpose.msra.mxu0 0
        %1061 = vmatprep.subr.bf16.mxu0 0
        %1062 = vmatpush1.bf16.xpose.msra.mxu0 0
        %1063 = vmatprep.subr.bf16.mxu0 0
        %1064 = vmatpush1.bf16.xpose.msra.mxu0 0
        %1065 = vmatprep.subr.bf16.mxu0 0
        %1066 = vmatpush1.bf16.xpose.msra.mxu0 0
        %1067 = vmatprep.subr.bf16.mxu0 0
        %1068 = vmatpush1.bf16.xpose.msra.mxu0 0
        %1069 = vmatprep.mubr.bf16.mxu0 0
        %1070 = vmatmul.mubr.bf16.gmra.mrb[0].mxu0 %v1032
        %v1071 = vpop.f32.mrb[0].mxu0
        %v1072 = vadd.f32 0.0, %v1071
        %v1073 = vpop.f32.mrb[0].mxu0
        %v1074 = vpop.f32.mrb[0].mxu0
        %v1075 = vadd.f32 0.0, %v1074
        %v1076 = vpop.f32.mrb[0].mxu0
        %1077 = vdwg.mxu0
        %v1078 = vsel %vm459, %v1072, -1e+09
        %v1079 = vsel %vm459, %v1075, -1e+09
        %v1080 = vsel %vm406, %v1078, -inf
        %1081 = vmax.xlane.f32.xlu0 %v1080
        %v1082 = vpop.xlane.xlu0 %1081
        %v1083 = vsel %vm406, %v1079, -inf
        %1084 = vmax.xlane.f32.xlu0 %v1083
        %v1085 = vpop.xlane.xlu0 %1084
        %v1086 = vsub.f32 %v1078, %v1082
        %v1087 = vsub.f32 %v1079, %v1085
        %v1088 = vmul.f32 %v1086, 1.442695
        %v1089 = vpow.pop %v1088
        %v1090 = vmul.f32 %v1087, 1.442695
        %v1091 = vpow.pop %v1090
        %v1092 = vsel %vm406, %v1089, 0.0
        %1093 = vadd.xlane.f32.xlu0 %v1092
        %v1094 = vpop.xlane.xlu0 %1093
        %v1095 = vsel %vm406, %v1091, 0.0
        %1096 = vadd.xlane.f32.xlu0 %v1095
        %v1097 = vpop.xlane.xlu0 %1096
        %v1098 = vrcp.pop %v1094
        %v1099 = vrcp.pop %v1097
        %v1100 = vmul.f32 %v1089, %v1098
        %v1101 = vmul.f32 %v1091, %v1099
        %v1102 = vpack.c.bf16 %v1101, %v1100
        %1103 = vrot.lane.b32.xlu0 %v489, 48
        %v1104 = vpop.permute.xlu0 %1103
        %v1107 = vsel %vm406, %v1102, 0
        %1109 = vmatprep.subr.bf16.mxu0 0
        %1110 = vmatpush1.bf16.msra.mxu0 %v1104
        %1111 = vmatprep.subr.bf16.mxu0 0
        %1112 = vmatpush1.bf16.msra.mxu0 0
        %1113 = vmatprep.subr.bf16.mxu0 0
        %1114 = vmatpush1.bf16.msra.mxu0 0
        %1115 = vmatprep.subr.bf16.mxu0 0
        %1116 = vmatpush1.bf16.msra.mxu0 0
        %1117 = vmatprep.subr.bf16.mxu0 0
        %1118 = vmatpush1.bf16.msra.mxu0 0
        %1119 = vmatprep.subr.bf16.mxu0 0
        %1120 = vmatpush1.bf16.msra.mxu0 0
        %1121 = vmatprep.subr.bf16.mxu0 0
        %1122 = vmatpush1.bf16.msra.mxu0 0
        %1123 = vmatprep.subr.bf16.mxu0 0
        %1124 = vmatpush1.bf16.msra.mxu0 0
        %1125 = vmatprep.subr.bf16.mxu0 0
        %1126 = vmatpush1.bf16.msra.mxu0 0
        %1127 = vmatprep.subr.bf16.mxu0 0
        %1128 = vmatpush1.bf16.msra.mxu0 0
        %1129 = vmatprep.subr.bf16.mxu0 0
        %1130 = vmatpush1.bf16.msra.mxu0 0
        %1131 = vmatprep.subr.bf16.mxu0 0
        %1132 = vmatpush1.bf16.msra.mxu0 0
        %1133 = vmatprep.subr.bf16.mxu0 0
        %1134 = vmatpush1.bf16.msra.mxu0 0
        %1135 = vmatprep.subr.bf16.mxu0 0
        %1136 = vmatpush1.bf16.msra.mxu0 0
        %1137 = vmatprep.subr.bf16.mxu0 0
        %1138 = vmatpush1.bf16.msra.mxu0 0
        %1139 = vmatprep.subr.bf16.mxu0 0
        %1140 = vmatpush1.bf16.msra.mxu0 0
        %1141 = vmatprep.mubr.bf16.mxu0 0
        %1142 = vmatmul.mubr.bf16.gmra.mrb[0].mxu0 %v1107
        %v1143 = vpop.f32.mrb[0].mxu0
        %v1144 = vadd.f32 0.0, %v1143
        %v1145 = vpop.f32.mrb[0].mxu0
        %v1146 = vpop.f32.mrb[0].mxu0
        %v1147 = vadd.f32 0.0, %v1146
        %v1148 = vpop.f32.mrb[0].mxu0
        %1149 = vdwg.mxu0
        %1150 = vrot.lane.b32.xlu0 %v400, 32
        %v1151 = vpop.permute.xlu0 %1150
        %1152 = vrot.lane.b32.xlu0 %v405, 32
        %v1153 = vpop.permute.xlu0 %1152
        %v1155 = vsel %vm406, %v1151, 0
        %v1158 = vsel %vm406, %v1153, 0
        %1160 = vmatprep.subr.bf16.mxu0 0
        %1161 = vmatpush1.bf16.xpose.msra.mxu0 %v1158
        %1162 = vmatprep.subr.bf16.mxu0 0
        %1163 = vmatpush1.bf16.xpose.msra.mxu0 0
        %1164 = vmatprep.subr.bf16.mxu0 0
        %1165 = vmatpush1.bf16.xpose.msra.mxu0 0
        %1166 = vmatprep.subr.bf16.mxu0 0
        %1167 = vmatpush1.bf16.xpose.msra.mxu0 0
        %1168 = vmatprep.subr.bf16.mxu0 0
        %1169 = vmatpush1.bf16.xpose.msra.mxu0 0
        %1170 = vmatprep.subr.bf16.mxu0 0
        %1171 = vmatpush1.bf16.xpose.msra.mxu0 0
        %1172 = vmatprep.subr.bf16.mxu0 0
        %1173 = vmatpush1.bf16.xpose.msra.mxu0 0
        %1174 = vmatprep.subr.bf16.mxu0 0
        %1175 = vmatpush1.bf16.xpose.msra.mxu0 0
        %1176 = vmatprep.subr.bf16.mxu0 0
        %1177 = vmatpush1.bf16.xpose.msra.mxu0 0
        %1178 = vmatprep.subr.bf16.mxu0 0
        %1179 = vmatpush1.bf16.xpose.msra.mxu0 0
        %1180 = vmatprep.subr.bf16.mxu0 0
        %1181 = vmatpush1.bf16.xpose.msra.mxu0 0
        %1182 = vmatprep.subr.bf16.mxu0 0
        %1183 = vmatpush1.bf16.xpose.msra.mxu0 0
        %1184 = vmatprep.subr.bf16.mxu0 0
        %1185 = vmatpush1.bf16.xpose.msra.mxu0 0
        %1186 = vmatprep.subr.bf16.mxu0 0
        %1187 = vmatpush1.bf16.xpose.msra.mxu0 0
        %1188 = vmatprep.subr.bf16.mxu0 0
        %1189 = vmatpush1.bf16.xpose.msra.mxu0 0
        %1190 = vmatprep.subr.bf16.mxu0 0
        %1191 = vmatpush1.bf16.xpose.msra.mxu0 0
        %1192 = vmatprep.mubr.bf16.mxu0 0
        %1193 = vmatmul.mubr.bf16.gmra.mrb[0].mxu0 %v1155
        %v1194 = vpop.f32.mrb[0].mxu0
        %v1195 = vadd.f32 0.0, %v1194
        %v1196 = vpop.f32.mrb[0].mxu0
        %v1197 = vpop.f32.mrb[0].mxu0
        %v1198 = vadd.f32 0.0, %v1197
        %v1199 = vpop.f32.mrb[0].mxu0
        %1200 = vdwg.mxu0
        %v1201 = vsel %vm459, %v1195, -1e+09
        %v1202 = vsel %vm459, %v1198, -1e+09
        %v1203 = vsel %vm406, %v1201, -inf
        %1204 = vmax.xlane.f32.xlu0 %v1203
        %v1205 = vpop.xlane.xlu0 %1204
        %v1206 = vsel %vm406, %v1202, -inf
        %1207 = vmax.xlane.f32.xlu0 %v1206
        %v1208 = vpop.xlane.xlu0 %1207
        %v1209 = vsub.f32 %v1201, %v1205
        %v1210 = vsub.f32 %v1202, %v1208
        %v1211 = vmul.f32 %v1209, 1.442695
        %v1212 = vpow.pop %v1211
        %v1213 = vmul.f32 %v1210, 1.442695
        %v1214 = vpow.pop %v1213
        %v1215 = vsel %vm406, %v1212, 0.0
        %1216 = vadd.xlane.f32.xlu0 %v1215
        %v1217 = vpop.xlane.xlu0 %1216
        %v1218 = vsel %vm406, %v1214, 0.0
        %1219 = vadd.xlane.f32.xlu0 %v1218
        %v1220 = vpop.xlane.xlu0 %1219
        %v1221 = vrcp.pop %v1217
        %v1222 = vrcp.pop %v1220
        %v1223 = vmul.f32 %v1212, %v1221
        %v1224 = vmul.f32 %v1214, %v1222
        %v1225 = vpack.c.bf16 %v1224, %v1223
        %1226 = vrot.lane.b32.xlu0 %v489, 32
        %v1227 = vpop.permute.xlu0 %1226
        %v1230 = vsel %vm406, %v1225, 0
        %1232 = vmatprep.subr.bf16.mxu0 0
        %1233 = vmatpush1.bf16.msra.mxu0 %v1227
        %1234 = vmatprep.subr.bf16.mxu0 0
        %1235 = vmatpush1.bf16.msra.mxu0 0
        %1236 = vmatprep.subr.bf16.mxu0 0
        %1237 = vmatpush1.bf16.msra.mxu0 0
        %1238 = vmatprep.subr.bf16.mxu0 0
        %1239 = vmatpush1.bf16.msra.mxu0 0
        %1240 = vmatprep.subr.bf16.mxu0 0
        %1241 = vmatpush1.bf16.msra.mxu0 0
        %1242 = vmatprep.subr.bf16.mxu0 0
        %1243 = vmatpush1.bf16.msra.mxu0 0
        %1244 = vmatprep.subr.bf16.mxu0 0
        %1245 = vmatpush1.bf16.msra.mxu0 0
        %1246 = vmatprep.subr.bf16.mxu0 0
        %1247 = vmatpush1.bf16.msra.mxu0 0
        %1248 = vmatprep.subr.bf16.mxu0 0
        %1249 = vmatpush1.bf16.msra.mxu0 0
        %1250 = vmatprep.subr.bf16.mxu0 0
        %1251 = vmatpush1.bf16.msra.mxu0 0
        %1252 = vmatprep.subr.bf16.mxu0 0
        %1253 = vmatpush1.bf16.msra.mxu0 0
        %1254 = vmatprep.subr.bf16.mxu0 0
        %1255 = vmatpush1.bf16.msra.mxu0 0
        %1256 = vmatprep.subr.bf16.mxu0 0
        %1257 = vmatpush1.bf16.msra.mxu0 0
        %1258 = vmatprep.subr.bf16.mxu0 0
        %1259 = vmatpush1.bf16.msra.mxu0 0
        %1260 = vmatprep.subr.bf16.mxu0 0
        %1261 = vmatpush1.bf16.msra.mxu0 0
        %1262 = vmatprep.subr.bf16.mxu0 0
        %1263 = vmatpush1.bf16.msra.mxu0 0
        %1264 = vmatprep.mubr.bf16.mxu0 0
        %1265 = vmatmul.mubr.bf16.gmra.mrb[0].mxu0 %v1230
        %v1266 = vpop.f32.mrb[0].mxu0
        %v1267 = vadd.f32 0.0, %v1266
        %v1268 = vpop.f32.mrb[0].mxu0
        %v1269 = vpop.f32.mrb[0].mxu0
        %v1270 = vadd.f32 0.0, %v1269
        %v1271 = vpop.f32.mrb[0].mxu0
        %1272 = vdwg.mxu0
        %1273 = vrot.lane.b32.xlu0 %v400, 16
        %v1274 = vpop.permute.xlu0 %1273
        %1275 = vrot.lane.b32.xlu0 %v405, 16
        %v1276 = vpop.permute.xlu0 %1275
        %v1278 = vsel %vm406, %v1274, 0
        %v1281 = vsel %vm406, %v1276, 0
        %1283 = vmatprep.subr.bf16.mxu0 0
        %1284 = vmatpush1.bf16.xpose.msra.mxu0 %v1281
        %1285 = vmatprep.subr.bf16.mxu0 0
        %1286 = vmatpush1.bf16.xpose.msra.mxu0 0
        %1287 = vmatprep.subr.bf16.mxu0 0
        %1288 = vmatpush1.bf16.xpose.msra.mxu0 0
        %1289 = vmatprep.subr.bf16.mxu0 0
        %1290 = vmatpush1.bf16.xpose.msra.mxu0 0
        %1291 = vmatprep.subr.bf16.mxu0 0
        %1292 = vmatpush1.bf16.xpose.msra.mxu0 0
        %1293 = vmatprep.subr.bf16.mxu0 0
        %1294 = vmatpush1.bf16.xpose.msra.mxu0 0
        %1295 = vmatprep.subr.bf16.mxu0 0
        %1296 = vmatpush1.bf16.xpose.msra.mxu0 0
        %1297 = vmatprep.subr.bf16.mxu0 0
        %1298 = vmatpush1.bf16.xpose.msra.mxu0 0
        %1299 = vmatprep.subr.bf16.mxu0 0
        %1300 = vmatpush1.bf16.xpose.msra.mxu0 0
        %1301 = vmatprep.subr.bf16.mxu0 0
        %1302 = vmatpush1.bf16.xpose.msra.mxu0 0
        %1303 = vmatprep.subr.bf16.mxu0 0
        %1304 = vmatpush1.bf16.xpose.msra.mxu0 0
        %1305 = vmatprep.subr.bf16.mxu0 0
        %1306 = vmatpush1.bf16.xpose.msra.mxu0 0
        %1307 = vmatprep.subr.bf16.mxu0 0
        %1308 = vmatpush1.bf16.xpose.msra.mxu0 0
        %1309 = vmatprep.subr.bf16.mxu0 0
        %1310 = vmatpush1.bf16.xpose.msra.mxu0 0
        %1311 = vmatprep.subr.bf16.mxu0 0
        %1312 = vmatpush1.bf16.xpose.msra.mxu0 0
        %1313 = vmatprep.subr.bf16.mxu0 0
        %1314 = vmatpush1.bf16.xpose.msra.mxu0 0
        %1315 = vmatprep.mubr.bf16.mxu0 0
        %1316 = vmatmul.mubr.bf16.gmra.mrb[0].mxu0 %v1278
        %v1317 = vpop.f32.mrb[0].mxu0
        %v1318 = vadd.f32 0.0, %v1317
        %v1319 = vpop.f32.mrb[0].mxu0
        %v1320 = vpop.f32.mrb[0].mxu0
        %v1321 = vadd.f32 0.0, %v1320
        %v1322 = vpop.f32.mrb[0].mxu0
        %1323 = vdwg.mxu0
        %v1324 = vsel %vm459, %v1318, -1e+09
        %v1325 = vsel %vm459, %v1321, -1e+09
        %v1326 = vsel %vm406, %v1324, -inf
        %1327 = vmax.xlane.f32.xlu0 %v1326
        %v1328 = vpop.xlane.xlu0 %1327
        %v1329 = vsel %vm406, %v1325, -inf
        %1330 = vmax.xlane.f32.xlu0 %v1329
        %v1331 = vpop.xlane.xlu0 %1330
        %v1332 = vsub.f32 %v1324, %v1328
        %v1333 = vsub.f32 %v1325, %v1331
        %v1334 = vmul.f32 %v1332, 1.442695
        %v1335 = vpow.pop %v1334
        %v1336 = vmul.f32 %v1333, 1.442695
        %v1337 = vpow.pop %v1336
        %v1338 = vsel %vm406, %v1335, 0.0
        %1339 = vadd.xlane.f32.xlu0 %v1338
        %v1340 = vpop.xlane.xlu0 %1339
        %v1341 = vsel %vm406, %v1337, 0.0
        %1342 = vadd.xlane.f32.xlu0 %v1341
        %v1343 = vpop.xlane.xlu0 %1342
        %v1344 = vrcp.pop %v1340
        %v1345 = vrcp.pop %v1343
        %v1346 = vmul.f32 %v1335, %v1344
        %v1347 = vmul.f32 %v1337, %v1345
        %v1348 = vpack.c.bf16 %v1347, %v1346
        %1349 = vrot.lane.b32.xlu0 %v489, 16
        %v1350 = vpop.permute.xlu0 %1349
        %v1353 = vsel %vm406, %v1348, 0
        %1355 = vmatprep.subr.bf16.mxu0 0
        %1356 = vmatpush1.bf16.msra.mxu0 %v1350
        %1357 = vmatprep.subr.bf16.mxu0 0
        %1358 = vmatpush1.bf16.msra.mxu0 0
        %1359 = vmatprep.subr.bf16.mxu0 0
        %1360 = vmatpush1.bf16.msra.mxu0 0
        %1361 = vmatprep.subr.bf16.mxu0 0
        %1362 = vmatpush1.bf16.msra.mxu0 0
        %1363 = vmatprep.subr.bf16.mxu0 0
        %1364 = vmatpush1.bf16.msra.mxu0 0
        %1365 = vmatprep.subr.bf16.mxu0 0
        %1366 = vmatpush1.bf16.msra.mxu0 0
        %1367 = vmatprep.subr.bf16.mxu0 0
        %1368 = vmatpush1.bf16.msra.mxu0 0
        %1369 = vmatprep.subr.bf16.mxu0 0
        %1370 = vmatpush1.bf16.msra.mxu0 0
        %1371 = vmatprep.subr.bf16.mxu0 0
        %1372 = vmatpush1.bf16.msra.mxu0 0
        %1373 = vmatprep.subr.bf16.mxu0 0
        %1374 = vmatpush1.bf16.msra.mxu0 0
        %1375 = vmatprep.subr.bf16.mxu0 0
        %1376 = vmatpush1.bf16.msra.mxu0 0
        %1377 = vmatprep.subr.bf16.mxu0 0
        %1378 = vmatpush1.bf16.msra.mxu0 0
        %1379 = vmatprep.subr.bf16.mxu0 0
        %1380 = vmatpush1.bf16.msra.mxu0 0
        %1381 = vmatprep.subr.bf16.mxu0 0
        %1382 = vmatpush1.bf16.msra.mxu0 0
        %1383 = vmatprep.subr.bf16.mxu0 0
        %1384 = vmatpush1.bf16.msra.mxu0 0
        %1385 = vmatprep.subr.bf16.mxu0 0
        %1386 = vmatpush1.bf16.msra.mxu0 0
        %1387 = vmatprep.mubr.bf16.mxu0 0
        %1388 = vmatmul.mubr.bf16.gmra.mrb[0].mxu0 %v1353
        %v1389 = vpop.f32.mrb[0].mxu0
        %v1390 = vadd.f32 0.0, %v1389
        %v1391 = vpop.f32.mrb[0].mxu0
        %v1392 = vpop.f32.mrb[0].mxu0
        %v1393 = vadd.f32 0.0, %v1392
        %v1394 = vpop.f32.mrb[0].mxu0
        %1395 = vdwg.mxu0
        %1398 = vrot.lane.b32.xlu0 %v652, 16
        %v1399 = vpop.permute.xlu0 %1398
        %1400 = vrot.lane.b32.xlu0 %v655, 16
        %v1401 = vpop.permute.xlu0 %1400
        %1406 = vrot.lane.b32.xlu0 %v775, 32
        %v1407 = vpop.permute.xlu0 %1406
        %1408 = vrot.lane.b32.xlu0 %v778, 32
        %v1409 = vpop.permute.xlu0 %1408
        %1414 = vrot.lane.b32.xlu0 %v898, 48
        %v1415 = vpop.permute.xlu0 %1414
        %1416 = vrot.lane.b32.xlu0 %v901, 48
        %v1417 = vpop.permute.xlu0 %1416
        %1422 = vrot.lane.b32.xlu0 %v1021, 64
        %v1423 = vpop.permute.xlu0 %1422
        %1424 = vrot.lane.b32.xlu0 %v1024, 64
        %v1425 = vpop.permute.xlu0 %1424
        %1430 = vrot.lane.b32.xlu0 %v1144, 80
        %v1431 = vpop.permute.xlu0 %1430
        %1432 = vrot.lane.b32.xlu0 %v1147, 80
        %v1433 = vpop.permute.xlu0 %1432
        %1438 = vrot.lane.b32.xlu0 %v1267, 96
        %v1439 = vpop.permute.xlu0 %1438
        %1440 = vrot.lane.b32.xlu0 %v1270, 96
        %v1441 = vpop.permute.xlu0 %1440
        %1446 = vrot.lane.b32.xlu0 %v1390, 112
        %v1447 = vpop.permute.xlu0 %1446
        %1448 = vrot.lane.b32.xlu0 %v1393, 112
        %v1449 = vpop.permute.xlu0 %1448
        %v1452 = vsel %vm406, %v529, %v1399
        %v1453 = vsel %vm406, %v532, %v1401
        %vm1454 = vcmask 261120
        %v1455 = vsel %vm1454, %v1452, %v1407
        %v1456 = vsel %vm1454, %v1453, %v1409
        %vm1457 = vcmask 392192
        %v1458 = vsel %vm1457, %v1455, %v1415
        %v1459 = vsel %vm1457, %v1456, %v1417
        %vm1460 = vcmask 523264
        %v1461 = vsel %vm1460, %v1458, %v1423
        %v1462 = vsel %vm1460, %v1459, %v1425
        %vm1463 = vcmask 654336
        %v1464 = vsel %vm1463, %v1461, %v1431
        %v1465 = vsel %vm1463, %v1462, %v1433
        %vm1466 = vcmask 785408
        %v1467 = vsel %vm1466, %v1464, %v1439
        %v1468 = vsel %vm1466, %v1465, %v1441
        %vm1469 = vcmask 916480
        %v1470 = vsel %vm1469, %v1467, %v1447
        %v1471 = vsel %vm1469, %v1468, %v1449
        %v1472 = vpack.c.bf16 %v1471, %v1470
        %v1474 = vunpack.c.l.b16 %v1472
        %v1475 = vunpack.c.h.b16 %v1472
        %v1476 = vpack.c.b16 %v1474, %v1474
        %v1477 = vpack.c.b16 %v1475, %v1475
        %1480 = vst [vmem:[%s382] sm:$0xf] %v1476
        %1481 = vst [vmem:[%s382 + $0x4] sm:$0xf] %v1477
        %s1482 = smul.u32 2, %s20
        %p1483 = scmp.lt.s32.totalorder %s19, 1
        %s1484 = scalar_select %p1483, %s19, 1
        %p1485 = scmp.lt.s32.totalorder %s1482, 1
        %s1486 = scalar_select %p1485, %s1482, 1
        %s1487 = smul.addr %s1484, 2
        %s1488 = sadd.s32 %s1486, %s1487
        %s1489 = smul.addr %s1488, 4
        %s1490 = scalar_lea.vmem %s4, %s1489
        // Predicated region
        $region119: #{transformer_decoder_layer.13} parent=109 // pred_check
          %p1491 = pneg %p153
        $region120: #{transformer_decoder_layer.13} parent=109 // pred_check_branch
          %1493 = sbr.rel (%p1491) target = $region122
        $region121: #{transformer_decoder_layer.13} parent=109 // pred_region
          %s1494 = smul.u32 2, %s20
        $region122: #{transformer_decoder_layer.13} parent=109 // pred_fallthru
          _
      $region110: #{transformer_decoder_layer.13} parent=5 // pred_fallthru
        _
      %p1495 = scmp.le.s32.totalorder 2, %s10
      // Predicated region
      $region123: #{transformer_decoder_layer.13} parent=5 // pred_check
        %p1496 = pneg %p1495
      $region124: #{transformer_decoder_layer.13} parent=5 // pred_check_branch
        %1498 = sbr.rel (%p1496) target = $region126
      $region125: #{transformer_decoder_layer.13} parent=5 // pred_region
        %s1499 = ssub.s32 %s10, 2
        // Predicated region
        $region127: #{transformer_decoder_layer.13} parent=125 // pred_check
          %p1500 = pneg %p159
        $region128: #{transformer_decoder_layer.13} parent=125 // pred_check_branch
          %1502 = sbr.rel (%p1500) target = $region130
        $region129: #{transformer_decoder_layer.13} parent=125 // pred_region
          %s1503 = smul.u32 2, %s22
          %p1504 = scmp.lt.s32.totalorder %s21, 1
          %s1505 = scalar_select %p1504, %s21, 1
          %p1506 = scmp.lt.s32.totalorder %s1503, 1
          %s1507 = scalar_select %p1506, %s1503, 1
          %s1508 = smul.addr %s1505, 2
          %s1509 = sadd.s32 %s1507, %s1508
          %s1510 = smul.addr %s1509, 4
          %s1511 = scalar_lea.vmem %s4, %s1510
        $region130: #{transformer_decoder_layer.13} parent=125 // pred_fallthru
          _
      $region126: #{transformer_decoder_layer.13} parent=5 // pred_fallthru
        _
    $region6: #{transformer_decoder_layer.13} parent=1 // loop_footer
      %s14 = sadd.s32 1, %s10
    $region7: #{transformer_decoder_layer.13} parent=1 // loop_footer_branch
      %9 = sbr.rel target = $region3
    $region8: #{transformer_decoder_layer.13} parent=1 // loop_exit
      _

// kernel: transformer_decoder_layer.15
$region0: #{transformer_decoder_layer.15}
  #allocation0 [shape = 'u32[]', space=smem, size = 0x4, offset = 0x4, fixed_abs, tag = 'smem constant byte address 0x4 - core index']
  #allocation1 [shape = 'u32[144,128]{1,0:T(1,128)}', space=vmem, size = 0x12000, scoped, tag = 'internal scratch']
  #allocation2 [shape = 'f32[32,128]{1,0:T(8,128)}', space=vmem, size = 0x4000, scoped, tag = 'scratch operand']
  %s0 = inlined_call_operand.vmem [shape: bf16[32,128], index: 0, kind: input, shape index: {}]
  %s1 = inlined_call_operand.vmem [shape: bf16[128,256], index: 1, kind: input, shape index: {}]
  %s2 = inlined_call_operand.vmem [shape: f32[1,256], index: 2, kind: input, shape index: {}]
  %s3 = inlined_call_operand.vmem [shape: bf16[256,128], index: 3, kind: input, shape index: {}]
  %s4 = inlined_call_operand.vmem [shape: f32[1,128], index: 4, kind: input, shape index: {}]
  %s5 = inlined_call_operand.vmem [shape: f32[1,128], index: 5, kind: input, shape index: {}]
  %s6 = inlined_call_operand.vmem [shape: f32[1,128], index: 6, kind: input, shape index: {}]
  %s7 = inlined_call_operand.hbm [shape: f32[32,128], index: 7, kind: output, shape index: {}]
  %s8 = sld [smem:[#allocation0]]
  $region46: #{transformer_decoder_layer.15} parent=0
    _
  %s10 = ssub.s32 1, %s8
  %s11 = scalar_select 0, %s10, %s8
  $region1: #{transformer_decoder_layer.15} parent=0
    #allocation3 [shape = 'u8[16384]{0}', space=vmem, size = 0x4000, scoped, tag = 'output window, operand 0, single buffered']
    #allocation4 [shape = 's32[1]{0}', space=sflag, size = 0x4, scoped, tag = 'scoped memory for transformer_decoder_layer.15']
    %12 = vsyncpa [#allocation4], 0
    // Predicated region
    $region2: #{transformer_decoder_layer.15} parent=1 // pred_check
      _
    $region3: #{transformer_decoder_layer.15} parent=1 // pred_check_branch
      %14 = sbr.rel (0) target = $region5
    $region4: #{transformer_decoder_layer.15} parent=1 // pred_region
      _
    $region5: #{transformer_decoder_layer.15} parent=1 // pred_fallthru
      _
    // Predicated region
    $region6: #{transformer_decoder_layer.15} parent=1 // pred_check
      _
    $region7: #{transformer_decoder_layer.15} parent=1 // pred_check_branch
      %16 = sbr.rel (0) target = $region9
    $region8: #{transformer_decoder_layer.15} parent=1 // pred_region
      _
    $region9: #{transformer_decoder_layer.15} parent=1 // pred_fallthru
      _
    // Predicated region
    $region10: #{transformer_decoder_layer.15} parent=1 // pred_check
      _
    $region11: #{transformer_decoder_layer.15} parent=1 // pred_check_branch
      %18 = sbr.rel (0) target = $region13
    $region12: #{transformer_decoder_layer.15} parent=1 // pred_region
      _
    $region13: #{transformer_decoder_layer.15} parent=1 // pred_fallthru
      _
    // Predicated region
    $region14: #{transformer_decoder_layer.15} parent=1 // pred_check
      _
    $region15: #{transformer_decoder_layer.15} parent=1 // pred_check_branch
      %20 = sbr.rel (0) target = $region17
    $region16: #{transformer_decoder_layer.15} parent=1 // pred_region
      _
    $region17: #{transformer_decoder_layer.15} parent=1 // pred_fallthru
      _
    // Predicated region
    $region18: #{transformer_decoder_layer.15} parent=1 // pred_check
      _
    $region19: #{transformer_decoder_layer.15} parent=1 // pred_check_branch
      %22 = sbr.rel (0) target = $region21
    $region20: #{transformer_decoder_layer.15} parent=1 // pred_region
      _
    $region21: #{transformer_decoder_layer.15} parent=1 // pred_fallthru
      _
    // Predicated region
    $region22: #{transformer_decoder_layer.15} parent=1 // pred_check
      _
    $region23: #{transformer_decoder_layer.15} parent=1 // pred_check_branch
      %24 = sbr.rel (0) target = $region25
    $region24: #{transformer_decoder_layer.15} parent=1 // pred_region
      _
    $region25: #{transformer_decoder_layer.15} parent=1 // pred_fallthru
      _
    // Predicated region
    $region26: #{transformer_decoder_layer.15} parent=1 // pred_check
      _
    $region27: #{transformer_decoder_layer.15} parent=1 // pred_check_branch
      %26 = sbr.rel (0) target = $region29
    $region28: #{transformer_decoder_layer.15} parent=1 // pred_region
      _
    $region29: #{transformer_decoder_layer.15} parent=1 // pred_fallthru
      _
    %p28 = scmp.eq.s32.totalorder 0, 0
    // Predicated region
    $region30: #{transformer_decoder_layer.15} parent=1 // pred_check
      %p29 = pneg %p28
    $region31: #{transformer_decoder_layer.15} parent=1 // pred_check_branch
      %31 = sbr.rel (%p29) target = $region33
    $region32: #{transformer_decoder_layer.15} parent=1 // pred_region
      %32 = vst [vmem:[#allocation2] sm:$0xff] 0.0
      %33 = vst [vmem:[#allocation2 + $0x8] sm:$0xff] 0.0
      %34 = vst [vmem:[#allocation2 + $0x10] sm:$0xff] 0.0
      %35 = vst [vmem:[#allocation2 + $0x18] sm:$0xff] 0.0
    $region33: #{transformer_decoder_layer.15} parent=1 // pred_fallthru
      _
    %v36 = vld [vmem:[%s0] sm:$0xf]
    %v37 = vld [vmem:[%s0 + $0x4] sm:$0xf]
    %v38 = vld [vmem:[%s0 + $0x8] sm:$0xf]
    %v39 = vld [vmem:[%s0 + $0xc] sm:$0xf]
    %v40 = vld [vmem:[%s1] sm:$0xff]
    %v41 = vld [vmem:[%s1 + $0x8] sm:$0xff]
    %v42 = vld [vmem:[%s1 + $0x10] sm:$0xff]
    %v43 = vld [vmem:[%s1 + $0x18] sm:$0xff]
    %v44 = vld [vmem:[%s1 + $0x20] sm:$0xff]
    %v45 = vld [vmem:[%s1 + $0x28] sm:$0xff]
    %v46 = vld [vmem:[%s1 + $0x30] sm:$0xff]
    %v47 = vld [vmem:[%s1 + $0x38] sm:$0xff]
    %v48 = vld [vmem:[%s1 + $0x40] sm:$0xff]
    %v49 = vld [vmem:[%s1 + $0x48] sm:$0xff]
    %v50 = vld [vmem:[%s1 + $0x50] sm:$0xff]
    %v51 = vld [vmem:[%s1 + $0x58] sm:$0xff]
    %v52 = vld [vmem:[%s1 + $0x60] sm:$0xff]
    %v53 = vld [vmem:[%s1 + $0x68] sm:$0xff]
    %v54 = vld [vmem:[%s1 + $0x70] sm:$0xff]
    %v55 = vld [vmem:[%s1 + $0x78] sm:$0xff]
    %v56 = vld [vmem:[%s2] sm:$0x3]
    %v58 = vlaneseq
    %v59 = vshrl.u32 %v58, 7
    %v60 = vsub.s32 0, %v59
    %v61 = vrot.slane %v56, %v60
    %v62 = vlaneseq
    %v63 = vshrl.u32 %v62, 7
    %v64 = vsub.s32 1, %v63
    %v65 = vrot.slane %v56, %v64
    %v72 = vunpack.c.l.b16 %v36
    %v73 = vunpack.c.l.b16 %v37
    %v74 = vunpack.c.l.b16 %v38
    %v75 = vunpack.c.l.b16 %v39
    %v76 = vpack.c.b16 %v73, %v72
    %v77 = vpack.c.b16 %v75, %v74
    %v96 = vunpack.c.l.b16 %v40
    %v97 = vunpack.c.h.b16 %v40
    %v98 = vunpack.c.l.b16 %v41
    %v99 = vunpack.c.h.b16 %v41
    %v100 = vunpack.c.l.b16 %v42
    %v101 = vunpack.c.h.b16 %v42
    %v102 = vunpack.c.l.b16 %v43
    %v103 = vunpack.c.h.b16 %v43
    %v104 = vunpack.c.l.b16 %v44
    %v105 = vunpack.c.h.b16 %v44
    %v106 = vunpack.c.l.b16 %v45
    %v107 = vunpack.c.h.b16 %v45
    %v108 = vunpack.c.l.b16 %v46
    %v109 = vunpack.c.h.b16 %v46
    %v110 = vunpack.c.l.b16 %v47
    %v111 = vunpack.c.h.b16 %v47
    %v112 = vunpack.c.l.b16 %v48
    %v113 = vunpack.c.h.b16 %v48
    %v114 = vunpack.c.l.b16 %v49
    %v115 = vunpack.c.h.b16 %v49
    %v116 = vunpack.c.l.b16 %v50
    %v117 = vunpack.c.h.b16 %v50
    %v118 = vunpack.c.l.b16 %v51
    %v119 = vunpack.c.h.b16 %v51
    %v120 = vunpack.c.l.b16 %v52
    %v121 = vunpack.c.h.b16 %v52
    %v122 = vunpack.c.l.b16 %v53
    %v123 = vunpack.c.h.b16 %v53
    %v124 = vunpack.c.l.b16 %v54
    %v125 = vunpack.c.h.b16 %v54
    %v126 = vunpack.c.l.b16 %v55
    %v127 = vunpack.c.h.b16 %v55
    %v128 = vpack.c.b16 %v98, %v96
    %v129 = vpack.c.b16 %v99, %v97
    %v130 = vpack.c.b16 %v102, %v100
    %v131 = vpack.c.b16 %v103, %v101
    %v132 = vpack.c.b16 %v106, %v104
    %v133 = vpack.c.b16 %v107, %v105
    %v134 = vpack.c.b16 %v110, %v108
    %v135 = vpack.c.b16 %v111, %v109
    %v136 = vpack.c.b16 %v114, %v112
    %v137 = vpack.c.b16 %v115, %v113
    %v138 = vpack.c.b16 %v118, %v116
    %v139 = vpack.c.b16 %v119, %v117
    %v140 = vpack.c.b16 %v122, %v120
    %v141 = vpack.c.b16 %v123, %v121
    %v142 = vpack.c.b16 %v126, %v124
    %v143 = vpack.c.b16 %v127, %v125
    %160 = vmatprep.subr.bf16.mxu0 %v129
    %161 = vmatpush1.bf16.msra.mxu0 %v128
    %162 = vmatprep.subr.bf16.mxu0 %v131
    %163 = vmatpush1.bf16.msra.mxu0 %v130
    %164 = vmatprep.subr.bf16.mxu0 %v133
    %165 = vmatpush1.bf16.msra.mxu0 %v132
    %166 = vmatprep.subr.bf16.mxu0 %v135
    %167 = vmatpush1.bf16.msra.mxu0 %v134
    %168 = vmatprep.subr.bf16.mxu0 %v137
    %169 = vmatpush1.bf16.msra.mxu0 %v136
    %170 = vmatprep.subr.bf16.mxu0 %v139
    %171 = vmatpush1.bf16.msra.mxu0 %v138
    %172 = vmatprep.subr.bf16.mxu0 %v141
    %173 = vmatpush1.bf16.msra.mxu0 %v140
    %174 = vmatprep.subr.bf16.mxu0 %v143
    %175 = vmatpush1.bf16.msra.mxu0 %v142
    %176 = vmatprep.subr.bf16.mxu0 0
    %177 = vmatpush1.bf16.msra.mxu0 0
    %178 = vmatprep.subr.bf16.mxu0 0
    %179 = vmatpush1.bf16.msra.mxu0 0
    %180 = vmatprep.subr.bf16.mxu0 0
    %181 = vmatpush1.bf16.msra.mxu0 0
    %182 = vmatprep.subr.bf16.mxu0 0
    %183 = vmatpush1.bf16.msra.mxu0 0
    %184 = vmatprep.subr.bf16.mxu0 0
    %185 = vmatpush1.bf16.msra.mxu0 0
    %186 = vmatprep.subr.bf16.mxu0 0
    %187 = vmatpush1.bf16.msra.mxu0 0
    %188 = vmatprep.subr.bf16.mxu0 0
    %189 = vmatpush1.bf16.msra.mxu0 0
    %190 = vmatprep.subr.bf16.mxu0 0
    %191 = vmatpush1.bf16.msra.mxu0 0
    %192 = vmatprep.mubr.bf16.mxu0 0
    %193 = vmatmul.mubr.bf16.gmra.mrb[0].mxu0 %v76
    %v194 = vpop.f32.mrb[0].mxu0
    %v195 = vadd.f32 %v61, %v194
    %v196 = vpop.f32.mrb[0].mxu0
    %v197 = vadd.f32 %v65, %v196
    %v198 = vpop.f32.mrb[0].mxu0
    %v199 = vadd.f32 %v61, %v198
    %v200 = vpop.f32.mrb[0].mxu0
    %v201 = vadd.f32 %v65, %v200
    %202 = vmatprep.mubr.bf16.mxu0 0
    %203 = vmatmul.mubr.bf16.gmra.mrb[0].mxu0 %v77
    %v204 = vpop.f32.mrb[0].mxu0
    %v205 = vadd.f32 %v61, %v204
    %v206 = vpop.f32.mrb[0].mxu0
    %v207 = vadd.f32 %v65, %v206
    %v208 = vpop.f32.mrb[0].mxu0
    %v209 = vadd.f32 %v61, %v208
    %v210 = vpop.f32.mrb[0].mxu0
    %v211 = vadd.f32 %v65, %v210
    %212 = vdwg.mxu0
    %v213 = vmax.f32 %v195, 0.0
    %v214 = vmax.f32 %v197, 0.0
    %v215 = vmax.f32 %v199, 0.0
    %v216 = vmax.f32 %v201, 0.0
    %v217 = vmax.f32 %v205, 0.0
    %v218 = vmax.f32 %v207, 0.0
    %v219 = vmax.f32 %v209, 0.0
    %v220 = vmax.f32 %v211, 0.0
    %v221 = vld [vmem:[#allocation2] sm:$0xff]
    %v222 = vld [vmem:[#allocation2 + $0x8] sm:$0xff]
    %v223 = vld [vmem:[#allocation2 + $0x10] sm:$0xff]
    %v224 = vld [vmem:[#allocation2 + $0x18] sm:$0xff]
    %v225 = vpack.c.bf16 %v215, %v213
    %v226 = vpack.c.bf16 %v216, %v214
    %v227 = vpack.c.bf16 %v219, %v217
    %v228 = vpack.c.bf16 %v220, %v218
    %v229 = vld [vmem:[%s3] sm:$0xf]
    %v230 = vld [vmem:[%s3 + $0x4] sm:$0xf]
    %v231 = vld [vmem:[%s3 + $0x8] sm:$0xf]
    %v232 = vld [vmem:[%s3 + $0xc] sm:$0xf]
    %v233 = vld [vmem:[%s3 + $0x10] sm:$0xf]
    %v234 = vld [vmem:[%s3 + $0x14] sm:$0xf]
    %v235 = vld [vmem:[%s3 + $0x18] sm:$0xf]
    %v236 = vld [vmem:[%s3 + $0x1c] sm:$0xf]
    %v237 = vld [vmem:[%s3 + $0x20] sm:$0xf]
    %v238 = vld [vmem:[%s3 + $0x24] sm:$0xf]
    %v239 = vld [vmem:[%s3 + $0x28] sm:$0xf]
    %v240 = vld [vmem:[%s3 + $0x2c] sm:$0xf]
    %v241 = vld [vmem:[%s3 + $0x30] sm:$0xf]
    %v242 = vld [vmem:[%s3 + $0x34] sm:$0xf]
    %v243 = vld [vmem:[%s3 + $0x38] sm:$0xf]
    %v244 = vld [vmem:[%s3 + $0x3c] sm:$0xf]
    %v245 = vld [vmem:[%s3 + $0x40] sm:$0xf]
    %v246 = vld [vmem:[%s3 + $0x44] sm:$0xf]
    %v247 = vld [vmem:[%s3 + $0x48] sm:$0xf]
    %v248 = vld [vmem:[%s3 + $0x4c] sm:$0xf]
    %v249 = vld [vmem:[%s3 + $0x50] sm:$0xf]
    %v250 = vld [vmem:[%s3 + $0x54] sm:$0xf]
    %v251 = vld [vmem:[%s3 + $0x58] sm:$0xf]
    %v252 = vld [vmem:[%s3 + $0x5c] sm:$0xf]
    %v253 = vld [vmem:[%s3 + $0x60] sm:$0xf]
    %v254 = vld [vmem:[%s3 + $0x64] sm:$0xf]
    %v255 = vld [vmem:[%s3 + $0x68] sm:$0xf]
    %v256 = vld [vmem:[%s3 + $0x6c] sm:$0xf]
    %v257 = vld [vmem:[%s3 + $0x70] sm:$0xf]
    %v258 = vld [vmem:[%s3 + $0x74] sm:$0xf]
    %v259 = vld [vmem:[%s3 + $0x78] sm:$0xf]
    %v260 = vld [vmem:[%s3 + $0x7c] sm:$0xf]
    %v293 = vunpack.c.l.b16 %v229
    %v294 = vunpack.c.l.b16 %v230
    %v295 = vunpack.c.l.b16 %v231
    %v296 = vunpack.c.l.b16 %v232
    %v297 = vunpack.c.l.b16 %v233
    %v298 = vunpack.c.l.b16 %v234
    %v299 = vunpack.c.l.b16 %v235
    %v300 = vunpack.c.l.b16 %v236
    %v301 = vunpack.c.l.b16 %v237
    %v302 = vunpack.c.l.b16 %v238
    %v303 = vunpack.c.l.b16 %v239
    %v304 = vunpack.c.l.b16 %v240
    %v305 = vunpack.c.l.b16 %v241
    %v306 = vunpack.c.l.b16 %v242
    %v307 = vunpack.c.l.b16 %v243
    %v308 = vunpack.c.l.b16 %v244
    %v309 = vunpack.c.l.b16 %v245
    %v310 = vunpack.c.l.b16 %v246
    %v311 = vunpack.c.l.b16 %v247
    %v312 = vunpack.c.l.b16 %v248
    %v313 = vunpack.c.l.b16 %v249
    %v314 = vunpack.c.l.b16 %v250
    %v315 = vunpack.c.l.b16 %v251
    %v316 = vunpack.c.l.b16 %v252
    %v317 = vunpack.c.l.b16 %v253
    %v318 = vunpack.c.l.b16 %v254
    %v319 = vunpack.c.l.b16 %v255
    %v320 = vunpack.c.l.b16 %v256
    %v321 = vunpack.c.l.b16 %v257
    %v322 = vunpack.c.l.b16 %v258
    %v323 = vunpack.c.l.b16 %v259
    %v324 = vunpack.c.l.b16 %v260
    %v325 = vpack.c.b16 %v294, %v293
    %v326 = vpack.c.b16 %v296, %v295
    %v327 = vpack.c.b16 %v298, %v297
    %v328 = vpack.c.b16 %v300, %v299
    %v329 = vpack.c.b16 %v302, %v301
    %v330 = vpack.c.b16 %v304, %v303
    %v331 = vpack.c.b16 %v306, %v305
    %v332 = vpack.c.b16 %v308, %v307
    %v333 = vpack.c.b16 %v310, %v309
    %v334 = vpack.c.b16 %v312, %v311
    %v335 = vpack.c.b16 %v314, %v313
    %v336 = vpack.c.b16 %v316, %v315
    %v337 = vpack.c.b16 %v318, %v317
    %v338 = vpack.c.b16 %v320, %v319
    %v339 = vpack.c.b16 %v322, %v321
    %v340 = vpack.c.b16 %v324, %v323
    %357 = vmatprep.subr.bf16.mxu0 0
    %358 = vmatpush1.bf16.msra.mxu0 %v325
    %359 = vmatprep.subr.bf16.mxu0 0
    %360 = vmatpush1.bf16.msra.mxu0 %v326
    %361 = vmatprep.subr.bf16.mxu0 0
    %362 = vmatpush1.bf16.msra.mxu0 %v327
    %363 = vmatprep.subr.bf16.mxu0 0
    %364 = vmatpush1.bf16.msra.mxu0 %v328
    %365 = vmatprep.subr.bf16.mxu0 0
    %366 = vmatpush1.bf16.msra.mxu0 %v329
    %367 = vmatprep.subr.bf16.mxu0 0
    %368 = vmatpush1.bf16.msra.mxu0 %v330
    %369 = vmatprep.subr.bf16.mxu0 0
    %370 = vmatpush1.bf16.msra.mxu0 %v331
    %371 = vmatprep.subr.bf16.mxu0 0
    %372 = vmatpush1.bf16.msra.mxu0 %v332
    %373 = vmatprep.subr.bf16.mxu0 0
    %374 = vmatpush1.bf16.msra.mxu0 %v333
    %375 = vmatprep.subr.bf16.mxu0 0
    %376 = vmatpush1.bf16.msra.mxu0 %v334
    %377 = vmatprep.subr.bf16.mxu0 0
    %378 = vmatpush1.bf16.msra.mxu0 %v335
    %379 = vmatprep.subr.bf16.mxu0 0
    %380 = vmatpush1.bf16.msra.mxu0 %v336
    %381 = vmatprep.subr.bf16.mxu0 0
    %382 = vmatpush1.bf16.msra.mxu0 %v337
    %383 = vmatprep.subr.bf16.mxu0 0
    %384 = vmatpush1.bf16.msra.mxu0 %v338
    %385 = vmatprep.subr.bf16.mxu0 0
    %386 = vmatpush1.bf16.msra.mxu0 %v339
    %387 = vmatprep.subr.bf16.mxu0 0
    %388 = vmatpush1.bf16.msra.mxu0 %v340
    %389 = vmatprep.mubr.bf16.mxu0 %v226
    %390 = vmatmul.mubr.bf16.gmra.mrb[0].mxu0 %v225
    %v391 = vpop.f32.mrb[0].mxu0
    %v392 = vadd.f32 0.0, %v391
    %v393 = vpop.f32.mrb[0].mxu0
    %v394 = vpop.f32.mrb[0].mxu0
    %v395 = vadd.f32 0.0, %v394
    %v396 = vpop.f32.mrb[0].mxu0
    %397 = vmatprep.mubr.bf16.mxu0 %v228
    %398 = vmatmul.mubr.bf16.gmra.mrb[0].mxu0 %v227
    %v399 = vpop.f32.mrb[0].mxu0
    %v400 = vadd.f32 0.0, %v399
    %v401 = vpop.f32.mrb[0].mxu0
    %v402 = vpop.f32.mrb[0].mxu0
    %v403 = vadd.f32 0.0, %v402
    %v404 = vpop.f32.mrb[0].mxu0
    %405 = vdwg.mxu0
    %v406 = vadd.f32 %v221, %v392
    %v407 = vadd.f32 %v222, %v395
    %v408 = vadd.f32 %v223, %v400
    %v409 = vadd.f32 %v224, %v403
    %410 = vst [vmem:[#allocation2] sm:$0xff] %v406
    %411 = vst [vmem:[#allocation2 + $0x8] sm:$0xff] %v407
    %412 = vst [vmem:[#allocation2 + $0x10] sm:$0xff] %v408
    %413 = vst [vmem:[#allocation2 + $0x18] sm:$0xff] %v409
    // Predicated region
    $region34: #{transformer_decoder_layer.15} parent=1 // pred_check
      %p414 = pneg %p28
    $region35: #{transformer_decoder_layer.15} parent=1 // pred_check_branch
      %416 = sbr.rel (%p414) target = $region37
    $region36: #{transformer_decoder_layer.15} parent=1 // pred_region
      %v417 = vld [vmem:[#allocation2] sm:$0xff]
      %v418 = vld [vmem:[#allocation2 + $0x8] sm:$0xff]
      %v419 = vld [vmem:[#allocation2 + $0x10] sm:$0xff]
      %v420 = vld [vmem:[#allocation2 + $0x18] sm:$0xff]
      %v421 = vld [vmem:[%s4] sm:$0x1]
      %v423 = vlaneseq
      %v424 = vshrl.u32 %v423, 7
      %v425 = vsub.s32 0, %v424
      %v426 = vrot.slane %v421, %v425
      %v428 = vadd.f32 %v417, %v426
      %v429 = vadd.f32 %v418, %v426
      %v430 = vadd.f32 %v419, %v426
      %v431 = vadd.f32 %v420, %v426
      %v432 = vld [vmem:[%s0] sm:$0xf]
      %v433 = vld [vmem:[%s0 + $0x4] sm:$0xf]
      %v434 = vld [vmem:[%s0 + $0x8] sm:$0xf]
      %v435 = vld [vmem:[%s0 + $0xc] sm:$0xf]
      %v436 = vunpack.c.l.bf16 %v432
      %v437 = vunpack.c.l.bf16 %v433
      %v438 = vunpack.c.l.bf16 %v434
      %v439 = vunpack.c.l.bf16 %v435
      %v440 = vadd.f32 %v428, %v436
      %v441 = vadd.f32 %v429, %v437
      %v442 = vadd.f32 %v430, %v438
      %v443 = vadd.f32 %v431, %v439
      %444 = vadd.xlane.f32.xlu0 %v440
      %v445 = vpop.xlane.xlu0 %444
      %446 = vadd.xlane.f32.xlu0 %v441
      %v447 = vpop.xlane.xlu0 %446
      %448 = vadd.xlane.f32.xlu0 %v442
      %v449 = vpop.xlane.xlu0 %448
      %450 = vadd.xlane.f32.xlu0 %v443
      %v451 = vpop.xlane.xlu0 %450
      %v452 = vrcp.pop 128.0
      %v453 = vmul.f32 %v445, %v452
      %v454 = vmul.f32 %v447, %v452
      %v455 = vmul.f32 %v449, %v452
      %v456 = vmul.f32 %v451, %v452
      %v457 = vsub.f32 %v440, %v453
      %v458 = vsub.f32 %v441, %v454
      %v459 = vsub.f32 %v442, %v455
      %v460 = vsub.f32 %v443, %v456
      %v461 = vmul.f32 %v457, %v457
      %v462 = vmul.f32 %v458, %v458
      %v463 = vmul.f32 %v459, %v459
      %v464 = vmul.f32 %v460, %v460
      %465 = vadd.xlane.f32.xlu0 %v461
      %v466 = vpop.xlane.xlu0 %465
      %467 = vadd.xlane.f32.xlu0 %v462
      %v468 = vpop.xlane.xlu0 %467
      %469 = vadd.xlane.f32.xlu0 %v463
      %v470 = vpop.xlane.xlu0 %469
      %471 = vadd.xlane.f32.xlu0 %v464
      %v472 = vpop.xlane.xlu0 %471
      %v473 = vmul.f32 %v466, %v452
      %v474 = vmul.f32 %v468, %v452
      %v475 = vmul.f32 %v470, %v452
      %v476 = vmul.f32 %v472, %v452
      %v477 = vadd.f32 %v473, 1e-05
      %v478 = vadd.f32 %v474, 1e-05
      %v479 = vadd.f32 %v475, 1e-05
      %v480 = vadd.f32 %v476, 1e-05
      %v481 = vrsqrt.pop %v477
      %v482 = vrsqrt.pop %v478
      %v483 = vrsqrt.pop %v479
      %v484 = vrsqrt.pop %v480
      %v485 = vmul.f32 %v457, %v481
      %v486 = vmul.f32 %v458, %v482
      %v487 = vmul.f32 %v459, %v483
      %v488 = vmul.f32 %v460, %v484
      %v489 = vld [vmem:[%s5] sm:$0x1]
      %v491 = vlaneseq
      %v492 = vshrl.u32 %v491, 7
      %v493 = vsub.s32 0, %v492
      %v494 = vrot.slane %v489, %v493
      %v496 = vmul.f32 %v485, %v494
      %v497 = vmul.f32 %v486, %v494
      %v498 = vmul.f32 %v487, %v494
      %v499 = vmul.f32 %v488, %v494
      %v500 = vld [vmem:[%s6] sm:$0x1]
      %v502 = vlaneseq
      %v503 = vshrl.u32 %v502, 7
      %v504 = vsub.s32 0, %v503
      %v505 = vrot.slane %v500, %v504
      %v507 = vadd.f32 %v496, %v505
      %v508 = vadd.f32 %v497, %v505
      %v509 = vadd.f32 %v498, %v505
      %v510 = vadd.f32 %v499, %v505
      %511 = vst [vmem:[#allocation3] sm:$0xff] %v507
      %512 = vst [vmem:[#allocation3 + $0x8] sm:$0xff] %v508
      %513 = vst [vmem:[#allocation3 + $0x10] sm:$0xff] %v509
      %514 = vst [vmem:[#allocation3 + $0x18] sm:$0xff] %v510
    $region37: #{transformer_decoder_layer.15} parent=1 // pred_fallthru
      _
    // Predicated region
    $region38: #{transformer_decoder_layer.15} parent=1 // pred_check
      _
    $region39: #{transformer_decoder_layer.15} parent=1 // pred_check_branch
      %516 = sbr.rel (0) target = $region41
    $region40: #{transformer_decoder_layer.15} parent=1 // pred_region
      %s518 = ssub.s32 512, 512
      %519 = vsyncadd [#allocation4], %s518
      %s520 = sshll.u32 [#allocation3], 4
      %s521 = int_to_ptr.vmem [resolvable:$true] %s520
      %526 = dma.vmem_to_hbm [thread:$0]  %s521, 512, %s7, [#allocation4], 128, 128, 8
    $region41: #{transformer_decoder_layer.15} parent=1 // pred_fallthru
      _
    // Predicated region
    $region42: #{transformer_decoder_layer.15} parent=1 // pred_check
      _
    $region43: #{transformer_decoder_layer.15} parent=1 // pred_check_branch
      %528 = sbr.rel (0) target = $region45
    $region44: #{transformer_decoder_layer.15} parent=1 // pred_region
      %529 = dma.done [#allocation4], 512
    $region45: #{transformer_decoder_layer.15} parent=1 // pred_fallthru
      _
    %530 = vsyncpa [#allocation4], 1

</llo_original>
